<compile_context>
chip_gen: v7x
topology: tpu7x:2x2x1
jax: 0.10.0
libtpu: 0.0.40
codegen_flags: <defaults>
</compile_context>

<pallas_src>
import functools
import math

import jax
import jax.numpy as jnp
from jax import lax
from jax.experimental import pallas as pl
from jax.experimental.pallas import tpu as pltpu


# ----------------------------------------------------------------------------
# In-kernel helpers (traced inside the Pallas kernel)
# ----------------------------------------------------------------------------
def _leaky_relu(y):
    return jnp.where(y >= 0, y, 0.2 * y)                     # LeakyReLU(0.2)


def _layernorm(x, g, b):
    mean = jnp.mean(x, axis=-1, keepdims=True)
    var = jnp.mean((x - mean) ** 2, axis=-1, keepdims=True)
    return (x - mean) * lax.rsqrt(var + 1e-5) * g + b


def _linear(x, w, b=None):
    # x: (M, K), w: (K, N) already in (in, out) layout.
    y = lax.dot_general(x, w, (((1,), (0,)), ((), ())),
                        preferred_element_type=jnp.float32)
    return y if b is None else y + b


def _softmax_lastdim(s):
    # Exact softmax (division, not approx reciprocal) for torch parity.
    s = s - jnp.max(s, axis=-1, keepdims=True)
    e = jnp.exp(s)
    return e / jnp.sum(e, axis=-1, keepdims=True)


# ----------------------------------------------------------------------------
# Single fused kernel: one grid step = full Trans forward for Bb batch elements
# (x and c streams merged into one row block).
# ----------------------------------------------------------------------------
def trans_kernel(
    x_ref, c_ref,
    # per-depth (stacked) transformer-block weights, (in, out) layout, folded
    ln1_g, ln1_b, w_qkv, b_qkv, w_of, b_of, w_fc2, b_fc2,
    ln2_g, ln2_b, w_ff1, b_ff1, w_ff2, b_ff2,
    # cross-attention head (MultiHead_two)
    d_wq, d_wk, d_wvfc, d_bfc,
    # outputs
    res_ref, attn_ref,
    *, depth, heads,
):
    Bb, N, dim = x_ref.shape
    E = w_of.shape[-1]                 # MHSA embed dim (== d_v)
    hd = E // heads
    S = 2 * Bb                         # sequences this step (x-stream + c-stream)
    R = S * N                          # merged row count
    mhsa_scale = 1.0 / math.sqrt(hd)   # nn.MultiheadAttention scaling

    # Merge x and c rows: everything except attention is row-wise.
    t = jnp.concatenate(
        [x_ref[...].reshape(Bb * N, dim), c_ref[...].reshape(Bb * N, dim)],
        axis=0)                                                    # (R, dim)

    for d in range(depth):
        # ---- Residual(PreNormDrop(MultiHead_self)) -------------------------
        xn = _layernorm(t, ln1_g[d], ln1_b[d])
        # Folded w_q/w_k/w_v + in_proj: one (R, dim) x (dim, 3E) matmul.
        qkv = (_linear(xn, w_qkv[d]) + b_qkv[d]).reshape(S, N, 3 * E)

        w_of_d = w_of[d]                                 # (E, E): out_proj @ fc1 folded
        o = jnp.zeros((R, E), jnp.float32)
        for h in range(heads):                           # static head loop
            q_h = qkv[:, :, h * hd:(h + 1) * hd]                     # (S, N, hd)
            k_h = qkv[:, :, E + h * hd:E + (h + 1) * hd]
            v_h = qkv[:, :, 2 * E + h * hd:2 * E + (h + 1) * hd]
            s = jnp.einsum('sqd,skd->sqk', q_h, k_h,
                           preferred_element_type=jnp.float32) * mhsa_scale
            p = _softmax_lastdim(s)
            pv = jnp.einsum('sqk,skd->sqd', p, v_h,
                            preferred_element_type=jnp.float32)      # (S, N, hd)
            # Head concat folded into the (out_proj @ fc1) weight: accumulate.
            o = o + _linear(pv.reshape(R, hd), w_of_d[h * hd:(h + 1) * hd, :])
        o = _leaky_relu(o + b_of[d])                     # fused out_proj + fc1 bias
        o = _linear(o, w_fc2[d], b_fc2[d])               # MLP second linear -> dim
        t = t + o                                        # residual

        # ---- Residual(PreNormDrop(FeedForward)) ----------------------------
        xn = _layernorm(t, ln2_g[d], ln2_b[d])
        h1 = _leaky_relu(_linear(xn, w_ff1[d], b_ff1[d]))
        t = t + _linear(h1, w_ff2[d], b_ff2[d])          # residual

    # ---- MultiHead_two(X, C): cross attention -------------------------------
    x_rows = t[:Bb * N]                                  # (Bb*N, dim)
    c_rows = t[Bb * N:]
    q = _linear(x_rows, d_wq[...]).reshape(Bb, N, dim)
    k = _linear(c_rows, d_wk[...]).reshape(Bb, N, dim)
    v = _linear(c_rows, d_wvfc[...]).reshape(Bb, N, dim)  # value pre-folded with fc weight
    # torch: einsum('bmd,bnd->bnm', k, q) / q.shape[1]**0.5  -> scale = 1/sqrt(seq_len N)
    s = jnp.einsum('bnd,bmd->bnm', q, k,
                   preferred_element_type=jnp.float32) * (1.0 / math.sqrt(N))
    p = _softmax_lastdim(s)                               # (Bb, Nx, Nc), exact softmax
    attn_ref[...] = p.astype(attn_ref.dtype)
    res = jnp.einsum('bnm,bmd->bnd', p, v,
                     preferred_element_type=jnp.float32) + d_bfc[...].reshape(1, 1, dim)
    res_ref[...] = res.astype(res_ref.dtype)


# ----------------------------------------------------------------------------
# One-time host-side weight stacking / transposition / algebraic folding
# ----------------------------------------------------------------------------
def prepare_weights(params):
    blocks = params["blocks"]
    dim = blocks[0]["self"]["wq"].shape[1]
    E = blocks[0]["self"]["in_proj_w"].shape[1]

    def per_depth(fn):
        return jnp.stack([fn(b) for b in blocks], axis=0)

    def qkv_fold(b):                      # (dim, 3E): w_{q,k,v} folded with MHSA in_proj
        sp = b["self"]
        ipw = sp["in_proj_w"]             # (3E, E)
        wq_eff = sp["wq"].T @ ipw[:E].T
        wk_eff = sp["wk"].T @ ipw[E:2 * E].T
        wv_eff = sp["wv"].T @ ipw[2 * E:].T
        return jnp.concatenate([wq_eff, wk_eff, wv_eff], axis=1)

    def of_fold(b):                       # (E, E): out_proj followed by MLP fc1
        sp = b["self"]
        return sp["out_proj_w"].T @ sp["fc1_w"].T

    def of_bias(b):
        sp = b["self"]
        return (sp["out_proj_b"] @ sp["fc1_w"].T + sp["fc1_b"]).reshape(1, E)

    dual = params["dual"]
    weights = (
        per_depth(lambda b: b["self"]["ln_g"].reshape(1, dim)),
        per_depth(lambda b: b["self"]["ln_b"].reshape(1, dim)),
        per_depth(qkv_fold),                                          # (depth, dim, 3E)
        per_depth(lambda b: b["self"]["in_proj_b"].reshape(1, 3 * E)),
        per_depth(of_fold),                                           # (depth, E, E)
        per_depth(of_bias),                                           # (depth, 1, E)
        per_depth(lambda b: b["self"]["fc2_w"].T),                    # (depth, E, dim)
        per_depth(lambda b: b["self"]["fc2_b"].reshape(1, dim)),
        per_depth(lambda b: b["ff"]["ln_g"].reshape(1, dim)),
        per_depth(lambda b: b["ff"]["ln_b"].reshape(1, dim)),
        per_depth(lambda b: b["ff"]["w1"].T),                         # (depth, dim, 2dim)
        per_depth(lambda b: b["ff"]["b1"].reshape(1, 2 * dim)),
        per_depth(lambda b: b["ff"]["w2"].T),                         # (depth, 2dim, dim)
        per_depth(lambda b: b["ff"]["b2"].reshape(1, dim)),
        dual["wq"].T,                                                 # (dim, dim)
        dual["wk"].T,
        dual["wv"].T @ dual["fc_w"].T,                                # value + fc folded
        dual["fc_b"].reshape(1, dim),
    )
    return weights


# ----------------------------------------------------------------------------
# Jitted apply: builds specs and launches the single fused pallas_call
# ----------------------------------------------------------------------------
@functools.partial(jax.jit, static_argnames=("heads",))
def trans_apply(x, c, weights, heads):
    B, N, dim = x.shape
    depth = int(weights[0].shape[0])

    # >=2 grid steps keep both v7x TensorCores busy; Bb > 1 per step amortizes the
    # per-step overhead on single-TC chips (v5e / v6e).
    G = 2 if (B >= 2 and B % 2 == 0) else 1
    Bb = B // G

    def const_spec(w):
        zeros = (0,) * w.ndim
        return pl.BlockSpec(w.shape, lambda b: zeros)   # resident across the grid

    io_spec = pl.BlockSpec((Bb, N, dim), lambda b: (b, 0, 0))
    attn_spec = pl.BlockSpec((Bb, N, N), lambda b: (b, 0, 0))

    weight_bytes = sum(int(w.size) * w.dtype.itemsize for w in weights)
    vmem_limit = int(max(32 << 20, min(64 << 20, 4 * weight_bytes + (4 << 20))))

    kern = functools.partial(trans_kernel, depth=depth, heads=heads)
    res, attn = pl.pallas_call(
        kern,
        out_shape=(
            jax.ShapeDtypeStruct((B, N, dim), x.dtype),
            jax.ShapeDtypeStruct((B, N, N), jnp.float32),
        ),
        grid=(G,),
        in_specs=[io_spec, io_spec] + [const_spec(w) for w in weights],
        out_specs=(io_spec, attn_spec),
        compiler_params=pltpu.CompilerParams(
            dimension_semantics=("parallel",),
            vmem_limit_bytes=vmem_limit),
    )(x, c, *weights)
    return res, attn


# ----------------------------------------------------------------------------
# Pure-JAX reference (unfolded weights, PyTorch-order math) for validation
# ----------------------------------------------------------------------------
def trans_reference(x, c, params, heads):
    def layernorm(t, g, b):
        mean = jnp.mean(t, axis=-1, keepdims=True)
        var = jnp.mean((t - mean) ** 2, axis=-1, keepdims=True)
        return (t - mean) / jnp.sqrt(var + 1e-5) * g + b

    def leaky(t):
        return jnp.where(t >= 0, t, 0.2 * t)

    def softmax(s):
        s = s - jnp.max(s, axis=-1, keepdims=True)
        e = jnp.exp(s)
        return e / jnp.sum(e, axis=-1, keepdims=True)

    def net(t):
        B_, N_, _ = t.shape
        for blk in params["blocks"]:
            sp = blk["self"]
            E = sp["in_proj_w"].shape[1]
            hd = E // heads
            xn = layernorm(t, sp["ln_g"], sp["ln_b"])
            q = xn @ sp["wq"].T
            k = xn @ sp["wk"].T
            v = xn @ sp["wv"].T
            q = q @ sp["in_proj_w"][:E].T + sp["in_proj_b"][:E]
            k = k @ sp["in_proj_w"][E:2 * E].T + sp["in_proj_b"][E:2 * E]
            v = v @ sp["in_proj_w"][2 * E:].T + sp["in_proj_b"][2 * E:]

            def split(z):
                return z.reshape(B_, N_, heads, hd).transpose(0, 2, 1, 3)

            qh, kh, vh = split(q), split(k), split(v)
            s = jnp.einsum('bhqd,bhkd->bhqk', qh, kh) / math.sqrt(hd)
            p = softmax(s)
            o = jnp.einsum('bhqk,bhkd->bhqd', p, vh)
            o = o.transpose(0, 2, 1, 3).reshape(B_, N_, E)
            o = o @ sp["out_proj_w"].T + sp["out_proj_b"]
            o = leaky(o @ sp["fc1_w"].T + sp["fc1_b"])
            o = o @ sp["fc2_w"].T + sp["fc2_b"]
            t = t + o

            fp = blk["ff"]
            xn = layernorm(t, fp["ln_g"], fp["ln_b"])
            h1 = leaky(xn @ fp["w1"].T + fp["b1"])
            t = t + h1 @ fp["w2"].T + fp["b2"]
        return t

    X, C = net(x), net(c)
    dp = params["dual"]
    q = X @ dp["wq"].T
    k = C @ dp["wk"].T
    v = C @ dp["wv"].T
    s = jnp.einsum('bnd,bmd->bnm', q, k) / math.sqrt(q.shape[1])
    p = softmax(s)
    res = (p @ v) @ dp["fc_w"].T + dp["fc_b"]
    return res, p


# ----------------------------------------------------------------------------
# Deterministic parameter initialization (shapes per module __init__)
# ----------------------------------------------------------------------------
def init_params(key, depth, dim, head, d_q, d_v):
    keys = jax.random.split(key, depth * 20 + 10)
    kit = iter(keys)

    def w(shape, scale=0.05):
        return jax.random.normal(next(kit), shape, jnp.float32) * scale

    blocks = []
    for _ in range(depth):
        self_p = dict(
            ln_g=1.0 + w((dim,)), ln_b=w((dim,)),
            wq=w((d_q, dim)), wk=w((d_q, dim)), wv=w((d_v, dim)),
            in_proj_w=w((3 * d_v, d_v)), in_proj_b=w((3 * d_v,)),
            out_proj_w=w((d_v, d_v)), out_proj_b=w((d_v,)),
            fc1_w=w((d_v, d_v)), fc1_b=w((d_v,)),
            fc2_w=w((dim, d_v)), fc2_b=w((dim,)),
        )
        ff_p = dict(
            ln_g=1.0 + w((dim,)), ln_b=w((dim,)),
            w1=w((2 * dim, dim)), b1=w((2 * dim,)),
            w2=w((dim, 2 * dim)), b2=w((dim,)),
        )
        blocks.append(dict(self=self_p, ff=ff_p))

    dual = dict(
        wq=w((dim, dim)), wk=w((dim, dim)), wv=w((dim, dim)),
        fc_w=w((dim, dim)), fc_b=w((dim,)),
    )
    return dict(blocks=blocks, dual=dual)


# ----------------------------------------------------------------------------
if __name__ == "__main__":
    # Small shapes consistent with the module: B=2, seq N=8, dim=32, head=4,
    # depth=2, d_q = d_v = 32 (nn.MultiheadAttention(d_v, head) needs q dim == d_v).
    B, N, dim, head, depth = 2, 8, 32, 4, 2
    d_q = d_v = dim

    key = jax.random.PRNGKey(0)
    kx, kc, kp = jax.random.split(key, 3)
    x = jax.random.normal(kx, (B, N, dim), jnp.float32)
    c = jax.random.normal(kc, (B, N, dim), jnp.float32)
    params = init_params(kp, depth, dim, head, d_q, d_v)

    # TODO(synk): nn.Dropout layers are treated as eval-mode identity (no masking).
    weights = prepare_weights(params)            # one-time host prep (hoisted out of call)
    res, attn = trans_apply(x, c, weights, heads=head)
    jax.block_until_ready(res)
    jax.block_until_ready(attn)

    res_gold, attn_gold = trans_reference(x, c, params, head)

    assert res.shape == (B, N, dim) and attn.shape == (B, N, N)
    assert bool(jnp.all(jnp.isfinite(res))) and bool(jnp.all(jnp.isfinite(attn)))
    assert bool(jnp.allclose(res, res_gold, atol=2e-3, rtol=2e-3)), \
        float(jnp.max(jnp.abs(res - res_gold)))
    assert bool(jnp.allclose(attn, attn_gold, atol=2e-3, rtol=2e-3)), \
        float(jnp.max(jnp.abs(attn - attn_gold)))
    print("KERNEL_OK")
</pallas_src>

<mosaic_0001>
module attributes {stable_mosaic.version = 11 : i64} {
  func.func @trans_kernel(%arg0: i32, %arg1: memref<1x8x32xf32, #tpu.memory_space<vmem>>, %arg2: memref<1x8x32xf32, #tpu.memory_space<vmem>>, %arg3: memref<2x1x32xf32, #tpu.memory_space<vmem>>, %arg4: memref<2x1x32xf32, #tpu.memory_space<vmem>>, %arg5: memref<2x32x96xf32, #tpu.memory_space<vmem>>, %arg6: memref<2x1x96xf32, #tpu.memory_space<vmem>>, %arg7: memref<2x32x32xf32, #tpu.memory_space<vmem>>, %arg8: memref<2x1x32xf32, #tpu.memory_space<vmem>>, %arg9: memref<2x32x32xf32, #tpu.memory_space<vmem>>, %arg10: memref<2x1x32xf32, #tpu.memory_space<vmem>>, %arg11: memref<2x1x32xf32, #tpu.memory_space<vmem>>, %arg12: memref<2x1x32xf32, #tpu.memory_space<vmem>>, %arg13: memref<2x32x64xf32, #tpu.memory_space<vmem>>, %arg14: memref<2x1x64xf32, #tpu.memory_space<vmem>>, %arg15: memref<2x64x32xf32, #tpu.memory_space<vmem>>, %arg16: memref<2x1x32xf32, #tpu.memory_space<vmem>>, %arg17: memref<32x32xf32, #tpu.memory_space<vmem>>, %arg18: memref<32x32xf32, #tpu.memory_space<vmem>>, %arg19: memref<32x32xf32, #tpu.memory_space<vmem>>, %arg20: memref<1x32xf32, #tpu.memory_space<vmem>>, %arg21: memref<1x8x32xf32, #tpu.memory_space<vmem>>, %arg22: memref<1x8x8xf32, #tpu.memory_space<vmem>>) attributes {dimension_semantics = [#tpu.dimension_semantics<parallel>], iteration_bounds = array<i64: 2>, scalar_prefetch = 0 : i64, scratch_operands = 0 : i64, tpu.core_type = #tpu.core_type<tc>, window_params = [{transform_indices = @transform_0, window_bounds = array<i64: 1, 8, 32>}, {transform_indices = @transform_1, window_bounds = array<i64: 1, 8, 32>}, {pipeline_mode = #tpu.pipeline_mode<synchronous>, transform_indices = @transform_2, window_bounds = array<i64: 2, 1, 32>}, {pipeline_mode = #tpu.pipeline_mode<synchronous>, transform_indices = @transform_3, window_bounds = array<i64: 2, 1, 32>}, {pipeline_mode = #tpu.pipeline_mode<synchronous>, transform_indices = @transform_4, window_bounds = array<i64: 2, 32, 96>}, {pipeline_mode = #tpu.pipeline_mode<synchronous>, transform_indices = @transform_5, window_bounds = array<i64: 2, 1, 96>}, {pipeline_mode = #tpu.pipeline_mode<synchronous>, transform_indices = @transform_6, window_bounds = array<i64: 2, 32, 32>}, {pipeline_mode = #tpu.pipeline_mode<synchronous>, transform_indices = @transform_7, window_bounds = array<i64: 2, 1, 32>}, {pipeline_mode = #tpu.pipeline_mode<synchronous>, transform_indices = @transform_8, window_bounds = array<i64: 2, 32, 32>}, {pipeline_mode = #tpu.pipeline_mode<synchronous>, transform_indices = @transform_9, window_bounds = array<i64: 2, 1, 32>}, {pipeline_mode = #tpu.pipeline_mode<synchronous>, transform_indices = @transform_10, window_bounds = array<i64: 2, 1, 32>}, {pipeline_mode = #tpu.pipeline_mode<synchronous>, transform_indices = @transform_11, window_bounds = array<i64: 2, 1, 32>}, {pipeline_mode = #tpu.pipeline_mode<synchronous>, transform_indices = @transform_12, window_bounds = array<i64: 2, 32, 64>}, {pipeline_mode = #tpu.pipeline_mode<synchronous>, transform_indices = @transform_13, window_bounds = array<i64: 2, 1, 64>}, {pipeline_mode = #tpu.pipeline_mode<synchronous>, transform_indices = @transform_14, window_bounds = array<i64: 2, 64, 32>}, {pipeline_mode = #tpu.pipeline_mode<synchronous>, transform_indices = @transform_15, window_bounds = array<i64: 2, 1, 32>}, {pipeline_mode = #tpu.pipeline_mode<synchronous>, transform_indices = @transform_16, window_bounds = array<i64: 32, 32>}, {pipeline_mode = #tpu.pipeline_mode<synchronous>, transform_indices = @transform_17, window_bounds = array<i64: 32, 32>}, {pipeline_mode = #tpu.pipeline_mode<synchronous>, transform_indices = @transform_18, window_bounds = array<i64: 32, 32>}, {pipeline_mode = #tpu.pipeline_mode<synchronous>, transform_indices = @transform_19, window_bounds = array<i64: 1, 32>}, {transform_indices = @transform_20, window_bounds = array<i64: 1, 8, 32>}, {transform_indices = @transform_21, window_bounds = array<i64: 1, 8, 8>}]} {
    %c0 = arith.constant 0 : index
    %c0_0 = arith.constant 0 : index
    %c0_1 = arith.constant 0 : index
    %0 = vector.load %arg1[%c0, %c0_0, %c0_1] : memref<1x8x32xf32, #tpu.memory_space<vmem>>, vector<1x8x32xf32>
    %1 = vector.shape_cast %0 : vector<1x8x32xf32> to vector<8x32xf32>
    %c0_2 = arith.constant 0 : index
    %c0_3 = arith.constant 0 : index
    %c0_4 = arith.constant 0 : index
    %2 = vector.load %arg2[%c0_2, %c0_3, %c0_4] : memref<1x8x32xf32, #tpu.memory_space<vmem>>, vector<1x8x32xf32>
    %3 = vector.shape_cast %2 : vector<1x8x32xf32> to vector<8x32xf32>
    %4 = tpu.concatenate %1, %3 in 0 : vector<8x32xf32>, vector<8x32xf32> -> vector<16x32xf32>
    %c0_5 = arith.constant 0 : index
    %c0_6 = arith.constant 0 : index
    %c0_7 = arith.constant 0 : index
    %5 = vector.load %arg3[%c0_5, %c0_6, %c0_7] : memref<2x1x32xf32, #tpu.memory_space<vmem>>, vector<1x1x32xf32>
    %6 = vector.shape_cast %5 : vector<1x1x32xf32> to vector<1x32xf32>
    %c0_8 = arith.constant 0 : index
    %c0_9 = arith.constant 0 : index
    %c0_10 = arith.constant 0 : index
    %7 = vector.load %arg4[%c0_8, %c0_9, %c0_10] : memref<2x1x32xf32, #tpu.memory_space<vmem>>, vector<1x1x32xf32>
    %8 = vector.shape_cast %7 : vector<1x1x32xf32> to vector<1x32xf32>
    %cst = arith.constant dense<0.000000e+00> : vector<16xf32>
    %9 = vector.multi_reduction <add>, %4, %cst [1] : vector<16x32xf32> to vector<16xf32>
    %10 = vector.shape_cast %9 : vector<16xf32> to vector<16x1xf32>
    %cst_11 = arith.constant 3.200000e+01 : f32
    %11 = vector.broadcast %cst_11 : f32 to vector<16x1xf32>
    %12 = arith.divf %10, %11 : vector<16x1xf32>
    %13 = vector.broadcast %12 : vector<16x1xf32> to vector<16x32xf32>
    %14 = arith.subf %4, %13 : vector<16x32xf32>
    %15 = arith.mulf %14, %14 : vector<16x32xf32>
    %cst_12 = arith.constant dense<0.000000e+00> : vector<16xf32>
    %16 = vector.multi_reduction <add>, %15, %cst_12 [1] : vector<16x32xf32> to vector<16xf32>
    %17 = vector.shape_cast %16 : vector<16xf32> to vector<16x1xf32>
    %cst_13 = arith.constant 3.200000e+01 : f32
    %18 = vector.broadcast %cst_13 : f32 to vector<16x1xf32>
    %19 = arith.divf %17, %18 : vector<16x1xf32>
    %20 = vector.broadcast %12 : vector<16x1xf32> to vector<16x32xf32>
    %21 = arith.subf %4, %20 : vector<16x32xf32>
    %cst_14 = arith.constant 9.99999974E-6 : f32
    %22 = vector.broadcast %cst_14 : f32 to vector<16x1xf32>
    %23 = arith.addf %19, %22 : vector<16x1xf32>
    %24 = math.rsqrt %23 : vector<16x1xf32>
    %25 = vector.broadcast %24 : vector<16x1xf32> to vector<16x32xf32>
    %26 = arith.mulf %21, %25 : vector<16x32xf32>
    %27 = vector.broadcast %6 : vector<1x32xf32> to vector<16x32xf32>
    %28 = arith.mulf %26, %27 : vector<16x32xf32>
    %29 = vector.broadcast %8 : vector<1x32xf32> to vector<16x32xf32>
    %30 = arith.addf %28, %29 : vector<16x32xf32>
    %c0_15 = arith.constant 0 : index
    %c0_16 = arith.constant 0 : index
    %c0_17 = arith.constant 0 : index
    %31 = vector.load %arg5[%c0_15, %c0_16, %c0_17] : memref<2x32x96xf32, #tpu.memory_space<vmem>>, vector<1x32x96xf32>
    %32 = vector.shape_cast %31 : vector<1x32x96xf32> to vector<32x96xf32>
    %cst_18 = arith.constant dense<0.000000e+00> : vector<16x96xf32>
    %33 = tpu.matmul %30, %32, %cst_18 {dimension_numbers = #tpu.dot_dimension_numbers<[1], [0], [0], [1], [0, 0, 1, 1], [], []>} : vector<16x32xf32>, vector<32x96xf32>, vector<16x96xf32> -> vector<16x96xf32>
    %c0_19 = arith.constant 0 : index
    %c0_20 = arith.constant 0 : index
    %c0_21 = arith.constant 0 : index
    %34 = vector.load %arg6[%c0_19, %c0_20, %c0_21] : memref<2x1x96xf32, #tpu.memory_space<vmem>>, vector<1x1x96xf32>
    %35 = vector.shape_cast %34 : vector<1x1x96xf32> to vector<1x96xf32>
    %36 = vector.broadcast %35 : vector<1x96xf32> to vector<16x96xf32>
    %37 = arith.addf %33, %36 : vector<16x96xf32>
    %38 = vector.shape_cast %37 : vector<16x96xf32> to vector<2x8x96xf32>
    %c0_22 = arith.constant 0 : index
    %c0_23 = arith.constant 0 : index
    %c0_24 = arith.constant 0 : index
    %39 = vector.load %arg7[%c0_22, %c0_23, %c0_24] : memref<2x32x32xf32, #tpu.memory_space<vmem>>, vector<1x32x32xf32>
    %40 = vector.shape_cast %39 : vector<1x32x32xf32> to vector<32x32xf32>
    %cst_25 = arith.constant 0.000000e+00 : f32
    %41 = vector.broadcast %cst_25 : f32 to vector<16x32xf32>
    %42 = vector.extract_strided_slice %38 {offsets = [0, 0, 0], sizes = [2, 8, 8], strides = [1, 1, 1]} : vector<2x8x96xf32> to vector<2x8x8xf32>
    %43 = vector.extract_strided_slice %38 {offsets = [0, 0, 32], sizes = [2, 8, 8], strides = [1, 1, 1]} : vector<2x8x96xf32> to vector<2x8x8xf32>
    %44 = vector.extract_strided_slice %38 {offsets = [0, 0, 64], sizes = [2, 8, 8], strides = [1, 1, 1]} : vector<2x8x96xf32> to vector<2x8x8xf32>
    "tpu.trace_start"() <{level = 10 : i32, message = "sqd,skd->sqk"}> : () -> ()
    %cst_26 = arith.constant dense<0.000000e+00> : vector<2x8x8xf32>
    %45 = tpu.matmul %42, %43, %cst_26 {dimension_numbers = #tpu.dot_dimension_numbers<[2], [2], [1], [1], [0, 0, 0, 1, 1, 1], [0], [0]>} : vector<2x8x8xf32>, vector<2x8x8xf32>, vector<2x8x8xf32> -> vector<2x8x8xf32>
    "tpu.trace_stop"() : () -> ()
    %cst_27 = arith.constant 0.353553385 : f32
    %46 = vector.broadcast %cst_27 : f32 to vector<2x8x8xf32>
    %47 = arith.mulf %45, %46 : vector<2x8x8xf32>
    %cst_28 = arith.constant dense<0xFF800000> : vector<2x8xf32>
    %48 = vector.multi_reduction <maximumf>, %47, %cst_28 [2] : vector<2x8x8xf32> to vector<2x8xf32>
    %49 = vector.shape_cast %48 : vector<2x8xf32> to vector<2x8x1xf32>
    %50 = vector.broadcast %49 : vector<2x8x1xf32> to vector<2x8x8xf32>
    %51 = arith.subf %47, %50 : vector<2x8x8xf32>
    %52 = math.exp %51 : vector<2x8x8xf32>
    %cst_29 = arith.constant dense<0.000000e+00> : vector<2x8xf32>
    %53 = vector.multi_reduction <add>, %52, %cst_29 [2] : vector<2x8x8xf32> to vector<2x8xf32>
    %54 = vector.shape_cast %53 : vector<2x8xf32> to vector<2x8x1xf32>
    %55 = vector.broadcast %54 : vector<2x8x1xf32> to vector<2x8x8xf32>
    %56 = arith.divf %52, %55 : vector<2x8x8xf32>
    "tpu.trace_start"() <{level = 10 : i32, message = "sqk,skd->sqd"}> : () -> ()
    %cst_30 = arith.constant dense<0.000000e+00> : vector<2x8x8xf32>
    %57 = tpu.matmul %56, %44, %cst_30 {dimension_numbers = #tpu.dot_dimension_numbers<[2], [1], [1], [2], [0, 0, 0, 1, 1, 2], [0], [0]>} : vector<2x8x8xf32>, vector<2x8x8xf32>, vector<2x8x8xf32> -> vector<2x8x8xf32>
    "tpu.trace_stop"() : () -> ()
    %58 = vector.shape_cast %57 : vector<2x8x8xf32> to vector<16x8xf32>
    %59 = vector.extract_strided_slice %40 {offsets = [0, 0], sizes = [8, 32], strides = [1, 1]} : vector<32x32xf32> to vector<8x32xf32>
    %cst_31 = arith.constant dense<0.000000e+00> : vector<16x32xf32>
    %60 = tpu.matmul %58, %59, %cst_31 {dimension_numbers = #tpu.dot_dimension_numbers<[1], [0], [0], [1], [0, 0, 1, 1], [], []>} : vector<16x8xf32>, vector<8x32xf32>, vector<16x32xf32> -> vector<16x32xf32>
    %61 = arith.addf %41, %60 : vector<16x32xf32>
    %62 = vector.extract_strided_slice %38 {offsets = [0, 0, 8], sizes = [2, 8, 8], strides = [1, 1, 1]} : vector<2x8x96xf32> to vector<2x8x8xf32>
    %63 = vector.extract_strided_slice %38 {offsets = [0, 0, 40], sizes = [2, 8, 8], strides = [1, 1, 1]} : vector<2x8x96xf32> to vector<2x8x8xf32>
    %64 = vector.extract_strided_slice %38 {offsets = [0, 0, 72], sizes = [2, 8, 8], strides = [1, 1, 1]} : vector<2x8x96xf32> to vector<2x8x8xf32>
    "tpu.trace_start"() <{level = 10 : i32, message = "sqd,skd->sqk"}> : () -> ()
    %cst_32 = arith.constant dense<0.000000e+00> : vector<2x8x8xf32>
    %65 = tpu.matmul %62, %63, %cst_32 {dimension_numbers = #tpu.dot_dimension_numbers<[2], [2], [1], [1], [0, 0, 0, 1, 1, 1], [0], [0]>} : vector<2x8x8xf32>, vector<2x8x8xf32>, vector<2x8x8xf32> -> vector<2x8x8xf32>
    "tpu.trace_stop"() : () -> ()
    %cst_33 = arith.constant 0.353553385 : f32
    %66 = vector.broadcast %cst_33 : f32 to vector<2x8x8xf32>
    %67 = arith.mulf %65, %66 : vector<2x8x8xf32>
    %cst_34 = arith.constant dense<0xFF800000> : vector<2x8xf32>
    %68 = vector.multi_reduction <maximumf>, %67, %cst_34 [2] : vector<2x8x8xf32> to vector<2x8xf32>
    %69 = vector.shape_cast %68 : vector<2x8xf32> to vector<2x8x1xf32>
    %70 = vector.broadcast %69 : vector<2x8x1xf32> to vector<2x8x8xf32>
    %71 = arith.subf %67, %70 : vector<2x8x8xf32>
    %72 = math.exp %71 : vector<2x8x8xf32>
    %cst_35 = arith.constant dense<0.000000e+00> : vector<2x8xf32>
    %73 = vector.multi_reduction <add>, %72, %cst_35 [2] : vector<2x8x8xf32> to vector<2x8xf32>
    %74 = vector.shape_cast %73 : vector<2x8xf32> to vector<2x8x1xf32>
    %75 = vector.broadcast %74 : vector<2x8x1xf32> to vector<2x8x8xf32>
    %76 = arith.divf %72, %75 : vector<2x8x8xf32>
    "tpu.trace_start"() <{level = 10 : i32, message = "sqk,skd->sqd"}> : () -> ()
    %cst_36 = arith.constant dense<0.000000e+00> : vector<2x8x8xf32>
    %77 = tpu.matmul %76, %64, %cst_36 {dimension_numbers = #tpu.dot_dimension_numbers<[2], [1], [1], [2], [0, 0, 0, 1, 1, 2], [0], [0]>} : vector<2x8x8xf32>, vector<2x8x8xf32>, vector<2x8x8xf32> -> vector<2x8x8xf32>
    "tpu.trace_stop"() : () -> ()
    %78 = vector.shape_cast %77 : vector<2x8x8xf32> to vector<16x8xf32>
    %79 = vector.extract_strided_slice %40 {offsets = [8, 0], sizes = [8, 32], strides = [1, 1]} : vector<32x32xf32> to vector<8x32xf32>
    %cst_37 = arith.constant dense<0.000000e+00> : vector<16x32xf32>
    %80 = tpu.matmul %78, %79, %cst_37 {dimension_numbers = #tpu.dot_dimension_numbers<[1], [0], [0], [1], [0, 0, 1, 1], [], []>} : vector<16x8xf32>, vector<8x32xf32>, vector<16x32xf32> -> vector<16x32xf32>
    %81 = arith.addf %61, %80 : vector<16x32xf32>
    %82 = vector.extract_strided_slice %38 {offsets = [0, 0, 16], sizes = [2, 8, 8], strides = [1, 1, 1]} : vector<2x8x96xf32> to vector<2x8x8xf32>
    %83 = vector.extract_strided_slice %38 {offsets = [0, 0, 48], sizes = [2, 8, 8], strides = [1, 1, 1]} : vector<2x8x96xf32> to vector<2x8x8xf32>
    %84 = vector.extract_strided_slice %38 {offsets = [0, 0, 80], sizes = [2, 8, 8], strides = [1, 1, 1]} : vector<2x8x96xf32> to vector<2x8x8xf32>
    "tpu.trace_start"() <{level = 10 : i32, message = "sqd,skd->sqk"}> : () -> ()
    %cst_38 = arith.constant dense<0.000000e+00> : vector<2x8x8xf32>
    %85 = tpu.matmul %82, %83, %cst_38 {dimension_numbers = #tpu.dot_dimension_numbers<[2], [2], [1], [1], [0, 0, 0, 1, 1, 1], [0], [0]>} : vector<2x8x8xf32>, vector<2x8x8xf32>, vector<2x8x8xf32> -> vector<2x8x8xf32>
    "tpu.trace_stop"() : () -> ()
    %cst_39 = arith.constant 0.353553385 : f32
    %86 = vector.broadcast %cst_39 : f32 to vector<2x8x8xf32>
    %87 = arith.mulf %85, %86 : vector<2x8x8xf32>
    %cst_40 = arith.constant dense<0xFF800000> : vector<2x8xf32>
    %88 = vector.multi_reduction <maximumf>, %87, %cst_40 [2] : vector<2x8x8xf32> to vector<2x8xf32>
    %89 = vector.shape_cast %88 : vector<2x8xf32> to vector<2x8x1xf32>
    %90 = vector.broadcast %89 : vector<2x8x1xf32> to vector<2x8x8xf32>
    %91 = arith.subf %87, %90 : vector<2x8x8xf32>
    %92 = math.exp %91 : vector<2x8x8xf32>
    %cst_41 = arith.constant dense<0.000000e+00> : vector<2x8xf32>
    %93 = vector.multi_reduction <add>, %92, %cst_41 [2] : vector<2x8x8xf32> to vector<2x8xf32>
    %94 = vector.shape_cast %93 : vector<2x8xf32> to vector<2x8x1xf32>
    %95 = vector.broadcast %94 : vector<2x8x1xf32> to vector<2x8x8xf32>
    %96 = arith.divf %92, %95 : vector<2x8x8xf32>
    "tpu.trace_start"() <{level = 10 : i32, message = "sqk,skd->sqd"}> : () -> ()
    %cst_42 = arith.constant dense<0.000000e+00> : vector<2x8x8xf32>
    %97 = tpu.matmul %96, %84, %cst_42 {dimension_numbers = #tpu.dot_dimension_numbers<[2], [1], [1], [2], [0, 0, 0, 1, 1, 2], [0], [0]>} : vector<2x8x8xf32>, vector<2x8x8xf32>, vector<2x8x8xf32> -> vector<2x8x8xf32>
    "tpu.trace_stop"() : () -> ()
    %98 = vector.shape_cast %97 : vector<2x8x8xf32> to vector<16x8xf32>
    %99 = vector.extract_strided_slice %40 {offsets = [16, 0], sizes = [8, 32], strides = [1, 1]} : vector<32x32xf32> to vector<8x32xf32>
    %cst_43 = arith.constant dense<0.000000e+00> : vector<16x32xf32>
    %100 = tpu.matmul %98, %99, %cst_43 {dimension_numbers = #tpu.dot_dimension_numbers<[1], [0], [0], [1], [0, 0, 1, 1], [], []>} : vector<16x8xf32>, vector<8x32xf32>, vector<16x32xf32> -> vector<16x32xf32>
    %101 = arith.addf %81, %100 : vector<16x32xf32>
    %102 = vector.extract_strided_slice %38 {offsets = [0, 0, 24], sizes = [2, 8, 8], strides = [1, 1, 1]} : vector<2x8x96xf32> to vector<2x8x8xf32>
    %103 = vector.extract_strided_slice %38 {offsets = [0, 0, 56], sizes = [2, 8, 8], strides = [1, 1, 1]} : vector<2x8x96xf32> to vector<2x8x8xf32>
    %104 = vector.extract_strided_slice %38 {offsets = [0, 0, 88], sizes = [2, 8, 8], strides = [1, 1, 1]} : vector<2x8x96xf32> to vector<2x8x8xf32>
    "tpu.trace_start"() <{level = 10 : i32, message = "sqd,skd->sqk"}> : () -> ()
    %cst_44 = arith.constant dense<0.000000e+00> : vector<2x8x8xf32>
    %105 = tpu.matmul %102, %103, %cst_44 {dimension_numbers = #tpu.dot_dimension_numbers<[2], [2], [1], [1], [0, 0, 0, 1, 1, 1], [0], [0]>} : vector<2x8x8xf32>, vector<2x8x8xf32>, vector<2x8x8xf32> -> vector<2x8x8xf32>
    "tpu.trace_stop"() : () -> ()
    %cst_45 = arith.constant 0.353553385 : f32
    %106 = vector.broadcast %cst_45 : f32 to vector<2x8x8xf32>
    %107 = arith.mulf %105, %106 : vector<2x8x8xf32>
    %cst_46 = arith.constant dense<0xFF800000> : vector<2x8xf32>
    %108 = vector.multi_reduction <maximumf>, %107, %cst_46 [2] : vector<2x8x8xf32> to vector<2x8xf32>
    %109 = vector.shape_cast %108 : vector<2x8xf32> to vector<2x8x1xf32>
    %110 = vector.broadcast %109 : vector<2x8x1xf32> to vector<2x8x8xf32>
    %111 = arith.subf %107, %110 : vector<2x8x8xf32>
    %112 = math.exp %111 : vector<2x8x8xf32>
    %cst_47 = arith.constant dense<0.000000e+00> : vector<2x8xf32>
    %113 = vector.multi_reduction <add>, %112, %cst_47 [2] : vector<2x8x8xf32> to vector<2x8xf32>
    %114 = vector.shape_cast %113 : vector<2x8xf32> to vector<2x8x1xf32>
    %115 = vector.broadcast %114 : vector<2x8x1xf32> to vector<2x8x8xf32>
    %116 = arith.divf %112, %115 : vector<2x8x8xf32>
    "tpu.trace_start"() <{level = 10 : i32, message = "sqk,skd->sqd"}> : () -> ()
    %cst_48 = arith.constant dense<0.000000e+00> : vector<2x8x8xf32>
    %117 = tpu.matmul %116, %104, %cst_48 {dimension_numbers = #tpu.dot_dimension_numbers<[2], [1], [1], [2], [0, 0, 0, 1, 1, 2], [0], [0]>} : vector<2x8x8xf32>, vector<2x8x8xf32>, vector<2x8x8xf32> -> vector<2x8x8xf32>
    "tpu.trace_stop"() : () -> ()
    %118 = vector.shape_cast %117 : vector<2x8x8xf32> to vector<16x8xf32>
    %119 = vector.extract_strided_slice %40 {offsets = [24, 0], sizes = [8, 32], strides = [1, 1]} : vector<32x32xf32> to vector<8x32xf32>
    %cst_49 = arith.constant dense<0.000000e+00> : vector<16x32xf32>
    %120 = tpu.matmul %118, %119, %cst_49 {dimension_numbers = #tpu.dot_dimension_numbers<[1], [0], [0], [1], [0, 0, 1, 1], [], []>} : vector<16x8xf32>, vector<8x32xf32>, vector<16x32xf32> -> vector<16x32xf32>
    %121 = arith.addf %101, %120 : vector<16x32xf32>
    %c0_50 = arith.constant 0 : index
    %c0_51 = arith.constant 0 : index
    %c0_52 = arith.constant 0 : index
    %122 = vector.load %arg8[%c0_50, %c0_51, %c0_52] : memref<2x1x32xf32, #tpu.memory_space<vmem>>, vector<1x1x32xf32>
    %123 = vector.shape_cast %122 : vector<1x1x32xf32> to vector<1x32xf32>
    %124 = vector.broadcast %123 : vector<1x32xf32> to vector<16x32xf32>
    %125 = arith.addf %121, %124 : vector<16x32xf32>
    %cst_53 = arith.constant 0.000000e+00 : f32
    %126 = vector.broadcast %cst_53 : f32 to vector<16x32xf32>
    %127 = arith.cmpf oge, %125, %126 : vector<16x32xf32>
    %cst_54 = arith.constant 2.000000e-01 : f32
    %128 = vector.broadcast %cst_54 : f32 to vector<16x32xf32>
    %129 = arith.mulf %128, %125 : vector<16x32xf32>
    %130 = arith.select %127, %125, %129 : vector<16x32xi1>, vector<16x32xf32>
    %c0_55 = arith.constant 0 : index
    %c0_56 = arith.constant 0 : index
    %c0_57 = arith.constant 0 : index
    %131 = vector.load %arg9[%c0_55, %c0_56, %c0_57] : memref<2x32x32xf32, #tpu.memory_space<vmem>>, vector<1x32x32xf32>
    %132 = vector.shape_cast %131 : vector<1x32x32xf32> to vector<32x32xf32>
    %c0_58 = arith.constant 0 : index
    %c0_59 = arith.constant 0 : index
    %c0_60 = arith.constant 0 : index
    %133 = vector.load %arg10[%c0_58, %c0_59, %c0_60] : memref<2x1x32xf32, #tpu.memory_space<vmem>>, vector<1x1x32xf32>
    %134 = vector.shape_cast %133 : vector<1x1x32xf32> to vector<1x32xf32>
    %cst_61 = arith.constant dense<0.000000e+00> : vector<16x32xf32>
    %135 = tpu.matmul %130, %132, %cst_61 {dimension_numbers = #tpu.dot_dimension_numbers<[1], [0], [0], [1], [0, 0, 1, 1], [], []>} : vector<16x32xf32>, vector<32x32xf32>, vector<16x32xf32> -> vector<16x32xf32>
    %136 = vector.broadcast %134 : vector<1x32xf32> to vector<16x32xf32>
    %137 = arith.addf %135, %136 : vector<16x32xf32>
    %138 = arith.addf %4, %137 : vector<16x32xf32>
    %c0_62 = arith.constant 0 : index
    %c0_63 = arith.constant 0 : index
    %c0_64 = arith.constant 0 : index
    %139 = vector.load %arg11[%c0_62, %c0_63, %c0_64] : memref<2x1x32xf32, #tpu.memory_space<vmem>>, vector<1x1x32xf32>
    %140 = vector.shape_cast %139 : vector<1x1x32xf32> to vector<1x32xf32>
    %c0_65 = arith.constant 0 : index
    %c0_66 = arith.constant 0 : index
    %c0_67 = arith.constant 0 : index
    %141 = vector.load %arg12[%c0_65, %c0_66, %c0_67] : memref<2x1x32xf32, #tpu.memory_space<vmem>>, vector<1x1x32xf32>
    %142 = vector.shape_cast %141 : vector<1x1x32xf32> to vector<1x32xf32>
    %cst_68 = arith.constant dense<0.000000e+00> : vector<16xf32>
    %143 = vector.multi_reduction <add>, %138, %cst_68 [1] : vector<16x32xf32> to vector<16xf32>
    %144 = vector.shape_cast %143 : vector<16xf32> to vector<16x1xf32>
    %cst_69 = arith.constant 3.200000e+01 : f32
    %145 = vector.broadcast %cst_69 : f32 to vector<16x1xf32>
    %146 = arith.divf %144, %145 : vector<16x1xf32>
    %147 = vector.broadcast %146 : vector<16x1xf32> to vector<16x32xf32>
    %148 = arith.subf %138, %147 : vector<16x32xf32>
    %149 = arith.mulf %148, %148 : vector<16x32xf32>
    %cst_70 = arith.constant dense<0.000000e+00> : vector<16xf32>
    %150 = vector.multi_reduction <add>, %149, %cst_70 [1] : vector<16x32xf32> to vector<16xf32>
    %151 = vector.shape_cast %150 : vector<16xf32> to vector<16x1xf32>
    %cst_71 = arith.constant 3.200000e+01 : f32
    %152 = vector.broadcast %cst_71 : f32 to vector<16x1xf32>
    %153 = arith.divf %151, %152 : vector<16x1xf32>
    %154 = vector.broadcast %146 : vector<16x1xf32> to vector<16x32xf32>
    %155 = arith.subf %138, %154 : vector<16x32xf32>
    %cst_72 = arith.constant 9.99999974E-6 : f32
    %156 = vector.broadcast %cst_72 : f32 to vector<16x1xf32>
    %157 = arith.addf %153, %156 : vector<16x1xf32>
    %158 = math.rsqrt %157 : vector<16x1xf32>
    %159 = vector.broadcast %158 : vector<16x1xf32> to vector<16x32xf32>
    %160 = arith.mulf %155, %159 : vector<16x32xf32>
    %161 = vector.broadcast %140 : vector<1x32xf32> to vector<16x32xf32>
    %162 = arith.mulf %160, %161 : vector<16x32xf32>
    %163 = vector.broadcast %142 : vector<1x32xf32> to vector<16x32xf32>
    %164 = arith.addf %162, %163 : vector<16x32xf32>
    %c0_73 = arith.constant 0 : index
    %c0_74 = arith.constant 0 : index
    %c0_75 = arith.constant 0 : index
    %165 = vector.load %arg13[%c0_73, %c0_74, %c0_75] : memref<2x32x64xf32, #tpu.memory_space<vmem>>, vector<1x32x64xf32>
    %166 = vector.shape_cast %165 : vector<1x32x64xf32> to vector<32x64xf32>
    %c0_76 = arith.constant 0 : index
    %c0_77 = arith.constant 0 : index
    %c0_78 = arith.constant 0 : index
    %167 = vector.load %arg14[%c0_76, %c0_77, %c0_78] : memref<2x1x64xf32, #tpu.memory_space<vmem>>, vector<1x1x64xf32>
    %168 = vector.shape_cast %167 : vector<1x1x64xf32> to vector<1x64xf32>
    %cst_79 = arith.constant dense<0.000000e+00> : vector<16x64xf32>
    %169 = tpu.matmul %164, %166, %cst_79 {dimension_numbers = #tpu.dot_dimension_numbers<[1], [0], [0], [1], [0, 0, 1, 1], [], []>} : vector<16x32xf32>, vector<32x64xf32>, vector<16x64xf32> -> vector<16x64xf32>
    %170 = vector.broadcast %168 : vector<1x64xf32> to vector<16x64xf32>
    %171 = arith.addf %169, %170 : vector<16x64xf32>
    %cst_80 = arith.constant 0.000000e+00 : f32
    %172 = vector.broadcast %cst_80 : f32 to vector<16x64xf32>
    %173 = arith.cmpf oge, %171, %172 : vector<16x64xf32>
    %cst_81 = arith.constant 2.000000e-01 : f32
    %174 = vector.broadcast %cst_81 : f32 to vector<16x64xf32>
    %175 = arith.mulf %174, %171 : vector<16x64xf32>
    %176 = arith.select %173, %171, %175 : vector<16x64xi1>, vector<16x64xf32>
    %c0_82 = arith.constant 0 : index
    %c0_83 = arith.constant 0 : index
    %c0_84 = arith.constant 0 : index
    %177 = vector.load %arg15[%c0_82, %c0_83, %c0_84] : memref<2x64x32xf32, #tpu.memory_space<vmem>>, vector<1x64x32xf32>
    %178 = vector.shape_cast %177 : vector<1x64x32xf32> to vector<64x32xf32>
    %c0_85 = arith.constant 0 : index
    %c0_86 = arith.constant 0 : index
    %c0_87 = arith.constant 0 : index
    %179 = vector.load %arg16[%c0_85, %c0_86, %c0_87] : memref<2x1x32xf32, #tpu.memory_space<vmem>>, vector<1x1x32xf32>
    %180 = vector.shape_cast %179 : vector<1x1x32xf32> to vector<1x32xf32>
    %cst_88 = arith.constant dense<0.000000e+00> : vector<16x32xf32>
    %181 = tpu.matmul %176, %178, %cst_88 {dimension_numbers = #tpu.dot_dimension_numbers<[1], [0], [0], [1], [0, 0, 1, 1], [], []>} : vector<16x64xf32>, vector<64x32xf32>, vector<16x32xf32> -> vector<16x32xf32>
    %182 = vector.broadcast %180 : vector<1x32xf32> to vector<16x32xf32>
    %183 = arith.addf %181, %182 : vector<16x32xf32>
    %184 = arith.addf %138, %183 : vector<16x32xf32>
    %c1 = arith.constant 1 : index
    %c0_89 = arith.constant 0 : index
    %c0_90 = arith.constant 0 : index
    %185 = vector.load %arg3[%c1, %c0_89, %c0_90] : memref<2x1x32xf32, #tpu.memory_space<vmem>>, vector<1x1x32xf32>
    %186 = vector.shape_cast %185 : vector<1x1x32xf32> to vector<1x32xf32>
    %c1_91 = arith.constant 1 : index
    %c0_92 = arith.constant 0 : index
    %c0_93 = arith.constant 0 : index
    %187 = vector.load %arg4[%c1_91, %c0_92, %c0_93] : memref<2x1x32xf32, #tpu.memory_space<vmem>>, vector<1x1x32xf32>
    %188 = vector.shape_cast %187 : vector<1x1x32xf32> to vector<1x32xf32>
    %cst_94 = arith.constant dense<0.000000e+00> : vector<16xf32>
    %189 = vector.multi_reduction <add>, %184, %cst_94 [1] : vector<16x32xf32> to vector<16xf32>
    %190 = vector.shape_cast %189 : vector<16xf32> to vector<16x1xf32>
    %cst_95 = arith.constant 3.200000e+01 : f32
    %191 = vector.broadcast %cst_95 : f32 to vector<16x1xf32>
    %192 = arith.divf %190, %191 : vector<16x1xf32>
    %193 = vector.broadcast %192 : vector<16x1xf32> to vector<16x32xf32>
    %194 = arith.subf %184, %193 : vector<16x32xf32>
    %195 = arith.mulf %194, %194 : vector<16x32xf32>
    %cst_96 = arith.constant dense<0.000000e+00> : vector<16xf32>
    %196 = vector.multi_reduction <add>, %195, %cst_96 [1] : vector<16x32xf32> to vector<16xf32>
    %197 = vector.shape_cast %196 : vector<16xf32> to vector<16x1xf32>
    %cst_97 = arith.constant 3.200000e+01 : f32
    %198 = vector.broadcast %cst_97 : f32 to vector<16x1xf32>
    %199 = arith.divf %197, %198 : vector<16x1xf32>
    %200 = vector.broadcast %192 : vector<16x1xf32> to vector<16x32xf32>
    %201 = arith.subf %184, %200 : vector<16x32xf32>
    %cst_98 = arith.constant 9.99999974E-6 : f32
    %202 = vector.broadcast %cst_98 : f32 to vector<16x1xf32>
    %203 = arith.addf %199, %202 : vector<16x1xf32>
    %204 = math.rsqrt %203 : vector<16x1xf32>
    %205 = vector.broadcast %204 : vector<16x1xf32> to vector<16x32xf32>
    %206 = arith.mulf %201, %205 : vector<16x32xf32>
    %207 = vector.broadcast %186 : vector<1x32xf32> to vector<16x32xf32>
    %208 = arith.mulf %206, %207 : vector<16x32xf32>
    %209 = vector.broadcast %188 : vector<1x32xf32> to vector<16x32xf32>
    %210 = arith.addf %208, %209 : vector<16x32xf32>
    %c1_99 = arith.constant 1 : index
    %c0_100 = arith.constant 0 : index
    %c0_101 = arith.constant 0 : index
    %211 = vector.load %arg5[%c1_99, %c0_100, %c0_101] : memref<2x32x96xf32, #tpu.memory_space<vmem>>, vector<1x32x96xf32>
    %212 = vector.shape_cast %211 : vector<1x32x96xf32> to vector<32x96xf32>
    %cst_102 = arith.constant dense<0.000000e+00> : vector<16x96xf32>
    %213 = tpu.matmul %210, %212, %cst_102 {dimension_numbers = #tpu.dot_dimension_numbers<[1], [0], [0], [1], [0, 0, 1, 1], [], []>} : vector<16x32xf32>, vector<32x96xf32>, vector<16x96xf32> -> vector<16x96xf32>
    %c1_103 = arith.constant 1 : index
    %c0_104 = arith.constant 0 : index
    %c0_105 = arith.constant 0 : index
    %214 = vector.load %arg6[%c1_103, %c0_104, %c0_105] : memref<2x1x96xf32, #tpu.memory_space<vmem>>, vector<1x1x96xf32>
    %215 = vector.shape_cast %214 : vector<1x1x96xf32> to vector<1x96xf32>
    %216 = vector.broadcast %215 : vector<1x96xf32> to vector<16x96xf32>
    %217 = arith.addf %213, %216 : vector<16x96xf32>
    %218 = vector.shape_cast %217 : vector<16x96xf32> to vector<2x8x96xf32>
    %c1_106 = arith.constant 1 : index
    %c0_107 = arith.constant 0 : index
    %c0_108 = arith.constant 0 : index
    %219 = vector.load %arg7[%c1_106, %c0_107, %c0_108] : memref<2x32x32xf32, #tpu.memory_space<vmem>>, vector<1x32x32xf32>
    %220 = vector.shape_cast %219 : vector<1x32x32xf32> to vector<32x32xf32>
    %cst_109 = arith.constant 0.000000e+00 : f32
    %221 = vector.broadcast %cst_109 : f32 to vector<16x32xf32>
    %222 = vector.extract_strided_slice %218 {offsets = [0, 0, 0], sizes = [2, 8, 8], strides = [1, 1, 1]} : vector<2x8x96xf32> to vector<2x8x8xf32>
    %223 = vector.extract_strided_slice %218 {offsets = [0, 0, 32], sizes = [2, 8, 8], strides = [1, 1, 1]} : vector<2x8x96xf32> to vector<2x8x8xf32>
    %224 = vector.extract_strided_slice %218 {offsets = [0, 0, 64], sizes = [2, 8, 8], strides = [1, 1, 1]} : vector<2x8x96xf32> to vector<2x8x8xf32>
    "tpu.trace_start"() <{level = 10 : i32, message = "sqd,skd->sqk"}> : () -> ()
    %cst_110 = arith.constant dense<0.000000e+00> : vector<2x8x8xf32>
    %225 = tpu.matmul %222, %223, %cst_110 {dimension_numbers = #tpu.dot_dimension_numbers<[2], [2], [1], [1], [0, 0, 0, 1, 1, 1], [0], [0]>} : vector<2x8x8xf32>, vector<2x8x8xf32>, vector<2x8x8xf32> -> vector<2x8x8xf32>
    "tpu.trace_stop"() : () -> ()
    %cst_111 = arith.constant 0.353553385 : f32
    %226 = vector.broadcast %cst_111 : f32 to vector<2x8x8xf32>
    %227 = arith.mulf %225, %226 : vector<2x8x8xf32>
    %cst_112 = arith.constant dense<0xFF800000> : vector<2x8xf32>
    %228 = vector.multi_reduction <maximumf>, %227, %cst_112 [2] : vector<2x8x8xf32> to vector<2x8xf32>
    %229 = vector.shape_cast %228 : vector<2x8xf32> to vector<2x8x1xf32>
    %230 = vector.broadcast %229 : vector<2x8x1xf32> to vector<2x8x8xf32>
    %231 = arith.subf %227, %230 : vector<2x8x8xf32>
    %232 = math.exp %231 : vector<2x8x8xf32>
    %cst_113 = arith.constant dense<0.000000e+00> : vector<2x8xf32>
    %233 = vector.multi_reduction <add>, %232, %cst_113 [2] : vector<2x8x8xf32> to vector<2x8xf32>
    %234 = vector.shape_cast %233 : vector<2x8xf32> to vector<2x8x1xf32>
    %235 = vector.broadcast %234 : vector<2x8x1xf32> to vector<2x8x8xf32>
    %236 = arith.divf %232, %235 : vector<2x8x8xf32>
    "tpu.trace_start"() <{level = 10 : i32, message = "sqk,skd->sqd"}> : () -> ()
    %cst_114 = arith.constant dense<0.000000e+00> : vector<2x8x8xf32>
    %237 = tpu.matmul %236, %224, %cst_114 {dimension_numbers = #tpu.dot_dimension_numbers<[2], [1], [1], [2], [0, 0, 0, 1, 1, 2], [0], [0]>} : vector<2x8x8xf32>, vector<2x8x8xf32>, vector<2x8x8xf32> -> vector<2x8x8xf32>
    "tpu.trace_stop"() : () -> ()
    %238 = vector.shape_cast %237 : vector<2x8x8xf32> to vector<16x8xf32>
    %239 = vector.extract_strided_slice %220 {offsets = [0, 0], sizes = [8, 32], strides = [1, 1]} : vector<32x32xf32> to vector<8x32xf32>
    %cst_115 = arith.constant dense<0.000000e+00> : vector<16x32xf32>
    %240 = tpu.matmul %238, %239, %cst_115 {dimension_numbers = #tpu.dot_dimension_numbers<[1], [0], [0], [1], [0, 0, 1, 1], [], []>} : vector<16x8xf32>, vector<8x32xf32>, vector<16x32xf32> -> vector<16x32xf32>
    %241 = arith.addf %221, %240 : vector<16x32xf32>
    %242 = vector.extract_strided_slice %218 {offsets = [0, 0, 8], sizes = [2, 8, 8], strides = [1, 1, 1]} : vector<2x8x96xf32> to vector<2x8x8xf32>
    %243 = vector.extract_strided_slice %218 {offsets = [0, 0, 40], sizes = [2, 8, 8], strides = [1, 1, 1]} : vector<2x8x96xf32> to vector<2x8x8xf32>
    %244 = vector.extract_strided_slice %218 {offsets = [0, 0, 72], sizes = [2, 8, 8], strides = [1, 1, 1]} : vector<2x8x96xf32> to vector<2x8x8xf32>
    "tpu.trace_start"() <{level = 10 : i32, message = "sqd,skd->sqk"}> : () -> ()
    %cst_116 = arith.constant dense<0.000000e+00> : vector<2x8x8xf32>
    %245 = tpu.matmul %242, %243, %cst_116 {dimension_numbers = #tpu.dot_dimension_numbers<[2], [2], [1], [1], [0, 0, 0, 1, 1, 1], [0], [0]>} : vector<2x8x8xf32>, vector<2x8x8xf32>, vector<2x8x8xf32> -> vector<2x8x8xf32>
    "tpu.trace_stop"() : () -> ()
    %cst_117 = arith.constant 0.353553385 : f32
    %246 = vector.broadcast %cst_117 : f32 to vector<2x8x8xf32>
    %247 = arith.mulf %245, %246 : vector<2x8x8xf32>
    %cst_118 = arith.constant dense<0xFF800000> : vector<2x8xf32>
    %248 = vector.multi_reduction <maximumf>, %247, %cst_118 [2] : vector<2x8x8xf32> to vector<2x8xf32>
    %249 = vector.shape_cast %248 : vector<2x8xf32> to vector<2x8x1xf32>
    %250 = vector.broadcast %249 : vector<2x8x1xf32> to vector<2x8x8xf32>
    %251 = arith.subf %247, %250 : vector<2x8x8xf32>
    %252 = math.exp %251 : vector<2x8x8xf32>
    %cst_119 = arith.constant dense<0.000000e+00> : vector<2x8xf32>
    %253 = vector.multi_reduction <add>, %252, %cst_119 [2] : vector<2x8x8xf32> to vector<2x8xf32>
    %254 = vector.shape_cast %253 : vector<2x8xf32> to vector<2x8x1xf32>
    %255 = vector.broadcast %254 : vector<2x8x1xf32> to vector<2x8x8xf32>
    %256 = arith.divf %252, %255 : vector<2x8x8xf32>
    "tpu.trace_start"() <{level = 10 : i32, message = "sqk,skd->sqd"}> : () -> ()
    %cst_120 = arith.constant dense<0.000000e+00> : vector<2x8x8xf32>
    %257 = tpu.matmul %256, %244, %cst_120 {dimension_numbers = #tpu.dot_dimension_numbers<[2], [1], [1], [2], [0, 0, 0, 1, 1, 2], [0], [0]>} : vector<2x8x8xf32>, vector<2x8x8xf32>, vector<2x8x8xf32> -> vector<2x8x8xf32>
    "tpu.trace_stop"() : () -> ()
    %258 = vector.shape_cast %257 : vector<2x8x8xf32> to vector<16x8xf32>
    %259 = vector.extract_strided_slice %220 {offsets = [8, 0], sizes = [8, 32], strides = [1, 1]} : vector<32x32xf32> to vector<8x32xf32>
    %cst_121 = arith.constant dense<0.000000e+00> : vector<16x32xf32>
    %260 = tpu.matmul %258, %259, %cst_121 {dimension_numbers = #tpu.dot_dimension_numbers<[1], [0], [0], [1], [0, 0, 1, 1], [], []>} : vector<16x8xf32>, vector<8x32xf32>, vector<16x32xf32> -> vector<16x32xf32>
    %261 = arith.addf %241, %260 : vector<16x32xf32>
    %262 = vector.extract_strided_slice %218 {offsets = [0, 0, 16], sizes = [2, 8, 8], strides = [1, 1, 1]} : vector<2x8x96xf32> to vector<2x8x8xf32>
    %263 = vector.extract_strided_slice %218 {offsets = [0, 0, 48], sizes = [2, 8, 8], strides = [1, 1, 1]} : vector<2x8x96xf32> to vector<2x8x8xf32>
    %264 = vector.extract_strided_slice %218 {offsets = [0, 0, 80], sizes = [2, 8, 8], strides = [1, 1, 1]} : vector<2x8x96xf32> to vector<2x8x8xf32>
    "tpu.trace_start"() <{level = 10 : i32, message = "sqd,skd->sqk"}> : () -> ()
    %cst_122 = arith.constant dense<0.000000e+00> : vector<2x8x8xf32>
    %265 = tpu.matmul %262, %263, %cst_122 {dimension_numbers = #tpu.dot_dimension_numbers<[2], [2], [1], [1], [0, 0, 0, 1, 1, 1], [0], [0]>} : vector<2x8x8xf32>, vector<2x8x8xf32>, vector<2x8x8xf32> -> vector<2x8x8xf32>
    "tpu.trace_stop"() : () -> ()
    %cst_123 = arith.constant 0.353553385 : f32
    %266 = vector.broadcast %cst_123 : f32 to vector<2x8x8xf32>
    %267 = arith.mulf %265, %266 : vector<2x8x8xf32>
    %cst_124 = arith.constant dense<0xFF800000> : vector<2x8xf32>
    %268 = vector.multi_reduction <maximumf>, %267, %cst_124 [2] : vector<2x8x8xf32> to vector<2x8xf32>
    %269 = vector.shape_cast %268 : vector<2x8xf32> to vector<2x8x1xf32>
    %270 = vector.broadcast %269 : vector<2x8x1xf32> to vector<2x8x8xf32>
    %271 = arith.subf %267, %270 : vector<2x8x8xf32>
    %272 = math.exp %271 : vector<2x8x8xf32>
    %cst_125 = arith.constant dense<0.000000e+00> : vector<2x8xf32>
    %273 = vector.multi_reduction <add>, %272, %cst_125 [2] : vector<2x8x8xf32> to vector<2x8xf32>
    %274 = vector.shape_cast %273 : vector<2x8xf32> to vector<2x8x1xf32>
    %275 = vector.broadcast %274 : vector<2x8x1xf32> to vector<2x8x8xf32>
    %276 = arith.divf %272, %275 : vector<2x8x8xf32>
    "tpu.trace_start"() <{level = 10 : i32, message = "sqk,skd->sqd"}> : () -> ()
    %cst_126 = arith.constant dense<0.000000e+00> : vector<2x8x8xf32>
    %277 = tpu.matmul %276, %264, %cst_126 {dimension_numbers = #tpu.dot_dimension_numbers<[2], [1], [1], [2], [0, 0, 0, 1, 1, 2], [0], [0]>} : vector<2x8x8xf32>, vector<2x8x8xf32>, vector<2x8x8xf32> -> vector<2x8x8xf32>
    "tpu.trace_stop"() : () -> ()
    %278 = vector.shape_cast %277 : vector<2x8x8xf32> to vector<16x8xf32>
    %279 = vector.extract_strided_slice %220 {offsets = [16, 0], sizes = [8, 32], strides = [1, 1]} : vector<32x32xf32> to vector<8x32xf32>
    %cst_127 = arith.constant dense<0.000000e+00> : vector<16x32xf32>
    %280 = tpu.matmul %278, %279, %cst_127 {dimension_numbers = #tpu.dot_dimension_numbers<[1], [0], [0], [1], [0, 0, 1, 1], [], []>} : vector<16x8xf32>, vector<8x32xf32>, vector<16x32xf32> -> vector<16x32xf32>
    %281 = arith.addf %261, %280 : vector<16x32xf32>
    %282 = vector.extract_strided_slice %218 {offsets = [0, 0, 24], sizes = [2, 8, 8], strides = [1, 1, 1]} : vector<2x8x96xf32> to vector<2x8x8xf32>
    %283 = vector.extract_strided_slice %218 {offsets = [0, 0, 56], sizes = [2, 8, 8], strides = [1, 1, 1]} : vector<2x8x96xf32> to vector<2x8x8xf32>
    %284 = vector.extract_strided_slice %218 {offsets = [0, 0, 88], sizes = [2, 8, 8], strides = [1, 1, 1]} : vector<2x8x96xf32> to vector<2x8x8xf32>
    "tpu.trace_start"() <{level = 10 : i32, message = "sqd,skd->sqk"}> : () -> ()
    %cst_128 = arith.constant dense<0.000000e+00> : vector<2x8x8xf32>
    %285 = tpu.matmul %282, %283, %cst_128 {dimension_numbers = #tpu.dot_dimension_numbers<[2], [2], [1], [1], [0, 0, 0, 1, 1, 1], [0], [0]>} : vector<2x8x8xf32>, vector<2x8x8xf32>, vector<2x8x8xf32> -> vector<2x8x8xf32>
    "tpu.trace_stop"() : () -> ()
    %cst_129 = arith.constant 0.353553385 : f32
    %286 = vector.broadcast %cst_129 : f32 to vector<2x8x8xf32>
    %287 = arith.mulf %285, %286 : vector<2x8x8xf32>
    %cst_130 = arith.constant dense<0xFF800000> : vector<2x8xf32>
    %288 = vector.multi_reduction <maximumf>, %287, %cst_130 [2] : vector<2x8x8xf32> to vector<2x8xf32>
    %289 = vector.shape_cast %288 : vector<2x8xf32> to vector<2x8x1xf32>
    %290 = vector.broadcast %289 : vector<2x8x1xf32> to vector<2x8x8xf32>
    %291 = arith.subf %287, %290 : vector<2x8x8xf32>
    %292 = math.exp %291 : vector<2x8x8xf32>
    %cst_131 = arith.constant dense<0.000000e+00> : vector<2x8xf32>
    %293 = vector.multi_reduction <add>, %292, %cst_131 [2] : vector<2x8x8xf32> to vector<2x8xf32>
    %294 = vector.shape_cast %293 : vector<2x8xf32> to vector<2x8x1xf32>
    %295 = vector.broadcast %294 : vector<2x8x1xf32> to vector<2x8x8xf32>
    %296 = arith.divf %292, %295 : vector<2x8x8xf32>
    "tpu.trace_start"() <{level = 10 : i32, message = "sqk,skd->sqd"}> : () -> ()
    %cst_132 = arith.constant dense<0.000000e+00> : vector<2x8x8xf32>
    %297 = tpu.matmul %296, %284, %cst_132 {dimension_numbers = #tpu.dot_dimension_numbers<[2], [1], [1], [2], [0, 0, 0, 1, 1, 2], [0], [0]>} : vector<2x8x8xf32>, vector<2x8x8xf32>, vector<2x8x8xf32> -> vector<2x8x8xf32>
    "tpu.trace_stop"() : () -> ()
    %298 = vector.shape_cast %297 : vector<2x8x8xf32> to vector<16x8xf32>
    %299 = vector.extract_strided_slice %220 {offsets = [24, 0], sizes = [8, 32], strides = [1, 1]} : vector<32x32xf32> to vector<8x32xf32>
    %cst_133 = arith.constant dense<0.000000e+00> : vector<16x32xf32>
    %300 = tpu.matmul %298, %299, %cst_133 {dimension_numbers = #tpu.dot_dimension_numbers<[1], [0], [0], [1], [0, 0, 1, 1], [], []>} : vector<16x8xf32>, vector<8x32xf32>, vector<16x32xf32> -> vector<16x32xf32>
    %301 = arith.addf %281, %300 : vector<16x32xf32>
    %c1_134 = arith.constant 1 : index
    %c0_135 = arith.constant 0 : index
    %c0_136 = arith.constant 0 : index
    %302 = vector.load %arg8[%c1_134, %c0_135, %c0_136] : memref<2x1x32xf32, #tpu.memory_space<vmem>>, vector<1x1x32xf32>
    %303 = vector.shape_cast %302 : vector<1x1x32xf32> to vector<1x32xf32>
    %304 = vector.broadcast %303 : vector<1x32xf32> to vector<16x32xf32>
    %305 = arith.addf %301, %304 : vector<16x32xf32>
    %cst_137 = arith.constant 0.000000e+00 : f32
    %306 = vector.broadcast %cst_137 : f32 to vector<16x32xf32>
    %307 = arith.cmpf oge, %305, %306 : vector<16x32xf32>
    %cst_138 = arith.constant 2.000000e-01 : f32
    %308 = vector.broadcast %cst_138 : f32 to vector<16x32xf32>
    %309 = arith.mulf %308, %305 : vector<16x32xf32>
    %310 = arith.select %307, %305, %309 : vector<16x32xi1>, vector<16x32xf32>
    %c1_139 = arith.constant 1 : index
    %c0_140 = arith.constant 0 : index
    %c0_141 = arith.constant 0 : index
    %311 = vector.load %arg9[%c1_139, %c0_140, %c0_141] : memref<2x32x32xf32, #tpu.memory_space<vmem>>, vector<1x32x32xf32>
    %312 = vector.shape_cast %311 : vector<1x32x32xf32> to vector<32x32xf32>
    %c1_142 = arith.constant 1 : index
    %c0_143 = arith.constant 0 : index
    %c0_144 = arith.constant 0 : index
    %313 = vector.load %arg10[%c1_142, %c0_143, %c0_144] : memref<2x1x32xf32, #tpu.memory_space<vmem>>, vector<1x1x32xf32>
    %314 = vector.shape_cast %313 : vector<1x1x32xf32> to vector<1x32xf32>
    %cst_145 = arith.constant dense<0.000000e+00> : vector<16x32xf32>
    %315 = tpu.matmul %310, %312, %cst_145 {dimension_numbers = #tpu.dot_dimension_numbers<[1], [0], [0], [1], [0, 0, 1, 1], [], []>} : vector<16x32xf32>, vector<32x32xf32>, vector<16x32xf32> -> vector<16x32xf32>
    %316 = vector.broadcast %314 : vector<1x32xf32> to vector<16x32xf32>
    %317 = arith.addf %315, %316 : vector<16x32xf32>
    %318 = arith.addf %184, %317 : vector<16x32xf32>
    %c1_146 = arith.constant 1 : index
    %c0_147 = arith.constant 0 : index
    %c0_148 = arith.constant 0 : index
    %319 = vector.load %arg11[%c1_146, %c0_147, %c0_148] : memref<2x1x32xf32, #tpu.memory_space<vmem>>, vector<1x1x32xf32>
    %320 = vector.shape_cast %319 : vector<1x1x32xf32> to vector<1x32xf32>
    %c1_149 = arith.constant 1 : index
    %c0_150 = arith.constant 0 : index
    %c0_151 = arith.constant 0 : index
    %321 = vector.load %arg12[%c1_149, %c0_150, %c0_151] : memref<2x1x32xf32, #tpu.memory_space<vmem>>, vector<1x1x32xf32>
    %322 = vector.shape_cast %321 : vector<1x1x32xf32> to vector<1x32xf32>
    %cst_152 = arith.constant dense<0.000000e+00> : vector<16xf32>
    %323 = vector.multi_reduction <add>, %318, %cst_152 [1] : vector<16x32xf32> to vector<16xf32>
    %324 = vector.shape_cast %323 : vector<16xf32> to vector<16x1xf32>
    %cst_153 = arith.constant 3.200000e+01 : f32
    %325 = vector.broadcast %cst_153 : f32 to vector<16x1xf32>
    %326 = arith.divf %324, %325 : vector<16x1xf32>
    %327 = vector.broadcast %326 : vector<16x1xf32> to vector<16x32xf32>
    %328 = arith.subf %318, %327 : vector<16x32xf32>
    %329 = arith.mulf %328, %328 : vector<16x32xf32>
    %cst_154 = arith.constant dense<0.000000e+00> : vector<16xf32>
    %330 = vector.multi_reduction <add>, %329, %cst_154 [1] : vector<16x32xf32> to vector<16xf32>
    %331 = vector.shape_cast %330 : vector<16xf32> to vector<16x1xf32>
    %cst_155 = arith.constant 3.200000e+01 : f32
    %332 = vector.broadcast %cst_155 : f32 to vector<16x1xf32>
    %333 = arith.divf %331, %332 : vector<16x1xf32>
    %334 = vector.broadcast %326 : vector<16x1xf32> to vector<16x32xf32>
    %335 = arith.subf %318, %334 : vector<16x32xf32>
    %cst_156 = arith.constant 9.99999974E-6 : f32
    %336 = vector.broadcast %cst_156 : f32 to vector<16x1xf32>
    %337 = arith.addf %333, %336 : vector<16x1xf32>
    %338 = math.rsqrt %337 : vector<16x1xf32>
    %339 = vector.broadcast %338 : vector<16x1xf32> to vector<16x32xf32>
    %340 = arith.mulf %335, %339 : vector<16x32xf32>
    %341 = vector.broadcast %320 : vector<1x32xf32> to vector<16x32xf32>
    %342 = arith.mulf %340, %341 : vector<16x32xf32>
    %343 = vector.broadcast %322 : vector<1x32xf32> to vector<16x32xf32>
    %344 = arith.addf %342, %343 : vector<16x32xf32>
    %c1_157 = arith.constant 1 : index
    %c0_158 = arith.constant 0 : index
    %c0_159 = arith.constant 0 : index
    %345 = vector.load %arg13[%c1_157, %c0_158, %c0_159] : memref<2x32x64xf32, #tpu.memory_space<vmem>>, vector<1x32x64xf32>
    %346 = vector.shape_cast %345 : vector<1x32x64xf32> to vector<32x64xf32>
    %c1_160 = arith.constant 1 : index
    %c0_161 = arith.constant 0 : index
    %c0_162 = arith.constant 0 : index
    %347 = vector.load %arg14[%c1_160, %c0_161, %c0_162] : memref<2x1x64xf32, #tpu.memory_space<vmem>>, vector<1x1x64xf32>
    %348 = vector.shape_cast %347 : vector<1x1x64xf32> to vector<1x64xf32>
    %cst_163 = arith.constant dense<0.000000e+00> : vector<16x64xf32>
    %349 = tpu.matmul %344, %346, %cst_163 {dimension_numbers = #tpu.dot_dimension_numbers<[1], [0], [0], [1], [0, 0, 1, 1], [], []>} : vector<16x32xf32>, vector<32x64xf32>, vector<16x64xf32> -> vector<16x64xf32>
    %350 = vector.broadcast %348 : vector<1x64xf32> to vector<16x64xf32>
    %351 = arith.addf %349, %350 : vector<16x64xf32>
    %cst_164 = arith.constant 0.000000e+00 : f32
    %352 = vector.broadcast %cst_164 : f32 to vector<16x64xf32>
    %353 = arith.cmpf oge, %351, %352 : vector<16x64xf32>
    %cst_165 = arith.constant 2.000000e-01 : f32
    %354 = vector.broadcast %cst_165 : f32 to vector<16x64xf32>
    %355 = arith.mulf %354, %351 : vector<16x64xf32>
    %356 = arith.select %353, %351, %355 : vector<16x64xi1>, vector<16x64xf32>
    %c1_166 = arith.constant 1 : index
    %c0_167 = arith.constant 0 : index
    %c0_168 = arith.constant 0 : index
    %357 = vector.load %arg15[%c1_166, %c0_167, %c0_168] : memref<2x64x32xf32, #tpu.memory_space<vmem>>, vector<1x64x32xf32>
    %358 = vector.shape_cast %357 : vector<1x64x32xf32> to vector<64x32xf32>
    %c1_169 = arith.constant 1 : index
    %c0_170 = arith.constant 0 : index
    %c0_171 = arith.constant 0 : index
    %359 = vector.load %arg16[%c1_169, %c0_170, %c0_171] : memref<2x1x32xf32, #tpu.memory_space<vmem>>, vector<1x1x32xf32>
    %360 = vector.shape_cast %359 : vector<1x1x32xf32> to vector<1x32xf32>
    %cst_172 = arith.constant dense<0.000000e+00> : vector<16x32xf32>
    %361 = tpu.matmul %356, %358, %cst_172 {dimension_numbers = #tpu.dot_dimension_numbers<[1], [0], [0], [1], [0, 0, 1, 1], [], []>} : vector<16x64xf32>, vector<64x32xf32>, vector<16x32xf32> -> vector<16x32xf32>
    %362 = vector.broadcast %360 : vector<1x32xf32> to vector<16x32xf32>
    %363 = arith.addf %361, %362 : vector<16x32xf32>
    %364 = arith.addf %318, %363 : vector<16x32xf32>
    %365 = vector.extract_strided_slice %364 {offsets = [0, 0], sizes = [8, 32], strides = [1, 1]} : vector<16x32xf32> to vector<8x32xf32>
    %366 = vector.extract_strided_slice %364 {offsets = [8, 0], sizes = [8, 32], strides = [1, 1]} : vector<16x32xf32> to vector<8x32xf32>
    %c0_173 = arith.constant 0 : index
    %c0_174 = arith.constant 0 : index
    %367 = vector.load %arg17[%c0_173, %c0_174] : memref<32x32xf32, #tpu.memory_space<vmem>>, vector<32x32xf32>
    %cst_175 = arith.constant dense<0.000000e+00> : vector<8x32xf32>
    %368 = tpu.matmul %365, %367, %cst_175 {dimension_numbers = #tpu.dot_dimension_numbers<[1], [0], [0], [1], [0, 0, 1, 1], [], []>} : vector<8x32xf32>, vector<32x32xf32>, vector<8x32xf32> -> vector<8x32xf32>
    %369 = vector.shape_cast %368 : vector<8x32xf32> to vector<1x8x32xf32>
    %c0_176 = arith.constant 0 : index
    %c0_177 = arith.constant 0 : index
    %370 = vector.load %arg18[%c0_176, %c0_177] : memref<32x32xf32, #tpu.memory_space<vmem>>, vector<32x32xf32>
    %cst_178 = arith.constant dense<0.000000e+00> : vector<8x32xf32>
    %371 = tpu.matmul %366, %370, %cst_178 {dimension_numbers = #tpu.dot_dimension_numbers<[1], [0], [0], [1], [0, 0, 1, 1], [], []>} : vector<8x32xf32>, vector<32x32xf32>, vector<8x32xf32> -> vector<8x32xf32>
    %372 = vector.shape_cast %371 : vector<8x32xf32> to vector<1x8x32xf32>
    %c0_179 = arith.constant 0 : index
    %c0_180 = arith.constant 0 : index
    %373 = vector.load %arg19[%c0_179, %c0_180] : memref<32x32xf32, #tpu.memory_space<vmem>>, vector<32x32xf32>
    %cst_181 = arith.constant dense<0.000000e+00> : vector<8x32xf32>
    %374 = tpu.matmul %366, %373, %cst_181 {dimension_numbers = #tpu.dot_dimension_numbers<[1], [0], [0], [1], [0, 0, 1, 1], [], []>} : vector<8x32xf32>, vector<32x32xf32>, vector<8x32xf32> -> vector<8x32xf32>
    %375 = vector.shape_cast %374 : vector<8x32xf32> to vector<1x8x32xf32>
    "tpu.trace_start"() <{level = 10 : i32, message = "bnd,bmd->bnm"}> : () -> ()
    %cst_182 = arith.constant dense<0.000000e+00> : vector<1x8x8xf32>
    %376 = tpu.matmul %369, %372, %cst_182 {dimension_numbers = #tpu.dot_dimension_numbers<[2], [2], [1], [1], [0, 0, 0, 1, 1, 1], [0], [0]>} : vector<1x8x32xf32>, vector<1x8x32xf32>, vector<1x8x8xf32> -> vector<1x8x8xf32>
    "tpu.trace_stop"() : () -> ()
    %cst_183 = arith.constant 0.353553385 : f32
    %377 = vector.broadcast %cst_183 : f32 to vector<1x8x8xf32>
    %378 = arith.mulf %376, %377 : vector<1x8x8xf32>
    %cst_184 = arith.constant dense<0xFF800000> : vector<1x8xf32>
    %379 = vector.multi_reduction <maximumf>, %378, %cst_184 [2] : vector<1x8x8xf32> to vector<1x8xf32>
    %380 = vector.shape_cast %379 : vector<1x8xf32> to vector<1x8x1xf32>
    %381 = vector.broadcast %380 : vector<1x8x1xf32> to vector<1x8x8xf32>
    %382 = arith.subf %378, %381 : vector<1x8x8xf32>
    %383 = math.exp %382 : vector<1x8x8xf32>
    %cst_185 = arith.constant dense<0.000000e+00> : vector<1x8xf32>
    %384 = vector.multi_reduction <add>, %383, %cst_185 [2] : vector<1x8x8xf32> to vector<1x8xf32>
    %385 = vector.shape_cast %384 : vector<1x8xf32> to vector<1x8x1xf32>
    %386 = vector.broadcast %385 : vector<1x8x1xf32> to vector<1x8x8xf32>
    %387 = arith.divf %383, %386 : vector<1x8x8xf32>
    %c0_186 = arith.constant 0 : index
    %c0_187 = arith.constant 0 : index
    %c0_188 = arith.constant 0 : index
    %388 = vector.load %arg22[%c0_186, %c0_187, %c0_188] : memref<1x8x8xf32, #tpu.memory_space<vmem>>, vector<1x8x8xf32>
    tpu.vector_store %arg22[%c0_186, %c0_187, %c0_188], %387 {strides = array<i32>} : memref<1x8x8xf32, #tpu.memory_space<vmem>>, vector<1x8x8xf32>,
    "tpu.trace_start"() <{level = 10 : i32, message = "bnm,bmd->bnd"}> : () -> ()
    %cst_189 = arith.constant dense<0.000000e+00> : vector<1x8x32xf32>
    %389 = tpu.matmul %387, %375, %cst_189 {dimension_numbers = #tpu.dot_dimension_numbers<[2], [1], [1], [2], [0, 0, 0, 1, 1, 2], [0], [0]>} : vector<1x8x8xf32>, vector<1x8x32xf32>, vector<1x8x32xf32> -> vector<1x8x32xf32>
    "tpu.trace_stop"() : () -> ()
    %c0_190 = arith.constant 0 : index
    %c0_191 = arith.constant 0 : index
    %390 = vector.load %arg20[%c0_190, %c0_191] : memref<1x32xf32, #tpu.memory_space<vmem>>, vector<1x32xf32>
    %391 = vector.shape_cast %390 : vector<1x32xf32> to vector<1x1x32xf32>
    %392 = vector.broadcast %391 : vector<1x1x32xf32> to vector<1x8x32xf32>
    %393 = arith.addf %389, %392 : vector<1x8x32xf32>
    %c0_192 = arith.constant 0 : index
    %c0_193 = arith.constant 0 : index
    %c0_194 = arith.constant 0 : index
    %394 = vector.load %arg21[%c0_192, %c0_193, %c0_194] : memref<1x8x32xf32, #tpu.memory_space<vmem>>, vector<1x8x32xf32>
    tpu.vector_store %arg21[%c0_192, %c0_193, %c0_194], %393 {strides = array<i32>} : memref<1x8x32xf32, #tpu.memory_space<vmem>>, vector<1x8x32xf32>,
    return
  }
  func.func @transform_0(%arg0: i32) -> (i32, i32, i32) {
    %c0_i32 = arith.constant 0 : i32
    %c0_i32_0 = arith.constant 0 : i32
    %c0_i32_1 = arith.constant 0 : i32
    return %arg0, %c0_i32, %c0_i32_0 : i32, i32, i32
  }
  func.func @transform_1(%arg0: i32) -> (i32, i32, i32) {
    %c0_i32 = arith.constant 0 : i32
    %c0_i32_0 = arith.constant 0 : i32
    %c0_i32_1 = arith.constant 0 : i32
    return %arg0, %c0_i32, %c0_i32_0 : i32, i32, i32
  }
  func.func @transform_2(%arg0: i32) -> (i32, i32, i32) {
    %c0_i32 = arith.constant 0 : i32
    %c0_i32_0 = arith.constant 0 : i32
    %c0_i32_1 = arith.constant 0 : i32
    %c0_i32_2 = arith.constant 0 : i32
    return %c0_i32, %c0_i32_0, %c0_i32_1 : i32, i32, i32
  }
  func.func @transform_3(%arg0: i32) -> (i32, i32, i32) {
    %c0_i32 = arith.constant 0 : i32
    %c0_i32_0 = arith.constant 0 : i32
    %c0_i32_1 = arith.constant 0 : i32
    %c0_i32_2 = arith.constant 0 : i32
    return %c0_i32, %c0_i32_0, %c0_i32_1 : i32, i32, i32
  }
  func.func @transform_4(%arg0: i32) -> (i32, i32, i32) {
    %c0_i32 = arith.constant 0 : i32
    %c0_i32_0 = arith.constant 0 : i32
    %c0_i32_1 = arith.constant 0 : i32
    %c0_i32_2 = arith.constant 0 : i32
    return %c0_i32, %c0_i32_0, %c0_i32_1 : i32, i32, i32
  }
  func.func @transform_5(%arg0: i32) -> (i32, i32, i32) {
    %c0_i32 = arith.constant 0 : i32
    %c0_i32_0 = arith.constant 0 : i32
    %c0_i32_1 = arith.constant 0 : i32
    %c0_i32_2 = arith.constant 0 : i32
    return %c0_i32, %c0_i32_0, %c0_i32_1 : i32, i32, i32
  }
  func.func @transform_6(%arg0: i32) -> (i32, i32, i32) {
    %c0_i32 = arith.constant 0 : i32
    %c0_i32_0 = arith.constant 0 : i32
    %c0_i32_1 = arith.constant 0 : i32
    %c0_i32_2 = arith.constant 0 : i32
    return %c0_i32, %c0_i32_0, %c0_i32_1 : i32, i32, i32
  }
  func.func @transform_7(%arg0: i32) -> (i32, i32, i32) {
    %c0_i32 = arith.constant 0 : i32
    %c0_i32_0 = arith.constant 0 : i32
    %c0_i32_1 = arith.constant 0 : i32
    %c0_i32_2 = arith.constant 0 : i32
    return %c0_i32, %c0_i32_0, %c0_i32_1 : i32, i32, i32
  }
  func.func @transform_8(%arg0: i32) -> (i32, i32, i32) {
    %c0_i32 = arith.constant 0 : i32
    %c0_i32_0 = arith.constant 0 : i32
    %c0_i32_1 = arith.constant 0 : i32
    %c0_i32_2 = arith.constant 0 : i32
    return %c0_i32, %c0_i32_0, %c0_i32_1 : i32, i32, i32
  }
  func.func @transform_9(%arg0: i32) -> (i32, i32, i32) {
    %c0_i32 = arith.constant 0 : i32
    %c0_i32_0 = arith.constant 0 : i32
    %c0_i32_1 = arith.constant 0 : i32
    %c0_i32_2 = arith.constant 0 : i32
    return %c0_i32, %c0_i32_0, %c0_i32_1 : i32, i32, i32
  }
  func.func @transform_10(%arg0: i32) -> (i32, i32, i32) {
    %c0_i32 = arith.constant 0 : i32
    %c0_i32_0 = arith.constant 0 : i32
    %c0_i32_1 = arith.constant 0 : i32
    %c0_i32_2 = arith.constant 0 : i32
    return %c0_i32, %c0_i32_0, %c0_i32_1 : i32, i32, i32
  }
  func.func @transform_11(%arg0: i32) -> (i32, i32, i32) {
    %c0_i32 = arith.constant 0 : i32
    %c0_i32_0 = arith.constant 0 : i32
    %c0_i32_1 = arith.constant 0 : i32
    %c0_i32_2 = arith.constant 0 : i32
    return %c0_i32, %c0_i32_0, %c0_i32_1 : i32, i32, i32
  }
  func.func @transform_12(%arg0: i32) -> (i32, i32, i32) {
    %c0_i32 = arith.constant 0 : i32
    %c0_i32_0 = arith.constant 0 : i32
    %c0_i32_1 = arith.constant 0 : i32
    %c0_i32_2 = arith.constant 0 : i32
    return %c0_i32, %c0_i32_0, %c0_i32_1 : i32, i32, i32
  }
  func.func @transform_13(%arg0: i32) -> (i32, i32, i32) {
    %c0_i32 = arith.constant 0 : i32
    %c0_i32_0 = arith.constant 0 : i32
    %c0_i32_1 = arith.constant 0 : i32
    %c0_i32_2 = arith.constant 0 : i32
    return %c0_i32, %c0_i32_0, %c0_i32_1 : i32, i32, i32
  }
  func.func @transform_14(%arg0: i32) -> (i32, i32, i32) {
    %c0_i32 = arith.constant 0 : i32
    %c0_i32_0 = arith.constant 0 : i32
    %c0_i32_1 = arith.constant 0 : i32
    %c0_i32_2 = arith.constant 0 : i32
    return %c0_i32, %c0_i32_0, %c0_i32_1 : i32, i32, i32
  }
  func.func @transform_15(%arg0: i32) -> (i32, i32, i32) {
    %c0_i32 = arith.constant 0 : i32
    %c0_i32_0 = arith.constant 0 : i32
    %c0_i32_1 = arith.constant 0 : i32
    %c0_i32_2 = arith.constant 0 : i32
    return %c0_i32, %c0_i32_0, %c0_i32_1 : i32, i32, i32
  }
  func.func @transform_16(%arg0: i32) -> (i32, i32) {
    %c0_i32 = arith.constant 0 : i32
    %c0_i32_0 = arith.constant 0 : i32
    %c0_i32_1 = arith.constant 0 : i32
    return %c0_i32, %c0_i32_0 : i32, i32
  }
  func.func @transform_17(%arg0: i32) -> (i32, i32) {
    %c0_i32 = arith.constant 0 : i32
    %c0_i32_0 = arith.constant 0 : i32
    %c0_i32_1 = arith.constant 0 : i32
    return %c0_i32, %c0_i32_0 : i32, i32
  }
  func.func @transform_18(%arg0: i32) -> (i32, i32) {
    %c0_i32 = arith.constant 0 : i32
    %c0_i32_0 = arith.constant 0 : i32
    %c0_i32_1 = arith.constant 0 : i32
    return %c0_i32, %c0_i32_0 : i32, i32
  }
  func.func @transform_19(%arg0: i32) -> (i32, i32) {
    %c0_i32 = arith.constant 0 : i32
    %c0_i32_0 = arith.constant 0 : i32
    %c0_i32_1 = arith.constant 0 : i32
    return %c0_i32, %c0_i32_0 : i32, i32
  }
  func.func @transform_20(%arg0: i32) -> (i32, i32, i32) {
    %c0_i32 = arith.constant 0 : i32
    %c0_i32_0 = arith.constant 0 : i32
    %c0_i32_1 = arith.constant 0 : i32
    return %arg0, %c0_i32, %c0_i32_0 : i32, i32, i32
  }
  func.func @transform_21(%arg0: i32) -> (i32, i32, i32) {
    %c0_i32 = arith.constant 0 : i32
    %c0_i32_0 = arith.constant 0 : i32
    %c0_i32_1 = arith.constant 0 : i32
    return %arg0, %c0_i32, %c0_i32_0 : i32, i32, i32
  }
}

</mosaic_0001>

<llo_original>
// kernel: trans_apply.1
$region0: #{trans_apply.1}
  #allocation0 [shape = 'u32[]', space=smem, size = 0x4, offset = 0x4, fixed_abs, tag = 'smem constant byte address 0x4 - core index']
  #allocation1 [shape = 'u32[144,128]{1,0:T(1,128)}', space=vmem, size = 0x12000, scoped, tag = 'internal scratch']
  %s0 = inlined_call_operand.hbm [shape: f32[2,8,32], index: 0, kind: input, shape index: {}]
  %s1 = inlined_call_operand.hbm [shape: f32[2,8,32], index: 1, kind: input, shape index: {}]
  %s2 = inlined_call_operand.hbm [shape: f32[2,1,32], index: 2, kind: input, shape index: {}]
  %s3 = inlined_call_operand.hbm [shape: f32[2,1,32], index: 3, kind: input, shape index: {}]
  %s4 = inlined_call_operand.vmem [shape: f32[2,32,96], index: 4, kind: input, shape index: {}]
  %s5 = inlined_call_operand.hbm [shape: f32[2,1,96], index: 5, kind: input, shape index: {}]
  %s6 = inlined_call_operand.vmem [shape: f32[2,32,32], index: 6, kind: input, shape index: {}]
  %s7 = inlined_call_operand.hbm [shape: f32[2,1,32], index: 7, kind: input, shape index: {}]
  %s8 = inlined_call_operand.vmem [shape: f32[2,32,32], index: 8, kind: input, shape index: {}]
  %s9 = inlined_call_operand.hbm [shape: f32[2,1,32], index: 9, kind: input, shape index: {}]
  %s10 = inlined_call_operand.hbm [shape: f32[2,1,32], index: 10, kind: input, shape index: {}]
  %s11 = inlined_call_operand.hbm [shape: f32[2,1,32], index: 11, kind: input, shape index: {}]
  %s12 = inlined_call_operand.hbm [shape: f32[2,32,64], index: 12, kind: input, shape index: {}]
  %s13 = inlined_call_operand.hbm [shape: f32[2,1,64], index: 13, kind: input, shape index: {}]
  %s14 = inlined_call_operand.vmem [shape: f32[2,64,32], index: 14, kind: input, shape index: {}]
  %s15 = inlined_call_operand.hbm [shape: f32[2,1,32], index: 15, kind: input, shape index: {}]
  %s16 = inlined_call_operand.vmem [shape: f32[32,32], index: 16, kind: input, shape index: {}]
  %s17 = inlined_call_operand.vmem [shape: f32[32,32], index: 17, kind: input, shape index: {}]
  %s18 = inlined_call_operand.hbm [shape: f32[32,32], index: 18, kind: input, shape index: {}]
  %s19 = inlined_call_operand.vmem [shape: f32[1,32], index: 19, kind: input, shape index: {}]
  %s20 = inlined_call_operand.hbm [shape: f32[2,8,32], index: 20, kind: output, shape index: {0}]
  %s21 = inlined_call_operand.hbm [shape: f32[2,8,8], index: 21, kind: output, shape index: {1}]
  %22 = xla_tuple %s20, %s21
  %s23 = sld [smem:[#allocation0]]
  $region173: #{trans_apply.1} parent=0
    _
  %s25 = ssub.s32 1, %s23
  %s26 = scalar_select 0, %s25, %s23
  $region1: #{trans_apply.1} parent=0
    #allocation2 [shape = 'u8[8192]{0}', space=vmem, size = 0x2000, scoped, tag = 'input window, operand 0']
    #allocation3 [shape = 's32[2]{0}', space=sflag, size = 0x8, scoped, tag = 'scoped memory for trans_apply.1']
    #allocation4 [shape = 's32[2]{0}', space=sflag, size = 0x8, scoped, tag = 'scoped memory for trans_apply.1']
    #allocation5 [shape = 'u8[8192]{0}', space=vmem, size = 0x2000, scoped, tag = 'input window, operand 1']
    #allocation6 [shape = 's32[2]{0}', space=sflag, size = 0x8, scoped, tag = 'scoped memory for trans_apply.1']
    #allocation7 [shape = 'u8[1024]{0}', space=vmem, size = 0x400, scoped, tag = 'input window, operand 2, single buffered']
    #allocation8 [shape = 'u8[1024]{0}', space=vmem, size = 0x400, scoped, tag = 'input window, operand 3, single buffered']
    #allocation9 [shape = 's32[1]{0}', space=sflag, size = 0x4, scoped, tag = 'scoped memory for trans_apply.1']
    #allocation10 [shape = 'u8[1024]{0}', space=vmem, size = 0x400, scoped, tag = 'input window, operand 5, single buffered']
    #allocation11 [shape = 'u8[1024]{0}', space=vmem, size = 0x400, scoped, tag = 'input window, operand 7, single buffered']
    #allocation12 [shape = 's32[1]{0}', space=sflag, size = 0x4, scoped, tag = 'scoped memory for trans_apply.1']
    #allocation13 [shape = 'u8[1024]{0}', space=vmem, size = 0x400, scoped, tag = 'input window, operand 9, single buffered']
    #allocation14 [shape = 'u8[1024]{0}', space=vmem, size = 0x400, scoped, tag = 'input window, operand 10, single buffered']
    #allocation15 [shape = 's32[1]{0}', space=sflag, size = 0x4, scoped, tag = 'scoped memory for trans_apply.1']
    #allocation16 [shape = 'u8[1024]{0}', space=vmem, size = 0x400, scoped, tag = 'input window, operand 11, single buffered']
    #allocation17 [shape = 'u8[32768]{0}', space=vmem, size = 0x8000, scoped, tag = 'input window, operand 12, single buffered']
    #allocation18 [shape = 's32[1]{0}', space=sflag, size = 0x4, scoped, tag = 'scoped memory for trans_apply.1']
    #allocation19 [shape = 'u8[1024]{0}', space=vmem, size = 0x400, scoped, tag = 'input window, operand 13, single buffered']
    #allocation20 [shape = 'u8[1024]{0}', space=vmem, size = 0x400, scoped, tag = 'input window, operand 15, single buffered']
    #allocation21 [shape = 's32[1]{0}', space=sflag, size = 0x4, scoped, tag = 'scoped memory for trans_apply.1']
    #allocation22 [shape = 'u8[16384]{0}', space=vmem, size = 0x4000, scoped, tag = 'input window, operand 18, single buffered']
    #allocation23 [shape = 'u8[8192]{0}', space=vmem, size = 0x2000, scoped, tag = 'output window, operand 0']
    #allocation24 [shape = 'u8[8192]{0}', space=vmem, size = 0x2000, scoped, tag = 'output window, operand 1']
    #allocation25 [shape = 's32[2]{0}', space=sflag, size = 0x8, scoped, tag = 'scoped memory for trans_apply.1']
    %27 = vsyncpa [#allocation3], 0
    %s28 = scalar_lea.sflag [#allocation3], 1
    %29 = vsyncpa %s28, 0
    %30 = vsyncpa [#allocation6], 0
    %s31 = scalar_lea.sflag [#allocation6], 1
    %32 = vsyncpa %s31, 0
    %33 = vsyncpa [#allocation9], 0
    %34 = vsyncpa [#allocation12], 0
    %35 = vsyncpa [#allocation15], 0
    %36 = vsyncpa [#allocation18], 0
    %37 = vsyncpa [#allocation21], 0
    %38 = vsyncpa [#allocation4], 0
    %s39 = scalar_lea.sflag [#allocation4], 1
    %40 = vsyncpa %s39, 0
    %41 = vsyncpa [#allocation25], 0
    %s42 = scalar_lea.sflag [#allocation25], 1
    %43 = vsyncpa %s42, 0
    loop: start=0, step=1, limit=4
    $region2: #{trans_apply.1} parent=1 // loop_pre_header
      _
    $region3: #{trans_apply.1} parent=1 // loop_header
      %s45 = sphi 0, %s49
      %p46 = scmp.ge.s32.totalorder %s45, 4
      %s55 = sphi 0, %s57
      %s58 = sphi 0, %s55
      %s59 = sphi 0, %s58
      %s75 = sphi 0, %s59
      %s81 = sphi 0, %s83
      %s84 = sphi 0, %s81
      %s85 = sphi 0, %s84
      %s101 = sphi 0, %s85
      %s105 = sphi 0, %s105
      %s107 = sphi 0, %s105
      %s108 = sphi 0, %s107
      %s122 = sphi 0, %s108
      %s126 = sphi 0, %s126
      %s128 = sphi 0, %s126
      %s129 = sphi 0, %s128
      %s143 = sphi 0, %s129
      %s147 = sphi 0, %s147
      %s149 = sphi 0, %s147
      %s150 = sphi 0, %s149
      %s164 = sphi 0, %s150
      %s168 = sphi 0, %s168
      %s170 = sphi 0, %s168
      %s171 = sphi 0, %s170
      %s185 = sphi 0, %s171
      %s189 = sphi 0, %s189
      %s191 = sphi 0, %s189
      %s192 = sphi 0, %s191
      %s206 = sphi 0, %s192
      %s210 = sphi 0, %s210
      %s212 = sphi 0, %s210
      %s213 = sphi 0, %s212
      %s227 = sphi 0, %s213
      %s231 = sphi 0, %s231
      %s233 = sphi 0, %s231
      %s234 = sphi 0, %s233
      %s248 = sphi 0, %s234
      %s252 = sphi 0, %s252
      %s254 = sphi 0, %s252
      %s255 = sphi 0, %s254
      %s269 = sphi 0, %s255
      %s273 = sphi 0, %s273
      %s275 = sphi 0, %s273
      %s276 = sphi 0, %s275
      %s290 = sphi 0, %s276
      %s294 = sphi 0, %s294
      %s296 = sphi 0, %s294
      %s297 = sphi 0, %s296
      %s311 = sphi 0, %s297
      %s315 = sphi 0, %s315
      %s317 = sphi 0, %s315
      %s318 = sphi 0, %s317
      %s332 = sphi 0, %s318
      %s336 = sphi 0, %s336
      %s338 = sphi 0, %s336
      %s339 = sphi 0, %s338
      %s353 = sphi 0, %s339
      %s357 = sphi 0, %s357
      %s359 = sphi 0, %s357
      %s360 = sphi 0, %s359
      %s374 = sphi 0, %s360
      %s378 = sphi 0, %s378
      %s380 = sphi 0, %s378
      %s381 = sphi 0, %s380
      %s395 = sphi 0, %s381
      %s399 = sphi 0, %s399
      %s401 = sphi 0, %s399
      %s402 = sphi 0, %s401
      %s416 = sphi 0, %s402
      %s420 = sphi 0, %s420
      %s422 = sphi 0, %s420
      %s423 = sphi 0, %s422
      %s437 = sphi 0, %s423
      %s441 = sphi 0, %s441
      %s443 = sphi 0, %s441
      %s444 = sphi 0, %s443
      %s458 = sphi 0, %s444
      %s462 = sphi 0, %s462
      %s464 = sphi 0, %s462
      %s465 = sphi 0, %s464
      %s479 = sphi 0, %s465
      %s485 = sphi 0, %s487
      %s488 = sphi 0, %s485
      %s489 = sphi 0, %s488
      %s505 = sphi 0, %s489
      %s511 = sphi 0, %s513
      %s514 = sphi 0, %s511
      %s515 = sphi 0, %s514
      %s531 = sphi 0, %s515
    $region4: #{trans_apply.1} parent=1 // loop_header_branch
      %48 = sbr.rel (%p46) target = $region8
    $region5: #{trans_apply.1} parent=1 // loop_body
      %s50 = ssub.s32 %s45, 1
      %s51 = ssub.s32 %s45, 2
      %s52 = sadd.s32 %s45, 1
      %s53 = ssub.s32 %s45, %s52
      %p54 = scmp.eq.s32.totalorder %s53, 0
      %s56 = sadd.s32 %s55, 1
      %s57 = scalar_select %p54, %s55, %s56
      %p60 = pneg %p54
      %p61 = scmp.eq.s32.totalorder %s45, 1
      %p62 = por %p60, %p61
      %p63 = scmp.ne.s32.totalorder %s55, %s58
      %p64 = scmp.eq.s32.totalorder %s45, 0
      %p65 = por %p63, %p64
      %p66 = scmp.ne.s32.totalorder %s55, %s58
      %p67 = scmp.eq.s32.totalorder %s50, 1
      %p68 = por %p66, %p67
      %p69 = scmp.ne.s32.totalorder %s58, %s59
      %p70 = scmp.eq.s32.totalorder %s50, 0
      %p71 = por %p69, %p70
      %p72 = scmp.ne.s32.totalorder %s58, %s59
      %p73 = scmp.eq.s32.totalorder %s51, 1
      %p74 = por %p72, %p73
      %p76 = scmp.ne.s32.totalorder %s59, %s75
      %p77 = scmp.eq.s32.totalorder %s51, 0
      %p78 = por %p76, %p77
      %s79 = ssub.s32 %s45, %s52
      %p80 = scmp.eq.s32.totalorder %s79, 0
      %s82 = sadd.s32 %s81, 1
      %s83 = scalar_select %p80, %s81, %s82
      %p86 = pneg %p80
      %p87 = scmp.eq.s32.totalorder %s45, 1
      %p88 = por %p86, %p87
      %p89 = scmp.ne.s32.totalorder %s81, %s84
      %p90 = scmp.eq.s32.totalorder %s45, 0
      %p91 = por %p89, %p90
      %p92 = scmp.ne.s32.totalorder %s81, %s84
      %p93 = scmp.eq.s32.totalorder %s50, 1
      %p94 = por %p92, %p93
      %p95 = scmp.ne.s32.totalorder %s84, %s85
      %p96 = scmp.eq.s32.totalorder %s50, 0
      %p97 = por %p95, %p96
      %p98 = scmp.ne.s32.totalorder %s84, %s85
      %p99 = scmp.eq.s32.totalorder %s51, 1
      %p100 = por %p98, %p99
      %p102 = scmp.ne.s32.totalorder %s85, %s101
      %p103 = scmp.eq.s32.totalorder %s51, 0
      %p104 = por %p102, %p103
      %s106 = sadd.s32 %s105, 1
      %p109 = scmp.eq.s32.totalorder %s45, 1
      %p110 = scmp.ne.s32.totalorder %s105, %s107
      %p111 = scmp.eq.s32.totalorder %s45, 0
      %p112 = por %p110, %p111
      %p113 = scmp.ne.s32.totalorder %s105, %s107
      %p114 = scmp.eq.s32.totalorder %s50, 1
      %p115 = por %p113, %p114
      %p116 = scmp.ne.s32.totalorder %s107, %s108
      %p117 = scmp.eq.s32.totalorder %s50, 0
      %p118 = por %p116, %p117
      %p119 = scmp.ne.s32.totalorder %s107, %s108
      %p120 = scmp.eq.s32.totalorder %s51, 1
      %p121 = por %p119, %p120
      %p123 = scmp.ne.s32.totalorder %s108, %s122
      %p124 = scmp.eq.s32.totalorder %s51, 0
      %p125 = por %p123, %p124
      %s127 = sadd.s32 %s126, 1
      %p130 = scmp.eq.s32.totalorder %s45, 1
      %p131 = scmp.ne.s32.totalorder %s126, %s128
      %p132 = scmp.eq.s32.totalorder %s45, 0
      %p133 = por %p131, %p132
      %p134 = scmp.ne.s32.totalorder %s126, %s128
      %p135 = scmp.eq.s32.totalorder %s50, 1
      %p136 = por %p134, %p135
      %p137 = scmp.ne.s32.totalorder %s128, %s129
      %p138 = scmp.eq.s32.totalorder %s50, 0
      %p139 = por %p137, %p138
      %p140 = scmp.ne.s32.totalorder %s128, %s129
      %p141 = scmp.eq.s32.totalorder %s51, 1
      %p142 = por %p140, %p141
      %p144 = scmp.ne.s32.totalorder %s129, %s143
      %p145 = scmp.eq.s32.totalorder %s51, 0
      %p146 = por %p144, %p145
      %s148 = sadd.s32 %s147, 1
      %p151 = scmp.eq.s32.totalorder %s45, 1
      %p152 = scmp.ne.s32.totalorder %s147, %s149
      %p153 = scmp.eq.s32.totalorder %s45, 0
      %p154 = por %p152, %p153
      %p155 = scmp.ne.s32.totalorder %s147, %s149
      %p156 = scmp.eq.s32.totalorder %s50, 1
      %p157 = por %p155, %p156
      %p158 = scmp.ne.s32.totalorder %s149, %s150
      %p159 = scmp.eq.s32.totalorder %s50, 0
      %p160 = por %p158, %p159
      %p161 = scmp.ne.s32.totalorder %s149, %s150
      %p162 = scmp.eq.s32.totalorder %s51, 1
      %p163 = por %p161, %p162
      %p165 = scmp.ne.s32.totalorder %s150, %s164
      %p166 = scmp.eq.s32.totalorder %s51, 0
      %p167 = por %p165, %p166
      %s169 = sadd.s32 %s168, 1
      %p172 = scmp.eq.s32.totalorder %s45, 1
      %p173 = scmp.ne.s32.totalorder %s168, %s170
      %p174 = scmp.eq.s32.totalorder %s45, 0
      %p175 = por %p173, %p174
      %p176 = scmp.ne.s32.totalorder %s168, %s170
      %p177 = scmp.eq.s32.totalorder %s50, 1
      %p178 = por %p176, %p177
      %p179 = scmp.ne.s32.totalorder %s170, %s171
      %p180 = scmp.eq.s32.totalorder %s50, 0
      %p181 = por %p179, %p180
      %p182 = scmp.ne.s32.totalorder %s170, %s171
      %p183 = scmp.eq.s32.totalorder %s51, 1
      %p184 = por %p182, %p183
      %p186 = scmp.ne.s32.totalorder %s171, %s185
      %p187 = scmp.eq.s32.totalorder %s51, 0
      %p188 = por %p186, %p187
      %s190 = sadd.s32 %s189, 1
      %p193 = scmp.eq.s32.totalorder %s45, 1
      %p194 = scmp.ne.s32.totalorder %s189, %s191
      %p195 = scmp.eq.s32.totalorder %s45, 0
      %p196 = por %p194, %p195
      %p197 = scmp.ne.s32.totalorder %s189, %s191
      %p198 = scmp.eq.s32.totalorder %s50, 1
      %p199 = por %p197, %p198
      %p200 = scmp.ne.s32.totalorder %s191, %s192
      %p201 = scmp.eq.s32.totalorder %s50, 0
      %p202 = por %p200, %p201
      %p203 = scmp.ne.s32.totalorder %s191, %s192
      %p204 = scmp.eq.s32.totalorder %s51, 1
      %p205 = por %p203, %p204
      %p207 = scmp.ne.s32.totalorder %s192, %s206
      %p208 = scmp.eq.s32.totalorder %s51, 0
      %p209 = por %p207, %p208
      %s211 = sadd.s32 %s210, 1
      %p214 = scmp.eq.s32.totalorder %s45, 1
      %p215 = scmp.ne.s32.totalorder %s210, %s212
      %p216 = scmp.eq.s32.totalorder %s45, 0
      %p217 = por %p215, %p216
      %p218 = scmp.ne.s32.totalorder %s210, %s212
      %p219 = scmp.eq.s32.totalorder %s50, 1
      %p220 = por %p218, %p219
      %p221 = scmp.ne.s32.totalorder %s212, %s213
      %p222 = scmp.eq.s32.totalorder %s50, 0
      %p223 = por %p221, %p222
      %p224 = scmp.ne.s32.totalorder %s212, %s213
      %p225 = scmp.eq.s32.totalorder %s51, 1
      %p226 = por %p224, %p225
      %p228 = scmp.ne.s32.totalorder %s213, %s227
      %p229 = scmp.eq.s32.totalorder %s51, 0
      %p230 = por %p228, %p229
      %s232 = sadd.s32 %s231, 1
      %p235 = scmp.eq.s32.totalorder %s45, 1
      %p236 = scmp.ne.s32.totalorder %s231, %s233
      %p237 = scmp.eq.s32.totalorder %s45, 0
      %p238 = por %p236, %p237
      %p239 = scmp.ne.s32.totalorder %s231, %s233
      %p240 = scmp.eq.s32.totalorder %s50, 1
      %p241 = por %p239, %p240
      %p242 = scmp.ne.s32.totalorder %s233, %s234
      %p243 = scmp.eq.s32.totalorder %s50, 0
      %p244 = por %p242, %p243
      %p245 = scmp.ne.s32.totalorder %s233, %s234
      %p246 = scmp.eq.s32.totalorder %s51, 1
      %p247 = por %p245, %p246
      %p249 = scmp.ne.s32.totalorder %s234, %s248
      %p250 = scmp.eq.s32.totalorder %s51, 0
      %p251 = por %p249, %p250
      %s253 = sadd.s32 %s252, 1
      %p256 = scmp.eq.s32.totalorder %s45, 1
      %p257 = scmp.ne.s32.totalorder %s252, %s254
      %p258 = scmp.eq.s32.totalorder %s45, 0
      %p259 = por %p257, %p258
      %p260 = scmp.ne.s32.totalorder %s252, %s254
      %p261 = scmp.eq.s32.totalorder %s50, 1
      %p262 = por %p260, %p261
      %p263 = scmp.ne.s32.totalorder %s254, %s255
      %p264 = scmp.eq.s32.totalorder %s50, 0
      %p265 = por %p263, %p264
      %p266 = scmp.ne.s32.totalorder %s254, %s255
      %p267 = scmp.eq.s32.totalorder %s51, 1
      %p268 = por %p266, %p267
      %p270 = scmp.ne.s32.totalorder %s255, %s269
      %p271 = scmp.eq.s32.totalorder %s51, 0
      %p272 = por %p270, %p271
      %s274 = sadd.s32 %s273, 1
      %p277 = scmp.eq.s32.totalorder %s45, 1
      %p278 = scmp.ne.s32.totalorder %s273, %s275
      %p279 = scmp.eq.s32.totalorder %s45, 0
      %p280 = por %p278, %p279
      %p281 = scmp.ne.s32.totalorder %s273, %s275
      %p282 = scmp.eq.s32.totalorder %s50, 1
      %p283 = por %p281, %p282
      %p284 = scmp.ne.s32.totalorder %s275, %s276
      %p285 = scmp.eq.s32.totalorder %s50, 0
      %p286 = por %p284, %p285
      %p287 = scmp.ne.s32.totalorder %s275, %s276
      %p288 = scmp.eq.s32.totalorder %s51, 1
      %p289 = por %p287, %p288
      %p291 = scmp.ne.s32.totalorder %s276, %s290
      %p292 = scmp.eq.s32.totalorder %s51, 0
      %p293 = por %p291, %p292
      %s295 = sadd.s32 %s294, 1
      %p298 = scmp.eq.s32.totalorder %s45, 1
      %p299 = scmp.ne.s32.totalorder %s294, %s296
      %p300 = scmp.eq.s32.totalorder %s45, 0
      %p301 = por %p299, %p300
      %p302 = scmp.ne.s32.totalorder %s294, %s296
      %p303 = scmp.eq.s32.totalorder %s50, 1
      %p304 = por %p302, %p303
      %p305 = scmp.ne.s32.totalorder %s296, %s297
      %p306 = scmp.eq.s32.totalorder %s50, 0
      %p307 = por %p305, %p306
      %p308 = scmp.ne.s32.totalorder %s296, %s297
      %p309 = scmp.eq.s32.totalorder %s51, 1
      %p310 = por %p308, %p309
      %p312 = scmp.ne.s32.totalorder %s297, %s311
      %p313 = scmp.eq.s32.totalorder %s51, 0
      %p314 = por %p312, %p313
      %s316 = sadd.s32 %s315, 1
      %p319 = scmp.eq.s32.totalorder %s45, 1
      %p320 = scmp.ne.s32.totalorder %s315, %s317
      %p321 = scmp.eq.s32.totalorder %s45, 0
      %p322 = por %p320, %p321
      %p323 = scmp.ne.s32.totalorder %s315, %s317
      %p324 = scmp.eq.s32.totalorder %s50, 1
      %p325 = por %p323, %p324
      %p326 = scmp.ne.s32.totalorder %s317, %s318
      %p327 = scmp.eq.s32.totalorder %s50, 0
      %p328 = por %p326, %p327
      %p329 = scmp.ne.s32.totalorder %s317, %s318
      %p330 = scmp.eq.s32.totalorder %s51, 1
      %p331 = por %p329, %p330
      %p333 = scmp.ne.s32.totalorder %s318, %s332
      %p334 = scmp.eq.s32.totalorder %s51, 0
      %p335 = por %p333, %p334
      %s337 = sadd.s32 %s336, 1
      %p340 = scmp.eq.s32.totalorder %s45, 1
      %p341 = scmp.ne.s32.totalorder %s336, %s338
      %p342 = scmp.eq.s32.totalorder %s45, 0
      %p343 = por %p341, %p342
      %p344 = scmp.ne.s32.totalorder %s336, %s338
      %p345 = scmp.eq.s32.totalorder %s50, 1
      %p346 = por %p344, %p345
      %p347 = scmp.ne.s32.totalorder %s338, %s339
      %p348 = scmp.eq.s32.totalorder %s50, 0
      %p349 = por %p347, %p348
      %p350 = scmp.ne.s32.totalorder %s338, %s339
      %p351 = scmp.eq.s32.totalorder %s51, 1
      %p352 = por %p350, %p351
      %p354 = scmp.ne.s32.totalorder %s339, %s353
      %p355 = scmp.eq.s32.totalorder %s51, 0
      %p356 = por %p354, %p355
      %s358 = sadd.s32 %s357, 1
      %p361 = scmp.eq.s32.totalorder %s45, 1
      %p362 = scmp.ne.s32.totalorder %s357, %s359
      %p363 = scmp.eq.s32.totalorder %s45, 0
      %p364 = por %p362, %p363
      %p365 = scmp.ne.s32.totalorder %s357, %s359
      %p366 = scmp.eq.s32.totalorder %s50, 1
      %p367 = por %p365, %p366
      %p368 = scmp.ne.s32.totalorder %s359, %s360
      %p369 = scmp.eq.s32.totalorder %s50, 0
      %p370 = por %p368, %p369
      %p371 = scmp.ne.s32.totalorder %s359, %s360
      %p372 = scmp.eq.s32.totalorder %s51, 1
      %p373 = por %p371, %p372
      %p375 = scmp.ne.s32.totalorder %s360, %s374
      %p376 = scmp.eq.s32.totalorder %s51, 0
      %p377 = por %p375, %p376
      %s379 = sadd.s32 %s378, 1
      %p382 = scmp.eq.s32.totalorder %s45, 1
      %p383 = scmp.ne.s32.totalorder %s378, %s380
      %p384 = scmp.eq.s32.totalorder %s45, 0
      %p385 = por %p383, %p384
      %p386 = scmp.ne.s32.totalorder %s378, %s380
      %p387 = scmp.eq.s32.totalorder %s50, 1
      %p388 = por %p386, %p387
      %p389 = scmp.ne.s32.totalorder %s380, %s381
      %p390 = scmp.eq.s32.totalorder %s50, 0
      %p391 = por %p389, %p390
      %p392 = scmp.ne.s32.totalorder %s380, %s381
      %p393 = scmp.eq.s32.totalorder %s51, 1
      %p394 = por %p392, %p393
      %p396 = scmp.ne.s32.totalorder %s381, %s395
      %p397 = scmp.eq.s32.totalorder %s51, 0
      %p398 = por %p396, %p397
      %s400 = sadd.s32 %s399, 1
      %p403 = scmp.eq.s32.totalorder %s45, 1
      %p404 = scmp.ne.s32.totalorder %s399, %s401
      %p405 = scmp.eq.s32.totalorder %s45, 0
      %p406 = por %p404, %p405
      %p407 = scmp.ne.s32.totalorder %s399, %s401
      %p408 = scmp.eq.s32.totalorder %s50, 1
      %p409 = por %p407, %p408
      %p410 = scmp.ne.s32.totalorder %s401, %s402
      %p411 = scmp.eq.s32.totalorder %s50, 0
      %p412 = por %p410, %p411
      %p413 = scmp.ne.s32.totalorder %s401, %s402
      %p414 = scmp.eq.s32.totalorder %s51, 1
      %p415 = por %p413, %p414
      %p417 = scmp.ne.s32.totalorder %s402, %s416
      %p418 = scmp.eq.s32.totalorder %s51, 0
      %p419 = por %p417, %p418
      %s421 = sadd.s32 %s420, 1
      %p424 = scmp.eq.s32.totalorder %s45, 1
      %p425 = scmp.ne.s32.totalorder %s420, %s422
      %p426 = scmp.eq.s32.totalorder %s45, 0
      %p427 = por %p425, %p426
      %p428 = scmp.ne.s32.totalorder %s420, %s422
      %p429 = scmp.eq.s32.totalorder %s50, 1
      %p430 = por %p428, %p429
      %p431 = scmp.ne.s32.totalorder %s422, %s423
      %p432 = scmp.eq.s32.totalorder %s50, 0
      %p433 = por %p431, %p432
      %p434 = scmp.ne.s32.totalorder %s422, %s423
      %p435 = scmp.eq.s32.totalorder %s51, 1
      %p436 = por %p434, %p435
      %p438 = scmp.ne.s32.totalorder %s423, %s437
      %p439 = scmp.eq.s32.totalorder %s51, 0
      %p440 = por %p438, %p439
      %s442 = sadd.s32 %s441, 1
      %p445 = scmp.eq.s32.totalorder %s45, 1
      %p446 = scmp.ne.s32.totalorder %s441, %s443
      %p447 = scmp.eq.s32.totalorder %s45, 0
      %p448 = por %p446, %p447
      %p449 = scmp.ne.s32.totalorder %s441, %s443
      %p450 = scmp.eq.s32.totalorder %s50, 1
      %p451 = por %p449, %p450
      %p452 = scmp.ne.s32.totalorder %s443, %s444
      %p453 = scmp.eq.s32.totalorder %s50, 0
      %p454 = por %p452, %p453
      %p455 = scmp.ne.s32.totalorder %s443, %s444
      %p456 = scmp.eq.s32.totalorder %s51, 1
      %p457 = por %p455, %p456
      %p459 = scmp.ne.s32.totalorder %s444, %s458
      %p460 = scmp.eq.s32.totalorder %s51, 0
      %p461 = por %p459, %p460
      %s463 = sadd.s32 %s462, 1
      %p466 = scmp.eq.s32.totalorder %s45, 1
      %p467 = scmp.ne.s32.totalorder %s462, %s464
      %p468 = scmp.eq.s32.totalorder %s45, 0
      %p469 = por %p467, %p468
      %p470 = scmp.ne.s32.totalorder %s462, %s464
      %p471 = scmp.eq.s32.totalorder %s50, 1
      %p472 = por %p470, %p471
      %p473 = scmp.ne.s32.totalorder %s464, %s465
      %p474 = scmp.eq.s32.totalorder %s50, 0
      %p475 = por %p473, %p474
      %p476 = scmp.ne.s32.totalorder %s464, %s465
      %p477 = scmp.eq.s32.totalorder %s51, 1
      %p478 = por %p476, %p477
      %p480 = scmp.ne.s32.totalorder %s465, %s479
      %p481 = scmp.eq.s32.totalorder %s51, 0
      %p482 = por %p480, %p481
      %s483 = ssub.s32 %s45, %s52
      %p484 = scmp.eq.s32.totalorder %s483, 0
      %s486 = sadd.s32 %s485, 1
      %s487 = scalar_select %p484, %s485, %s486
      %p490 = pneg %p484
      %p491 = scmp.eq.s32.totalorder %s45, 1
      %p492 = por %p490, %p491
      %p493 = scmp.ne.s32.totalorder %s485, %s488
      %p494 = scmp.eq.s32.totalorder %s45, 0
      %p495 = por %p493, %p494
      %p496 = scmp.ne.s32.totalorder %s485, %s488
      %p497 = scmp.eq.s32.totalorder %s50, 1
      %p498 = por %p496, %p497
      %p499 = scmp.ne.s32.totalorder %s488, %s489
      %p500 = scmp.eq.s32.totalorder %s50, 0
      %p501 = por %p499, %p500
      %p502 = scmp.ne.s32.totalorder %s488, %s489
      %p503 = scmp.eq.s32.totalorder %s51, 1
      %p504 = por %p502, %p503
      %p506 = scmp.ne.s32.totalorder %s489, %s505
      %p507 = scmp.eq.s32.totalorder %s51, 0
      %p508 = por %p506, %p507
      %s509 = ssub.s32 %s45, %s52
      %p510 = scmp.eq.s32.totalorder %s509, 0
      %s512 = sadd.s32 %s511, 1
      %s513 = scalar_select %p510, %s511, %s512
      %p516 = pneg %p510
      %p517 = scmp.eq.s32.totalorder %s45, 1
      %p518 = por %p516, %p517
      %p519 = scmp.ne.s32.totalorder %s511, %s514
      %p520 = scmp.eq.s32.totalorder %s45, 0
      %p521 = por %p519, %p520
      %p522 = scmp.ne.s32.totalorder %s511, %s514
      %p523 = scmp.eq.s32.totalorder %s50, 1
      %p524 = por %p522, %p523
      %p525 = scmp.ne.s32.totalorder %s514, %s515
      %p526 = scmp.eq.s32.totalorder %s50, 0
      %p527 = por %p525, %p526
      %p528 = scmp.ne.s32.totalorder %s514, %s515
      %p529 = scmp.eq.s32.totalorder %s51, 1
      %p530 = por %p528, %p529
      %p532 = scmp.ne.s32.totalorder %s515, %s531
      %p533 = scmp.eq.s32.totalorder %s51, 0
      %p534 = por %p532, %p533
      %p535 = scmp.le.s32.totalorder 1, %s45
      %p536 = scmp.lt.s32.totalorder %s45, 3
      %p537 = pnand %p535, %p536
      %p538 = pneg %p537
      // Predicated region
      $region9: #{trans_apply.1} parent=5 // pred_check
        _
      $region10: #{trans_apply.1} parent=5 // pred_check_branch
        %540 = sbr.rel (%p537) target = $region12
      $region11: #{trans_apply.1} parent=5 // pred_region
        %s541 = ssub.s32 %s45, 1
        // Predicated region
        $region13: #{trans_apply.1} parent=11 // pred_check
          %p542 = pneg %p118
        $region14: #{trans_apply.1} parent=11 // pred_check_branch
          %544 = sbr.rel (%p542) target = $region16
        $region15: #{trans_apply.1} parent=11 // pred_region
          %s546 = ssub.s32 32, 32
          %547 = vsyncadd [#allocation6], %s546
          %s548 = sshll.u32 [#allocation7], 4
          %s549 = int_to_ptr.vmem [resolvable:$true] %s548
          %554 = dma.hbm_to_vmem [thread:$0]  %s2, 32, %s549, [#allocation6], 16, 16, 1
        $region16: #{trans_apply.1} parent=11 // pred_fallthru
          _
        // Predicated region
        $region17: #{trans_apply.1} parent=11 // pred_check
          %p555 = pneg %p139
        $region18: #{trans_apply.1} parent=11 // pred_check_branch
          %557 = sbr.rel (%p555) target = $region20
        $region19: #{trans_apply.1} parent=11 // pred_region
          %s559 = ssub.s32 32, 32
          %560 = vsyncadd [#allocation9], %s559
          %s561 = sshll.u32 [#allocation8], 4
          %s562 = int_to_ptr.vmem [resolvable:$true] %s561
          %567 = dma.hbm_to_vmem [thread:$0]  %s3, 32, %s562, [#allocation9], 16, 16, 1
        $region20: #{trans_apply.1} parent=11 // pred_fallthru
          _
        // Predicated region
        $region21: #{trans_apply.1} parent=11 // pred_check
          %p568 = pneg %p160
        $region22: #{trans_apply.1} parent=11 // pred_check_branch
          %570 = sbr.rel (%p568) target = $region24
        $region23: #{trans_apply.1} parent=11 // pred_region
          _
        $region24: #{trans_apply.1} parent=11 // pred_fallthru
          _
        // Predicated region
        $region25: #{trans_apply.1} parent=11 // pred_check
          %p571 = pneg %p181
        $region26: #{trans_apply.1} parent=11 // pred_check_branch
          %573 = sbr.rel (%p571) target = $region28
        $region27: #{trans_apply.1} parent=11 // pred_region
          %s575 = ssub.s32 32, 32
          %576 = vsyncadd [#allocation9], %s575
          %s577 = sshll.u32 [#allocation10], 4
          %s578 = int_to_ptr.vmem [resolvable:$true] %s577
          %583 = dma.hbm_to_vmem [thread:$0]  %s5, 32, %s578, [#allocation9], 16, 16, 1
        $region28: #{trans_apply.1} parent=11 // pred_fallthru
          _
        // Predicated region
        $region29: #{trans_apply.1} parent=11 // pred_check
          %p584 = pneg %p202
        $region30: #{trans_apply.1} parent=11 // pred_check_branch
          %586 = sbr.rel (%p584) target = $region32
        $region31: #{trans_apply.1} parent=11 // pred_region
          _
        $region32: #{trans_apply.1} parent=11 // pred_fallthru
          _
        // Predicated region
        $region33: #{trans_apply.1} parent=11 // pred_check
          %p587 = pneg %p223
        $region34: #{trans_apply.1} parent=11 // pred_check_branch
          %589 = sbr.rel (%p587) target = $region36
        $region35: #{trans_apply.1} parent=11 // pred_region
          %s591 = ssub.s32 32, 32
          %592 = vsyncadd [#allocation12], %s591
          %s593 = sshll.u32 [#allocation11], 4
          %s594 = int_to_ptr.vmem [resolvable:$true] %s593
          %599 = dma.hbm_to_vmem [thread:$0]  %s7, 32, %s594, [#allocation12], 16, 16, 1
        $region36: #{trans_apply.1} parent=11 // pred_fallthru
          _
        // Predicated region
        $region37: #{trans_apply.1} parent=11 // pred_check
          %p600 = pneg %p244
        $region38: #{trans_apply.1} parent=11 // pred_check_branch
          %602 = sbr.rel (%p600) target = $region40
        $region39: #{trans_apply.1} parent=11 // pred_region
          _
        $region40: #{trans_apply.1} parent=11 // pred_fallthru
          _
        // Predicated region
        $region41: #{trans_apply.1} parent=11 // pred_check
          %p603 = pneg %p265
        $region42: #{trans_apply.1} parent=11 // pred_check_branch
          %605 = sbr.rel (%p603) target = $region44
        $region43: #{trans_apply.1} parent=11 // pred_region
          %s607 = ssub.s32 32, 32
          %608 = vsyncadd [#allocation12], %s607
          %s609 = sshll.u32 [#allocation13], 4
          %s610 = int_to_ptr.vmem [resolvable:$true] %s609
          %615 = dma.hbm_to_vmem [thread:$0]  %s9, 32, %s610, [#allocation12], 16, 16, 1
        $region44: #{trans_apply.1} parent=11 // pred_fallthru
          _
        // Predicated region
        $region45: #{trans_apply.1} parent=11 // pred_check
          %p616 = pneg %p286
        $region46: #{trans_apply.1} parent=11 // pred_check_branch
          %618 = sbr.rel (%p616) target = $region48
        $region47: #{trans_apply.1} parent=11 // pred_region
          %s620 = ssub.s32 32, 32
          %621 = vsyncadd [#allocation15], %s620
          %s622 = sshll.u32 [#allocation14], 4
          %s623 = int_to_ptr.vmem [resolvable:$true] %s622
          %628 = dma.hbm_to_vmem [thread:$0]  %s10, 32, %s623, [#allocation15], 16, 16, 1
        $region48: #{trans_apply.1} parent=11 // pred_fallthru
          _
        // Predicated region
        $region49: #{trans_apply.1} parent=11 // pred_check
          %p629 = pneg %p307
        $region50: #{trans_apply.1} parent=11 // pred_check_branch
          %631 = sbr.rel (%p629) target = $region52
        $region51: #{trans_apply.1} parent=11 // pred_region
          %s633 = ssub.s32 32, 32
          %634 = vsyncadd [#allocation15], %s633
          %s635 = sshll.u32 [#allocation16], 4
          %s636 = int_to_ptr.vmem [resolvable:$true] %s635
          %641 = dma.hbm_to_vmem [thread:$0]  %s11, 32, %s636, [#allocation15], 16, 16, 1
        $region52: #{trans_apply.1} parent=11 // pred_fallthru
          _
        // Predicated region
        $region53: #{trans_apply.1} parent=11 // pred_check
          %p642 = pneg %p328
        $region54: #{trans_apply.1} parent=11 // pred_check_branch
          %644 = sbr.rel (%p642) target = $region56
        $region55: #{trans_apply.1} parent=11 // pred_region
          %s646 = ssub.s32 1024, 1024
          %647 = vsyncadd [#allocation18], %s646
          %s648 = sshll.u32 [#allocation17], 4
          %s649 = int_to_ptr.vmem [resolvable:$true] %s648
          %654 = dma.hbm_to_vmem [thread:$0]  %s12, 1024, %s649, [#allocation18], 128, 128, 8
        $region56: #{trans_apply.1} parent=11 // pred_fallthru
          _
        // Predicated region
        $region57: #{trans_apply.1} parent=11 // pred_check
          %p655 = pneg %p349
        $region58: #{trans_apply.1} parent=11 // pred_check_branch
          %657 = sbr.rel (%p655) target = $region60
        $region59: #{trans_apply.1} parent=11 // pred_region
          %s659 = ssub.s32 32, 32
          %660 = vsyncadd [#allocation18], %s659
          %s661 = sshll.u32 [#allocation19], 4
          %s662 = int_to_ptr.vmem [resolvable:$true] %s661
          %667 = dma.hbm_to_vmem [thread:$0]  %s13, 32, %s662, [#allocation18], 16, 16, 1
        $region60: #{trans_apply.1} parent=11 // pred_fallthru
          _
        // Predicated region
        $region61: #{trans_apply.1} parent=11 // pred_check
          %p668 = pneg %p370
        $region62: #{trans_apply.1} parent=11 // pred_check_branch
          %670 = sbr.rel (%p668) target = $region64
        $region63: #{trans_apply.1} parent=11 // pred_region
          _
        $region64: #{trans_apply.1} parent=11 // pred_fallthru
          _
        // Predicated region
        $region65: #{trans_apply.1} parent=11 // pred_check
          %p671 = pneg %p391
        $region66: #{trans_apply.1} parent=11 // pred_check_branch
          %673 = sbr.rel (%p671) target = $region68
        $region67: #{trans_apply.1} parent=11 // pred_region
          %s675 = ssub.s32 32, 32
          %676 = vsyncadd [#allocation21], %s675
          %s677 = sshll.u32 [#allocation20], 4
          %s678 = int_to_ptr.vmem [resolvable:$true] %s677
          %683 = dma.hbm_to_vmem [thread:$0]  %s15, 32, %s678, [#allocation21], 16, 16, 1
        $region68: #{trans_apply.1} parent=11 // pred_fallthru
          _
        // Predicated region
        $region69: #{trans_apply.1} parent=11 // pred_check
          %p684 = pneg %p412
        $region70: #{trans_apply.1} parent=11 // pred_check_branch
          %686 = sbr.rel (%p684) target = $region72
        $region71: #{trans_apply.1} parent=11 // pred_region
          _
        $region72: #{trans_apply.1} parent=11 // pred_fallthru
          _
        // Predicated region
        $region73: #{trans_apply.1} parent=11 // pred_check
          %p687 = pneg %p433
        $region74: #{trans_apply.1} parent=11 // pred_check_branch
          %689 = sbr.rel (%p687) target = $region76
        $region75: #{trans_apply.1} parent=11 // pred_region
          _
        $region76: #{trans_apply.1} parent=11 // pred_fallthru
          _
        // Predicated region
        $region77: #{trans_apply.1} parent=11 // pred_check
          %p690 = pneg %p454
        $region78: #{trans_apply.1} parent=11 // pred_check_branch
          %692 = sbr.rel (%p690) target = $region80
        $region79: #{trans_apply.1} parent=11 // pred_region
          %s694 = ssub.s32 512, 512
          %695 = vsyncadd [#allocation21], %s694
          %s696 = sshll.u32 [#allocation22], 4
          %s697 = int_to_ptr.vmem [resolvable:$true] %s696
          %702 = dma.hbm_to_vmem [thread:$0]  %s18, 512, %s697, [#allocation21], 128, 128, 8
        $region80: #{trans_apply.1} parent=11 // pred_fallthru
          _
        // Predicated region
        $region81: #{trans_apply.1} parent=11 // pred_check
          %p703 = pneg %p475
        $region82: #{trans_apply.1} parent=11 // pred_check_branch
          %705 = sbr.rel (%p703) target = $region84
        $region83: #{trans_apply.1} parent=11 // pred_region
          _
        $region84: #{trans_apply.1} parent=11 // pred_fallthru
          _
      $region12: #{trans_apply.1} parent=5 // pred_fallthru
        _
      %p706 = scmp.lt.s32.totalorder %s45, 2
      // Predicated region
      $region85: #{trans_apply.1} parent=5 // pred_check
        %p707 = pneg %p706
      $region86: #{trans_apply.1} parent=5 // pred_check_branch
        %709 = sbr.rel (%p707) target = $region88
      $region87: #{trans_apply.1} parent=5 // pred_region
        // Predicated region
        $region89: #{trans_apply.1} parent=87 // pred_check
          %p710 = pneg %p65
        $region90: #{trans_apply.1} parent=87 // pred_check_branch
          %712 = sbr.rel (%p710) target = $region92
        $region91: #{trans_apply.1} parent=87 // pred_region
          %s713 = sand.u32 %s55, 1
          %s714 = scalar_lea.sflag [#allocation3], %s713
          %s715 = sand.u32 %s55, 1
          %s716 = smul.addr %s715, 8
          %s717 = scalar_lea.vmem [#allocation2], %s716
          %s719 = ssub.s32 128, 128
          %720 = vsyncadd %s714, %s719
          %s721 = smul.addr %s45, 128
          %s722 = scalar_lea.hbm %s0, %s721
          %s724 = sshll.u32 %s717, 4
          %s725 = int_to_ptr.vmem [resolvable:$true] %s724
          %727 = dma.hbm_to_vmem [thread:$0]  %s722, 128, %s725, %s714
        $region92: #{trans_apply.1} parent=87 // pred_fallthru
          _
        // Predicated region
        $region93: #{trans_apply.1} parent=87 // pred_check
          %p728 = pneg %p91
        $region94: #{trans_apply.1} parent=87 // pred_check_branch
          %730 = sbr.rel (%p728) target = $region96
        $region95: #{trans_apply.1} parent=87 // pred_region
          %s731 = sand.u32 %s45, 1
          %s732 = scalar_lea.sflag [#allocation6], %s731
          %s733 = sand.u32 %s81, 1
          %s734 = smul.addr %s733, 8
          %s735 = scalar_lea.vmem [#allocation5], %s734
          %s737 = ssub.s32 128, 128
          %738 = vsyncadd %s732, %s737
          %s739 = smul.addr %s45, 128
          %s740 = scalar_lea.hbm %s1, %s739
          %s742 = sshll.u32 %s735, 4
          %s743 = int_to_ptr.vmem [resolvable:$true] %s742
          %745 = dma.hbm_to_vmem [thread:$0]  %s740, 128, %s743, %s732
        $region96: #{trans_apply.1} parent=87 // pred_fallthru
          _
      $region88: #{trans_apply.1} parent=5 // pred_fallthru
        _
      %p746 = scmp.le.s32.totalorder 1, %s45
      %p747 = scmp.lt.s32.totalorder %s45, 3
      %p748 = pnand %p746, %p747
      %p749 = pneg %p748
      // Predicated region
      $region97: #{trans_apply.1} parent=5 // pred_check
        _
      $region98: #{trans_apply.1} parent=5 // pred_check_branch
        %751 = sbr.rel (%p748) target = $region100
      $region99: #{trans_apply.1} parent=5 // pred_region
        %s752 = ssub.s32 %s45, 1
        %s753 = sand.u32 %s58, 1
        %s754 = scalar_lea.sflag [#allocation3], %s753
        %s755 = sand.u32 %s58, 1
        %s756 = smul.addr %s755, 8
        %s757 = scalar_lea.vmem [#allocation2], %s756
        // Predicated region
        $region101: #{trans_apply.1} parent=99 // pred_check
          %p758 = pneg %p71
        $region102: #{trans_apply.1} parent=99 // pred_check_branch
          %760 = sbr.rel (%p758) target = $region104
        $region103: #{trans_apply.1} parent=99 // pred_region
          %761 = dma.done %s754, 128
        $region104: #{trans_apply.1} parent=99 // pred_fallthru
          _
        %s762 = sand.u32 %s50, 1
        %s763 = scalar_lea.sflag [#allocation6], %s762
        %s764 = sand.u32 %s84, 1
        %s765 = smul.addr %s764, 8
        %s766 = scalar_lea.vmem [#allocation5], %s765
        // Predicated region
        $region105: #{trans_apply.1} parent=99 // pred_check
          %p767 = pneg %p97
        $region106: #{trans_apply.1} parent=99 // pred_check_branch
          %769 = sbr.rel (%p767) target = $region108
        $region107: #{trans_apply.1} parent=99 // pred_region
          %770 = dma.done %s763, 128
        $region108: #{trans_apply.1} parent=99 // pred_fallthru
          _
        // Predicated region
        $region109: #{trans_apply.1} parent=99 // pred_check
          %p771 = pneg %p118
        $region110: #{trans_apply.1} parent=99 // pred_check_branch
          %773 = sbr.rel (%p771) target = $region112
        $region111: #{trans_apply.1} parent=99 // pred_region
          %774 = dma.done [#allocation6], 32
        $region112: #{trans_apply.1} parent=99 // pred_fallthru
          _
        // Predicated region
        $region113: #{trans_apply.1} parent=99 // pred_check
          %p775 = pneg %p139
        $region114: #{trans_apply.1} parent=99 // pred_check_branch
          %777 = sbr.rel (%p775) target = $region116
        $region115: #{trans_apply.1} parent=99 // pred_region
          %778 = dma.done [#allocation9], 32
        $region116: #{trans_apply.1} parent=99 // pred_fallthru
          _
        // Predicated region
        $region117: #{trans_apply.1} parent=99 // pred_check
          %p779 = pneg %p181
        $region118: #{trans_apply.1} parent=99 // pred_check_branch
          %781 = sbr.rel (%p779) target = $region120
        $region119: #{trans_apply.1} parent=99 // pred_region
          %782 = dma.done [#allocation9], 32
        $region120: #{trans_apply.1} parent=99 // pred_fallthru
          _
        // Predicated region
        $region121: #{trans_apply.1} parent=99 // pred_check
          %p783 = pneg %p223
        $region122: #{trans_apply.1} parent=99 // pred_check_branch
          %785 = sbr.rel (%p783) target = $region124
        $region123: #{trans_apply.1} parent=99 // pred_region
          %786 = dma.done [#allocation12], 32
        $region124: #{trans_apply.1} parent=99 // pred_fallthru
          _
        // Predicated region
        $region125: #{trans_apply.1} parent=99 // pred_check
          %p787 = pneg %p265
        $region126: #{trans_apply.1} parent=99 // pred_check_branch
          %789 = sbr.rel (%p787) target = $region128
        $region127: #{trans_apply.1} parent=99 // pred_region
          %790 = dma.done [#allocation12], 32
        $region128: #{trans_apply.1} parent=99 // pred_fallthru
          _
        // Predicated region
        $region129: #{trans_apply.1} parent=99 // pred_check
          %p791 = pneg %p286
        $region130: #{trans_apply.1} parent=99 // pred_check_branch
          %793 = sbr.rel (%p791) target = $region132
        $region131: #{trans_apply.1} parent=99 // pred_region
          %794 = dma.done [#allocation15], 32
        $region132: #{trans_apply.1} parent=99 // pred_fallthru
          _
        // Predicated region
        $region133: #{trans_apply.1} parent=99 // pred_check
          %p795 = pneg %p307
        $region134: #{trans_apply.1} parent=99 // pred_check_branch
          %797 = sbr.rel (%p795) target = $region136
        $region135: #{trans_apply.1} parent=99 // pred_region
          %798 = dma.done [#allocation15], 32
        $region136: #{trans_apply.1} parent=99 // pred_fallthru
          _
        // Predicated region
        $region137: #{trans_apply.1} parent=99 // pred_check
          %p799 = pneg %p328
        $region138: #{trans_apply.1} parent=99 // pred_check_branch
          %801 = sbr.rel (%p799) target = $region140
        $region139: #{trans_apply.1} parent=99 // pred_region
          %802 = dma.done [#allocation18], 1024
        $region140: #{trans_apply.1} parent=99 // pred_fallthru
          _
        // Predicated region
        $region141: #{trans_apply.1} parent=99 // pred_check
          %p803 = pneg %p349
        $region142: #{trans_apply.1} parent=99 // pred_check_branch
          %805 = sbr.rel (%p803) target = $region144
        $region143: #{trans_apply.1} parent=99 // pred_region
          %806 = dma.done [#allocation18], 32
        $region144: #{trans_apply.1} parent=99 // pred_fallthru
          _
        // Predicated region
        $region145: #{trans_apply.1} parent=99 // pred_check
          %p807 = pneg %p391
        $region146: #{trans_apply.1} parent=99 // pred_check_branch
          %809 = sbr.rel (%p807) target = $region148
        $region147: #{trans_apply.1} parent=99 // pred_region
          %810 = dma.done [#allocation21], 32
        $region148: #{trans_apply.1} parent=99 // pred_fallthru
          _
        // Predicated region
        $region149: #{trans_apply.1} parent=99 // pred_check
          %p811 = pneg %p454
        $region150: #{trans_apply.1} parent=99 // pred_check_branch
          %813 = sbr.rel (%p811) target = $region152
        $region151: #{trans_apply.1} parent=99 // pred_region
          %814 = dma.done [#allocation21], 512
        $region152: #{trans_apply.1} parent=99 // pred_fallthru
          _
        %s815 = sand.u32 %s58, 1
        %s816 = scalar_lea.sflag [#allocation3], %s815
        %s817 = sand.u32 %s58, 1
        %s818 = smul.addr %s817, 8
        %s819 = scalar_lea.vmem [#allocation2], %s818
        %p820 = pneg %p71
        %p821 = pneg %p68
        %s822 = sand.u32 %s50, 1
        %s823 = scalar_lea.sflag [#allocation6], %s822
        %s824 = sand.u32 %s84, 1
        %s825 = smul.addr %s824, 8
        %s826 = scalar_lea.vmem [#allocation5], %s825
        %p827 = pneg %p97
        %p828 = pneg %p94
        %p829 = pneg %p118
        %p830 = pneg %p115
        %p831 = pneg %p139
        %p832 = pneg %p136
        %p833 = pneg %p160
        %p834 = pneg %p157
        %p835 = pneg %p181
        %p836 = pneg %p178
        %p837 = pneg %p202
        %p838 = pneg %p199
        %p839 = pneg %p223
        %p840 = pneg %p220
        %p841 = pneg %p244
        %p842 = pneg %p241
        %p843 = pneg %p265
        %p844 = pneg %p262
        %p845 = pneg %p286
        %p846 = pneg %p283
        %p847 = pneg %p307
        %p848 = pneg %p304
        %p849 = pneg %p328
        %p850 = pneg %p325
        %p851 = pneg %p349
        %p852 = pneg %p346
        %p853 = pneg %p370
        %p854 = pneg %p367
        %p855 = pneg %p391
        %p856 = pneg %p388
        %p857 = pneg %p412
        %p858 = pneg %p409
        %p859 = pneg %p433
        %p860 = pneg %p430
        %p861 = pneg %p454
        %p862 = pneg %p451
        %p863 = pneg %p475
        %p864 = pneg %p472
        %p865 = pneg %p501
        %p866 = pneg %p498
        %s867 = sand.u32 %s488, 1
        %s868 = scalar_lea.sflag [#allocation4], %s867
        %s869 = sand.u32 %s488, 1
        %s870 = smul.addr %s869, 8
        %s871 = scalar_lea.vmem [#allocation23], %s870
        %p872 = pneg %p527
        %p873 = pneg %p524
        %s874 = sand.u32 %s514, 1
        %s875 = scalar_lea.sflag [#allocation25], %s874
        %s876 = sand.u32 %s514, 1
        %s877 = smul.addr %s876, 8
        %s878 = scalar_lea.vmem [#allocation24], %s877
        %v879 = vld [vmem:[%s757] sm:$0xff]
        %v880 = vld [vmem:[%s766] sm:$0xff]
        %v881 = vld [vmem:[#allocation7] sm:$0x1]
        %v882 = vld [vmem:[#allocation8] sm:$0x1]
        %vm883 = vcmask 261120
        %v884 = vsel %vm883, %v879, 0.0
        %885 = vadd.xlane.f32.xlu0 %v884
        %v886 = vpop.xlane.xlu0 %885
        %v887 = vsel %vm883, %v880, 0.0
        %888 = vadd.xlane.f32.xlu0 %v887
        %v889 = vpop.xlane.xlu0 %888
        %v890 = vrcp.pop 32.0
        %v891 = vmul.f32 %v886, %v890
        %v892 = vmul.f32 %v889, %v890
        %v893 = vsub.f32 %v879, %v891
        %v894 = vsub.f32 %v880, %v892
        %v895 = vmul.f32 %v893, %v893
        %v896 = vmul.f32 %v894, %v894
        %v897 = vsel %vm883, %v895, 0.0
        %898 = vadd.xlane.f32.xlu0 %v897
        %v899 = vpop.xlane.xlu0 %898
        %v900 = vsel %vm883, %v896, 0.0
        %901 = vadd.xlane.f32.xlu0 %v900
        %v902 = vpop.xlane.xlu0 %901
        %v903 = vmul.f32 %v899, %v890
        %v904 = vmul.f32 %v902, %v890
        %v905 = vadd.f32 %v903, 1e-05
        %v906 = vadd.f32 %v904, 1e-05
        %v907 = vrsqrt.pop %v905
        %v908 = vrsqrt.pop %v906
        %v909 = vmul.f32 %v893, %v907
        %v910 = vmul.f32 %v894, %v908
        %v912 = vlaneseq
        %v913 = vshrl.u32 %v912, 7
        %v914 = vsub.s32 0, %v913
        %v915 = vrot.slane %v881, %v914
        %v917 = vmul.f32 %v909, %v915
        %v918 = vmul.f32 %v910, %v915
        %v920 = vlaneseq
        %v921 = vshrl.u32 %v920, 7
        %v922 = vsub.s32 0, %v921
        %v923 = vrot.slane %v882, %v922
        %v925 = vadd.f32 %v917, %v923
        %v926 = vadd.f32 %v918, %v923
        %v927 = vld [vmem:[%s4] sm:$0xff]
        %v928 = vld [vmem:[%s4 + $0x8] sm:$0xff]
        %v929 = vld [vmem:[%s4 + $0x10] sm:$0xff]
        %v930 = vld [vmem:[%s4 + $0x18] sm:$0xff]
        %v931 = vld [vmem:[#allocation10] sm:$0x1]
        %v933 = vlaneseq
        %v934 = vshrl.u32 %v933, 7
        %v935 = vsub.s32 0, %v934
        %v936 = vrot.slane %v931, %v935
        %v939 = vsel %vm883, %v925, 0
        %v942 = vsel %vm883, %v926, 0
        %944 = vmatprep.subr.mxu0 0.0
        %945 = vmatpush1.msra.mxu0 %v927
        %946 = vmatprep.subr.mxu0 0.0
        %947 = vmatpush1.msra.mxu0 %v928
        %948 = vmatprep.subr.mxu0 0.0
        %949 = vmatpush1.msra.mxu0 %v929
        %950 = vmatprep.subr.mxu0 0.0
        %951 = vmatpush1.msra.mxu0 %v930
        %952 = vmatprep.subr.mxu0 0.0
        %953 = vmatpush1.msra.mxu0 0.0
        %954 = vmatprep.subr.mxu0 0.0
        %955 = vmatpush1.msra.mxu0 0.0
        %956 = vmatprep.subr.mxu0 0.0
        %957 = vmatpush1.msra.mxu0 0.0
        %958 = vmatprep.subr.mxu0 0.0
        %959 = vmatpush1.msra.mxu0 0.0
        %960 = vmatprep.subr.mxu0 0.0
        %961 = vmatpush1.msra.mxu0 0.0
        %962 = vmatprep.subr.mxu0 0.0
        %963 = vmatpush1.msra.mxu0 0.0
        %964 = vmatprep.subr.mxu0 0.0
        %965 = vmatpush1.msra.mxu0 0.0
        %966 = vmatprep.subr.mxu0 0.0
        %967 = vmatpush1.msra.mxu0 0.0
        %968 = vmatprep.subr.mxu0 0.0
        %969 = vmatpush1.msra.mxu0 0.0
        %970 = vmatprep.subr.mxu0 0.0
        %971 = vmatpush1.msra.mxu0 0.0
        %972 = vmatprep.subr.mxu0 0.0
        %973 = vmatpush1.msra.mxu0 0.0
        %974 = vmatprep.subr.mxu0 0.0
        %975 = vmatpush1.msra.mxu0 0.0
        %976 = vmatprep.subr.mxu0 0.0
        %977 = vmatpush1.msra.mxu0 0.0
        %978 = vmatprep.subr.mxu0 0.0
        %979 = vmatpush1.msra.mxu0 0.0
        %980 = vmatprep.subr.mxu0 0.0
        %981 = vmatpush1.msra.mxu0 0.0
        %982 = vmatprep.subr.mxu0 0.0
        %983 = vmatpush1.msra.mxu0 0.0
        %984 = vmatprep.subr.mxu0 0.0
        %985 = vmatpush1.msra.mxu0 0.0
        %986 = vmatprep.subr.mxu0 0.0
        %987 = vmatpush1.msra.mxu0 0.0
        %988 = vmatprep.subr.mxu0 0.0
        %989 = vmatpush1.msra.mxu0 0.0
        %990 = vmatprep.subr.mxu0 0.0
        %991 = vmatpush1.msra.mxu0 0.0
        %992 = vmatprep.subr.mxu0 0.0
        %993 = vmatpush1.msra.mxu0 0.0
        %994 = vmatprep.subr.mxu0 0.0
        %995 = vmatpush1.msra.mxu0 0.0
        %996 = vmatprep.subr.mxu0 0.0
        %997 = vmatpush1.msra.mxu0 0.0
        %998 = vmatprep.subr.mxu0 0.0
        %999 = vmatpush1.msra.mxu0 0.0
        %1000 = vmatprep.subr.mxu0 0.0
        %1001 = vmatpush1.msra.mxu0 0.0
        %1002 = vmatprep.subr.mxu0 0.0
        %1003 = vmatpush1.msra.mxu0 0.0
        %1004 = vmatprep.subr.mxu0 0.0
        %1005 = vmatpush1.msra.mxu0 0.0
        %1006 = vmatprep.subr.mxu0 0.0
        %1007 = vmatpush1.msra.mxu0 0.0
        %1008 = vmatprep.mubr.f32.mxu0 0.0
        %1009 = vmatmul.mubr.f32.gmra.mrb[0].mxu0 %v939
        %v1010 = vpop.f32.mrb[0].mxu0
        %v1011 = vadd.f32 %v936, %v1010
        %v1012 = vpop.f32.mrb[0].mxu0
        %1013 = vmatprep.mubr.f32.mxu0 0.0
        %1014 = vmatmul.mubr.f32.gmra.mrb[0].mxu0 %v942
        %v1015 = vpop.f32.mrb[0].mxu0
        %v1016 = vadd.f32 %v936, %v1015
        %v1017 = vpop.f32.mrb[0].mxu0
        %1018 = vdwg.mxu0
        %v1019 = vld [vmem:[%s6] sm:$0xff]
        %v1020 = vld [vmem:[%s6 + $0x8] sm:$0xff]
        %v1021 = vld [vmem:[%s6 + $0x10] sm:$0xff]
        %v1022 = vld [vmem:[%s6 + $0x18] sm:$0xff]
        %1024 = vrot.lane.b32.xlu0 %v1011, 96
        %v1025 = vpop.permute.xlu0 %1024
        %vm1026 = vcmask 64512
        %v1027 = vsel %vm1026, %v1011, 0
        %v1029 = vsel %vm1026, %v1025, 0
        %1031 = vmatprep.subr.mxu0 0.0
        %1032 = vmatpush1.xpose.msra.mxu0 %v1029
        %1033 = vmatprep.subr.mxu0 0.0
        %1034 = vmatpush1.xpose.msra.mxu0 0.0
        %1035 = vmatprep.subr.mxu0 0.0
        %1036 = vmatpush1.xpose.msra.mxu0 0.0
        %1037 = vmatprep.subr.mxu0 0.0
        %1038 = vmatpush1.xpose.msra.mxu0 0.0
        %1039 = vmatprep.subr.mxu0 0.0
        %1040 = vmatpush1.xpose.msra.mxu0 0.0
        %1041 = vmatprep.subr.mxu0 0.0
        %1042 = vmatpush1.xpose.msra.mxu0 0.0
        %1043 = vmatprep.subr.mxu0 0.0
        %1044 = vmatpush1.xpose.msra.mxu0 0.0
        %1045 = vmatprep.subr.mxu0 0.0
        %1046 = vmatpush1.xpose.msra.mxu0 0.0
        %1047 = vmatprep.subr.mxu0 0.0
        %1048 = vmatpush1.xpose.msra.mxu0 0.0
        %1049 = vmatprep.subr.mxu0 0.0
        %1050 = vmatpush1.xpose.msra.mxu0 0.0
        %1051 = vmatprep.subr.mxu0 0.0
        %1052 = vmatpush1.xpose.msra.mxu0 0.0
        %1053 = vmatprep.subr.mxu0 0.0
        %1054 = vmatpush1.xpose.msra.mxu0 0.0
        %1055 = vmatprep.subr.mxu0 0.0
        %1056 = vmatpush1.xpose.msra.mxu0 0.0
        %1057 = vmatprep.subr.mxu0 0.0
        %1058 = vmatpush1.xpose.msra.mxu0 0.0
        %1059 = vmatprep.subr.mxu0 0.0
        %1060 = vmatpush1.xpose.msra.mxu0 0.0
        %1061 = vmatprep.subr.mxu0 0.0
        %1062 = vmatpush1.xpose.msra.mxu0 0.0
        %1063 = vmatprep.subr.mxu0 0.0
        %1064 = vmatpush1.xpose.msra.mxu0 0.0
        %1065 = vmatprep.subr.mxu0 0.0
        %1066 = vmatpush1.xpose.msra.mxu0 0.0
        %1067 = vmatprep.subr.mxu0 0.0
        %1068 = vmatpush1.xpose.msra.mxu0 0.0
        %1069 = vmatprep.subr.mxu0 0.0
        %1070 = vmatpush1.xpose.msra.mxu0 0.0
        %1071 = vmatprep.subr.mxu0 0.0
        %1072 = vmatpush1.xpose.msra.mxu0 0.0
        %1073 = vmatprep.subr.mxu0 0.0
        %1074 = vmatpush1.xpose.msra.mxu0 0.0
        %1075 = vmatprep.subr.mxu0 0.0
        %1076 = vmatpush1.xpose.msra.mxu0 0.0
        %1077 = vmatprep.subr.mxu0 0.0
        %1078 = vmatpush1.xpose.msra.mxu0 0.0
        %1079 = vmatprep.subr.mxu0 0.0
        %1080 = vmatpush1.xpose.msra.mxu0 0.0
        %1081 = vmatprep.subr.mxu0 0.0
        %1082 = vmatpush1.xpose.msra.mxu0 0.0
        %1083 = vmatprep.subr.mxu0 0.0
        %1084 = vmatpush1.xpose.msra.mxu0 0.0
        %1085 = vmatprep.subr.mxu0 0.0
        %1086 = vmatpush1.xpose.msra.mxu0 0.0
        %1087 = vmatprep.subr.mxu0 0.0
        %1088 = vmatpush1.xpose.msra.mxu0 0.0
        %1089 = vmatprep.subr.mxu0 0.0
        %1090 = vmatpush1.xpose.msra.mxu0 0.0
        %1091 = vmatprep.subr.mxu0 0.0
        %1092 = vmatpush1.xpose.msra.mxu0 0.0
        %1093 = vmatprep.subr.mxu0 0.0
        %1094 = vmatpush1.xpose.msra.mxu0 0.0
        %1095 = vmatprep.mubr.f32.mxu0 0.0
        %1096 = vmatmul.mubr.f32.gmra.mrb[0].mxu0 %v1027
        %v1097 = vpop.f32.mrb[0].mxu0
        %v1098 = vadd.f32 0.0, %v1097
        %v1099 = vpop.f32.mrb[0].mxu0
        %1100 = vdwg.mxu0
        %1102 = vrot.lane.b32.xlu0 %v1016, 96
        %v1103 = vpop.permute.xlu0 %1102
        %v1104 = vsel %vm1026, %v1016, 0
        %v1106 = vsel %vm1026, %v1103, 0
        %1108 = vmatprep.subr.mxu0 0.0
        %1109 = vmatpush1.xpose.msra.mxu0 %v1106
        %1110 = vmatprep.subr.mxu0 0.0
        %1111 = vmatpush1.xpose.msra.mxu0 0.0
        %1112 = vmatprep.subr.mxu0 0.0
        %1113 = vmatpush1.xpose.msra.mxu0 0.0
        %1114 = vmatprep.subr.mxu0 0.0
        %1115 = vmatpush1.xpose.msra.mxu0 0.0
        %1116 = vmatprep.subr.mxu0 0.0
        %1117 = vmatpush1.xpose.msra.mxu0 0.0
        %1118 = vmatprep.subr.mxu0 0.0
        %1119 = vmatpush1.xpose.msra.mxu0 0.0
        %1120 = vmatprep.subr.mxu0 0.0
        %1121 = vmatpush1.xpose.msra.mxu0 0.0
        %1122 = vmatprep.subr.mxu0 0.0
        %1123 = vmatpush1.xpose.msra.mxu0 0.0
        %1124 = vmatprep.subr.mxu0 0.0
        %1125 = vmatpush1.xpose.msra.mxu0 0.0
        %1126 = vmatprep.subr.mxu0 0.0
        %1127 = vmatpush1.xpose.msra.mxu0 0.0
        %1128 = vmatprep.subr.mxu0 0.0
        %1129 = vmatpush1.xpose.msra.mxu0 0.0
        %1130 = vmatprep.subr.mxu0 0.0
        %1131 = vmatpush1.xpose.msra.mxu0 0.0
        %1132 = vmatprep.subr.mxu0 0.0
        %1133 = vmatpush1.xpose.msra.mxu0 0.0
        %1134 = vmatprep.subr.mxu0 0.0
        %1135 = vmatpush1.xpose.msra.mxu0 0.0
        %1136 = vmatprep.subr.mxu0 0.0
        %1137 = vmatpush1.xpose.msra.mxu0 0.0
        %1138 = vmatprep.subr.mxu0 0.0
        %1139 = vmatpush1.xpose.msra.mxu0 0.0
        %1140 = vmatprep.subr.mxu0 0.0
        %1141 = vmatpush1.xpose.msra.mxu0 0.0
        %1142 = vmatprep.subr.mxu0 0.0
        %1143 = vmatpush1.xpose.msra.mxu0 0.0
        %1144 = vmatprep.subr.mxu0 0.0
        %1145 = vmatpush1.xpose.msra.mxu0 0.0
        %1146 = vmatprep.subr.mxu0 0.0
        %1147 = vmatpush1.xpose.msra.mxu0 0.0
        %1148 = vmatprep.subr.mxu0 0.0
        %1149 = vmatpush1.xpose.msra.mxu0 0.0
        %1150 = vmatprep.subr.mxu0 0.0
        %1151 = vmatpush1.xpose.msra.mxu0 0.0
        %1152 = vmatprep.subr.mxu0 0.0
        %1153 = vmatpush1.xpose.msra.mxu0 0.0
        %1154 = vmatprep.subr.mxu0 0.0
        %1155 = vmatpush1.xpose.msra.mxu0 0.0
        %1156 = vmatprep.subr.mxu0 0.0
        %1157 = vmatpush1.xpose.msra.mxu0 0.0
        %1158 = vmatprep.subr.mxu0 0.0
        %1159 = vmatpush1.xpose.msra.mxu0 0.0
        %1160 = vmatprep.subr.mxu0 0.0
        %1161 = vmatpush1.xpose.msra.mxu0 0.0
        %1162 = vmatprep.subr.mxu0 0.0
        %1163 = vmatpush1.xpose.msra.mxu0 0.0
        %1164 = vmatprep.subr.mxu0 0.0
        %1165 = vmatpush1.xpose.msra.mxu0 0.0
        %1166 = vmatprep.subr.mxu0 0.0
        %1167 = vmatpush1.xpose.msra.mxu0 0.0
        %1168 = vmatprep.subr.mxu0 0.0
        %1169 = vmatpush1.xpose.msra.mxu0 0.0
        %1170 = vmatprep.subr.mxu0 0.0
        %1171 = vmatpush1.xpose.msra.mxu0 0.0
        %1172 = vmatprep.mubr.f32.mxu0 0.0
        %1173 = vmatmul.mubr.f32.gmra.mrb[0].mxu0 %v1104
        %v1174 = vpop.f32.mrb[0].mxu0
        %v1175 = vadd.f32 0.0, %v1174
        %v1176 = vpop.f32.mrb[0].mxu0
        %1177 = vdwg.mxu0
        %v1178 = vmul.f32 %v1098, 0.35355338
        %v1179 = vmul.f32 %v1175, 0.35355338
        %v1180 = vsel %vm1026, %v1178, -inf
        %1181 = vmax.xlane.f32.xlu0 %v1180
        %v1182 = vpop.xlane.xlu0 %1181
        %v1183 = vsel %vm1026, %v1179, -inf
        %1184 = vmax.xlane.f32.xlu0 %v1183
        %v1185 = vpop.xlane.xlu0 %1184
        %v1186 = vsub.f32 %v1178, %v1182
        %v1187 = vsub.f32 %v1179, %v1185
        %v1188 = vmul.f32 %v1186, 1.442695
        %v1189 = vpow.pop %v1188
        %v1190 = vmul.f32 %v1187, 1.442695
        %v1191 = vpow.pop %v1190
        %v1192 = vsel %vm1026, %v1189, 0.0
        %1193 = vadd.xlane.f32.xlu0 %v1192
        %v1194 = vpop.xlane.xlu0 %1193
        %v1195 = vsel %vm1026, %v1191, 0.0
        %1196 = vadd.xlane.f32.xlu0 %v1195
        %v1197 = vpop.xlane.xlu0 %1196
        %v1198 = vrcp.pop %v1194
        %v1199 = vmul.f32 %v1189, %v1198
        %v1200 = vrcp.pop %v1197
        %v1201 = vmul.f32 %v1191, %v1200
        %1202 = vrot.lane.b32.xlu0 %v1011, 64
        %v1203 = vpop.permute.xlu0 %1202
        %v1206 = vsel %vm1026, %v1199, 0
        %1208 = vmatprep.subr.mxu0 0.0
        %1209 = vmatpush1.msra.mxu0 %v1203
        %1210 = vmatprep.subr.mxu0 0.0
        %1211 = vmatpush1.msra.mxu0 0.0
        %1212 = vmatprep.subr.mxu0 0.0
        %1213 = vmatpush1.msra.mxu0 0.0
        %1214 = vmatprep.subr.mxu0 0.0
        %1215 = vmatpush1.msra.mxu0 0.0
        %1216 = vmatprep.subr.mxu0 0.0
        %1217 = vmatpush1.msra.mxu0 0.0
        %1218 = vmatprep.subr.mxu0 0.0
        %1219 = vmatpush1.msra.mxu0 0.0
        %1220 = vmatprep.subr.mxu0 0.0
        %1221 = vmatpush1.msra.mxu0 0.0
        %1222 = vmatprep.subr.mxu0 0.0
        %1223 = vmatpush1.msra.mxu0 0.0
        %1224 = vmatprep.subr.mxu0 0.0
        %1225 = vmatpush1.msra.mxu0 0.0
        %1226 = vmatprep.subr.mxu0 0.0
        %1227 = vmatpush1.msra.mxu0 0.0
        %1228 = vmatprep.subr.mxu0 0.0
        %1229 = vmatpush1.msra.mxu0 0.0
        %1230 = vmatprep.subr.mxu0 0.0
        %1231 = vmatpush1.msra.mxu0 0.0
        %1232 = vmatprep.subr.mxu0 0.0
        %1233 = vmatpush1.msra.mxu0 0.0
        %1234 = vmatprep.subr.mxu0 0.0
        %1235 = vmatpush1.msra.mxu0 0.0
        %1236 = vmatprep.subr.mxu0 0.0
        %1237 = vmatpush1.msra.mxu0 0.0
        %1238 = vmatprep.subr.mxu0 0.0
        %1239 = vmatpush1.msra.mxu0 0.0
        %1240 = vmatprep.subr.mxu0 0.0
        %1241 = vmatpush1.msra.mxu0 0.0
        %1242 = vmatprep.subr.mxu0 0.0
        %1243 = vmatpush1.msra.mxu0 0.0
        %1244 = vmatprep.subr.mxu0 0.0
        %1245 = vmatpush1.msra.mxu0 0.0
        %1246 = vmatprep.subr.mxu0 0.0
        %1247 = vmatpush1.msra.mxu0 0.0
        %1248 = vmatprep.subr.mxu0 0.0
        %1249 = vmatpush1.msra.mxu0 0.0
        %1250 = vmatprep.subr.mxu0 0.0
        %1251 = vmatpush1.msra.mxu0 0.0
        %1252 = vmatprep.subr.mxu0 0.0
        %1253 = vmatpush1.msra.mxu0 0.0
        %1254 = vmatprep.subr.mxu0 0.0
        %1255 = vmatpush1.msra.mxu0 0.0
        %1256 = vmatprep.subr.mxu0 0.0
        %1257 = vmatpush1.msra.mxu0 0.0
        %1258 = vmatprep.subr.mxu0 0.0
        %1259 = vmatpush1.msra.mxu0 0.0
        %1260 = vmatprep.subr.mxu0 0.0
        %1261 = vmatpush1.msra.mxu0 0.0
        %1262 = vmatprep.subr.mxu0 0.0
        %1263 = vmatpush1.msra.mxu0 0.0
        %1264 = vmatprep.subr.mxu0 0.0
        %1265 = vmatpush1.msra.mxu0 0.0
        %1266 = vmatprep.subr.mxu0 0.0
        %1267 = vmatpush1.msra.mxu0 0.0
        %1268 = vmatprep.subr.mxu0 0.0
        %1269 = vmatpush1.msra.mxu0 0.0
        %1270 = vmatprep.subr.mxu0 0.0
        %1271 = vmatpush1.msra.mxu0 0.0
        %1272 = vmatprep.mubr.f32.mxu0 0.0
        %1273 = vmatmul.mubr.f32.gmra.mrb[0].mxu0 %v1206
        %v1274 = vpop.f32.mrb[0].mxu0
        %v1275 = vadd.f32 0.0, %v1274
        %v1276 = vpop.f32.mrb[0].mxu0
        %1277 = vdwg.mxu0
        %1278 = vrot.lane.b32.xlu0 %v1016, 64
        %v1279 = vpop.permute.xlu0 %1278
        %v1282 = vsel %vm1026, %v1201, 0
        %1284 = vmatprep.subr.mxu0 0.0
        %1285 = vmatpush1.msra.mxu0 %v1279
        %1286 = vmatprep.subr.mxu0 0.0
        %1287 = vmatpush1.msra.mxu0 0.0
        %1288 = vmatprep.subr.mxu0 0.0
        %1289 = vmatpush1.msra.mxu0 0.0
        %1290 = vmatprep.subr.mxu0 0.0
        %1291 = vmatpush1.msra.mxu0 0.0
        %1292 = vmatprep.subr.mxu0 0.0
        %1293 = vmatpush1.msra.mxu0 0.0
        %1294 = vmatprep.subr.mxu0 0.0
        %1295 = vmatpush1.msra.mxu0 0.0
        %1296 = vmatprep.subr.mxu0 0.0
        %1297 = vmatpush1.msra.mxu0 0.0
        %1298 = vmatprep.subr.mxu0 0.0
        %1299 = vmatpush1.msra.mxu0 0.0
        %1300 = vmatprep.subr.mxu0 0.0
        %1301 = vmatpush1.msra.mxu0 0.0
        %1302 = vmatprep.subr.mxu0 0.0
        %1303 = vmatpush1.msra.mxu0 0.0
        %1304 = vmatprep.subr.mxu0 0.0
        %1305 = vmatpush1.msra.mxu0 0.0
        %1306 = vmatprep.subr.mxu0 0.0
        %1307 = vmatpush1.msra.mxu0 0.0
        %1308 = vmatprep.subr.mxu0 0.0
        %1309 = vmatpush1.msra.mxu0 0.0
        %1310 = vmatprep.subr.mxu0 0.0
        %1311 = vmatpush1.msra.mxu0 0.0
        %1312 = vmatprep.subr.mxu0 0.0
        %1313 = vmatpush1.msra.mxu0 0.0
        %1314 = vmatprep.subr.mxu0 0.0
        %1315 = vmatpush1.msra.mxu0 0.0
        %1316 = vmatprep.subr.mxu0 0.0
        %1317 = vmatpush1.msra.mxu0 0.0
        %1318 = vmatprep.subr.mxu0 0.0
        %1319 = vmatpush1.msra.mxu0 0.0
        %1320 = vmatprep.subr.mxu0 0.0
        %1321 = vmatpush1.msra.mxu0 0.0
        %1322 = vmatprep.subr.mxu0 0.0
        %1323 = vmatpush1.msra.mxu0 0.0
        %1324 = vmatprep.subr.mxu0 0.0
        %1325 = vmatpush1.msra.mxu0 0.0
        %1326 = vmatprep.subr.mxu0 0.0
        %1327 = vmatpush1.msra.mxu0 0.0
        %1328 = vmatprep.subr.mxu0 0.0
        %1329 = vmatpush1.msra.mxu0 0.0
        %1330 = vmatprep.subr.mxu0 0.0
        %1331 = vmatpush1.msra.mxu0 0.0
        %1332 = vmatprep.subr.mxu0 0.0
        %1333 = vmatpush1.msra.mxu0 0.0
        %1334 = vmatprep.subr.mxu0 0.0
        %1335 = vmatpush1.msra.mxu0 0.0
        %1336 = vmatprep.subr.mxu0 0.0
        %1337 = vmatpush1.msra.mxu0 0.0
        %1338 = vmatprep.subr.mxu0 0.0
        %1339 = vmatpush1.msra.mxu0 0.0
        %1340 = vmatprep.subr.mxu0 0.0
        %1341 = vmatpush1.msra.mxu0 0.0
        %1342 = vmatprep.subr.mxu0 0.0
        %1343 = vmatpush1.msra.mxu0 0.0
        %1344 = vmatprep.subr.mxu0 0.0
        %1345 = vmatpush1.msra.mxu0 0.0
        %1346 = vmatprep.subr.mxu0 0.0
        %1347 = vmatpush1.msra.mxu0 0.0
        %1348 = vmatprep.mubr.f32.mxu0 0.0
        %1349 = vmatmul.mubr.f32.gmra.mrb[0].mxu0 %v1282
        %v1350 = vpop.f32.mrb[0].mxu0
        %v1351 = vadd.f32 0.0, %v1350
        %v1352 = vpop.f32.mrb[0].mxu0
        %1353 = vdwg.mxu0
        %1354 = vrot.lane.b32.xlu0 %v1011, 120
        %v1355 = vpop.permute.xlu0 %1354
        %1356 = vrot.lane.b32.xlu0 %v1011, 88
        %v1357 = vpop.permute.xlu0 %1356
        %v1358 = vsel %vm1026, %v1355, 0
        %v1360 = vsel %vm1026, %v1357, 0
        %1362 = vmatprep.subr.mxu0 0.0
        %1363 = vmatpush1.xpose.msra.mxu0 %v1360
        %1364 = vmatprep.subr.mxu0 0.0
        %1365 = vmatpush1.xpose.msra.mxu0 0.0
        %1366 = vmatprep.subr.mxu0 0.0
        %1367 = vmatpush1.xpose.msra.mxu0 0.0
        %1368 = vmatprep.subr.mxu0 0.0
        %1369 = vmatpush1.xpose.msra.mxu0 0.0
        %1370 = vmatprep.subr.mxu0 0.0
        %1371 = vmatpush1.xpose.msra.mxu0 0.0
        %1372 = vmatprep.subr.mxu0 0.0
        %1373 = vmatpush1.xpose.msra.mxu0 0.0
        %1374 = vmatprep.subr.mxu0 0.0
        %1375 = vmatpush1.xpose.msra.mxu0 0.0
        %1376 = vmatprep.subr.mxu0 0.0
        %1377 = vmatpush1.xpose.msra.mxu0 0.0
        %1378 = vmatprep.subr.mxu0 0.0
        %1379 = vmatpush1.xpose.msra.mxu0 0.0
        %1380 = vmatprep.subr.mxu0 0.0
        %1381 = vmatpush1.xpose.msra.mxu0 0.0
        %1382 = vmatprep.subr.mxu0 0.0
        %1383 = vmatpush1.xpose.msra.mxu0 0.0
        %1384 = vmatprep.subr.mxu0 0.0
        %1385 = vmatpush1.xpose.msra.mxu0 0.0
        %1386 = vmatprep.subr.mxu0 0.0
        %1387 = vmatpush1.xpose.msra.mxu0 0.0
        %1388 = vmatprep.subr.mxu0 0.0
        %1389 = vmatpush1.xpose.msra.mxu0 0.0
        %1390 = vmatprep.subr.mxu0 0.0
        %1391 = vmatpush1.xpose.msra.mxu0 0.0
        %1392 = vmatprep.subr.mxu0 0.0
        %1393 = vmatpush1.xpose.msra.mxu0 0.0
        %1394 = vmatprep.subr.mxu0 0.0
        %1395 = vmatpush1.xpose.msra.mxu0 0.0
        %1396 = vmatprep.subr.mxu0 0.0
        %1397 = vmatpush1.xpose.msra.mxu0 0.0
        %1398 = vmatprep.subr.mxu0 0.0
        %1399 = vmatpush1.xpose.msra.mxu0 0.0
        %1400 = vmatprep.subr.mxu0 0.0
        %1401 = vmatpush1.xpose.msra.mxu0 0.0
        %1402 = vmatprep.subr.mxu0 0.0
        %1403 = vmatpush1.xpose.msra.mxu0 0.0
        %1404 = vmatprep.subr.mxu0 0.0
        %1405 = vmatpush1.xpose.msra.mxu0 0.0
        %1406 = vmatprep.subr.mxu0 0.0
        %1407 = vmatpush1.xpose.msra.mxu0 0.0
        %1408 = vmatprep.subr.mxu0 0.0
        %1409 = vmatpush1.xpose.msra.mxu0 0.0
        %1410 = vmatprep.subr.mxu0 0.0
        %1411 = vmatpush1.xpose.msra.mxu0 0.0
        %1412 = vmatprep.subr.mxu0 0.0
        %1413 = vmatpush1.xpose.msra.mxu0 0.0
        %1414 = vmatprep.subr.mxu0 0.0
        %1415 = vmatpush1.xpose.msra.mxu0 0.0
        %1416 = vmatprep.subr.mxu0 0.0
        %1417 = vmatpush1.xpose.msra.mxu0 0.0
        %1418 = vmatprep.subr.mxu0 0.0
        %1419 = vmatpush1.xpose.msra.mxu0 0.0
        %1420 = vmatprep.subr.mxu0 0.0
        %1421 = vmatpush1.xpose.msra.mxu0 0.0
        %1422 = vmatprep.subr.mxu0 0.0
        %1423 = vmatpush1.xpose.msra.mxu0 0.0
        %1424 = vmatprep.subr.mxu0 0.0
        %1425 = vmatpush1.xpose.msra.mxu0 0.0
        %1426 = vmatprep.mubr.f32.mxu0 0.0
        %1427 = vmatmul.mubr.f32.gmra.mrb[0].mxu0 %v1358
        %v1428 = vpop.f32.mrb[0].mxu0
        %v1429 = vadd.f32 0.0, %v1428
        %v1430 = vpop.f32.mrb[0].mxu0
        %1431 = vdwg.mxu0
        %1432 = vrot.lane.b32.xlu0 %v1016, 120
        %v1433 = vpop.permute.xlu0 %1432
        %1434 = vrot.lane.b32.xlu0 %v1016, 88
        %v1435 = vpop.permute.xlu0 %1434
        %v1436 = vsel %vm1026, %v1433, 0
        %v1438 = vsel %vm1026, %v1435, 0
        %1440 = vmatprep.subr.mxu0 0.0
        %1441 = vmatpush1.xpose.msra.mxu0 %v1438
        %1442 = vmatprep.subr.mxu0 0.0
        %1443 = vmatpush1.xpose.msra.mxu0 0.0
        %1444 = vmatprep.subr.mxu0 0.0
        %1445 = vmatpush1.xpose.msra.mxu0 0.0
        %1446 = vmatprep.subr.mxu0 0.0
        %1447 = vmatpush1.xpose.msra.mxu0 0.0
        %1448 = vmatprep.subr.mxu0 0.0
        %1449 = vmatpush1.xpose.msra.mxu0 0.0
        %1450 = vmatprep.subr.mxu0 0.0
        %1451 = vmatpush1.xpose.msra.mxu0 0.0
        %1452 = vmatprep.subr.mxu0 0.0
        %1453 = vmatpush1.xpose.msra.mxu0 0.0
        %1454 = vmatprep.subr.mxu0 0.0
        %1455 = vmatpush1.xpose.msra.mxu0 0.0
        %1456 = vmatprep.subr.mxu0 0.0
        %1457 = vmatpush1.xpose.msra.mxu0 0.0
        %1458 = vmatprep.subr.mxu0 0.0
        %1459 = vmatpush1.xpose.msra.mxu0 0.0
        %1460 = vmatprep.subr.mxu0 0.0
        %1461 = vmatpush1.xpose.msra.mxu0 0.0
        %1462 = vmatprep.subr.mxu0 0.0
        %1463 = vmatpush1.xpose.msra.mxu0 0.0
        %1464 = vmatprep.subr.mxu0 0.0
        %1465 = vmatpush1.xpose.msra.mxu0 0.0
        %1466 = vmatprep.subr.mxu0 0.0
        %1467 = vmatpush1.xpose.msra.mxu0 0.0
        %1468 = vmatprep.subr.mxu0 0.0
        %1469 = vmatpush1.xpose.msra.mxu0 0.0
        %1470 = vmatprep.subr.mxu0 0.0
        %1471 = vmatpush1.xpose.msra.mxu0 0.0
        %1472 = vmatprep.subr.mxu0 0.0
        %1473 = vmatpush1.xpose.msra.mxu0 0.0
        %1474 = vmatprep.subr.mxu0 0.0
        %1475 = vmatpush1.xpose.msra.mxu0 0.0
        %1476 = vmatprep.subr.mxu0 0.0
        %1477 = vmatpush1.xpose.msra.mxu0 0.0
        %1478 = vmatprep.subr.mxu0 0.0
        %1479 = vmatpush1.xpose.msra.mxu0 0.0
        %1480 = vmatprep.subr.mxu0 0.0
        %1481 = vmatpush1.xpose.msra.mxu0 0.0
        %1482 = vmatprep.subr.mxu0 0.0
        %1483 = vmatpush1.xpose.msra.mxu0 0.0
        %1484 = vmatprep.subr.mxu0 0.0
        %1485 = vmatpush1.xpose.msra.mxu0 0.0
        %1486 = vmatprep.subr.mxu0 0.0
        %1487 = vmatpush1.xpose.msra.mxu0 0.0
        %1488 = vmatprep.subr.mxu0 0.0
        %1489 = vmatpush1.xpose.msra.mxu0 0.0
        %1490 = vmatprep.subr.mxu0 0.0
        %1491 = vmatpush1.xpose.msra.mxu0 0.0
        %1492 = vmatprep.subr.mxu0 0.0
        %1493 = vmatpush1.xpose.msra.mxu0 0.0
        %1494 = vmatprep.subr.mxu0 0.0
        %1495 = vmatpush1.xpose.msra.mxu0 0.0
        %1496 = vmatprep.subr.mxu0 0.0
        %1497 = vmatpush1.xpose.msra.mxu0 0.0
        %1498 = vmatprep.subr.mxu0 0.0
        %1499 = vmatpush1.xpose.msra.mxu0 0.0
        %1500 = vmatprep.subr.mxu0 0.0
        %1501 = vmatpush1.xpose.msra.mxu0 0.0
        %1502 = vmatprep.subr.mxu0 0.0
        %1503 = vmatpush1.xpose.msra.mxu0 0.0
        %1504 = vmatprep.mubr.f32.mxu0 0.0
        %1505 = vmatmul.mubr.f32.gmra.mrb[0].mxu0 %v1436
        %v1506 = vpop.f32.mrb[0].mxu0
        %v1507 = vadd.f32 0.0, %v1506
        %v1508 = vpop.f32.mrb[0].mxu0
        %1509 = vdwg.mxu0
        %v1510 = vmul.f32 %v1429, 0.35355338
        %v1511 = vmul.f32 %v1507, 0.35355338
        %v1512 = vsel %vm1026, %v1510, -inf
        %1513 = vmax.xlane.f32.xlu0 %v1512
        %v1514 = vpop.xlane.xlu0 %1513
        %v1515 = vsel %vm1026, %v1511, -inf
        %1516 = vmax.xlane.f32.xlu0 %v1515
        %v1517 = vpop.xlane.xlu0 %1516
        %v1518 = vsub.f32 %v1510, %v1514
        %v1519 = vsub.f32 %v1511, %v1517
        %v1520 = vmul.f32 %v1518, 1.442695
        %v1521 = vpow.pop %v1520
        %v1522 = vmul.f32 %v1519, 1.442695
        %v1523 = vpow.pop %v1522
        %v1524 = vsel %vm1026, %v1521, 0.0
        %1525 = vadd.xlane.f32.xlu0 %v1524
        %v1526 = vpop.xlane.xlu0 %1525
        %v1527 = vsel %vm1026, %v1523, 0.0
        %1528 = vadd.xlane.f32.xlu0 %v1527
        %v1529 = vpop.xlane.xlu0 %1528
        %v1530 = vrcp.pop %v1526
        %v1531 = vmul.f32 %v1521, %v1530
        %v1532 = vrcp.pop %v1529
        %v1533 = vmul.f32 %v1523, %v1532
        %1534 = vrot.lane.b32.xlu0 %v1011, 56
        %v1535 = vpop.permute.xlu0 %1534
        %v1538 = vsel %vm1026, %v1531, 0
        %1540 = vmatprep.subr.mxu0 0.0
        %1541 = vmatpush1.msra.mxu0 %v1535
        %1542 = vmatprep.subr.mxu0 0.0
        %1543 = vmatpush1.msra.mxu0 0.0
        %1544 = vmatprep.subr.mxu0 0.0
        %1545 = vmatpush1.msra.mxu0 0.0
        %1546 = vmatprep.subr.mxu0 0.0
        %1547 = vmatpush1.msra.mxu0 0.0
        %1548 = vmatprep.subr.mxu0 0.0
        %1549 = vmatpush1.msra.mxu0 0.0
        %1550 = vmatprep.subr.mxu0 0.0
        %1551 = vmatpush1.msra.mxu0 0.0
        %1552 = vmatprep.subr.mxu0 0.0
        %1553 = vmatpush1.msra.mxu0 0.0
        %1554 = vmatprep.subr.mxu0 0.0
        %1555 = vmatpush1.msra.mxu0 0.0
        %1556 = vmatprep.subr.mxu0 0.0
        %1557 = vmatpush1.msra.mxu0 0.0
        %1558 = vmatprep.subr.mxu0 0.0
        %1559 = vmatpush1.msra.mxu0 0.0
        %1560 = vmatprep.subr.mxu0 0.0
        %1561 = vmatpush1.msra.mxu0 0.0
        %1562 = vmatprep.subr.mxu0 0.0
        %1563 = vmatpush1.msra.mxu0 0.0
        %1564 = vmatprep.subr.mxu0 0.0
        %1565 = vmatpush1.msra.mxu0 0.0
        %1566 = vmatprep.subr.mxu0 0.0
        %1567 = vmatpush1.msra.mxu0 0.0
        %1568 = vmatprep.subr.mxu0 0.0
        %1569 = vmatpush1.msra.mxu0 0.0
        %1570 = vmatprep.subr.mxu0 0.0
        %1571 = vmatpush1.msra.mxu0 0.0
        %1572 = vmatprep.subr.mxu0 0.0
        %1573 = vmatpush1.msra.mxu0 0.0
        %1574 = vmatprep.subr.mxu0 0.0
        %1575 = vmatpush1.msra.mxu0 0.0
        %1576 = vmatprep.subr.mxu0 0.0
        %1577 = vmatpush1.msra.mxu0 0.0
        %1578 = vmatprep.subr.mxu0 0.0
        %1579 = vmatpush1.msra.mxu0 0.0
        %1580 = vmatprep.subr.mxu0 0.0
        %1581 = vmatpush1.msra.mxu0 0.0
        %1582 = vmatprep.subr.mxu0 0.0
        %1583 = vmatpush1.msra.mxu0 0.0
        %1584 = vmatprep.subr.mxu0 0.0
        %1585 = vmatpush1.msra.mxu0 0.0
        %1586 = vmatprep.subr.mxu0 0.0
        %1587 = vmatpush1.msra.mxu0 0.0
        %1588 = vmatprep.subr.mxu0 0.0
        %1589 = vmatpush1.msra.mxu0 0.0
        %1590 = vmatprep.subr.mxu0 0.0
        %1591 = vmatpush1.msra.mxu0 0.0
        %1592 = vmatprep.subr.mxu0 0.0
        %1593 = vmatpush1.msra.mxu0 0.0
        %1594 = vmatprep.subr.mxu0 0.0
        %1595 = vmatpush1.msra.mxu0 0.0
        %1596 = vmatprep.subr.mxu0 0.0
        %1597 = vmatpush1.msra.mxu0 0.0
        %1598 = vmatprep.subr.mxu0 0.0
        %1599 = vmatpush1.msra.mxu0 0.0
        %1600 = vmatprep.subr.mxu0 0.0
        %1601 = vmatpush1.msra.mxu0 0.0
        %1602 = vmatprep.subr.mxu0 0.0
        %1603 = vmatpush1.msra.mxu0 0.0
        %1604 = vmatprep.mubr.f32.mxu0 0.0
        %1605 = vmatmul.mubr.f32.gmra.mrb[0].mxu0 %v1538
        %v1606 = vpop.f32.mrb[0].mxu0
        %v1607 = vadd.f32 0.0, %v1606
        %v1608 = vpop.f32.mrb[0].mxu0
        %1609 = vdwg.mxu0
        %1610 = vrot.lane.b32.xlu0 %v1016, 56
        %v1611 = vpop.permute.xlu0 %1610
        %v1614 = vsel %vm1026, %v1533, 0
        %1616 = vmatprep.subr.mxu0 0.0
        %1617 = vmatpush1.msra.mxu0 %v1611
        %1618 = vmatprep.subr.mxu0 0.0
        %1619 = vmatpush1.msra.mxu0 0.0
        %1620 = vmatprep.subr.mxu0 0.0
        %1621 = vmatpush1.msra.mxu0 0.0
        %1622 = vmatprep.subr.mxu0 0.0
        %1623 = vmatpush1.msra.mxu0 0.0
        %1624 = vmatprep.subr.mxu0 0.0
        %1625 = vmatpush1.msra.mxu0 0.0
        %1626 = vmatprep.subr.mxu0 0.0
        %1627 = vmatpush1.msra.mxu0 0.0
        %1628 = vmatprep.subr.mxu0 0.0
        %1629 = vmatpush1.msra.mxu0 0.0
        %1630 = vmatprep.subr.mxu0 0.0
        %1631 = vmatpush1.msra.mxu0 0.0
        %1632 = vmatprep.subr.mxu0 0.0
        %1633 = vmatpush1.msra.mxu0 0.0
        %1634 = vmatprep.subr.mxu0 0.0
        %1635 = vmatpush1.msra.mxu0 0.0
        %1636 = vmatprep.subr.mxu0 0.0
        %1637 = vmatpush1.msra.mxu0 0.0
        %1638 = vmatprep.subr.mxu0 0.0
        %1639 = vmatpush1.msra.mxu0 0.0
        %1640 = vmatprep.subr.mxu0 0.0
        %1641 = vmatpush1.msra.mxu0 0.0
        %1642 = vmatprep.subr.mxu0 0.0
        %1643 = vmatpush1.msra.mxu0 0.0
        %1644 = vmatprep.subr.mxu0 0.0
        %1645 = vmatpush1.msra.mxu0 0.0
        %1646 = vmatprep.subr.mxu0 0.0
        %1647 = vmatpush1.msra.mxu0 0.0
        %1648 = vmatprep.subr.mxu0 0.0
        %1649 = vmatpush1.msra.mxu0 0.0
        %1650 = vmatprep.subr.mxu0 0.0
        %1651 = vmatpush1.msra.mxu0 0.0
        %1652 = vmatprep.subr.mxu0 0.0
        %1653 = vmatpush1.msra.mxu0 0.0
        %1654 = vmatprep.subr.mxu0 0.0
        %1655 = vmatpush1.msra.mxu0 0.0
        %1656 = vmatprep.subr.mxu0 0.0
        %1657 = vmatpush1.msra.mxu0 0.0
        %1658 = vmatprep.subr.mxu0 0.0
        %1659 = vmatpush1.msra.mxu0 0.0
        %1660 = vmatprep.subr.mxu0 0.0
        %1661 = vmatpush1.msra.mxu0 0.0
        %1662 = vmatprep.subr.mxu0 0.0
        %1663 = vmatpush1.msra.mxu0 0.0
        %1664 = vmatprep.subr.mxu0 0.0
        %1665 = vmatpush1.msra.mxu0 0.0
        %1666 = vmatprep.subr.mxu0 0.0
        %1667 = vmatpush1.msra.mxu0 0.0
        %1668 = vmatprep.subr.mxu0 0.0
        %1669 = vmatpush1.msra.mxu0 0.0
        %1670 = vmatprep.subr.mxu0 0.0
        %1671 = vmatpush1.msra.mxu0 0.0
        %1672 = vmatprep.subr.mxu0 0.0
        %1673 = vmatpush1.msra.mxu0 0.0
        %1674 = vmatprep.subr.mxu0 0.0
        %1675 = vmatpush1.msra.mxu0 0.0
        %1676 = vmatprep.subr.mxu0 0.0
        %1677 = vmatpush1.msra.mxu0 0.0
        %1678 = vmatprep.subr.mxu0 0.0
        %1679 = vmatpush1.msra.mxu0 0.0
        %1680 = vmatprep.mubr.f32.mxu0 0.0
        %1681 = vmatmul.mubr.f32.gmra.mrb[0].mxu0 %v1614
        %v1682 = vpop.f32.mrb[0].mxu0
        %v1683 = vadd.f32 0.0, %v1682
        %v1684 = vpop.f32.mrb[0].mxu0
        %1685 = vdwg.mxu0
        %v1687 = vsel %vm1026, %v1607, 0
        %v1690 = vsel %vm1026, %v1683, 0
        %1692 = vmatprep.subr.mxu0 0.0
        %1693 = vmatpush1.msra.mxu0 %v1020
        %1694 = vmatprep.subr.mxu0 0.0
        %1695 = vmatpush1.msra.mxu0 0.0
        %1696 = vmatprep.subr.mxu0 0.0
        %1697 = vmatpush1.msra.mxu0 0.0
        %1698 = vmatprep.subr.mxu0 0.0
        %1699 = vmatpush1.msra.mxu0 0.0
        %1700 = vmatprep.subr.mxu0 0.0
        %1701 = vmatpush1.msra.mxu0 0.0
        %1702 = vmatprep.subr.mxu0 0.0
        %1703 = vmatpush1.msra.mxu0 0.0
        %1704 = vmatprep.subr.mxu0 0.0
        %1705 = vmatpush1.msra.mxu0 0.0
        %1706 = vmatprep.subr.mxu0 0.0
        %1707 = vmatpush1.msra.mxu0 0.0
        %1708 = vmatprep.subr.mxu0 0.0
        %1709 = vmatpush1.msra.mxu0 0.0
        %1710 = vmatprep.subr.mxu0 0.0
        %1711 = vmatpush1.msra.mxu0 0.0
        %1712 = vmatprep.subr.mxu0 0.0
        %1713 = vmatpush1.msra.mxu0 0.0
        %1714 = vmatprep.subr.mxu0 0.0
        %1715 = vmatpush1.msra.mxu0 0.0
        %1716 = vmatprep.subr.mxu0 0.0
        %1717 = vmatpush1.msra.mxu0 0.0
        %1718 = vmatprep.subr.mxu0 0.0
        %1719 = vmatpush1.msra.mxu0 0.0
        %1720 = vmatprep.subr.mxu0 0.0
        %1721 = vmatpush1.msra.mxu0 0.0
        %1722 = vmatprep.subr.mxu0 0.0
        %1723 = vmatpush1.msra.mxu0 0.0
        %1724 = vmatprep.subr.mxu0 0.0
        %1725 = vmatpush1.msra.mxu0 0.0
        %1726 = vmatprep.subr.mxu0 0.0
        %1727 = vmatpush1.msra.mxu0 0.0
        %1728 = vmatprep.subr.mxu0 0.0
        %1729 = vmatpush1.msra.mxu0 0.0
        %1730 = vmatprep.subr.mxu0 0.0
        %1731 = vmatpush1.msra.mxu0 0.0
        %1732 = vmatprep.subr.mxu0 0.0
        %1733 = vmatpush1.msra.mxu0 0.0
        %1734 = vmatprep.subr.mxu0 0.0
        %1735 = vmatpush1.msra.mxu0 0.0
        %1736 = vmatprep.subr.mxu0 0.0
        %1737 = vmatpush1.msra.mxu0 0.0
        %1738 = vmatprep.subr.mxu0 0.0
        %1739 = vmatpush1.msra.mxu0 0.0
        %1740 = vmatprep.subr.mxu0 0.0
        %1741 = vmatpush1.msra.mxu0 0.0
        %1742 = vmatprep.subr.mxu0 0.0
        %1743 = vmatpush1.msra.mxu0 0.0
        %1744 = vmatprep.subr.mxu0 0.0
        %1745 = vmatpush1.msra.mxu0 0.0
        %1746 = vmatprep.subr.mxu0 0.0
        %1747 = vmatpush1.msra.mxu0 0.0
        %1748 = vmatprep.subr.mxu0 0.0
        %1749 = vmatpush1.msra.mxu0 0.0
        %1750 = vmatprep.subr.mxu0 0.0
        %1751 = vmatpush1.msra.mxu0 0.0
        %1752 = vmatprep.subr.mxu0 0.0
        %1753 = vmatpush1.msra.mxu0 0.0
        %1754 = vmatprep.subr.mxu0 0.0
        %1755 = vmatpush1.msra.mxu0 0.0
        %1756 = vmatprep.mubr.f32.mxu0 0.0
        %1757 = vmatmul.mubr.f32.gmra.mrb[0].mxu0 %v1687
        %v1758 = vpop.f32.mrb[0].mxu0
        %v1759 = vadd.f32 0.0, %v1758
        %v1760 = vpop.f32.mrb[0].mxu0
        %1761 = vmatprep.mubr.f32.mxu0 0.0
        %1762 = vmatmul.mubr.f32.gmra.mrb[0].mxu0 %v1690
        %v1763 = vpop.f32.mrb[0].mxu0
        %v1764 = vadd.f32 0.0, %v1763
        %v1765 = vpop.f32.mrb[0].mxu0
        %1766 = vdwg.mxu0
        %v1768 = vsel %vm1026, %v1275, 0
        %v1771 = vsel %vm1026, %v1351, 0
        %1773 = vmatprep.subr.mxu0 0.0
        %1774 = vmatpush1.msra.mxu0 %v1019
        %1775 = vmatprep.subr.mxu0 0.0
        %1776 = vmatpush1.msra.mxu0 0.0
        %1777 = vmatprep.subr.mxu0 0.0
        %1778 = vmatpush1.msra.mxu0 0.0
        %1779 = vmatprep.subr.mxu0 0.0
        %1780 = vmatpush1.msra.mxu0 0.0
        %1781 = vmatprep.subr.mxu0 0.0
        %1782 = vmatpush1.msra.mxu0 0.0
        %1783 = vmatprep.subr.mxu0 0.0
        %1784 = vmatpush1.msra.mxu0 0.0
        %1785 = vmatprep.subr.mxu0 0.0
        %1786 = vmatpush1.msra.mxu0 0.0
        %1787 = vmatprep.subr.mxu0 0.0
        %1788 = vmatpush1.msra.mxu0 0.0
        %1789 = vmatprep.subr.mxu0 0.0
        %1790 = vmatpush1.msra.mxu0 0.0
        %1791 = vmatprep.subr.mxu0 0.0
        %1792 = vmatpush1.msra.mxu0 0.0
        %1793 = vmatprep.subr.mxu0 0.0
        %1794 = vmatpush1.msra.mxu0 0.0
        %1795 = vmatprep.subr.mxu0 0.0
        %1796 = vmatpush1.msra.mxu0 0.0
        %1797 = vmatprep.subr.mxu0 0.0
        %1798 = vmatpush1.msra.mxu0 0.0
        %1799 = vmatprep.subr.mxu0 0.0
        %1800 = vmatpush1.msra.mxu0 0.0
        %1801 = vmatprep.subr.mxu0 0.0
        %1802 = vmatpush1.msra.mxu0 0.0
        %1803 = vmatprep.subr.mxu0 0.0
        %1804 = vmatpush1.msra.mxu0 0.0
        %1805 = vmatprep.subr.mxu0 0.0
        %1806 = vmatpush1.msra.mxu0 0.0
        %1807 = vmatprep.subr.mxu0 0.0
        %1808 = vmatpush1.msra.mxu0 0.0
        %1809 = vmatprep.subr.mxu0 0.0
        %1810 = vmatpush1.msra.mxu0 0.0
        %1811 = vmatprep.subr.mxu0 0.0
        %1812 = vmatpush1.msra.mxu0 0.0
        %1813 = vmatprep.subr.mxu0 0.0
        %1814 = vmatpush1.msra.mxu0 0.0
        %1815 = vmatprep.subr.mxu0 0.0
        %1816 = vmatpush1.msra.mxu0 0.0
        %1817 = vmatprep.subr.mxu0 0.0
        %1818 = vmatpush1.msra.mxu0 0.0
        %1819 = vmatprep.subr.mxu0 0.0
        %1820 = vmatpush1.msra.mxu0 0.0
        %1821 = vmatprep.subr.mxu0 0.0
        %1822 = vmatpush1.msra.mxu0 0.0
        %1823 = vmatprep.subr.mxu0 0.0
        %1824 = vmatpush1.msra.mxu0 0.0
        %1825 = vmatprep.subr.mxu0 0.0
        %1826 = vmatpush1.msra.mxu0 0.0
        %1827 = vmatprep.subr.mxu0 0.0
        %1828 = vmatpush1.msra.mxu0 0.0
        %1829 = vmatprep.subr.mxu0 0.0
        %1830 = vmatpush1.msra.mxu0 0.0
        %1831 = vmatprep.subr.mxu0 0.0
        %1832 = vmatpush1.msra.mxu0 0.0
        %1833 = vmatprep.subr.mxu0 0.0
        %1834 = vmatpush1.msra.mxu0 0.0
        %1835 = vmatprep.subr.mxu0 0.0
        %1836 = vmatpush1.msra.mxu0 0.0
        %1837 = vmatprep.mubr.f32.mxu0 0.0
        %1838 = vmatmul.mubr.f32.gmra.mrb[0].mxu0 %v1768
        %v1839 = vpop.f32.mrb[0].mxu0
        %v1840 = vadd.f32 %v1759, %v1839
        %v1841 = vpop.f32.mrb[0].mxu0
        %1842 = vmatprep.mubr.f32.mxu0 0.0
        %1843 = vmatmul.mubr.f32.gmra.mrb[0].mxu0 %v1771
        %v1844 = vpop.f32.mrb[0].mxu0
        %v1845 = vadd.f32 %v1764, %v1844
        %v1846 = vpop.f32.mrb[0].mxu0
        %1847 = vdwg.mxu0
        %1848 = vrot.lane.b32.xlu0 %v1011, 112
        %v1849 = vpop.permute.xlu0 %1848
        %1850 = vrot.lane.b32.xlu0 %v1011, 80
        %v1851 = vpop.permute.xlu0 %1850
        %v1852 = vsel %vm1026, %v1849, 0
        %v1854 = vsel %vm1026, %v1851, 0
        %1856 = vmatprep.subr.mxu0 0.0
        %1857 = vmatpush1.xpose.msra.mxu0 %v1854
        %1858 = vmatprep.subr.mxu0 0.0
        %1859 = vmatpush1.xpose.msra.mxu0 0.0
        %1860 = vmatprep.subr.mxu0 0.0
        %1861 = vmatpush1.xpose.msra.mxu0 0.0
        %1862 = vmatprep.subr.mxu0 0.0
        %1863 = vmatpush1.xpose.msra.mxu0 0.0
        %1864 = vmatprep.subr.mxu0 0.0
        %1865 = vmatpush1.xpose.msra.mxu0 0.0
        %1866 = vmatprep.subr.mxu0 0.0
        %1867 = vmatpush1.xpose.msra.mxu0 0.0
        %1868 = vmatprep.subr.mxu0 0.0
        %1869 = vmatpush1.xpose.msra.mxu0 0.0
        %1870 = vmatprep.subr.mxu0 0.0
        %1871 = vmatpush1.xpose.msra.mxu0 0.0
        %1872 = vmatprep.subr.mxu0 0.0
        %1873 = vmatpush1.xpose.msra.mxu0 0.0
        %1874 = vmatprep.subr.mxu0 0.0
        %1875 = vmatpush1.xpose.msra.mxu0 0.0
        %1876 = vmatprep.subr.mxu0 0.0
        %1877 = vmatpush1.xpose.msra.mxu0 0.0
        %1878 = vmatprep.subr.mxu0 0.0
        %1879 = vmatpush1.xpose.msra.mxu0 0.0
        %1880 = vmatprep.subr.mxu0 0.0
        %1881 = vmatpush1.xpose.msra.mxu0 0.0
        %1882 = vmatprep.subr.mxu0 0.0
        %1883 = vmatpush1.xpose.msra.mxu0 0.0
        %1884 = vmatprep.subr.mxu0 0.0
        %1885 = vmatpush1.xpose.msra.mxu0 0.0
        %1886 = vmatprep.subr.mxu0 0.0
        %1887 = vmatpush1.xpose.msra.mxu0 0.0
        %1888 = vmatprep.subr.mxu0 0.0
        %1889 = vmatpush1.xpose.msra.mxu0 0.0
        %1890 = vmatprep.subr.mxu0 0.0
        %1891 = vmatpush1.xpose.msra.mxu0 0.0
        %1892 = vmatprep.subr.mxu0 0.0
        %1893 = vmatpush1.xpose.msra.mxu0 0.0
        %1894 = vmatprep.subr.mxu0 0.0
        %1895 = vmatpush1.xpose.msra.mxu0 0.0
        %1896 = vmatprep.subr.mxu0 0.0
        %1897 = vmatpush1.xpose.msra.mxu0 0.0
        %1898 = vmatprep.subr.mxu0 0.0
        %1899 = vmatpush1.xpose.msra.mxu0 0.0
        %1900 = vmatprep.subr.mxu0 0.0
        %1901 = vmatpush1.xpose.msra.mxu0 0.0
        %1902 = vmatprep.subr.mxu0 0.0
        %1903 = vmatpush1.xpose.msra.mxu0 0.0
        %1904 = vmatprep.subr.mxu0 0.0
        %1905 = vmatpush1.xpose.msra.mxu0 0.0
        %1906 = vmatprep.subr.mxu0 0.0
        %1907 = vmatpush1.xpose.msra.mxu0 0.0
        %1908 = vmatprep.subr.mxu0 0.0
        %1909 = vmatpush1.xpose.msra.mxu0 0.0
        %1910 = vmatprep.subr.mxu0 0.0
        %1911 = vmatpush1.xpose.msra.mxu0 0.0
        %1912 = vmatprep.subr.mxu0 0.0
        %1913 = vmatpush1.xpose.msra.mxu0 0.0
        %1914 = vmatprep.subr.mxu0 0.0
        %1915 = vmatpush1.xpose.msra.mxu0 0.0
        %1916 = vmatprep.subr.mxu0 0.0
        %1917 = vmatpush1.xpose.msra.mxu0 0.0
        %1918 = vmatprep.subr.mxu0 0.0
        %1919 = vmatpush1.xpose.msra.mxu0 0.0
        %1920 = vmatprep.mubr.f32.mxu0 0.0
        %1921 = vmatmul.mubr.f32.gmra.mrb[0].mxu0 %v1852
        %v1922 = vpop.f32.mrb[0].mxu0
        %v1923 = vadd.f32 0.0, %v1922
        %v1924 = vpop.f32.mrb[0].mxu0
        %1925 = vdwg.mxu0
        %1926 = vrot.lane.b32.xlu0 %v1016, 112
        %v1927 = vpop.permute.xlu0 %1926
        %1928 = vrot.lane.b32.xlu0 %v1016, 80
        %v1929 = vpop.permute.xlu0 %1928
        %v1930 = vsel %vm1026, %v1927, 0
        %v1932 = vsel %vm1026, %v1929, 0
        %1934 = vmatprep.subr.mxu0 0.0
        %1935 = vmatpush1.xpose.msra.mxu0 %v1932
        %1936 = vmatprep.subr.mxu0 0.0
        %1937 = vmatpush1.xpose.msra.mxu0 0.0
        %1938 = vmatprep.subr.mxu0 0.0
        %1939 = vmatpush1.xpose.msra.mxu0 0.0
        %1940 = vmatprep.subr.mxu0 0.0
        %1941 = vmatpush1.xpose.msra.mxu0 0.0
        %1942 = vmatprep.subr.mxu0 0.0
        %1943 = vmatpush1.xpose.msra.mxu0 0.0
        %1944 = vmatprep.subr.mxu0 0.0
        %1945 = vmatpush1.xpose.msra.mxu0 0.0
        %1946 = vmatprep.subr.mxu0 0.0
        %1947 = vmatpush1.xpose.msra.mxu0 0.0
        %1948 = vmatprep.subr.mxu0 0.0
        %1949 = vmatpush1.xpose.msra.mxu0 0.0
        %1950 = vmatprep.subr.mxu0 0.0
        %1951 = vmatpush1.xpose.msra.mxu0 0.0
        %1952 = vmatprep.subr.mxu0 0.0
        %1953 = vmatpush1.xpose.msra.mxu0 0.0
        %1954 = vmatprep.subr.mxu0 0.0
        %1955 = vmatpush1.xpose.msra.mxu0 0.0
        %1956 = vmatprep.subr.mxu0 0.0
        %1957 = vmatpush1.xpose.msra.mxu0 0.0
        %1958 = vmatprep.subr.mxu0 0.0
        %1959 = vmatpush1.xpose.msra.mxu0 0.0
        %1960 = vmatprep.subr.mxu0 0.0
        %1961 = vmatpush1.xpose.msra.mxu0 0.0
        %1962 = vmatprep.subr.mxu0 0.0
        %1963 = vmatpush1.xpose.msra.mxu0 0.0
        %1964 = vmatprep.subr.mxu0 0.0
        %1965 = vmatpush1.xpose.msra.mxu0 0.0
        %1966 = vmatprep.subr.mxu0 0.0
        %1967 = vmatpush1.xpose.msra.mxu0 0.0
        %1968 = vmatprep.subr.mxu0 0.0
        %1969 = vmatpush1.xpose.msra.mxu0 0.0
        %1970 = vmatprep.subr.mxu0 0.0
        %1971 = vmatpush1.xpose.msra.mxu0 0.0
        %1972 = vmatprep.subr.mxu0 0.0
        %1973 = vmatpush1.xpose.msra.mxu0 0.0
        %1974 = vmatprep.subr.mxu0 0.0
        %1975 = vmatpush1.xpose.msra.mxu0 0.0
        %1976 = vmatprep.subr.mxu0 0.0
        %1977 = vmatpush1.xpose.msra.mxu0 0.0
        %1978 = vmatprep.subr.mxu0 0.0
        %1979 = vmatpush1.xpose.msra.mxu0 0.0
        %1980 = vmatprep.subr.mxu0 0.0
        %1981 = vmatpush1.xpose.msra.mxu0 0.0
        %1982 = vmatprep.subr.mxu0 0.0
        %1983 = vmatpush1.xpose.msra.mxu0 0.0
        %1984 = vmatprep.subr.mxu0 0.0
        %1985 = vmatpush1.xpose.msra.mxu0 0.0
        %1986 = vmatprep.subr.mxu0 0.0
        %1987 = vmatpush1.xpose.msra.mxu0 0.0
        %1988 = vmatprep.subr.mxu0 0.0
        %1989 = vmatpush1.xpose.msra.mxu0 0.0
        %1990 = vmatprep.subr.mxu0 0.0
        %1991 = vmatpush1.xpose.msra.mxu0 0.0
        %1992 = vmatprep.subr.mxu0 0.0
        %1993 = vmatpush1.xpose.msra.mxu0 0.0
        %1994 = vmatprep.subr.mxu0 0.0
        %1995 = vmatpush1.xpose.msra.mxu0 0.0
        %1996 = vmatprep.subr.mxu0 0.0
        %1997 = vmatpush1.xpose.msra.mxu0 0.0
        %1998 = vmatprep.mubr.f32.mxu0 0.0
        %1999 = vmatmul.mubr.f32.gmra.mrb[0].mxu0 %v1930
        %v2000 = vpop.f32.mrb[0].mxu0
        %v2001 = vadd.f32 0.0, %v2000
        %v2002 = vpop.f32.mrb[0].mxu0
        %2003 = vdwg.mxu0
        %v2004 = vmul.f32 %v1923, 0.35355338
        %v2005 = vmul.f32 %v2001, 0.35355338
        %v2006 = vsel %vm1026, %v2004, -inf
        %2007 = vmax.xlane.f32.xlu0 %v2006
        %v2008 = vpop.xlane.xlu0 %2007
        %v2009 = vsel %vm1026, %v2005, -inf
        %2010 = vmax.xlane.f32.xlu0 %v2009
        %v2011 = vpop.xlane.xlu0 %2010
        %v2012 = vsub.f32 %v2004, %v2008
        %v2013 = vsub.f32 %v2005, %v2011
        %v2014 = vmul.f32 %v2012, 1.442695
        %v2015 = vpow.pop %v2014
        %v2016 = vmul.f32 %v2013, 1.442695
        %v2017 = vpow.pop %v2016
        %v2018 = vsel %vm1026, %v2015, 0.0
        %2019 = vadd.xlane.f32.xlu0 %v2018
        %v2020 = vpop.xlane.xlu0 %2019
        %v2021 = vsel %vm1026, %v2017, 0.0
        %2022 = vadd.xlane.f32.xlu0 %v2021
        %v2023 = vpop.xlane.xlu0 %2022
        %v2024 = vrcp.pop %v2020
        %v2025 = vmul.f32 %v2015, %v2024
        %v2026 = vrcp.pop %v2023
        %v2027 = vmul.f32 %v2017, %v2026
        %2028 = vrot.lane.b32.xlu0 %v1011, 48
        %v2029 = vpop.permute.xlu0 %2028
        %v2032 = vsel %vm1026, %v2025, 0
        %2034 = vmatprep.subr.mxu0 0.0
        %2035 = vmatpush1.msra.mxu0 %v2029
        %2036 = vmatprep.subr.mxu0 0.0
        %2037 = vmatpush1.msra.mxu0 0.0
        %2038 = vmatprep.subr.mxu0 0.0
        %2039 = vmatpush1.msra.mxu0 0.0
        %2040 = vmatprep.subr.mxu0 0.0
        %2041 = vmatpush1.msra.mxu0 0.0
        %2042 = vmatprep.subr.mxu0 0.0
        %2043 = vmatpush1.msra.mxu0 0.0
        %2044 = vmatprep.subr.mxu0 0.0
        %2045 = vmatpush1.msra.mxu0 0.0
        %2046 = vmatprep.subr.mxu0 0.0
        %2047 = vmatpush1.msra.mxu0 0.0
        %2048 = vmatprep.subr.mxu0 0.0
        %2049 = vmatpush1.msra.mxu0 0.0
        %2050 = vmatprep.subr.mxu0 0.0
        %2051 = vmatpush1.msra.mxu0 0.0
        %2052 = vmatprep.subr.mxu0 0.0
        %2053 = vmatpush1.msra.mxu0 0.0
        %2054 = vmatprep.subr.mxu0 0.0
        %2055 = vmatpush1.msra.mxu0 0.0
        %2056 = vmatprep.subr.mxu0 0.0
        %2057 = vmatpush1.msra.mxu0 0.0
        %2058 = vmatprep.subr.mxu0 0.0
        %2059 = vmatpush1.msra.mxu0 0.0
        %2060 = vmatprep.subr.mxu0 0.0
        %2061 = vmatpush1.msra.mxu0 0.0
        %2062 = vmatprep.subr.mxu0 0.0
        %2063 = vmatpush1.msra.mxu0 0.0
        %2064 = vmatprep.subr.mxu0 0.0
        %2065 = vmatpush1.msra.mxu0 0.0
        %2066 = vmatprep.subr.mxu0 0.0
        %2067 = vmatpush1.msra.mxu0 0.0
        %2068 = vmatprep.subr.mxu0 0.0
        %2069 = vmatpush1.msra.mxu0 0.0
        %2070 = vmatprep.subr.mxu0 0.0
        %2071 = vmatpush1.msra.mxu0 0.0
        %2072 = vmatprep.subr.mxu0 0.0
        %2073 = vmatpush1.msra.mxu0 0.0
        %2074 = vmatprep.subr.mxu0 0.0
        %2075 = vmatpush1.msra.mxu0 0.0
        %2076 = vmatprep.subr.mxu0 0.0
        %2077 = vmatpush1.msra.mxu0 0.0
        %2078 = vmatprep.subr.mxu0 0.0
        %2079 = vmatpush1.msra.mxu0 0.0
        %2080 = vmatprep.subr.mxu0 0.0
        %2081 = vmatpush1.msra.mxu0 0.0
        %2082 = vmatprep.subr.mxu0 0.0
        %2083 = vmatpush1.msra.mxu0 0.0
        %2084 = vmatprep.subr.mxu0 0.0
        %2085 = vmatpush1.msra.mxu0 0.0
        %2086 = vmatprep.subr.mxu0 0.0
        %2087 = vmatpush1.msra.mxu0 0.0
        %2088 = vmatprep.subr.mxu0 0.0
        %2089 = vmatpush1.msra.mxu0 0.0
        %2090 = vmatprep.subr.mxu0 0.0
        %2091 = vmatpush1.msra.mxu0 0.0
        %2092 = vmatprep.subr.mxu0 0.0
        %2093 = vmatpush1.msra.mxu0 0.0
        %2094 = vmatprep.subr.mxu0 0.0
        %2095 = vmatpush1.msra.mxu0 0.0
        %2096 = vmatprep.subr.mxu0 0.0
        %2097 = vmatpush1.msra.mxu0 0.0
        %2098 = vmatprep.mubr.f32.mxu0 0.0
        %2099 = vmatmul.mubr.f32.gmra.mrb[0].mxu0 %v2032
        %v2100 = vpop.f32.mrb[0].mxu0
        %v2101 = vadd.f32 0.0, %v2100
        %v2102 = vpop.f32.mrb[0].mxu0
        %2103 = vdwg.mxu0
        %2104 = vrot.lane.b32.xlu0 %v1016, 48
        %v2105 = vpop.permute.xlu0 %2104
        %v2108 = vsel %vm1026, %v2027, 0
        %2110 = vmatprep.subr.mxu0 0.0
        %2111 = vmatpush1.msra.mxu0 %v2105
        %2112 = vmatprep.subr.mxu0 0.0
        %2113 = vmatpush1.msra.mxu0 0.0
        %2114 = vmatprep.subr.mxu0 0.0
        %2115 = vmatpush1.msra.mxu0 0.0
        %2116 = vmatprep.subr.mxu0 0.0
        %2117 = vmatpush1.msra.mxu0 0.0
        %2118 = vmatprep.subr.mxu0 0.0
        %2119 = vmatpush1.msra.mxu0 0.0
        %2120 = vmatprep.subr.mxu0 0.0
        %2121 = vmatpush1.msra.mxu0 0.0
        %2122 = vmatprep.subr.mxu0 0.0
        %2123 = vmatpush1.msra.mxu0 0.0
        %2124 = vmatprep.subr.mxu0 0.0
        %2125 = vmatpush1.msra.mxu0 0.0
        %2126 = vmatprep.subr.mxu0 0.0
        %2127 = vmatpush1.msra.mxu0 0.0
        %2128 = vmatprep.subr.mxu0 0.0
        %2129 = vmatpush1.msra.mxu0 0.0
        %2130 = vmatprep.subr.mxu0 0.0
        %2131 = vmatpush1.msra.mxu0 0.0
        %2132 = vmatprep.subr.mxu0 0.0
        %2133 = vmatpush1.msra.mxu0 0.0
        %2134 = vmatprep.subr.mxu0 0.0
        %2135 = vmatpush1.msra.mxu0 0.0
        %2136 = vmatprep.subr.mxu0 0.0
        %2137 = vmatpush1.msra.mxu0 0.0
        %2138 = vmatprep.subr.mxu0 0.0
        %2139 = vmatpush1.msra.mxu0 0.0
        %2140 = vmatprep.subr.mxu0 0.0
        %2141 = vmatpush1.msra.mxu0 0.0
        %2142 = vmatprep.subr.mxu0 0.0
        %2143 = vmatpush1.msra.mxu0 0.0
        %2144 = vmatprep.subr.mxu0 0.0
        %2145 = vmatpush1.msra.mxu0 0.0
        %2146 = vmatprep.subr.mxu0 0.0
        %2147 = vmatpush1.msra.mxu0 0.0
        %2148 = vmatprep.subr.mxu0 0.0
        %2149 = vmatpush1.msra.mxu0 0.0
        %2150 = vmatprep.subr.mxu0 0.0
        %2151 = vmatpush1.msra.mxu0 0.0
        %2152 = vmatprep.subr.mxu0 0.0
        %2153 = vmatpush1.msra.mxu0 0.0
        %2154 = vmatprep.subr.mxu0 0.0
        %2155 = vmatpush1.msra.mxu0 0.0
        %2156 = vmatprep.subr.mxu0 0.0
        %2157 = vmatpush1.msra.mxu0 0.0
        %2158 = vmatprep.subr.mxu0 0.0
        %2159 = vmatpush1.msra.mxu0 0.0
        %2160 = vmatprep.subr.mxu0 0.0
        %2161 = vmatpush1.msra.mxu0 0.0
        %2162 = vmatprep.subr.mxu0 0.0
        %2163 = vmatpush1.msra.mxu0 0.0
        %2164 = vmatprep.subr.mxu0 0.0
        %2165 = vmatpush1.msra.mxu0 0.0
        %2166 = vmatprep.subr.mxu0 0.0
        %2167 = vmatpush1.msra.mxu0 0.0
        %2168 = vmatprep.subr.mxu0 0.0
        %2169 = vmatpush1.msra.mxu0 0.0
        %2170 = vmatprep.subr.mxu0 0.0
        %2171 = vmatpush1.msra.mxu0 0.0
        %2172 = vmatprep.subr.mxu0 0.0
        %2173 = vmatpush1.msra.mxu0 0.0
        %2174 = vmatprep.mubr.f32.mxu0 0.0
        %2175 = vmatmul.mubr.f32.gmra.mrb[0].mxu0 %v2108
        %v2176 = vpop.f32.mrb[0].mxu0
        %v2177 = vadd.f32 0.0, %v2176
        %v2178 = vpop.f32.mrb[0].mxu0
        %2179 = vdwg.mxu0
        %v2181 = vsel %vm1026, %v2101, 0
        %v2184 = vsel %vm1026, %v2177, 0
        %2186 = vmatprep.subr.mxu0 0.0
        %2187 = vmatpush1.msra.mxu0 %v1021
        %2188 = vmatprep.subr.mxu0 0.0
        %2189 = vmatpush1.msra.mxu0 0.0
        %2190 = vmatprep.subr.mxu0 0.0
        %2191 = vmatpush1.msra.mxu0 0.0
        %2192 = vmatprep.subr.mxu0 0.0
        %2193 = vmatpush1.msra.mxu0 0.0
        %2194 = vmatprep.subr.mxu0 0.0
        %2195 = vmatpush1.msra.mxu0 0.0
        %2196 = vmatprep.subr.mxu0 0.0
        %2197 = vmatpush1.msra.mxu0 0.0
        %2198 = vmatprep.subr.mxu0 0.0
        %2199 = vmatpush1.msra.mxu0 0.0
        %2200 = vmatprep.subr.mxu0 0.0
        %2201 = vmatpush1.msra.mxu0 0.0
        %2202 = vmatprep.subr.mxu0 0.0
        %2203 = vmatpush1.msra.mxu0 0.0
        %2204 = vmatprep.subr.mxu0 0.0
        %2205 = vmatpush1.msra.mxu0 0.0
        %2206 = vmatprep.subr.mxu0 0.0
        %2207 = vmatpush1.msra.mxu0 0.0
        %2208 = vmatprep.subr.mxu0 0.0
        %2209 = vmatpush1.msra.mxu0 0.0
        %2210 = vmatprep.subr.mxu0 0.0
        %2211 = vmatpush1.msra.mxu0 0.0
        %2212 = vmatprep.subr.mxu0 0.0
        %2213 = vmatpush1.msra.mxu0 0.0
        %2214 = vmatprep.subr.mxu0 0.0
        %2215 = vmatpush1.msra.mxu0 0.0
        %2216 = vmatprep.subr.mxu0 0.0
        %2217 = vmatpush1.msra.mxu0 0.0
        %2218 = vmatprep.subr.mxu0 0.0
        %2219 = vmatpush1.msra.mxu0 0.0
        %2220 = vmatprep.subr.mxu0 0.0
        %2221 = vmatpush1.msra.mxu0 0.0
        %2222 = vmatprep.subr.mxu0 0.0
        %2223 = vmatpush1.msra.mxu0 0.0
        %2224 = vmatprep.subr.mxu0 0.0
        %2225 = vmatpush1.msra.mxu0 0.0
        %2226 = vmatprep.subr.mxu0 0.0
        %2227 = vmatpush1.msra.mxu0 0.0
        %2228 = vmatprep.subr.mxu0 0.0
        %2229 = vmatpush1.msra.mxu0 0.0
        %2230 = vmatprep.subr.mxu0 0.0
        %2231 = vmatpush1.msra.mxu0 0.0
        %2232 = vmatprep.subr.mxu0 0.0
        %2233 = vmatpush1.msra.mxu0 0.0
        %2234 = vmatprep.subr.mxu0 0.0
        %2235 = vmatpush1.msra.mxu0 0.0
        %2236 = vmatprep.subr.mxu0 0.0
        %2237 = vmatpush1.msra.mxu0 0.0
        %2238 = vmatprep.subr.mxu0 0.0
        %2239 = vmatpush1.msra.mxu0 0.0
        %2240 = vmatprep.subr.mxu0 0.0
        %2241 = vmatpush1.msra.mxu0 0.0
        %2242 = vmatprep.subr.mxu0 0.0
        %2243 = vmatpush1.msra.mxu0 0.0
        %2244 = vmatprep.subr.mxu0 0.0
        %2245 = vmatpush1.msra.mxu0 0.0
        %2246 = vmatprep.subr.mxu0 0.0
        %2247 = vmatpush1.msra.mxu0 0.0
        %2248 = vmatprep.subr.mxu0 0.0
        %2249 = vmatpush1.msra.mxu0 0.0
        %2250 = vmatprep.mubr.f32.mxu0 0.0
        %2251 = vmatmul.mubr.f32.gmra.mrb[0].mxu0 %v2181
        %v2252 = vpop.f32.mrb[0].mxu0
        %v2253 = vadd.f32 0.0, %v2252
        %v2254 = vpop.f32.mrb[0].mxu0
        %2255 = vmatprep.mubr.f32.mxu0 0.0
        %2256 = vmatmul.mubr.f32.gmra.mrb[0].mxu0 %v2184
        %v2257 = vpop.f32.mrb[0].mxu0
        %v2258 = vadd.f32 0.0, %v2257
        %v2259 = vpop.f32.mrb[0].mxu0
        %2260 = vdwg.mxu0
        %v2261 = vadd.f32 %v1840, %v2253
        %v2262 = vadd.f32 %v1845, %v2258
        %2263 = vrot.lane.b32.xlu0 %v1011, 104
        %v2264 = vpop.permute.xlu0 %2263
        %2265 = vrot.lane.b32.xlu0 %v1011, 72
        %v2266 = vpop.permute.xlu0 %2265
        %v2267 = vsel %vm1026, %v2264, 0
        %v2269 = vsel %vm1026, %v2266, 0
        %2271 = vmatprep.subr.mxu0 0.0
        %2272 = vmatpush1.xpose.msra.mxu0 %v2269
        %2273 = vmatprep.subr.mxu0 0.0
        %2274 = vmatpush1.xpose.msra.mxu0 0.0
        %2275 = vmatprep.subr.mxu0 0.0
        %2276 = vmatpush1.xpose.msra.mxu0 0.0
        %2277 = vmatprep.subr.mxu0 0.0
        %2278 = vmatpush1.xpose.msra.mxu0 0.0
        %2279 = vmatprep.subr.mxu0 0.0
        %2280 = vmatpush1.xpose.msra.mxu0 0.0
        %2281 = vmatprep.subr.mxu0 0.0
        %2282 = vmatpush1.xpose.msra.mxu0 0.0
        %2283 = vmatprep.subr.mxu0 0.0
        %2284 = vmatpush1.xpose.msra.mxu0 0.0
        %2285 = vmatprep.subr.mxu0 0.0
        %2286 = vmatpush1.xpose.msra.mxu0 0.0
        %2287 = vmatprep.subr.mxu0 0.0
        %2288 = vmatpush1.xpose.msra.mxu0 0.0
        %2289 = vmatprep.subr.mxu0 0.0
        %2290 = vmatpush1.xpose.msra.mxu0 0.0
        %2291 = vmatprep.subr.mxu0 0.0
        %2292 = vmatpush1.xpose.msra.mxu0 0.0
        %2293 = vmatprep.subr.mxu0 0.0
        %2294 = vmatpush1.xpose.msra.mxu0 0.0
        %2295 = vmatprep.subr.mxu0 0.0
        %2296 = vmatpush1.xpose.msra.mxu0 0.0
        %2297 = vmatprep.subr.mxu0 0.0
        %2298 = vmatpush1.xpose.msra.mxu0 0.0
        %2299 = vmatprep.subr.mxu0 0.0
        %2300 = vmatpush1.xpose.msra.mxu0 0.0
        %2301 = vmatprep.subr.mxu0 0.0
        %2302 = vmatpush1.xpose.msra.mxu0 0.0
        %2303 = vmatprep.subr.mxu0 0.0
        %2304 = vmatpush1.xpose.msra.mxu0 0.0
        %2305 = vmatprep.subr.mxu0 0.0
        %2306 = vmatpush1.xpose.msra.mxu0 0.0
        %2307 = vmatprep.subr.mxu0 0.0
        %2308 = vmatpush1.xpose.msra.mxu0 0.0
        %2309 = vmatprep.subr.mxu0 0.0
        %2310 = vmatpush1.xpose.msra.mxu0 0.0
        %2311 = vmatprep.subr.mxu0 0.0
        %2312 = vmatpush1.xpose.msra.mxu0 0.0
        %2313 = vmatprep.subr.mxu0 0.0
        %2314 = vmatpush1.xpose.msra.mxu0 0.0
        %2315 = vmatprep.subr.mxu0 0.0
        %2316 = vmatpush1.xpose.msra.mxu0 0.0
        %2317 = vmatprep.subr.mxu0 0.0
        %2318 = vmatpush1.xpose.msra.mxu0 0.0
        %2319 = vmatprep.subr.mxu0 0.0
        %2320 = vmatpush1.xpose.msra.mxu0 0.0
        %2321 = vmatprep.subr.mxu0 0.0
        %2322 = vmatpush1.xpose.msra.mxu0 0.0
        %2323 = vmatprep.subr.mxu0 0.0
        %2324 = vmatpush1.xpose.msra.mxu0 0.0
        %2325 = vmatprep.subr.mxu0 0.0
        %2326 = vmatpush1.xpose.msra.mxu0 0.0
        %2327 = vmatprep.subr.mxu0 0.0
        %2328 = vmatpush1.xpose.msra.mxu0 0.0
        %2329 = vmatprep.subr.mxu0 0.0
        %2330 = vmatpush1.xpose.msra.mxu0 0.0
        %2331 = vmatprep.subr.mxu0 0.0
        %2332 = vmatpush1.xpose.msra.mxu0 0.0
        %2333 = vmatprep.subr.mxu0 0.0
        %2334 = vmatpush1.xpose.msra.mxu0 0.0
        %2335 = vmatprep.mubr.f32.mxu0 0.0
        %2336 = vmatmul.mubr.f32.gmra.mrb[0].mxu0 %v2267
        %v2337 = vpop.f32.mrb[0].mxu0
        %v2338 = vadd.f32 0.0, %v2337
        %v2339 = vpop.f32.mrb[0].mxu0
        %2340 = vdwg.mxu0
        %2341 = vrot.lane.b32.xlu0 %v1016, 104
        %v2342 = vpop.permute.xlu0 %2341
        %2343 = vrot.lane.b32.xlu0 %v1016, 72
        %v2344 = vpop.permute.xlu0 %2343
        %v2345 = vsel %vm1026, %v2342, 0
        %v2347 = vsel %vm1026, %v2344, 0
        %2349 = vmatprep.subr.mxu0 0.0
        %2350 = vmatpush1.xpose.msra.mxu0 %v2347
        %2351 = vmatprep.subr.mxu0 0.0
        %2352 = vmatpush1.xpose.msra.mxu0 0.0
        %2353 = vmatprep.subr.mxu0 0.0
        %2354 = vmatpush1.xpose.msra.mxu0 0.0
        %2355 = vmatprep.subr.mxu0 0.0
        %2356 = vmatpush1.xpose.msra.mxu0 0.0
        %2357 = vmatprep.subr.mxu0 0.0
        %2358 = vmatpush1.xpose.msra.mxu0 0.0
        %2359 = vmatprep.subr.mxu0 0.0
        %2360 = vmatpush1.xpose.msra.mxu0 0.0
        %2361 = vmatprep.subr.mxu0 0.0
        %2362 = vmatpush1.xpose.msra.mxu0 0.0
        %2363 = vmatprep.subr.mxu0 0.0
        %2364 = vmatpush1.xpose.msra.mxu0 0.0
        %2365 = vmatprep.subr.mxu0 0.0
        %2366 = vmatpush1.xpose.msra.mxu0 0.0
        %2367 = vmatprep.subr.mxu0 0.0
        %2368 = vmatpush1.xpose.msra.mxu0 0.0
        %2369 = vmatprep.subr.mxu0 0.0
        %2370 = vmatpush1.xpose.msra.mxu0 0.0
        %2371 = vmatprep.subr.mxu0 0.0
        %2372 = vmatpush1.xpose.msra.mxu0 0.0
        %2373 = vmatprep.subr.mxu0 0.0
        %2374 = vmatpush1.xpose.msra.mxu0 0.0
        %2375 = vmatprep.subr.mxu0 0.0
        %2376 = vmatpush1.xpose.msra.mxu0 0.0
        %2377 = vmatprep.subr.mxu0 0.0
        %2378 = vmatpush1.xpose.msra.mxu0 0.0
        %2379 = vmatprep.subr.mxu0 0.0
        %2380 = vmatpush1.xpose.msra.mxu0 0.0
        %2381 = vmatprep.subr.mxu0 0.0
        %2382 = vmatpush1.xpose.msra.mxu0 0.0
        %2383 = vmatprep.subr.mxu0 0.0
        %2384 = vmatpush1.xpose.msra.mxu0 0.0
        %2385 = vmatprep.subr.mxu0 0.0
        %2386 = vmatpush1.xpose.msra.mxu0 0.0
        %2387 = vmatprep.subr.mxu0 0.0
        %2388 = vmatpush1.xpose.msra.mxu0 0.0
        %2389 = vmatprep.subr.mxu0 0.0
        %2390 = vmatpush1.xpose.msra.mxu0 0.0
        %2391 = vmatprep.subr.mxu0 0.0
        %2392 = vmatpush1.xpose.msra.mxu0 0.0
        %2393 = vmatprep.subr.mxu0 0.0
        %2394 = vmatpush1.xpose.msra.mxu0 0.0
        %2395 = vmatprep.subr.mxu0 0.0
        %2396 = vmatpush1.xpose.msra.mxu0 0.0
        %2397 = vmatprep.subr.mxu0 0.0
        %2398 = vmatpush1.xpose.msra.mxu0 0.0
        %2399 = vmatprep.subr.mxu0 0.0
        %2400 = vmatpush1.xpose.msra.mxu0 0.0
        %2401 = vmatprep.subr.mxu0 0.0
        %2402 = vmatpush1.xpose.msra.mxu0 0.0
        %2403 = vmatprep.subr.mxu0 0.0
        %2404 = vmatpush1.xpose.msra.mxu0 0.0
        %2405 = vmatprep.subr.mxu0 0.0
        %2406 = vmatpush1.xpose.msra.mxu0 0.0
        %2407 = vmatprep.subr.mxu0 0.0
        %2408 = vmatpush1.xpose.msra.mxu0 0.0
        %2409 = vmatprep.subr.mxu0 0.0
        %2410 = vmatpush1.xpose.msra.mxu0 0.0
        %2411 = vmatprep.subr.mxu0 0.0
        %2412 = vmatpush1.xpose.msra.mxu0 0.0
        %2413 = vmatprep.mubr.f32.mxu0 0.0
        %2414 = vmatmul.mubr.f32.gmra.mrb[0].mxu0 %v2345
        %v2415 = vpop.f32.mrb[0].mxu0
        %v2416 = vadd.f32 0.0, %v2415
        %v2417 = vpop.f32.mrb[0].mxu0
        %2418 = vdwg.mxu0
        %v2419 = vmul.f32 %v2338, 0.35355338
        %v2420 = vmul.f32 %v2416, 0.35355338
        %v2421 = vsel %vm1026, %v2419, -inf
        %2422 = vmax.xlane.f32.xlu0 %v2421
        %v2423 = vpop.xlane.xlu0 %2422
        %v2424 = vsel %vm1026, %v2420, -inf
        %2425 = vmax.xlane.f32.xlu0 %v2424
        %v2426 = vpop.xlane.xlu0 %2425
        %v2427 = vsub.f32 %v2419, %v2423
        %v2428 = vsub.f32 %v2420, %v2426
        %v2429 = vmul.f32 %v2427, 1.442695
        %v2430 = vpow.pop %v2429
        %v2431 = vmul.f32 %v2428, 1.442695
        %v2432 = vpow.pop %v2431
        %v2433 = vsel %vm1026, %v2430, 0.0
        %2434 = vadd.xlane.f32.xlu0 %v2433
        %v2435 = vpop.xlane.xlu0 %2434
        %v2436 = vsel %vm1026, %v2432, 0.0
        %2437 = vadd.xlane.f32.xlu0 %v2436
        %v2438 = vpop.xlane.xlu0 %2437
        %v2439 = vrcp.pop %v2435
        %v2440 = vmul.f32 %v2430, %v2439
        %v2441 = vrcp.pop %v2438
        %v2442 = vmul.f32 %v2432, %v2441
        %2443 = vrot.lane.b32.xlu0 %v1011, 40
        %v2444 = vpop.permute.xlu0 %2443
        %v2447 = vsel %vm1026, %v2440, 0
        %2449 = vmatprep.subr.mxu0 0.0
        %2450 = vmatpush1.msra.mxu0 %v2444
        %2451 = vmatprep.subr.mxu0 0.0
        %2452 = vmatpush1.msra.mxu0 0.0
        %2453 = vmatprep.subr.mxu0 0.0
        %2454 = vmatpush1.msra.mxu0 0.0
        %2455 = vmatprep.subr.mxu0 0.0
        %2456 = vmatpush1.msra.mxu0 0.0
        %2457 = vmatprep.subr.mxu0 0.0
        %2458 = vmatpush1.msra.mxu0 0.0
        %2459 = vmatprep.subr.mxu0 0.0
        %2460 = vmatpush1.msra.mxu0 0.0
        %2461 = vmatprep.subr.mxu0 0.0
        %2462 = vmatpush1.msra.mxu0 0.0
        %2463 = vmatprep.subr.mxu0 0.0
        %2464 = vmatpush1.msra.mxu0 0.0
        %2465 = vmatprep.subr.mxu0 0.0
        %2466 = vmatpush1.msra.mxu0 0.0
        %2467 = vmatprep.subr.mxu0 0.0
        %2468 = vmatpush1.msra.mxu0 0.0
        %2469 = vmatprep.subr.mxu0 0.0
        %2470 = vmatpush1.msra.mxu0 0.0
        %2471 = vmatprep.subr.mxu0 0.0
        %2472 = vmatpush1.msra.mxu0 0.0
        %2473 = vmatprep.subr.mxu0 0.0
        %2474 = vmatpush1.msra.mxu0 0.0
        %2475 = vmatprep.subr.mxu0 0.0
        %2476 = vmatpush1.msra.mxu0 0.0
        %2477 = vmatprep.subr.mxu0 0.0
        %2478 = vmatpush1.msra.mxu0 0.0
        %2479 = vmatprep.subr.mxu0 0.0
        %2480 = vmatpush1.msra.mxu0 0.0
        %2481 = vmatprep.subr.mxu0 0.0
        %2482 = vmatpush1.msra.mxu0 0.0
        %2483 = vmatprep.subr.mxu0 0.0
        %2484 = vmatpush1.msra.mxu0 0.0
        %2485 = vmatprep.subr.mxu0 0.0
        %2486 = vmatpush1.msra.mxu0 0.0
        %2487 = vmatprep.subr.mxu0 0.0
        %2488 = vmatpush1.msra.mxu0 0.0
        %2489 = vmatprep.subr.mxu0 0.0
        %2490 = vmatpush1.msra.mxu0 0.0
        %2491 = vmatprep.subr.mxu0 0.0
        %2492 = vmatpush1.msra.mxu0 0.0
        %2493 = vmatprep.subr.mxu0 0.0
        %2494 = vmatpush1.msra.mxu0 0.0
        %2495 = vmatprep.subr.mxu0 0.0
        %2496 = vmatpush1.msra.mxu0 0.0
        %2497 = vmatprep.subr.mxu0 0.0
        %2498 = vmatpush1.msra.mxu0 0.0
        %2499 = vmatprep.subr.mxu0 0.0
        %2500 = vmatpush1.msra.mxu0 0.0
        %2501 = vmatprep.subr.mxu0 0.0
        %2502 = vmatpush1.msra.mxu0 0.0
        %2503 = vmatprep.subr.mxu0 0.0
        %2504 = vmatpush1.msra.mxu0 0.0
        %2505 = vmatprep.subr.mxu0 0.0
        %2506 = vmatpush1.msra.mxu0 0.0
        %2507 = vmatprep.subr.mxu0 0.0
        %2508 = vmatpush1.msra.mxu0 0.0
        %2509 = vmatprep.subr.mxu0 0.0
        %2510 = vmatpush1.msra.mxu0 0.0
        %2511 = vmatprep.subr.mxu0 0.0
        %2512 = vmatpush1.msra.mxu0 0.0
        %2513 = vmatprep.mubr.f32.mxu0 0.0
        %2514 = vmatmul.mubr.f32.gmra.mrb[0].mxu0 %v2447
        %v2515 = vpop.f32.mrb[0].mxu0
        %v2516 = vadd.f32 0.0, %v2515
        %v2517 = vpop.f32.mrb[0].mxu0
        %2518 = vdwg.mxu0
        %2519 = vrot.lane.b32.xlu0 %v1016, 40
        %v2520 = vpop.permute.xlu0 %2519
        %v2523 = vsel %vm1026, %v2442, 0
        %2525 = vmatprep.subr.mxu0 0.0
        %2526 = vmatpush1.msra.mxu0 %v2520
        %2527 = vmatprep.subr.mxu0 0.0
        %2528 = vmatpush1.msra.mxu0 0.0
        %2529 = vmatprep.subr.mxu0 0.0
        %2530 = vmatpush1.msra.mxu0 0.0
        %2531 = vmatprep.subr.mxu0 0.0
        %2532 = vmatpush1.msra.mxu0 0.0
        %2533 = vmatprep.subr.mxu0 0.0
        %2534 = vmatpush1.msra.mxu0 0.0
        %2535 = vmatprep.subr.mxu0 0.0
        %2536 = vmatpush1.msra.mxu0 0.0
        %2537 = vmatprep.subr.mxu0 0.0
        %2538 = vmatpush1.msra.mxu0 0.0
        %2539 = vmatprep.subr.mxu0 0.0
        %2540 = vmatpush1.msra.mxu0 0.0
        %2541 = vmatprep.subr.mxu0 0.0
        %2542 = vmatpush1.msra.mxu0 0.0
        %2543 = vmatprep.subr.mxu0 0.0
        %2544 = vmatpush1.msra.mxu0 0.0
        %2545 = vmatprep.subr.mxu0 0.0
        %2546 = vmatpush1.msra.mxu0 0.0
        %2547 = vmatprep.subr.mxu0 0.0
        %2548 = vmatpush1.msra.mxu0 0.0
        %2549 = vmatprep.subr.mxu0 0.0
        %2550 = vmatpush1.msra.mxu0 0.0
        %2551 = vmatprep.subr.mxu0 0.0
        %2552 = vmatpush1.msra.mxu0 0.0
        %2553 = vmatprep.subr.mxu0 0.0
        %2554 = vmatpush1.msra.mxu0 0.0
        %2555 = vmatprep.subr.mxu0 0.0
        %2556 = vmatpush1.msra.mxu0 0.0
        %2557 = vmatprep.subr.mxu0 0.0
        %2558 = vmatpush1.msra.mxu0 0.0
        %2559 = vmatprep.subr.mxu0 0.0
        %2560 = vmatpush1.msra.mxu0 0.0
        %2561 = vmatprep.subr.mxu0 0.0
        %2562 = vmatpush1.msra.mxu0 0.0
        %2563 = vmatprep.subr.mxu0 0.0
        %2564 = vmatpush1.msra.mxu0 0.0
        %2565 = vmatprep.subr.mxu0 0.0
        %2566 = vmatpush1.msra.mxu0 0.0
        %2567 = vmatprep.subr.mxu0 0.0
        %2568 = vmatpush1.msra.mxu0 0.0
        %2569 = vmatprep.subr.mxu0 0.0
        %2570 = vmatpush1.msra.mxu0 0.0
        %2571 = vmatprep.subr.mxu0 0.0
        %2572 = vmatpush1.msra.mxu0 0.0
        %2573 = vmatprep.subr.mxu0 0.0
        %2574 = vmatpush1.msra.mxu0 0.0
        %2575 = vmatprep.subr.mxu0 0.0
        %2576 = vmatpush1.msra.mxu0 0.0
        %2577 = vmatprep.subr.mxu0 0.0
        %2578 = vmatpush1.msra.mxu0 0.0
        %2579 = vmatprep.subr.mxu0 0.0
        %2580 = vmatpush1.msra.mxu0 0.0
        %2581 = vmatprep.subr.mxu0 0.0
        %2582 = vmatpush1.msra.mxu0 0.0
        %2583 = vmatprep.subr.mxu0 0.0
        %2584 = vmatpush1.msra.mxu0 0.0
        %2585 = vmatprep.subr.mxu0 0.0
        %2586 = vmatpush1.msra.mxu0 0.0
        %2587 = vmatprep.subr.mxu0 0.0
        %2588 = vmatpush1.msra.mxu0 0.0
        %2589 = vmatprep.mubr.f32.mxu0 0.0
        %2590 = vmatmul.mubr.f32.gmra.mrb[0].mxu0 %v2523
        %v2591 = vpop.f32.mrb[0].mxu0
        %v2592 = vadd.f32 0.0, %v2591
        %v2593 = vpop.f32.mrb[0].mxu0
        %2594 = vdwg.mxu0
        %v2596 = vsel %vm1026, %v2516, 0
        %v2599 = vsel %vm1026, %v2592, 0
        %2601 = vmatprep.subr.mxu0 0.0
        %2602 = vmatpush1.msra.mxu0 %v1022
        %2603 = vmatprep.subr.mxu0 0.0
        %2604 = vmatpush1.msra.mxu0 0.0
        %2605 = vmatprep.subr.mxu0 0.0
        %2606 = vmatpush1.msra.mxu0 0.0
        %2607 = vmatprep.subr.mxu0 0.0
        %2608 = vmatpush1.msra.mxu0 0.0
        %2609 = vmatprep.subr.mxu0 0.0
        %2610 = vmatpush1.msra.mxu0 0.0
        %2611 = vmatprep.subr.mxu0 0.0
        %2612 = vmatpush1.msra.mxu0 0.0
        %2613 = vmatprep.subr.mxu0 0.0
        %2614 = vmatpush1.msra.mxu0 0.0
        %2615 = vmatprep.subr.mxu0 0.0
        %2616 = vmatpush1.msra.mxu0 0.0
        %2617 = vmatprep.subr.mxu0 0.0
        %2618 = vmatpush1.msra.mxu0 0.0
        %2619 = vmatprep.subr.mxu0 0.0
        %2620 = vmatpush1.msra.mxu0 0.0
        %2621 = vmatprep.subr.mxu0 0.0
        %2622 = vmatpush1.msra.mxu0 0.0
        %2623 = vmatprep.subr.mxu0 0.0
        %2624 = vmatpush1.msra.mxu0 0.0
        %2625 = vmatprep.subr.mxu0 0.0
        %2626 = vmatpush1.msra.mxu0 0.0
        %2627 = vmatprep.subr.mxu0 0.0
        %2628 = vmatpush1.msra.mxu0 0.0
        %2629 = vmatprep.subr.mxu0 0.0
        %2630 = vmatpush1.msra.mxu0 0.0
        %2631 = vmatprep.subr.mxu0 0.0
        %2632 = vmatpush1.msra.mxu0 0.0
        %2633 = vmatprep.subr.mxu0 0.0
        %2634 = vmatpush1.msra.mxu0 0.0
        %2635 = vmatprep.subr.mxu0 0.0
        %2636 = vmatpush1.msra.mxu0 0.0
        %2637 = vmatprep.subr.mxu0 0.0
        %2638 = vmatpush1.msra.mxu0 0.0
        %2639 = vmatprep.subr.mxu0 0.0
        %2640 = vmatpush1.msra.mxu0 0.0
        %2641 = vmatprep.subr.mxu0 0.0
        %2642 = vmatpush1.msra.mxu0 0.0
        %2643 = vmatprep.subr.mxu0 0.0
        %2644 = vmatpush1.msra.mxu0 0.0
        %2645 = vmatprep.subr.mxu0 0.0
        %2646 = vmatpush1.msra.mxu0 0.0
        %2647 = vmatprep.subr.mxu0 0.0
        %2648 = vmatpush1.msra.mxu0 0.0
        %2649 = vmatprep.subr.mxu0 0.0
        %2650 = vmatpush1.msra.mxu0 0.0
        %2651 = vmatprep.subr.mxu0 0.0
        %2652 = vmatpush1.msra.mxu0 0.0
        %2653 = vmatprep.subr.mxu0 0.0
        %2654 = vmatpush1.msra.mxu0 0.0
        %2655 = vmatprep.subr.mxu0 0.0
        %2656 = vmatpush1.msra.mxu0 0.0
        %2657 = vmatprep.subr.mxu0 0.0
        %2658 = vmatpush1.msra.mxu0 0.0
        %2659 = vmatprep.subr.mxu0 0.0
        %2660 = vmatpush1.msra.mxu0 0.0
        %2661 = vmatprep.subr.mxu0 0.0
        %2662 = vmatpush1.msra.mxu0 0.0
        %2663 = vmatprep.subr.mxu0 0.0
        %2664 = vmatpush1.msra.mxu0 0.0
        %2665 = vmatprep.mubr.f32.mxu0 0.0
        %2666 = vmatmul.mubr.f32.gmra.mrb[0].mxu0 %v2596
        %v2667 = vpop.f32.mrb[0].mxu0
        %v2668 = vadd.f32 0.0, %v2667
        %v2669 = vpop.f32.mrb[0].mxu0
        %2670 = vmatprep.mubr.f32.mxu0 0.0
        %2671 = vmatmul.mubr.f32.gmra.mrb[0].mxu0 %v2599
        %v2672 = vpop.f32.mrb[0].mxu0
        %v2673 = vadd.f32 0.0, %v2672
        %v2674 = vpop.f32.mrb[0].mxu0
        %2675 = vdwg.mxu0
        %v2676 = vadd.f32 %v2261, %v2668
        %v2677 = vadd.f32 %v2262, %v2673
        %v2678 = vld [vmem:[#allocation11] sm:$0x1]
        %v2680 = vlaneseq
        %v2681 = vshrl.u32 %v2680, 7
        %v2682 = vsub.s32 0, %v2681
        %v2683 = vrot.slane %v2678, %v2682
        %v2685 = vadd.f32 %v2676, %v2683
        %v2686 = vadd.f32 %v2677, %v2683
        %vm2687 = vcmp.ge.f32.partialorder %v2685, 0.0
        %vm2688 = vcmp.ge.f32.partialorder %v2686, 0.0
        %v2689 = vmul.f32 %v2685, 0.2
        %v2690 = vmul.f32 %v2686, 0.2
        %v2691 = vsel %vm2687, %v2685, %v2689
        %v2692 = vsel %vm2688, %v2686, %v2690
        %v2693 = vld [vmem:[%s8] sm:$0xff]
        %v2694 = vld [vmem:[%s8 + $0x8] sm:$0xff]
        %v2695 = vld [vmem:[%s8 + $0x10] sm:$0xff]
        %v2696 = vld [vmem:[%s8 + $0x18] sm:$0xff]
        %v2697 = vld [vmem:[#allocation13] sm:$0x1]
        %v2699 = vlaneseq
        %v2700 = vshrl.u32 %v2699, 7
        %v2701 = vsub.s32 0, %v2700
        %v2702 = vrot.slane %v2697, %v2701
        %v2705 = vsel %vm883, %v2691, 0
        %v2708 = vsel %vm883, %v2692, 0
        %2710 = vmatprep.subr.mxu0 0.0
        %2711 = vmatpush1.msra.mxu0 %v2693
        %2712 = vmatprep.subr.mxu0 0.0
        %2713 = vmatpush1.msra.mxu0 %v2694
        %2714 = vmatprep.subr.mxu0 0.0
        %2715 = vmatpush1.msra.mxu0 %v2695
        %2716 = vmatprep.subr.mxu0 0.0
        %2717 = vmatpush1.msra.mxu0 %v2696
        %2718 = vmatprep.subr.mxu0 0.0
        %2719 = vmatpush1.msra.mxu0 0.0
        %2720 = vmatprep.subr.mxu0 0.0
        %2721 = vmatpush1.msra.mxu0 0.0
        %2722 = vmatprep.subr.mxu0 0.0
        %2723 = vmatpush1.msra.mxu0 0.0
        %2724 = vmatprep.subr.mxu0 0.0
        %2725 = vmatpush1.msra.mxu0 0.0
        %2726 = vmatprep.subr.mxu0 0.0
        %2727 = vmatpush1.msra.mxu0 0.0
        %2728 = vmatprep.subr.mxu0 0.0
        %2729 = vmatpush1.msra.mxu0 0.0
        %2730 = vmatprep.subr.mxu0 0.0
        %2731 = vmatpush1.msra.mxu0 0.0
        %2732 = vmatprep.subr.mxu0 0.0
        %2733 = vmatpush1.msra.mxu0 0.0
        %2734 = vmatprep.subr.mxu0 0.0
        %2735 = vmatpush1.msra.mxu0 0.0
        %2736 = vmatprep.subr.mxu0 0.0
        %2737 = vmatpush1.msra.mxu0 0.0
        %2738 = vmatprep.subr.mxu0 0.0
        %2739 = vmatpush1.msra.mxu0 0.0
        %2740 = vmatprep.subr.mxu0 0.0
        %2741 = vmatpush1.msra.mxu0 0.0
        %2742 = vmatprep.subr.mxu0 0.0
        %2743 = vmatpush1.msra.mxu0 0.0
        %2744 = vmatprep.subr.mxu0 0.0
        %2745 = vmatpush1.msra.mxu0 0.0
        %2746 = vmatprep.subr.mxu0 0.0
        %2747 = vmatpush1.msra.mxu0 0.0
        %2748 = vmatprep.subr.mxu0 0.0
        %2749 = vmatpush1.msra.mxu0 0.0
        %2750 = vmatprep.subr.mxu0 0.0
        %2751 = vmatpush1.msra.mxu0 0.0
        %2752 = vmatprep.subr.mxu0 0.0
        %2753 = vmatpush1.msra.mxu0 0.0
        %2754 = vmatprep.subr.mxu0 0.0
        %2755 = vmatpush1.msra.mxu0 0.0
        %2756 = vmatprep.subr.mxu0 0.0
        %2757 = vmatpush1.msra.mxu0 0.0
        %2758 = vmatprep.subr.mxu0 0.0
        %2759 = vmatpush1.msra.mxu0 0.0
        %2760 = vmatprep.subr.mxu0 0.0
        %2761 = vmatpush1.msra.mxu0 0.0
        %2762 = vmatprep.subr.mxu0 0.0
        %2763 = vmatpush1.msra.mxu0 0.0
        %2764 = vmatprep.subr.mxu0 0.0
        %2765 = vmatpush1.msra.mxu0 0.0
        %2766 = vmatprep.subr.mxu0 0.0
        %2767 = vmatpush1.msra.mxu0 0.0
        %2768 = vmatprep.subr.mxu0 0.0
        %2769 = vmatpush1.msra.mxu0 0.0
        %2770 = vmatprep.subr.mxu0 0.0
        %2771 = vmatpush1.msra.mxu0 0.0
        %2772 = vmatprep.subr.mxu0 0.0
        %2773 = vmatpush1.msra.mxu0 0.0
        %2774 = vmatprep.mubr.f32.mxu0 0.0
        %2775 = vmatmul.mubr.f32.gmra.mrb[0].mxu0 %v2705
        %v2776 = vpop.f32.mrb[0].mxu0
        %v2777 = vadd.f32 %v2702, %v2776
        %v2778 = vpop.f32.mrb[0].mxu0
        %2779 = vmatprep.mubr.f32.mxu0 0.0
        %2780 = vmatmul.mubr.f32.gmra.mrb[0].mxu0 %v2708
        %v2781 = vpop.f32.mrb[0].mxu0
        %v2782 = vadd.f32 %v2702, %v2781
        %v2783 = vpop.f32.mrb[0].mxu0
        %2784 = vdwg.mxu0
        %v2785 = vadd.f32 %v879, %v2777
        %v2786 = vadd.f32 %v880, %v2782
        %v2787 = vld [vmem:[#allocation14] sm:$0x1]
        %v2788 = vld [vmem:[#allocation16] sm:$0x1]
        %v2789 = vsel %vm883, %v2785, 0.0
        %2790 = vadd.xlane.f32.xlu0 %v2789
        %v2791 = vpop.xlane.xlu0 %2790
        %v2792 = vsel %vm883, %v2786, 0.0
        %2793 = vadd.xlane.f32.xlu0 %v2792
        %v2794 = vpop.xlane.xlu0 %2793
        %v2795 = vmul.f32 %v2791, %v890
        %v2796 = vmul.f32 %v2794, %v890
        %v2797 = vsub.f32 %v2785, %v2795
        %v2798 = vsub.f32 %v2786, %v2796
        %v2799 = vmul.f32 %v2797, %v2797
        %v2800 = vmul.f32 %v2798, %v2798
        %v2801 = vsel %vm883, %v2799, 0.0
        %2802 = vadd.xlane.f32.xlu0 %v2801
        %v2803 = vpop.xlane.xlu0 %2802
        %v2804 = vsel %vm883, %v2800, 0.0
        %2805 = vadd.xlane.f32.xlu0 %v2804
        %v2806 = vpop.xlane.xlu0 %2805
        %v2807 = vmul.f32 %v2803, %v890
        %v2808 = vmul.f32 %v2806, %v890
        %v2809 = vadd.f32 %v2807, 1e-05
        %v2810 = vadd.f32 %v2808, 1e-05
        %v2811 = vrsqrt.pop %v2809
        %v2812 = vrsqrt.pop %v2810
        %v2813 = vmul.f32 %v2797, %v2811
        %v2814 = vmul.f32 %v2798, %v2812
        %v2816 = vlaneseq
        %v2817 = vshrl.u32 %v2816, 7
        %v2818 = vsub.s32 0, %v2817
        %v2819 = vrot.slane %v2787, %v2818
        %v2821 = vmul.f32 %v2813, %v2819
        %v2822 = vmul.f32 %v2814, %v2819
        %v2824 = vlaneseq
        %v2825 = vshrl.u32 %v2824, 7
        %v2826 = vsub.s32 0, %v2825
        %v2827 = vrot.slane %v2788, %v2826
        %v2829 = vadd.f32 %v2821, %v2827
        %v2830 = vadd.f32 %v2822, %v2827
        %v2831 = vld [vmem:[#allocation17] sm:$0xff]
        %v2832 = vld [vmem:[#allocation17 + $0x8] sm:$0xff]
        %v2833 = vld [vmem:[#allocation17 + $0x10] sm:$0xff]
        %v2834 = vld [vmem:[#allocation17 + $0x18] sm:$0xff]
        %v2835 = vld [vmem:[#allocation19] sm:$0x1]
        %v2837 = vlaneseq
        %v2838 = vshrl.u32 %v2837, 7
        %v2839 = vsub.s32 0, %v2838
        %v2840 = vrot.slane %v2835, %v2839
        %v2843 = vsel %vm883, %v2829, 0
        %v2846 = vsel %vm883, %v2830, 0
        %2848 = vmatprep.subr.mxu0 0.0
        %2849 = vmatpush1.msra.mxu0 %v2831
        %2850 = vmatprep.subr.mxu0 0.0
        %2851 = vmatpush1.msra.mxu0 %v2832
        %2852 = vmatprep.subr.mxu0 0.0
        %2853 = vmatpush1.msra.mxu0 %v2833
        %2854 = vmatprep.subr.mxu0 0.0
        %2855 = vmatpush1.msra.mxu0 %v2834
        %2856 = vmatprep.subr.mxu0 0.0
        %2857 = vmatpush1.msra.mxu0 0.0
        %2858 = vmatprep.subr.mxu0 0.0
        %2859 = vmatpush1.msra.mxu0 0.0
        %2860 = vmatprep.subr.mxu0 0.0
        %2861 = vmatpush1.msra.mxu0 0.0
        %2862 = vmatprep.subr.mxu0 0.0
        %2863 = vmatpush1.msra.mxu0 0.0
        %2864 = vmatprep.subr.mxu0 0.0
        %2865 = vmatpush1.msra.mxu0 0.0
        %2866 = vmatprep.subr.mxu0 0.0
        %2867 = vmatpush1.msra.mxu0 0.0
        %2868 = vmatprep.subr.mxu0 0.0
        %2869 = vmatpush1.msra.mxu0 0.0
        %2870 = vmatprep.subr.mxu0 0.0
        %2871 = vmatpush1.msra.mxu0 0.0
        %2872 = vmatprep.subr.mxu0 0.0
        %2873 = vmatpush1.msra.mxu0 0.0
        %2874 = vmatprep.subr.mxu0 0.0
        %2875 = vmatpush1.msra.mxu0 0.0
        %2876 = vmatprep.subr.mxu0 0.0
        %2877 = vmatpush1.msra.mxu0 0.0
        %2878 = vmatprep.subr.mxu0 0.0
        %2879 = vmatpush1.msra.mxu0 0.0
        %2880 = vmatprep.subr.mxu0 0.0
        %2881 = vmatpush1.msra.mxu0 0.0
        %2882 = vmatprep.subr.mxu0 0.0
        %2883 = vmatpush1.msra.mxu0 0.0
        %2884 = vmatprep.subr.mxu0 0.0
        %2885 = vmatpush1.msra.mxu0 0.0
        %2886 = vmatprep.subr.mxu0 0.0
        %2887 = vmatpush1.msra.mxu0 0.0
        %2888 = vmatprep.subr.mxu0 0.0
        %2889 = vmatpush1.msra.mxu0 0.0
        %2890 = vmatprep.subr.mxu0 0.0
        %2891 = vmatpush1.msra.mxu0 0.0
        %2892 = vmatprep.subr.mxu0 0.0
        %2893 = vmatpush1.msra.mxu0 0.0
        %2894 = vmatprep.subr.mxu0 0.0
        %2895 = vmatpush1.msra.mxu0 0.0
        %2896 = vmatprep.subr.mxu0 0.0
        %2897 = vmatpush1.msra.mxu0 0.0
        %2898 = vmatprep.subr.mxu0 0.0
        %2899 = vmatpush1.msra.mxu0 0.0
        %2900 = vmatprep.subr.mxu0 0.0
        %2901 = vmatpush1.msra.mxu0 0.0
        %2902 = vmatprep.subr.mxu0 0.0
        %2903 = vmatpush1.msra.mxu0 0.0
        %2904 = vmatprep.subr.mxu0 0.0
        %2905 = vmatpush1.msra.mxu0 0.0
        %2906 = vmatprep.subr.mxu0 0.0
        %2907 = vmatpush1.msra.mxu0 0.0
        %2908 = vmatprep.subr.mxu0 0.0
        %2909 = vmatpush1.msra.mxu0 0.0
        %2910 = vmatprep.subr.mxu0 0.0
        %2911 = vmatpush1.msra.mxu0 0.0
        %2912 = vmatprep.mubr.f32.mxu0 0.0
        %2913 = vmatmul.mubr.f32.gmra.mrb[0].mxu0 %v2843
        %v2914 = vpop.f32.mrb[0].mxu0
        %v2915 = vadd.f32 %v2840, %v2914
        %v2916 = vpop.f32.mrb[0].mxu0
        %2917 = vmatprep.mubr.f32.mxu0 0.0
        %2918 = vmatmul.mubr.f32.gmra.mrb[0].mxu0 %v2846
        %v2919 = vpop.f32.mrb[0].mxu0
        %v2920 = vadd.f32 %v2840, %v2919
        %v2921 = vpop.f32.mrb[0].mxu0
        %2922 = vdwg.mxu0
        %vm2923 = vcmp.ge.f32.partialorder %v2915, 0.0
        %vm2924 = vcmp.ge.f32.partialorder %v2920, 0.0
        %v2925 = vmul.f32 %v2915, 0.2
        %v2926 = vmul.f32 %v2920, 0.2
        %v2927 = vsel %vm2923, %v2915, %v2925
        %v2928 = vsel %vm2924, %v2920, %v2926
        %v2929 = vld [vmem:[%s14] sm:$0xff]
        %v2930 = vld [vmem:[%s14 + $0x8] sm:$0xff]
        %v2931 = vld [vmem:[%s14 + $0x10] sm:$0xff]
        %v2932 = vld [vmem:[%s14 + $0x18] sm:$0xff]
        %v2933 = vld [vmem:[%s14 + $0x20] sm:$0xff]
        %v2934 = vld [vmem:[%s14 + $0x28] sm:$0xff]
        %v2935 = vld [vmem:[%s14 + $0x30] sm:$0xff]
        %v2936 = vld [vmem:[%s14 + $0x38] sm:$0xff]
        %v2937 = vld [vmem:[#allocation20] sm:$0x1]
        %v2939 = vlaneseq
        %v2940 = vshrl.u32 %v2939, 7
        %v2941 = vsub.s32 0, %v2940
        %v2942 = vrot.slane %v2937, %v2941
        %vm2944 = vcmask 523264
        %v2946 = vsel %vm2944, %v2927, 0
        %v2949 = vsel %vm2944, %v2928, 0
        %2951 = vmatprep.subr.mxu0 0.0
        %2952 = vmatpush1.msra.mxu0 %v2929
        %2953 = vmatprep.subr.mxu0 0.0
        %2954 = vmatpush1.msra.mxu0 %v2930
        %2955 = vmatprep.subr.mxu0 0.0
        %2956 = vmatpush1.msra.mxu0 %v2931
        %2957 = vmatprep.subr.mxu0 0.0
        %2958 = vmatpush1.msra.mxu0 %v2932
        %2959 = vmatprep.subr.mxu0 0.0
        %2960 = vmatpush1.msra.mxu0 %v2933
        %2961 = vmatprep.subr.mxu0 0.0
        %2962 = vmatpush1.msra.mxu0 %v2934
        %2963 = vmatprep.subr.mxu0 0.0
        %2964 = vmatpush1.msra.mxu0 %v2935
        %2965 = vmatprep.subr.mxu0 0.0
        %2966 = vmatpush1.msra.mxu0 %v2936
        %2967 = vmatprep.subr.mxu0 0.0
        %2968 = vmatpush1.msra.mxu0 0.0
        %2969 = vmatprep.subr.mxu0 0.0
        %2970 = vmatpush1.msra.mxu0 0.0
        %2971 = vmatprep.subr.mxu0 0.0
        %2972 = vmatpush1.msra.mxu0 0.0
        %2973 = vmatprep.subr.mxu0 0.0
        %2974 = vmatpush1.msra.mxu0 0.0
        %2975 = vmatprep.subr.mxu0 0.0
        %2976 = vmatpush1.msra.mxu0 0.0
        %2977 = vmatprep.subr.mxu0 0.0
        %2978 = vmatpush1.msra.mxu0 0.0
        %2979 = vmatprep.subr.mxu0 0.0
        %2980 = vmatpush1.msra.mxu0 0.0
        %2981 = vmatprep.subr.mxu0 0.0
        %2982 = vmatpush1.msra.mxu0 0.0
        %2983 = vmatprep.subr.mxu0 0.0
        %2984 = vmatpush1.msra.mxu0 0.0
        %2985 = vmatprep.subr.mxu0 0.0
        %2986 = vmatpush1.msra.mxu0 0.0
        %2987 = vmatprep.subr.mxu0 0.0
        %2988 = vmatpush1.msra.mxu0 0.0
        %2989 = vmatprep.subr.mxu0 0.0
        %2990 = vmatpush1.msra.mxu0 0.0
        %2991 = vmatprep.subr.mxu0 0.0
        %2992 = vmatpush1.msra.mxu0 0.0
        %2993 = vmatprep.subr.mxu0 0.0
        %2994 = vmatpush1.msra.mxu0 0.0
        %2995 = vmatprep.subr.mxu0 0.0
        %2996 = vmatpush1.msra.mxu0 0.0
        %2997 = vmatprep.subr.mxu0 0.0
        %2998 = vmatpush1.msra.mxu0 0.0
        %2999 = vmatprep.subr.mxu0 0.0
        %3000 = vmatpush1.msra.mxu0 0.0
        %3001 = vmatprep.subr.mxu0 0.0
        %3002 = vmatpush1.msra.mxu0 0.0
        %3003 = vmatprep.subr.mxu0 0.0
        %3004 = vmatpush1.msra.mxu0 0.0
        %3005 = vmatprep.subr.mxu0 0.0
        %3006 = vmatpush1.msra.mxu0 0.0
        %3007 = vmatprep.subr.mxu0 0.0
        %3008 = vmatpush1.msra.mxu0 0.0
        %3009 = vmatprep.subr.mxu0 0.0
        %3010 = vmatpush1.msra.mxu0 0.0
        %3011 = vmatprep.subr.mxu0 0.0
        %3012 = vmatpush1.msra.mxu0 0.0
        %3013 = vmatprep.subr.mxu0 0.0
        %3014 = vmatpush1.msra.mxu0 0.0
        %3015 = vmatprep.mubr.f32.mxu0 0.0
        %3016 = vmatmul.mubr.f32.gmra.mrb[0].mxu0 %v2946
        %v3017 = vpop.f32.mrb[0].mxu0
        %v3018 = vadd.f32 %v2942, %v3017
        %v3019 = vpop.f32.mrb[0].mxu0
        %3020 = vmatprep.mubr.f32.mxu0 0.0
        %3021 = vmatmul.mubr.f32.gmra.mrb[0].mxu0 %v2949
        %v3022 = vpop.f32.mrb[0].mxu0
        %v3023 = vadd.f32 %v2942, %v3022
        %v3024 = vpop.f32.mrb[0].mxu0
        %3025 = vdwg.mxu0
        %v3026 = vadd.f32 %v2785, %v3018
        %v3027 = vadd.f32 %v2786, %v3023
        %s3028 = scalar_lea.vmem [#allocation7], 1
        %v3029 = vld [vmem:[%s3028] sm:$0x1]
        %s3030 = scalar_lea.vmem [#allocation8], 1
        %v3031 = vld [vmem:[%s3030] sm:$0x1]
        %v3032 = vsel %vm883, %v3026, 0.0
        %3033 = vadd.xlane.f32.xlu0 %v3032
        %v3034 = vpop.xlane.xlu0 %3033
        %v3035 = vsel %vm883, %v3027, 0.0
        %3036 = vadd.xlane.f32.xlu0 %v3035
        %v3037 = vpop.xlane.xlu0 %3036
        %v3038 = vmul.f32 %v3034, %v890
        %v3039 = vmul.f32 %v3037, %v890
        %v3040 = vsub.f32 %v3026, %v3038
        %v3041 = vsub.f32 %v3027, %v3039
        %v3042 = vmul.f32 %v3040, %v3040
        %v3043 = vmul.f32 %v3041, %v3041
        %v3044 = vsel %vm883, %v3042, 0.0
        %3045 = vadd.xlane.f32.xlu0 %v3044
        %v3046 = vpop.xlane.xlu0 %3045
        %v3047 = vsel %vm883, %v3043, 0.0
        %3048 = vadd.xlane.f32.xlu0 %v3047
        %v3049 = vpop.xlane.xlu0 %3048
        %v3050 = vmul.f32 %v3046, %v890
        %v3051 = vmul.f32 %v3049, %v890
        %v3052 = vadd.f32 %v3050, 1e-05
        %v3053 = vadd.f32 %v3051, 1e-05
        %v3054 = vrsqrt.pop %v3052
        %v3055 = vrsqrt.pop %v3053
        %v3056 = vmul.f32 %v3040, %v3054
        %v3057 = vmul.f32 %v3041, %v3055
        %v3059 = vlaneseq
        %v3060 = vshrl.u32 %v3059, 7
        %v3061 = vsub.s32 0, %v3060
        %v3062 = vrot.slane %v3029, %v3061
        %v3064 = vmul.f32 %v3056, %v3062
        %v3065 = vmul.f32 %v3057, %v3062
        %v3067 = vlaneseq
        %v3068 = vshrl.u32 %v3067, 7
        %v3069 = vsub.s32 0, %v3068
        %v3070 = vrot.slane %v3031, %v3069
        %v3072 = vadd.f32 %v3064, %v3070
        %v3073 = vadd.f32 %v3065, %v3070
        %s3074 = scalar_lea.vmem %s4, 32
        %v3075 = vld [vmem:[%s3074] sm:$0xff]
        %v3076 = vld [vmem:[%s3074 + $0x8] sm:$0xff]
        %v3077 = vld [vmem:[%s3074 + $0x10] sm:$0xff]
        %v3078 = vld [vmem:[%s3074 + $0x18] sm:$0xff]
        %s3079 = scalar_lea.vmem [#allocation10], 1
        %v3080 = vld [vmem:[%s3079] sm:$0x1]
        %v3082 = vlaneseq
        %v3083 = vshrl.u32 %v3082, 7
        %v3084 = vsub.s32 0, %v3083
        %v3085 = vrot.slane %v3080, %v3084
        %v3088 = vsel %vm883, %v3072, 0
        %v3091 = vsel %vm883, %v3073, 0
        %3093 = vmatprep.subr.mxu0 0.0
        %3094 = vmatpush1.msra.mxu0 %v3075
        %3095 = vmatprep.subr.mxu0 0.0
        %3096 = vmatpush1.msra.mxu0 %v3076
        %3097 = vmatprep.subr.mxu0 0.0
        %3098 = vmatpush1.msra.mxu0 %v3077
        %3099 = vmatprep.subr.mxu0 0.0
        %3100 = vmatpush1.msra.mxu0 %v3078
        %3101 = vmatprep.subr.mxu0 0.0
        %3102 = vmatpush1.msra.mxu0 0.0
        %3103 = vmatprep.subr.mxu0 0.0
        %3104 = vmatpush1.msra.mxu0 0.0
        %3105 = vmatprep.subr.mxu0 0.0
        %3106 = vmatpush1.msra.mxu0 0.0
        %3107 = vmatprep.subr.mxu0 0.0
        %3108 = vmatpush1.msra.mxu0 0.0
        %3109 = vmatprep.subr.mxu0 0.0
        %3110 = vmatpush1.msra.mxu0 0.0
        %3111 = vmatprep.subr.mxu0 0.0
        %3112 = vmatpush1.msra.mxu0 0.0
        %3113 = vmatprep.subr.mxu0 0.0
        %3114 = vmatpush1.msra.mxu0 0.0
        %3115 = vmatprep.subr.mxu0 0.0
        %3116 = vmatpush1.msra.mxu0 0.0
        %3117 = vmatprep.subr.mxu0 0.0
        %3118 = vmatpush1.msra.mxu0 0.0
        %3119 = vmatprep.subr.mxu0 0.0
        %3120 = vmatpush1.msra.mxu0 0.0
        %3121 = vmatprep.subr.mxu0 0.0
        %3122 = vmatpush1.msra.mxu0 0.0
        %3123 = vmatprep.subr.mxu0 0.0
        %3124 = vmatpush1.msra.mxu0 0.0
        %3125 = vmatprep.subr.mxu0 0.0
        %3126 = vmatpush1.msra.mxu0 0.0
        %3127 = vmatprep.subr.mxu0 0.0
        %3128 = vmatpush1.msra.mxu0 0.0
        %3129 = vmatprep.subr.mxu0 0.0
        %3130 = vmatpush1.msra.mxu0 0.0
        %3131 = vmatprep.subr.mxu0 0.0
        %3132 = vmatpush1.msra.mxu0 0.0
        %3133 = vmatprep.subr.mxu0 0.0
        %3134 = vmatpush1.msra.mxu0 0.0
        %3135 = vmatprep.subr.mxu0 0.0
        %3136 = vmatpush1.msra.mxu0 0.0
        %3137 = vmatprep.subr.mxu0 0.0
        %3138 = vmatpush1.msra.mxu0 0.0
        %3139 = vmatprep.subr.mxu0 0.0
        %3140 = vmatpush1.msra.mxu0 0.0
        %3141 = vmatprep.subr.mxu0 0.0
        %3142 = vmatpush1.msra.mxu0 0.0
        %3143 = vmatprep.subr.mxu0 0.0
        %3144 = vmatpush1.msra.mxu0 0.0
        %3145 = vmatprep.subr.mxu0 0.0
        %3146 = vmatpush1.msra.mxu0 0.0
        %3147 = vmatprep.subr.mxu0 0.0
        %3148 = vmatpush1.msra.mxu0 0.0
        %3149 = vmatprep.subr.mxu0 0.0
        %3150 = vmatpush1.msra.mxu0 0.0
        %3151 = vmatprep.subr.mxu0 0.0
        %3152 = vmatpush1.msra.mxu0 0.0
        %3153 = vmatprep.subr.mxu0 0.0
        %3154 = vmatpush1.msra.mxu0 0.0
        %3155 = vmatprep.subr.mxu0 0.0
        %3156 = vmatpush1.msra.mxu0 0.0
        %3157 = vmatprep.mubr.f32.mxu0 0.0
        %3158 = vmatmul.mubr.f32.gmra.mrb[0].mxu0 %v3088
        %v3159 = vpop.f32.mrb[0].mxu0
        %v3160 = vadd.f32 %v3085, %v3159
        %v3161 = vpop.f32.mrb[0].mxu0
        %3162 = vmatprep.mubr.f32.mxu0 0.0
        %3163 = vmatmul.mubr.f32.gmra.mrb[0].mxu0 %v3091
        %v3164 = vpop.f32.mrb[0].mxu0
        %v3165 = vadd.f32 %v3085, %v3164
        %v3166 = vpop.f32.mrb[0].mxu0
        %3167 = vdwg.mxu0
        %s3168 = scalar_lea.vmem %s6, 32
        %v3169 = vld [vmem:[%s3168] sm:$0xff]
        %v3170 = vld [vmem:[%s3168 + $0x8] sm:$0xff]
        %v3171 = vld [vmem:[%s3168 + $0x10] sm:$0xff]
        %v3172 = vld [vmem:[%s3168 + $0x18] sm:$0xff]
        %3174 = vrot.lane.b32.xlu0 %v3160, 96
        %v3175 = vpop.permute.xlu0 %3174
        %v3176 = vsel %vm1026, %v3160, 0
        %v3178 = vsel %vm1026, %v3175, 0
        %3180 = vmatprep.subr.mxu0 0.0
        %3181 = vmatpush1.xpose.msra.mxu0 %v3178
        %3182 = vmatprep.subr.mxu0 0.0
        %3183 = vmatpush1.xpose.msra.mxu0 0.0
        %3184 = vmatprep.subr.mxu0 0.0
        %3185 = vmatpush1.xpose.msra.mxu0 0.0
        %3186 = vmatprep.subr.mxu0 0.0
        %3187 = vmatpush1.xpose.msra.mxu0 0.0
        %3188 = vmatprep.subr.mxu0 0.0
        %3189 = vmatpush1.xpose.msra.mxu0 0.0
        %3190 = vmatprep.subr.mxu0 0.0
        %3191 = vmatpush1.xpose.msra.mxu0 0.0
        %3192 = vmatprep.subr.mxu0 0.0
        %3193 = vmatpush1.xpose.msra.mxu0 0.0
        %3194 = vmatprep.subr.mxu0 0.0
        %3195 = vmatpush1.xpose.msra.mxu0 0.0
        %3196 = vmatprep.subr.mxu0 0.0
        %3197 = vmatpush1.xpose.msra.mxu0 0.0
        %3198 = vmatprep.subr.mxu0 0.0
        %3199 = vmatpush1.xpose.msra.mxu0 0.0
        %3200 = vmatprep.subr.mxu0 0.0
        %3201 = vmatpush1.xpose.msra.mxu0 0.0
        %3202 = vmatprep.subr.mxu0 0.0
        %3203 = vmatpush1.xpose.msra.mxu0 0.0
        %3204 = vmatprep.subr.mxu0 0.0
        %3205 = vmatpush1.xpose.msra.mxu0 0.0
        %3206 = vmatprep.subr.mxu0 0.0
        %3207 = vmatpush1.xpose.msra.mxu0 0.0
        %3208 = vmatprep.subr.mxu0 0.0
        %3209 = vmatpush1.xpose.msra.mxu0 0.0
        %3210 = vmatprep.subr.mxu0 0.0
        %3211 = vmatpush1.xpose.msra.mxu0 0.0
        %3212 = vmatprep.subr.mxu0 0.0
        %3213 = vmatpush1.xpose.msra.mxu0 0.0
        %3214 = vmatprep.subr.mxu0 0.0
        %3215 = vmatpush1.xpose.msra.mxu0 0.0
        %3216 = vmatprep.subr.mxu0 0.0
        %3217 = vmatpush1.xpose.msra.mxu0 0.0
        %3218 = vmatprep.subr.mxu0 0.0
        %3219 = vmatpush1.xpose.msra.mxu0 0.0
        %3220 = vmatprep.subr.mxu0 0.0
        %3221 = vmatpush1.xpose.msra.mxu0 0.0
        %3222 = vmatprep.subr.mxu0 0.0
        %3223 = vmatpush1.xpose.msra.mxu0 0.0
        %3224 = vmatprep.subr.mxu0 0.0
        %3225 = vmatpush1.xpose.msra.mxu0 0.0
        %3226 = vmatprep.subr.mxu0 0.0
        %3227 = vmatpush1.xpose.msra.mxu0 0.0
        %3228 = vmatprep.subr.mxu0 0.0
        %3229 = vmatpush1.xpose.msra.mxu0 0.0
        %3230 = vmatprep.subr.mxu0 0.0
        %3231 = vmatpush1.xpose.msra.mxu0 0.0
        %3232 = vmatprep.subr.mxu0 0.0
        %3233 = vmatpush1.xpose.msra.mxu0 0.0
        %3234 = vmatprep.subr.mxu0 0.0
        %3235 = vmatpush1.xpose.msra.mxu0 0.0
        %3236 = vmatprep.subr.mxu0 0.0
        %3237 = vmatpush1.xpose.msra.mxu0 0.0
        %3238 = vmatprep.subr.mxu0 0.0
        %3239 = vmatpush1.xpose.msra.mxu0 0.0
        %3240 = vmatprep.subr.mxu0 0.0
        %3241 = vmatpush1.xpose.msra.mxu0 0.0
        %3242 = vmatprep.subr.mxu0 0.0
        %3243 = vmatpush1.xpose.msra.mxu0 0.0
        %3244 = vmatprep.mubr.f32.mxu0 0.0
        %3245 = vmatmul.mubr.f32.gmra.mrb[0].mxu0 %v3176
        %v3246 = vpop.f32.mrb[0].mxu0
        %v3247 = vadd.f32 0.0, %v3246
        %v3248 = vpop.f32.mrb[0].mxu0
        %3249 = vdwg.mxu0
        %3251 = vrot.lane.b32.xlu0 %v3165, 96
        %v3252 = vpop.permute.xlu0 %3251
        %v3253 = vsel %vm1026, %v3165, 0
        %v3255 = vsel %vm1026, %v3252, 0
        %3257 = vmatprep.subr.mxu0 0.0
        %3258 = vmatpush1.xpose.msra.mxu0 %v3255
        %3259 = vmatprep.subr.mxu0 0.0
        %3260 = vmatpush1.xpose.msra.mxu0 0.0
        %3261 = vmatprep.subr.mxu0 0.0
        %3262 = vmatpush1.xpose.msra.mxu0 0.0
        %3263 = vmatprep.subr.mxu0 0.0
        %3264 = vmatpush1.xpose.msra.mxu0 0.0
        %3265 = vmatprep.subr.mxu0 0.0
        %3266 = vmatpush1.xpose.msra.mxu0 0.0
        %3267 = vmatprep.subr.mxu0 0.0
        %3268 = vmatpush1.xpose.msra.mxu0 0.0
        %3269 = vmatprep.subr.mxu0 0.0
        %3270 = vmatpush1.xpose.msra.mxu0 0.0
        %3271 = vmatprep.subr.mxu0 0.0
        %3272 = vmatpush1.xpose.msra.mxu0 0.0
        %3273 = vmatprep.subr.mxu0 0.0
        %3274 = vmatpush1.xpose.msra.mxu0 0.0
        %3275 = vmatprep.subr.mxu0 0.0
        %3276 = vmatpush1.xpose.msra.mxu0 0.0
        %3277 = vmatprep.subr.mxu0 0.0
        %3278 = vmatpush1.xpose.msra.mxu0 0.0
        %3279 = vmatprep.subr.mxu0 0.0
        %3280 = vmatpush1.xpose.msra.mxu0 0.0
        %3281 = vmatprep.subr.mxu0 0.0
        %3282 = vmatpush1.xpose.msra.mxu0 0.0
        %3283 = vmatprep.subr.mxu0 0.0
        %3284 = vmatpush1.xpose.msra.mxu0 0.0
        %3285 = vmatprep.subr.mxu0 0.0
        %3286 = vmatpush1.xpose.msra.mxu0 0.0
        %3287 = vmatprep.subr.mxu0 0.0
        %3288 = vmatpush1.xpose.msra.mxu0 0.0
        %3289 = vmatprep.subr.mxu0 0.0
        %3290 = vmatpush1.xpose.msra.mxu0 0.0
        %3291 = vmatprep.subr.mxu0 0.0
        %3292 = vmatpush1.xpose.msra.mxu0 0.0
        %3293 = vmatprep.subr.mxu0 0.0
        %3294 = vmatpush1.xpose.msra.mxu0 0.0
        %3295 = vmatprep.subr.mxu0 0.0
        %3296 = vmatpush1.xpose.msra.mxu0 0.0
        %3297 = vmatprep.subr.mxu0 0.0
        %3298 = vmatpush1.xpose.msra.mxu0 0.0
        %3299 = vmatprep.subr.mxu0 0.0
        %3300 = vmatpush1.xpose.msra.mxu0 0.0
        %3301 = vmatprep.subr.mxu0 0.0
        %3302 = vmatpush1.xpose.msra.mxu0 0.0
        %3303 = vmatprep.subr.mxu0 0.0
        %3304 = vmatpush1.xpose.msra.mxu0 0.0
        %3305 = vmatprep.subr.mxu0 0.0
        %3306 = vmatpush1.xpose.msra.mxu0 0.0
        %3307 = vmatprep.subr.mxu0 0.0
        %3308 = vmatpush1.xpose.msra.mxu0 0.0
        %3309 = vmatprep.subr.mxu0 0.0
        %3310 = vmatpush1.xpose.msra.mxu0 0.0
        %3311 = vmatprep.subr.mxu0 0.0
        %3312 = vmatpush1.xpose.msra.mxu0 0.0
        %3313 = vmatprep.subr.mxu0 0.0
        %3314 = vmatpush1.xpose.msra.mxu0 0.0
        %3315 = vmatprep.subr.mxu0 0.0
        %3316 = vmatpush1.xpose.msra.mxu0 0.0
        %3317 = vmatprep.subr.mxu0 0.0
        %3318 = vmatpush1.xpose.msra.mxu0 0.0
        %3319 = vmatprep.subr.mxu0 0.0
        %3320 = vmatpush1.xpose.msra.mxu0 0.0
        %3321 = vmatprep.mubr.f32.mxu0 0.0
        %3322 = vmatmul.mubr.f32.gmra.mrb[0].mxu0 %v3253
        %v3323 = vpop.f32.mrb[0].mxu0
        %v3324 = vadd.f32 0.0, %v3323
        %v3325 = vpop.f32.mrb[0].mxu0
        %3326 = vdwg.mxu0
        %v3327 = vmul.f32 %v3247, 0.35355338
        %v3328 = vmul.f32 %v3324, 0.35355338
        %v3329 = vsel %vm1026, %v3327, -inf
        %3330 = vmax.xlane.f32.xlu0 %v3329
        %v3331 = vpop.xlane.xlu0 %3330
        %v3332 = vsel %vm1026, %v3328, -inf
        %3333 = vmax.xlane.f32.xlu0 %v3332
        %v3334 = vpop.xlane.xlu0 %3333
        %v3335 = vsub.f32 %v3327, %v3331
        %v3336 = vsub.f32 %v3328, %v3334
        %v3337 = vmul.f32 %v3335, 1.442695
        %v3338 = vpow.pop %v3337
        %v3339 = vmul.f32 %v3336, 1.442695
        %v3340 = vpow.pop %v3339
        %v3341 = vsel %vm1026, %v3338, 0.0
        %3342 = vadd.xlane.f32.xlu0 %v3341
        %v3343 = vpop.xlane.xlu0 %3342
        %v3344 = vsel %vm1026, %v3340, 0.0
        %3345 = vadd.xlane.f32.xlu0 %v3344
        %v3346 = vpop.xlane.xlu0 %3345
        %v3347 = vrcp.pop %v3343
        %v3348 = vmul.f32 %v3338, %v3347
        %v3349 = vrcp.pop %v3346
        %v3350 = vmul.f32 %v3340, %v3349
        %3351 = vrot.lane.b32.xlu0 %v3160, 64
        %v3352 = vpop.permute.xlu0 %3351
        %v3355 = vsel %vm1026, %v3348, 0
        %3357 = vmatprep.subr.mxu0 0.0
        %3358 = vmatpush1.msra.mxu0 %v3352
        %3359 = vmatprep.subr.mxu0 0.0
        %3360 = vmatpush1.msra.mxu0 0.0
        %3361 = vmatprep.subr.mxu0 0.0
        %3362 = vmatpush1.msra.mxu0 0.0
        %3363 = vmatprep.subr.mxu0 0.0
        %3364 = vmatpush1.msra.mxu0 0.0
        %3365 = vmatprep.subr.mxu0 0.0
        %3366 = vmatpush1.msra.mxu0 0.0
        %3367 = vmatprep.subr.mxu0 0.0
        %3368 = vmatpush1.msra.mxu0 0.0
        %3369 = vmatprep.subr.mxu0 0.0
        %3370 = vmatpush1.msra.mxu0 0.0
        %3371 = vmatprep.subr.mxu0 0.0
        %3372 = vmatpush1.msra.mxu0 0.0
        %3373 = vmatprep.subr.mxu0 0.0
        %3374 = vmatpush1.msra.mxu0 0.0
        %3375 = vmatprep.subr.mxu0 0.0
        %3376 = vmatpush1.msra.mxu0 0.0
        %3377 = vmatprep.subr.mxu0 0.0
        %3378 = vmatpush1.msra.mxu0 0.0
        %3379 = vmatprep.subr.mxu0 0.0
        %3380 = vmatpush1.msra.mxu0 0.0
        %3381 = vmatprep.subr.mxu0 0.0
        %3382 = vmatpush1.msra.mxu0 0.0
        %3383 = vmatprep.subr.mxu0 0.0
        %3384 = vmatpush1.msra.mxu0 0.0
        %3385 = vmatprep.subr.mxu0 0.0
        %3386 = vmatpush1.msra.mxu0 0.0
        %3387 = vmatprep.subr.mxu0 0.0
        %3388 = vmatpush1.msra.mxu0 0.0
        %3389 = vmatprep.subr.mxu0 0.0
        %3390 = vmatpush1.msra.mxu0 0.0
        %3391 = vmatprep.subr.mxu0 0.0
        %3392 = vmatpush1.msra.mxu0 0.0
        %3393 = vmatprep.subr.mxu0 0.0
        %3394 = vmatpush1.msra.mxu0 0.0
        %3395 = vmatprep.subr.mxu0 0.0
        %3396 = vmatpush1.msra.mxu0 0.0
        %3397 = vmatprep.subr.mxu0 0.0
        %3398 = vmatpush1.msra.mxu0 0.0
        %3399 = vmatprep.subr.mxu0 0.0
        %3400 = vmatpush1.msra.mxu0 0.0
        %3401 = vmatprep.subr.mxu0 0.0
        %3402 = vmatpush1.msra.mxu0 0.0
        %3403 = vmatprep.subr.mxu0 0.0
        %3404 = vmatpush1.msra.mxu0 0.0
        %3405 = vmatprep.subr.mxu0 0.0
        %3406 = vmatpush1.msra.mxu0 0.0
        %3407 = vmatprep.subr.mxu0 0.0
        %3408 = vmatpush1.msra.mxu0 0.0
        %3409 = vmatprep.subr.mxu0 0.0
        %3410 = vmatpush1.msra.mxu0 0.0
        %3411 = vmatprep.subr.mxu0 0.0
        %3412 = vmatpush1.msra.mxu0 0.0
        %3413 = vmatprep.subr.mxu0 0.0
        %3414 = vmatpush1.msra.mxu0 0.0
        %3415 = vmatprep.subr.mxu0 0.0
        %3416 = vmatpush1.msra.mxu0 0.0
        %3417 = vmatprep.subr.mxu0 0.0
        %3418 = vmatpush1.msra.mxu0 0.0
        %3419 = vmatprep.subr.mxu0 0.0
        %3420 = vmatpush1.msra.mxu0 0.0
        %3421 = vmatprep.mubr.f32.mxu0 0.0
        %3422 = vmatmul.mubr.f32.gmra.mrb[0].mxu0 %v3355
        %v3423 = vpop.f32.mrb[0].mxu0
        %v3424 = vadd.f32 0.0, %v3423
        %v3425 = vpop.f32.mrb[0].mxu0
        %3426 = vdwg.mxu0
        %3427 = vrot.lane.b32.xlu0 %v3165, 64
        %v3428 = vpop.permute.xlu0 %3427
        %v3431 = vsel %vm1026, %v3350, 0
        %3433 = vmatprep.subr.mxu0 0.0
        %3434 = vmatpush1.msra.mxu0 %v3428
        %3435 = vmatprep.subr.mxu0 0.0
        %3436 = vmatpush1.msra.mxu0 0.0
        %3437 = vmatprep.subr.mxu0 0.0
        %3438 = vmatpush1.msra.mxu0 0.0
        %3439 = vmatprep.subr.mxu0 0.0
        %3440 = vmatpush1.msra.mxu0 0.0
        %3441 = vmatprep.subr.mxu0 0.0
        %3442 = vmatpush1.msra.mxu0 0.0
        %3443 = vmatprep.subr.mxu0 0.0
        %3444 = vmatpush1.msra.mxu0 0.0
        %3445 = vmatprep.subr.mxu0 0.0
        %3446 = vmatpush1.msra.mxu0 0.0
        %3447 = vmatprep.subr.mxu0 0.0
        %3448 = vmatpush1.msra.mxu0 0.0
        %3449 = vmatprep.subr.mxu0 0.0
        %3450 = vmatpush1.msra.mxu0 0.0
        %3451 = vmatprep.subr.mxu0 0.0
        %3452 = vmatpush1.msra.mxu0 0.0
        %3453 = vmatprep.subr.mxu0 0.0
        %3454 = vmatpush1.msra.mxu0 0.0
        %3455 = vmatprep.subr.mxu0 0.0
        %3456 = vmatpush1.msra.mxu0 0.0
        %3457 = vmatprep.subr.mxu0 0.0
        %3458 = vmatpush1.msra.mxu0 0.0
        %3459 = vmatprep.subr.mxu0 0.0
        %3460 = vmatpush1.msra.mxu0 0.0
        %3461 = vmatprep.subr.mxu0 0.0
        %3462 = vmatpush1.msra.mxu0 0.0
        %3463 = vmatprep.subr.mxu0 0.0
        %3464 = vmatpush1.msra.mxu0 0.0
        %3465 = vmatprep.subr.mxu0 0.0
        %3466 = vmatpush1.msra.mxu0 0.0
        %3467 = vmatprep.subr.mxu0 0.0
        %3468 = vmatpush1.msra.mxu0 0.0
        %3469 = vmatprep.subr.mxu0 0.0
        %3470 = vmatpush1.msra.mxu0 0.0
        %3471 = vmatprep.subr.mxu0 0.0
        %3472 = vmatpush1.msra.mxu0 0.0
        %3473 = vmatprep.subr.mxu0 0.0
        %3474 = vmatpush1.msra.mxu0 0.0
        %3475 = vmatprep.subr.mxu0 0.0
        %3476 = vmatpush1.msra.mxu0 0.0
        %3477 = vmatprep.subr.mxu0 0.0
        %3478 = vmatpush1.msra.mxu0 0.0
        %3479 = vmatprep.subr.mxu0 0.0
        %3480 = vmatpush1.msra.mxu0 0.0
        %3481 = vmatprep.subr.mxu0 0.0
        %3482 = vmatpush1.msra.mxu0 0.0
        %3483 = vmatprep.subr.mxu0 0.0
        %3484 = vmatpush1.msra.mxu0 0.0
        %3485 = vmatprep.subr.mxu0 0.0
        %3486 = vmatpush1.msra.mxu0 0.0
        %3487 = vmatprep.subr.mxu0 0.0
        %3488 = vmatpush1.msra.mxu0 0.0
        %3489 = vmatprep.subr.mxu0 0.0
        %3490 = vmatpush1.msra.mxu0 0.0
        %3491 = vmatprep.subr.mxu0 0.0
        %3492 = vmatpush1.msra.mxu0 0.0
        %3493 = vmatprep.subr.mxu0 0.0
        %3494 = vmatpush1.msra.mxu0 0.0
        %3495 = vmatprep.subr.mxu0 0.0
        %3496 = vmatpush1.msra.mxu0 0.0
        %3497 = vmatprep.mubr.f32.mxu0 0.0
        %3498 = vmatmul.mubr.f32.gmra.mrb[0].mxu0 %v3431
        %v3499 = vpop.f32.mrb[0].mxu0
        %v3500 = vadd.f32 0.0, %v3499
        %v3501 = vpop.f32.mrb[0].mxu0
        %3502 = vdwg.mxu0
        %3503 = vrot.lane.b32.xlu0 %v3160, 120
        %v3504 = vpop.permute.xlu0 %3503
        %3505 = vrot.lane.b32.xlu0 %v3160, 88
        %v3506 = vpop.permute.xlu0 %3505
        %v3507 = vsel %vm1026, %v3504, 0
        %v3509 = vsel %vm1026, %v3506, 0
        %3511 = vmatprep.subr.mxu0 0.0
        %3512 = vmatpush1.xpose.msra.mxu0 %v3509
        %3513 = vmatprep.subr.mxu0 0.0
        %3514 = vmatpush1.xpose.msra.mxu0 0.0
        %3515 = vmatprep.subr.mxu0 0.0
        %3516 = vmatpush1.xpose.msra.mxu0 0.0
        %3517 = vmatprep.subr.mxu0 0.0
        %3518 = vmatpush1.xpose.msra.mxu0 0.0
        %3519 = vmatprep.subr.mxu0 0.0
        %3520 = vmatpush1.xpose.msra.mxu0 0.0
        %3521 = vmatprep.subr.mxu0 0.0
        %3522 = vmatpush1.xpose.msra.mxu0 0.0
        %3523 = vmatprep.subr.mxu0 0.0
        %3524 = vmatpush1.xpose.msra.mxu0 0.0
        %3525 = vmatprep.subr.mxu0 0.0
        %3526 = vmatpush1.xpose.msra.mxu0 0.0
        %3527 = vmatprep.subr.mxu0 0.0
        %3528 = vmatpush1.xpose.msra.mxu0 0.0
        %3529 = vmatprep.subr.mxu0 0.0
        %3530 = vmatpush1.xpose.msra.mxu0 0.0
        %3531 = vmatprep.subr.mxu0 0.0
        %3532 = vmatpush1.xpose.msra.mxu0 0.0
        %3533 = vmatprep.subr.mxu0 0.0
        %3534 = vmatpush1.xpose.msra.mxu0 0.0
        %3535 = vmatprep.subr.mxu0 0.0
        %3536 = vmatpush1.xpose.msra.mxu0 0.0
        %3537 = vmatprep.subr.mxu0 0.0
        %3538 = vmatpush1.xpose.msra.mxu0 0.0
        %3539 = vmatprep.subr.mxu0 0.0
        %3540 = vmatpush1.xpose.msra.mxu0 0.0
        %3541 = vmatprep.subr.mxu0 0.0
        %3542 = vmatpush1.xpose.msra.mxu0 0.0
        %3543 = vmatprep.subr.mxu0 0.0
        %3544 = vmatpush1.xpose.msra.mxu0 0.0
        %3545 = vmatprep.subr.mxu0 0.0
        %3546 = vmatpush1.xpose.msra.mxu0 0.0
        %3547 = vmatprep.subr.mxu0 0.0
        %3548 = vmatpush1.xpose.msra.mxu0 0.0
        %3549 = vmatprep.subr.mxu0 0.0
        %3550 = vmatpush1.xpose.msra.mxu0 0.0
        %3551 = vmatprep.subr.mxu0 0.0
        %3552 = vmatpush1.xpose.msra.mxu0 0.0
        %3553 = vmatprep.subr.mxu0 0.0
        %3554 = vmatpush1.xpose.msra.mxu0 0.0
        %3555 = vmatprep.subr.mxu0 0.0
        %3556 = vmatpush1.xpose.msra.mxu0 0.0
        %3557 = vmatprep.subr.mxu0 0.0
        %3558 = vmatpush1.xpose.msra.mxu0 0.0
        %3559 = vmatprep.subr.mxu0 0.0
        %3560 = vmatpush1.xpose.msra.mxu0 0.0
        %3561 = vmatprep.subr.mxu0 0.0
        %3562 = vmatpush1.xpose.msra.mxu0 0.0
        %3563 = vmatprep.subr.mxu0 0.0
        %3564 = vmatpush1.xpose.msra.mxu0 0.0
        %3565 = vmatprep.subr.mxu0 0.0
        %3566 = vmatpush1.xpose.msra.mxu0 0.0
        %3567 = vmatprep.subr.mxu0 0.0
        %3568 = vmatpush1.xpose.msra.mxu0 0.0
        %3569 = vmatprep.subr.mxu0 0.0
        %3570 = vmatpush1.xpose.msra.mxu0 0.0
        %3571 = vmatprep.subr.mxu0 0.0
        %3572 = vmatpush1.xpose.msra.mxu0 0.0
        %3573 = vmatprep.subr.mxu0 0.0
        %3574 = vmatpush1.xpose.msra.mxu0 0.0
        %3575 = vmatprep.mubr.f32.mxu0 0.0
        %3576 = vmatmul.mubr.f32.gmra.mrb[0].mxu0 %v3507
        %v3577 = vpop.f32.mrb[0].mxu0
        %v3578 = vadd.f32 0.0, %v3577
        %v3579 = vpop.f32.mrb[0].mxu0
        %3580 = vdwg.mxu0
        %3581 = vrot.lane.b32.xlu0 %v3165, 120
        %v3582 = vpop.permute.xlu0 %3581
        %3583 = vrot.lane.b32.xlu0 %v3165, 88
        %v3584 = vpop.permute.xlu0 %3583
        %v3585 = vsel %vm1026, %v3582, 0
        %v3587 = vsel %vm1026, %v3584, 0
        %3589 = vmatprep.subr.mxu0 0.0
        %3590 = vmatpush1.xpose.msra.mxu0 %v3587
        %3591 = vmatprep.subr.mxu0 0.0
        %3592 = vmatpush1.xpose.msra.mxu0 0.0
        %3593 = vmatprep.subr.mxu0 0.0
        %3594 = vmatpush1.xpose.msra.mxu0 0.0
        %3595 = vmatprep.subr.mxu0 0.0
        %3596 = vmatpush1.xpose.msra.mxu0 0.0
        %3597 = vmatprep.subr.mxu0 0.0
        %3598 = vmatpush1.xpose.msra.mxu0 0.0
        %3599 = vmatprep.subr.mxu0 0.0
        %3600 = vmatpush1.xpose.msra.mxu0 0.0
        %3601 = vmatprep.subr.mxu0 0.0
        %3602 = vmatpush1.xpose.msra.mxu0 0.0
        %3603 = vmatprep.subr.mxu0 0.0
        %3604 = vmatpush1.xpose.msra.mxu0 0.0
        %3605 = vmatprep.subr.mxu0 0.0
        %3606 = vmatpush1.xpose.msra.mxu0 0.0
        %3607 = vmatprep.subr.mxu0 0.0
        %3608 = vmatpush1.xpose.msra.mxu0 0.0
        %3609 = vmatprep.subr.mxu0 0.0
        %3610 = vmatpush1.xpose.msra.mxu0 0.0
        %3611 = vmatprep.subr.mxu0 0.0
        %3612 = vmatpush1.xpose.msra.mxu0 0.0
        %3613 = vmatprep.subr.mxu0 0.0
        %3614 = vmatpush1.xpose.msra.mxu0 0.0
        %3615 = vmatprep.subr.mxu0 0.0
        %3616 = vmatpush1.xpose.msra.mxu0 0.0
        %3617 = vmatprep.subr.mxu0 0.0
        %3618 = vmatpush1.xpose.msra.mxu0 0.0
        %3619 = vmatprep.subr.mxu0 0.0
        %3620 = vmatpush1.xpose.msra.mxu0 0.0
        %3621 = vmatprep.subr.mxu0 0.0
        %3622 = vmatpush1.xpose.msra.mxu0 0.0
        %3623 = vmatprep.subr.mxu0 0.0
        %3624 = vmatpush1.xpose.msra.mxu0 0.0
        %3625 = vmatprep.subr.mxu0 0.0
        %3626 = vmatpush1.xpose.msra.mxu0 0.0
        %3627 = vmatprep.subr.mxu0 0.0
        %3628 = vmatpush1.xpose.msra.mxu0 0.0
        %3629 = vmatprep.subr.mxu0 0.0
        %3630 = vmatpush1.xpose.msra.mxu0 0.0
        %3631 = vmatprep.subr.mxu0 0.0
        %3632 = vmatpush1.xpose.msra.mxu0 0.0
        %3633 = vmatprep.subr.mxu0 0.0
        %3634 = vmatpush1.xpose.msra.mxu0 0.0
        %3635 = vmatprep.subr.mxu0 0.0
        %3636 = vmatpush1.xpose.msra.mxu0 0.0
        %3637 = vmatprep.subr.mxu0 0.0
        %3638 = vmatpush1.xpose.msra.mxu0 0.0
        %3639 = vmatprep.subr.mxu0 0.0
        %3640 = vmatpush1.xpose.msra.mxu0 0.0
        %3641 = vmatprep.subr.mxu0 0.0
        %3642 = vmatpush1.xpose.msra.mxu0 0.0
        %3643 = vmatprep.subr.mxu0 0.0
        %3644 = vmatpush1.xpose.msra.mxu0 0.0
        %3645 = vmatprep.subr.mxu0 0.0
        %3646 = vmatpush1.xpose.msra.mxu0 0.0
        %3647 = vmatprep.subr.mxu0 0.0
        %3648 = vmatpush1.xpose.msra.mxu0 0.0
        %3649 = vmatprep.subr.mxu0 0.0
        %3650 = vmatpush1.xpose.msra.mxu0 0.0
        %3651 = vmatprep.subr.mxu0 0.0
        %3652 = vmatpush1.xpose.msra.mxu0 0.0
        %3653 = vmatprep.mubr.f32.mxu0 0.0
        %3654 = vmatmul.mubr.f32.gmra.mrb[0].mxu0 %v3585
        %v3655 = vpop.f32.mrb[0].mxu0
        %v3656 = vadd.f32 0.0, %v3655
        %v3657 = vpop.f32.mrb[0].mxu0
        %3658 = vdwg.mxu0
        %v3659 = vmul.f32 %v3578, 0.35355338
        %v3660 = vmul.f32 %v3656, 0.35355338
        %v3661 = vsel %vm1026, %v3659, -inf
        %3662 = vmax.xlane.f32.xlu0 %v3661
        %v3663 = vpop.xlane.xlu0 %3662
        %v3664 = vsel %vm1026, %v3660, -inf
        %3665 = vmax.xlane.f32.xlu0 %v3664
        %v3666 = vpop.xlane.xlu0 %3665
        %v3667 = vsub.f32 %v3659, %v3663
        %v3668 = vsub.f32 %v3660, %v3666
        %v3669 = vmul.f32 %v3667, 1.442695
        %v3670 = vpow.pop %v3669
        %v3671 = vmul.f32 %v3668, 1.442695
        %v3672 = vpow.pop %v3671
        %v3673 = vsel %vm1026, %v3670, 0.0
        %3674 = vadd.xlane.f32.xlu0 %v3673
        %v3675 = vpop.xlane.xlu0 %3674
        %v3676 = vsel %vm1026, %v3672, 0.0
        %3677 = vadd.xlane.f32.xlu0 %v3676
        %v3678 = vpop.xlane.xlu0 %3677
        %v3679 = vrcp.pop %v3675
        %v3680 = vmul.f32 %v3670, %v3679
        %v3681 = vrcp.pop %v3678
        %v3682 = vmul.f32 %v3672, %v3681
        %3683 = vrot.lane.b32.xlu0 %v3160, 56
        %v3684 = vpop.permute.xlu0 %3683
        %v3687 = vsel %vm1026, %v3680, 0
        %3689 = vmatprep.subr.mxu0 0.0
        %3690 = vmatpush1.msra.mxu0 %v3684
        %3691 = vmatprep.subr.mxu0 0.0
        %3692 = vmatpush1.msra.mxu0 0.0
        %3693 = vmatprep.subr.mxu0 0.0
        %3694 = vmatpush1.msra.mxu0 0.0
        %3695 = vmatprep.subr.mxu0 0.0
        %3696 = vmatpush1.msra.mxu0 0.0
        %3697 = vmatprep.subr.mxu0 0.0
        %3698 = vmatpush1.msra.mxu0 0.0
        %3699 = vmatprep.subr.mxu0 0.0
        %3700 = vmatpush1.msra.mxu0 0.0
        %3701 = vmatprep.subr.mxu0 0.0
        %3702 = vmatpush1.msra.mxu0 0.0
        %3703 = vmatprep.subr.mxu0 0.0
        %3704 = vmatpush1.msra.mxu0 0.0
        %3705 = vmatprep.subr.mxu0 0.0
        %3706 = vmatpush1.msra.mxu0 0.0
        %3707 = vmatprep.subr.mxu0 0.0
        %3708 = vmatpush1.msra.mxu0 0.0
        %3709 = vmatprep.subr.mxu0 0.0
        %3710 = vmatpush1.msra.mxu0 0.0
        %3711 = vmatprep.subr.mxu0 0.0
        %3712 = vmatpush1.msra.mxu0 0.0
        %3713 = vmatprep.subr.mxu0 0.0
        %3714 = vmatpush1.msra.mxu0 0.0
        %3715 = vmatprep.subr.mxu0 0.0
        %3716 = vmatpush1.msra.mxu0 0.0
        %3717 = vmatprep.subr.mxu0 0.0
        %3718 = vmatpush1.msra.mxu0 0.0
        %3719 = vmatprep.subr.mxu0 0.0
        %3720 = vmatpush1.msra.mxu0 0.0
        %3721 = vmatprep.subr.mxu0 0.0
        %3722 = vmatpush1.msra.mxu0 0.0
        %3723 = vmatprep.subr.mxu0 0.0
        %3724 = vmatpush1.msra.mxu0 0.0
        %3725 = vmatprep.subr.mxu0 0.0
        %3726 = vmatpush1.msra.mxu0 0.0
        %3727 = vmatprep.subr.mxu0 0.0
        %3728 = vmatpush1.msra.mxu0 0.0
        %3729 = vmatprep.subr.mxu0 0.0
        %3730 = vmatpush1.msra.mxu0 0.0
        %3731 = vmatprep.subr.mxu0 0.0
        %3732 = vmatpush1.msra.mxu0 0.0
        %3733 = vmatprep.subr.mxu0 0.0
        %3734 = vmatpush1.msra.mxu0 0.0
        %3735 = vmatprep.subr.mxu0 0.0
        %3736 = vmatpush1.msra.mxu0 0.0
        %3737 = vmatprep.subr.mxu0 0.0
        %3738 = vmatpush1.msra.mxu0 0.0
        %3739 = vmatprep.subr.mxu0 0.0
        %3740 = vmatpush1.msra.mxu0 0.0
        %3741 = vmatprep.subr.mxu0 0.0
        %3742 = vmatpush1.msra.mxu0 0.0
        %3743 = vmatprep.subr.mxu0 0.0
        %3744 = vmatpush1.msra.mxu0 0.0
        %3745 = vmatprep.subr.mxu0 0.0
        %3746 = vmatpush1.msra.mxu0 0.0
        %3747 = vmatprep.subr.mxu0 0.0
        %3748 = vmatpush1.msra.mxu0 0.0
        %3749 = vmatprep.subr.mxu0 0.0
        %3750 = vmatpush1.msra.mxu0 0.0
        %3751 = vmatprep.subr.mxu0 0.0
        %3752 = vmatpush1.msra.mxu0 0.0
        %3753 = vmatprep.mubr.f32.mxu0 0.0
        %3754 = vmatmul.mubr.f32.gmra.mrb[0].mxu0 %v3687
        %v3755 = vpop.f32.mrb[0].mxu0
        %v3756 = vadd.f32 0.0, %v3755
        %v3757 = vpop.f32.mrb[0].mxu0
        %3758 = vdwg.mxu0
        %3759 = vrot.lane.b32.xlu0 %v3165, 56
        %v3760 = vpop.permute.xlu0 %3759
        %v3763 = vsel %vm1026, %v3682, 0
        %3765 = vmatprep.subr.mxu0 0.0
        %3766 = vmatpush1.msra.mxu0 %v3760
        %3767 = vmatprep.subr.mxu0 0.0
        %3768 = vmatpush1.msra.mxu0 0.0
        %3769 = vmatprep.subr.mxu0 0.0
        %3770 = vmatpush1.msra.mxu0 0.0
        %3771 = vmatprep.subr.mxu0 0.0
        %3772 = vmatpush1.msra.mxu0 0.0
        %3773 = vmatprep.subr.mxu0 0.0
        %3774 = vmatpush1.msra.mxu0 0.0
        %3775 = vmatprep.subr.mxu0 0.0
        %3776 = vmatpush1.msra.mxu0 0.0
        %3777 = vmatprep.subr.mxu0 0.0
        %3778 = vmatpush1.msra.mxu0 0.0
        %3779 = vmatprep.subr.mxu0 0.0
        %3780 = vmatpush1.msra.mxu0 0.0
        %3781 = vmatprep.subr.mxu0 0.0
        %3782 = vmatpush1.msra.mxu0 0.0
        %3783 = vmatprep.subr.mxu0 0.0
        %3784 = vmatpush1.msra.mxu0 0.0
        %3785 = vmatprep.subr.mxu0 0.0
        %3786 = vmatpush1.msra.mxu0 0.0
        %3787 = vmatprep.subr.mxu0 0.0
        %3788 = vmatpush1.msra.mxu0 0.0
        %3789 = vmatprep.subr.mxu0 0.0
        %3790 = vmatpush1.msra.mxu0 0.0
        %3791 = vmatprep.subr.mxu0 0.0
        %3792 = vmatpush1.msra.mxu0 0.0
        %3793 = vmatprep.subr.mxu0 0.0
        %3794 = vmatpush1.msra.mxu0 0.0
        %3795 = vmatprep.subr.mxu0 0.0
        %3796 = vmatpush1.msra.mxu0 0.0
        %3797 = vmatprep.subr.mxu0 0.0
        %3798 = vmatpush1.msra.mxu0 0.0
        %3799 = vmatprep.subr.mxu0 0.0
        %3800 = vmatpush1.msra.mxu0 0.0
        %3801 = vmatprep.subr.mxu0 0.0
        %3802 = vmatpush1.msra.mxu0 0.0
        %3803 = vmatprep.subr.mxu0 0.0
        %3804 = vmatpush1.msra.mxu0 0.0
        %3805 = vmatprep.subr.mxu0 0.0
        %3806 = vmatpush1.msra.mxu0 0.0
        %3807 = vmatprep.subr.mxu0 0.0
        %3808 = vmatpush1.msra.mxu0 0.0
        %3809 = vmatprep.subr.mxu0 0.0
        %3810 = vmatpush1.msra.mxu0 0.0
        %3811 = vmatprep.subr.mxu0 0.0
        %3812 = vmatpush1.msra.mxu0 0.0
        %3813 = vmatprep.subr.mxu0 0.0
        %3814 = vmatpush1.msra.mxu0 0.0
        %3815 = vmatprep.subr.mxu0 0.0
        %3816 = vmatpush1.msra.mxu0 0.0
        %3817 = vmatprep.subr.mxu0 0.0
        %3818 = vmatpush1.msra.mxu0 0.0
        %3819 = vmatprep.subr.mxu0 0.0
        %3820 = vmatpush1.msra.mxu0 0.0
        %3821 = vmatprep.subr.mxu0 0.0
        %3822 = vmatpush1.msra.mxu0 0.0
        %3823 = vmatprep.subr.mxu0 0.0
        %3824 = vmatpush1.msra.mxu0 0.0
        %3825 = vmatprep.subr.mxu0 0.0
        %3826 = vmatpush1.msra.mxu0 0.0
        %3827 = vmatprep.subr.mxu0 0.0
        %3828 = vmatpush1.msra.mxu0 0.0
        %3829 = vmatprep.mubr.f32.mxu0 0.0
        %3830 = vmatmul.mubr.f32.gmra.mrb[0].mxu0 %v3763
        %v3831 = vpop.f32.mrb[0].mxu0
        %v3832 = vadd.f32 0.0, %v3831
        %v3833 = vpop.f32.mrb[0].mxu0
        %3834 = vdwg.mxu0
        %v3836 = vsel %vm1026, %v3756, 0
        %v3839 = vsel %vm1026, %v3832, 0
        %3841 = vmatprep.subr.mxu0 0.0
        %3842 = vmatpush1.msra.mxu0 %v3170
        %3843 = vmatprep.subr.mxu0 0.0
        %3844 = vmatpush1.msra.mxu0 0.0
        %3845 = vmatprep.subr.mxu0 0.0
        %3846 = vmatpush1.msra.mxu0 0.0
        %3847 = vmatprep.subr.mxu0 0.0
        %3848 = vmatpush1.msra.mxu0 0.0
        %3849 = vmatprep.subr.mxu0 0.0
        %3850 = vmatpush1.msra.mxu0 0.0
        %3851 = vmatprep.subr.mxu0 0.0
        %3852 = vmatpush1.msra.mxu0 0.0
        %3853 = vmatprep.subr.mxu0 0.0
        %3854 = vmatpush1.msra.mxu0 0.0
        %3855 = vmatprep.subr.mxu0 0.0
        %3856 = vmatpush1.msra.mxu0 0.0
        %3857 = vmatprep.subr.mxu0 0.0
        %3858 = vmatpush1.msra.mxu0 0.0
        %3859 = vmatprep.subr.mxu0 0.0
        %3860 = vmatpush1.msra.mxu0 0.0
        %3861 = vmatprep.subr.mxu0 0.0
        %3862 = vmatpush1.msra.mxu0 0.0
        %3863 = vmatprep.subr.mxu0 0.0
        %3864 = vmatpush1.msra.mxu0 0.0
        %3865 = vmatprep.subr.mxu0 0.0
        %3866 = vmatpush1.msra.mxu0 0.0
        %3867 = vmatprep.subr.mxu0 0.0
        %3868 = vmatpush1.msra.mxu0 0.0
        %3869 = vmatprep.subr.mxu0 0.0
        %3870 = vmatpush1.msra.mxu0 0.0
        %3871 = vmatprep.subr.mxu0 0.0
        %3872 = vmatpush1.msra.mxu0 0.0
        %3873 = vmatprep.subr.mxu0 0.0
        %3874 = vmatpush1.msra.mxu0 0.0
        %3875 = vmatprep.subr.mxu0 0.0
        %3876 = vmatpush1.msra.mxu0 0.0
        %3877 = vmatprep.subr.mxu0 0.0
        %3878 = vmatpush1.msra.mxu0 0.0
        %3879 = vmatprep.subr.mxu0 0.0
        %3880 = vmatpush1.msra.mxu0 0.0
        %3881 = vmatprep.subr.mxu0 0.0
        %3882 = vmatpush1.msra.mxu0 0.0
        %3883 = vmatprep.subr.mxu0 0.0
        %3884 = vmatpush1.msra.mxu0 0.0
        %3885 = vmatprep.subr.mxu0 0.0
        %3886 = vmatpush1.msra.mxu0 0.0
        %3887 = vmatprep.subr.mxu0 0.0
        %3888 = vmatpush1.msra.mxu0 0.0
        %3889 = vmatprep.subr.mxu0 0.0
        %3890 = vmatpush1.msra.mxu0 0.0
        %3891 = vmatprep.subr.mxu0 0.0
        %3892 = vmatpush1.msra.mxu0 0.0
        %3893 = vmatprep.subr.mxu0 0.0
        %3894 = vmatpush1.msra.mxu0 0.0
        %3895 = vmatprep.subr.mxu0 0.0
        %3896 = vmatpush1.msra.mxu0 0.0
        %3897 = vmatprep.subr.mxu0 0.0
        %3898 = vmatpush1.msra.mxu0 0.0
        %3899 = vmatprep.subr.mxu0 0.0
        %3900 = vmatpush1.msra.mxu0 0.0
        %3901 = vmatprep.subr.mxu0 0.0
        %3902 = vmatpush1.msra.mxu0 0.0
        %3903 = vmatprep.subr.mxu0 0.0
        %3904 = vmatpush1.msra.mxu0 0.0
        %3905 = vmatprep.mubr.f32.mxu0 0.0
        %3906 = vmatmul.mubr.f32.gmra.mrb[0].mxu0 %v3836
        %v3907 = vpop.f32.mrb[0].mxu0
        %v3908 = vadd.f32 0.0, %v3907
        %v3909 = vpop.f32.mrb[0].mxu0
        %3910 = vmatprep.mubr.f32.mxu0 0.0
        %3911 = vmatmul.mubr.f32.gmra.mrb[0].mxu0 %v3839
        %v3912 = vpop.f32.mrb[0].mxu0
        %v3913 = vadd.f32 0.0, %v3912
        %v3914 = vpop.f32.mrb[0].mxu0
        %3915 = vdwg.mxu0
        %v3917 = vsel %vm1026, %v3424, 0
        %v3920 = vsel %vm1026, %v3500, 0
        %3922 = vmatprep.subr.mxu0 0.0
        %3923 = vmatpush1.msra.mxu0 %v3169
        %3924 = vmatprep.subr.mxu0 0.0
        %3925 = vmatpush1.msra.mxu0 0.0
        %3926 = vmatprep.subr.mxu0 0.0
        %3927 = vmatpush1.msra.mxu0 0.0
        %3928 = vmatprep.subr.mxu0 0.0
        %3929 = vmatpush1.msra.mxu0 0.0
        %3930 = vmatprep.subr.mxu0 0.0
        %3931 = vmatpush1.msra.mxu0 0.0
        %3932 = vmatprep.subr.mxu0 0.0
        %3933 = vmatpush1.msra.mxu0 0.0
        %3934 = vmatprep.subr.mxu0 0.0
        %3935 = vmatpush1.msra.mxu0 0.0
        %3936 = vmatprep.subr.mxu0 0.0
        %3937 = vmatpush1.msra.mxu0 0.0
        %3938 = vmatprep.subr.mxu0 0.0
        %3939 = vmatpush1.msra.mxu0 0.0
        %3940 = vmatprep.subr.mxu0 0.0
        %3941 = vmatpush1.msra.mxu0 0.0
        %3942 = vmatprep.subr.mxu0 0.0
        %3943 = vmatpush1.msra.mxu0 0.0
        %3944 = vmatprep.subr.mxu0 0.0
        %3945 = vmatpush1.msra.mxu0 0.0
        %3946 = vmatprep.subr.mxu0 0.0
        %3947 = vmatpush1.msra.mxu0 0.0
        %3948 = vmatprep.subr.mxu0 0.0
        %3949 = vmatpush1.msra.mxu0 0.0
        %3950 = vmatprep.subr.mxu0 0.0
        %3951 = vmatpush1.msra.mxu0 0.0
        %3952 = vmatprep.subr.mxu0 0.0
        %3953 = vmatpush1.msra.mxu0 0.0
        %3954 = vmatprep.subr.mxu0 0.0
        %3955 = vmatpush1.msra.mxu0 0.0
        %3956 = vmatprep.subr.mxu0 0.0
        %3957 = vmatpush1.msra.mxu0 0.0
        %3958 = vmatprep.subr.mxu0 0.0
        %3959 = vmatpush1.msra.mxu0 0.0
        %3960 = vmatprep.subr.mxu0 0.0
        %3961 = vmatpush1.msra.mxu0 0.0
        %3962 = vmatprep.subr.mxu0 0.0
        %3963 = vmatpush1.msra.mxu0 0.0
        %3964 = vmatprep.subr.mxu0 0.0
        %3965 = vmatpush1.msra.mxu0 0.0
        %3966 = vmatprep.subr.mxu0 0.0
        %3967 = vmatpush1.msra.mxu0 0.0
        %3968 = vmatprep.subr.mxu0 0.0
        %3969 = vmatpush1.msra.mxu0 0.0
        %3970 = vmatprep.subr.mxu0 0.0
        %3971 = vmatpush1.msra.mxu0 0.0
        %3972 = vmatprep.subr.mxu0 0.0
        %3973 = vmatpush1.msra.mxu0 0.0
        %3974 = vmatprep.subr.mxu0 0.0
        %3975 = vmatpush1.msra.mxu0 0.0
        %3976 = vmatprep.subr.mxu0 0.0
        %3977 = vmatpush1.msra.mxu0 0.0
        %3978 = vmatprep.subr.mxu0 0.0
        %3979 = vmatpush1.msra.mxu0 0.0
        %3980 = vmatprep.subr.mxu0 0.0
        %3981 = vmatpush1.msra.mxu0 0.0
        %3982 = vmatprep.subr.mxu0 0.0
        %3983 = vmatpush1.msra.mxu0 0.0
        %3984 = vmatprep.subr.mxu0 0.0
        %3985 = vmatpush1.msra.mxu0 0.0
        %3986 = vmatprep.mubr.f32.mxu0 0.0
        %3987 = vmatmul.mubr.f32.gmra.mrb[0].mxu0 %v3917
        %v3988 = vpop.f32.mrb[0].mxu0
        %v3989 = vadd.f32 %v3908, %v3988
        %v3990 = vpop.f32.mrb[0].mxu0
        %3991 = vmatprep.mubr.f32.mxu0 0.0
        %3992 = vmatmul.mubr.f32.gmra.mrb[0].mxu0 %v3920
        %v3993 = vpop.f32.mrb[0].mxu0
        %v3994 = vadd.f32 %v3913, %v3993
        %v3995 = vpop.f32.mrb[0].mxu0
        %3996 = vdwg.mxu0
        %3997 = vrot.lane.b32.xlu0 %v3160, 112
        %v3998 = vpop.permute.xlu0 %3997
        %3999 = vrot.lane.b32.xlu0 %v3160, 80
        %v4000 = vpop.permute.xlu0 %3999
        %v4001 = vsel %vm1026, %v3998, 0
        %v4003 = vsel %vm1026, %v4000, 0
        %4005 = vmatprep.subr.mxu0 0.0
        %4006 = vmatpush1.xpose.msra.mxu0 %v4003
        %4007 = vmatprep.subr.mxu0 0.0
        %4008 = vmatpush1.xpose.msra.mxu0 0.0
        %4009 = vmatprep.subr.mxu0 0.0
        %4010 = vmatpush1.xpose.msra.mxu0 0.0
        %4011 = vmatprep.subr.mxu0 0.0
        %4012 = vmatpush1.xpose.msra.mxu0 0.0
        %4013 = vmatprep.subr.mxu0 0.0
        %4014 = vmatpush1.xpose.msra.mxu0 0.0
        %4015 = vmatprep.subr.mxu0 0.0
        %4016 = vmatpush1.xpose.msra.mxu0 0.0
        %4017 = vmatprep.subr.mxu0 0.0
        %4018 = vmatpush1.xpose.msra.mxu0 0.0
        %4019 = vmatprep.subr.mxu0 0.0
        %4020 = vmatpush1.xpose.msra.mxu0 0.0
        %4021 = vmatprep.subr.mxu0 0.0
        %4022 = vmatpush1.xpose.msra.mxu0 0.0
        %4023 = vmatprep.subr.mxu0 0.0
        %4024 = vmatpush1.xpose.msra.mxu0 0.0
        %4025 = vmatprep.subr.mxu0 0.0
        %4026 = vmatpush1.xpose.msra.mxu0 0.0
        %4027 = vmatprep.subr.mxu0 0.0
        %4028 = vmatpush1.xpose.msra.mxu0 0.0
        %4029 = vmatprep.subr.mxu0 0.0
        %4030 = vmatpush1.xpose.msra.mxu0 0.0
        %4031 = vmatprep.subr.mxu0 0.0
        %4032 = vmatpush1.xpose.msra.mxu0 0.0
        %4033 = vmatprep.subr.mxu0 0.0
        %4034 = vmatpush1.xpose.msra.mxu0 0.0
        %4035 = vmatprep.subr.mxu0 0.0
        %4036 = vmatpush1.xpose.msra.mxu0 0.0
        %4037 = vmatprep.subr.mxu0 0.0
        %4038 = vmatpush1.xpose.msra.mxu0 0.0
        %4039 = vmatprep.subr.mxu0 0.0
        %4040 = vmatpush1.xpose.msra.mxu0 0.0
        %4041 = vmatprep.subr.mxu0 0.0
        %4042 = vmatpush1.xpose.msra.mxu0 0.0
        %4043 = vmatprep.subr.mxu0 0.0
        %4044 = vmatpush1.xpose.msra.mxu0 0.0
        %4045 = vmatprep.subr.mxu0 0.0
        %4046 = vmatpush1.xpose.msra.mxu0 0.0
        %4047 = vmatprep.subr.mxu0 0.0
        %4048 = vmatpush1.xpose.msra.mxu0 0.0
        %4049 = vmatprep.subr.mxu0 0.0
        %4050 = vmatpush1.xpose.msra.mxu0 0.0
        %4051 = vmatprep.subr.mxu0 0.0
        %4052 = vmatpush1.xpose.msra.mxu0 0.0
        %4053 = vmatprep.subr.mxu0 0.0
        %4054 = vmatpush1.xpose.msra.mxu0 0.0
        %4055 = vmatprep.subr.mxu0 0.0
        %4056 = vmatpush1.xpose.msra.mxu0 0.0
        %4057 = vmatprep.subr.mxu0 0.0
        %4058 = vmatpush1.xpose.msra.mxu0 0.0
        %4059 = vmatprep.subr.mxu0 0.0
        %4060 = vmatpush1.xpose.msra.mxu0 0.0
        %4061 = vmatprep.subr.mxu0 0.0
        %4062 = vmatpush1.xpose.msra.mxu0 0.0
        %4063 = vmatprep.subr.mxu0 0.0
        %4064 = vmatpush1.xpose.msra.mxu0 0.0
        %4065 = vmatprep.subr.mxu0 0.0
        %4066 = vmatpush1.xpose.msra.mxu0 0.0
        %4067 = vmatprep.subr.mxu0 0.0
        %4068 = vmatpush1.xpose.msra.mxu0 0.0
        %4069 = vmatprep.mubr.f32.mxu0 0.0
        %4070 = vmatmul.mubr.f32.gmra.mrb[0].mxu0 %v4001
        %v4071 = vpop.f32.mrb[0].mxu0
        %v4072 = vadd.f32 0.0, %v4071
        %v4073 = vpop.f32.mrb[0].mxu0
        %4074 = vdwg.mxu0
        %4075 = vrot.lane.b32.xlu0 %v3165, 112
        %v4076 = vpop.permute.xlu0 %4075
        %4077 = vrot.lane.b32.xlu0 %v3165, 80
        %v4078 = vpop.permute.xlu0 %4077
        %v4079 = vsel %vm1026, %v4076, 0
        %v4081 = vsel %vm1026, %v4078, 0
        %4083 = vmatprep.subr.mxu0 0.0
        %4084 = vmatpush1.xpose.msra.mxu0 %v4081
        %4085 = vmatprep.subr.mxu0 0.0
        %4086 = vmatpush1.xpose.msra.mxu0 0.0
        %4087 = vmatprep.subr.mxu0 0.0
        %4088 = vmatpush1.xpose.msra.mxu0 0.0
        %4089 = vmatprep.subr.mxu0 0.0
        %4090 = vmatpush1.xpose.msra.mxu0 0.0
        %4091 = vmatprep.subr.mxu0 0.0
        %4092 = vmatpush1.xpose.msra.mxu0 0.0
        %4093 = vmatprep.subr.mxu0 0.0
        %4094 = vmatpush1.xpose.msra.mxu0 0.0
        %4095 = vmatprep.subr.mxu0 0.0
        %4096 = vmatpush1.xpose.msra.mxu0 0.0
        %4097 = vmatprep.subr.mxu0 0.0
        %4098 = vmatpush1.xpose.msra.mxu0 0.0
        %4099 = vmatprep.subr.mxu0 0.0
        %4100 = vmatpush1.xpose.msra.mxu0 0.0
        %4101 = vmatprep.subr.mxu0 0.0
        %4102 = vmatpush1.xpose.msra.mxu0 0.0
        %4103 = vmatprep.subr.mxu0 0.0
        %4104 = vmatpush1.xpose.msra.mxu0 0.0
        %4105 = vmatprep.subr.mxu0 0.0
        %4106 = vmatpush1.xpose.msra.mxu0 0.0
        %4107 = vmatprep.subr.mxu0 0.0
        %4108 = vmatpush1.xpose.msra.mxu0 0.0
        %4109 = vmatprep.subr.mxu0 0.0
        %4110 = vmatpush1.xpose.msra.mxu0 0.0
        %4111 = vmatprep.subr.mxu0 0.0
        %4112 = vmatpush1.xpose.msra.mxu0 0.0
        %4113 = vmatprep.subr.mxu0 0.0
        %4114 = vmatpush1.xpose.msra.mxu0 0.0
        %4115 = vmatprep.subr.mxu0 0.0
        %4116 = vmatpush1.xpose.msra.mxu0 0.0
        %4117 = vmatprep.subr.mxu0 0.0
        %4118 = vmatpush1.xpose.msra.mxu0 0.0
        %4119 = vmatprep.subr.mxu0 0.0
        %4120 = vmatpush1.xpose.msra.mxu0 0.0
        %4121 = vmatprep.subr.mxu0 0.0
        %4122 = vmatpush1.xpose.msra.mxu0 0.0
        %4123 = vmatprep.subr.mxu0 0.0
        %4124 = vmatpush1.xpose.msra.mxu0 0.0
        %4125 = vmatprep.subr.mxu0 0.0
        %4126 = vmatpush1.xpose.msra.mxu0 0.0
        %4127 = vmatprep.subr.mxu0 0.0
        %4128 = vmatpush1.xpose.msra.mxu0 0.0
        %4129 = vmatprep.subr.mxu0 0.0
        %4130 = vmatpush1.xpose.msra.mxu0 0.0
        %4131 = vmatprep.subr.mxu0 0.0
        %4132 = vmatpush1.xpose.msra.mxu0 0.0
        %4133 = vmatprep.subr.mxu0 0.0
        %4134 = vmatpush1.xpose.msra.mxu0 0.0
        %4135 = vmatprep.subr.mxu0 0.0
        %4136 = vmatpush1.xpose.msra.mxu0 0.0
        %4137 = vmatprep.subr.mxu0 0.0
        %4138 = vmatpush1.xpose.msra.mxu0 0.0
        %4139 = vmatprep.subr.mxu0 0.0
        %4140 = vmatpush1.xpose.msra.mxu0 0.0
        %4141 = vmatprep.subr.mxu0 0.0
        %4142 = vmatpush1.xpose.msra.mxu0 0.0
        %4143 = vmatprep.subr.mxu0 0.0
        %4144 = vmatpush1.xpose.msra.mxu0 0.0
        %4145 = vmatprep.subr.mxu0 0.0
        %4146 = vmatpush1.xpose.msra.mxu0 0.0
        %4147 = vmatprep.mubr.f32.mxu0 0.0
        %4148 = vmatmul.mubr.f32.gmra.mrb[0].mxu0 %v4079
        %v4149 = vpop.f32.mrb[0].mxu0
        %v4150 = vadd.f32 0.0, %v4149
        %v4151 = vpop.f32.mrb[0].mxu0
        %4152 = vdwg.mxu0
        %v4153 = vmul.f32 %v4072, 0.35355338
        %v4154 = vmul.f32 %v4150, 0.35355338
        %v4155 = vsel %vm1026, %v4153, -inf
        %4156 = vmax.xlane.f32.xlu0 %v4155
        %v4157 = vpop.xlane.xlu0 %4156
        %v4158 = vsel %vm1026, %v4154, -inf
        %4159 = vmax.xlane.f32.xlu0 %v4158
        %v4160 = vpop.xlane.xlu0 %4159
        %v4161 = vsub.f32 %v4153, %v4157
        %v4162 = vsub.f32 %v4154, %v4160
        %v4163 = vmul.f32 %v4161, 1.442695
        %v4164 = vpow.pop %v4163
        %v4165 = vmul.f32 %v4162, 1.442695
        %v4166 = vpow.pop %v4165
        %v4167 = vsel %vm1026, %v4164, 0.0
        %4168 = vadd.xlane.f32.xlu0 %v4167
        %v4169 = vpop.xlane.xlu0 %4168
        %v4170 = vsel %vm1026, %v4166, 0.0
        %4171 = vadd.xlane.f32.xlu0 %v4170
        %v4172 = vpop.xlane.xlu0 %4171
        %v4173 = vrcp.pop %v4169
        %v4174 = vmul.f32 %v4164, %v4173
        %v4175 = vrcp.pop %v4172
        %v4176 = vmul.f32 %v4166, %v4175
        %4177 = vrot.lane.b32.xlu0 %v3160, 48
        %v4178 = vpop.permute.xlu0 %4177
        %v4181 = vsel %vm1026, %v4174, 0
        %4183 = vmatprep.subr.mxu0 0.0
        %4184 = vmatpush1.msra.mxu0 %v4178
        %4185 = vmatprep.subr.mxu0 0.0
        %4186 = vmatpush1.msra.mxu0 0.0
        %4187 = vmatprep.subr.mxu0 0.0
        %4188 = vmatpush1.msra.mxu0 0.0
        %4189 = vmatprep.subr.mxu0 0.0
        %4190 = vmatpush1.msra.mxu0 0.0
        %4191 = vmatprep.subr.mxu0 0.0
        %4192 = vmatpush1.msra.mxu0 0.0
        %4193 = vmatprep.subr.mxu0 0.0
        %4194 = vmatpush1.msra.mxu0 0.0
        %4195 = vmatprep.subr.mxu0 0.0
        %4196 = vmatpush1.msra.mxu0 0.0
        %4197 = vmatprep.subr.mxu0 0.0
        %4198 = vmatpush1.msra.mxu0 0.0
        %4199 = vmatprep.subr.mxu0 0.0
        %4200 = vmatpush1.msra.mxu0 0.0
        %4201 = vmatprep.subr.mxu0 0.0
        %4202 = vmatpush1.msra.mxu0 0.0
        %4203 = vmatprep.subr.mxu0 0.0
        %4204 = vmatpush1.msra.mxu0 0.0
        %4205 = vmatprep.subr.mxu0 0.0
        %4206 = vmatpush1.msra.mxu0 0.0
        %4207 = vmatprep.subr.mxu0 0.0
        %4208 = vmatpush1.msra.mxu0 0.0
        %4209 = vmatprep.subr.mxu0 0.0
        %4210 = vmatpush1.msra.mxu0 0.0
        %4211 = vmatprep.subr.mxu0 0.0
        %4212 = vmatpush1.msra.mxu0 0.0
        %4213 = vmatprep.subr.mxu0 0.0
        %4214 = vmatpush1.msra.mxu0 0.0
        %4215 = vmatprep.subr.mxu0 0.0
        %4216 = vmatpush1.msra.mxu0 0.0
        %4217 = vmatprep.subr.mxu0 0.0
        %4218 = vmatpush1.msra.mxu0 0.0
        %4219 = vmatprep.subr.mxu0 0.0
        %4220 = vmatpush1.msra.mxu0 0.0
        %4221 = vmatprep.subr.mxu0 0.0
        %4222 = vmatpush1.msra.mxu0 0.0
        %4223 = vmatprep.subr.mxu0 0.0
        %4224 = vmatpush1.msra.mxu0 0.0
        %4225 = vmatprep.subr.mxu0 0.0
        %4226 = vmatpush1.msra.mxu0 0.0
        %4227 = vmatprep.subr.mxu0 0.0
        %4228 = vmatpush1.msra.mxu0 0.0
        %4229 = vmatprep.subr.mxu0 0.0
        %4230 = vmatpush1.msra.mxu0 0.0
        %4231 = vmatprep.subr.mxu0 0.0
        %4232 = vmatpush1.msra.mxu0 0.0
        %4233 = vmatprep.subr.mxu0 0.0
        %4234 = vmatpush1.msra.mxu0 0.0
        %4235 = vmatprep.subr.mxu0 0.0
        %4236 = vmatpush1.msra.mxu0 0.0
        %4237 = vmatprep.subr.mxu0 0.0
        %4238 = vmatpush1.msra.mxu0 0.0
        %4239 = vmatprep.subr.mxu0 0.0
        %4240 = vmatpush1.msra.mxu0 0.0
        %4241 = vmatprep.subr.mxu0 0.0
        %4242 = vmatpush1.msra.mxu0 0.0
        %4243 = vmatprep.subr.mxu0 0.0
        %4244 = vmatpush1.msra.mxu0 0.0
        %4245 = vmatprep.subr.mxu0 0.0
        %4246 = vmatpush1.msra.mxu0 0.0
        %4247 = vmatprep.mubr.f32.mxu0 0.0
        %4248 = vmatmul.mubr.f32.gmra.mrb[0].mxu0 %v4181
        %v4249 = vpop.f32.mrb[0].mxu0
        %v4250 = vadd.f32 0.0, %v4249
        %v4251 = vpop.f32.mrb[0].mxu0
        %4252 = vdwg.mxu0
        %4253 = vrot.lane.b32.xlu0 %v3165, 48
        %v4254 = vpop.permute.xlu0 %4253
        %v4257 = vsel %vm1026, %v4176, 0
        %4259 = vmatprep.subr.mxu0 0.0
        %4260 = vmatpush1.msra.mxu0 %v4254
        %4261 = vmatprep.subr.mxu0 0.0
        %4262 = vmatpush1.msra.mxu0 0.0
        %4263 = vmatprep.subr.mxu0 0.0
        %4264 = vmatpush1.msra.mxu0 0.0
        %4265 = vmatprep.subr.mxu0 0.0
        %4266 = vmatpush1.msra.mxu0 0.0
        %4267 = vmatprep.subr.mxu0 0.0
        %4268 = vmatpush1.msra.mxu0 0.0
        %4269 = vmatprep.subr.mxu0 0.0
        %4270 = vmatpush1.msra.mxu0 0.0
        %4271 = vmatprep.subr.mxu0 0.0
        %4272 = vmatpush1.msra.mxu0 0.0
        %4273 = vmatprep.subr.mxu0 0.0
        %4274 = vmatpush1.msra.mxu0 0.0
        %4275 = vmatprep.subr.mxu0 0.0
        %4276 = vmatpush1.msra.mxu0 0.0
        %4277 = vmatprep.subr.mxu0 0.0
        %4278 = vmatpush1.msra.mxu0 0.0
        %4279 = vmatprep.subr.mxu0 0.0
        %4280 = vmatpush1.msra.mxu0 0.0
        %4281 = vmatprep.subr.mxu0 0.0
        %4282 = vmatpush1.msra.mxu0 0.0
        %4283 = vmatprep.subr.mxu0 0.0
        %4284 = vmatpush1.msra.mxu0 0.0
        %4285 = vmatprep.subr.mxu0 0.0
        %4286 = vmatpush1.msra.mxu0 0.0
        %4287 = vmatprep.subr.mxu0 0.0
        %4288 = vmatpush1.msra.mxu0 0.0
        %4289 = vmatprep.subr.mxu0 0.0
        %4290 = vmatpush1.msra.mxu0 0.0
        %4291 = vmatprep.subr.mxu0 0.0
        %4292 = vmatpush1.msra.mxu0 0.0
        %4293 = vmatprep.subr.mxu0 0.0
        %4294 = vmatpush1.msra.mxu0 0.0
        %4295 = vmatprep.subr.mxu0 0.0
        %4296 = vmatpush1.msra.mxu0 0.0
        %4297 = vmatprep.subr.mxu0 0.0
        %4298 = vmatpush1.msra.mxu0 0.0
        %4299 = vmatprep.subr.mxu0 0.0
        %4300 = vmatpush1.msra.mxu0 0.0
        %4301 = vmatprep.subr.mxu0 0.0
        %4302 = vmatpush1.msra.mxu0 0.0
        %4303 = vmatprep.subr.mxu0 0.0
        %4304 = vmatpush1.msra.mxu0 0.0
        %4305 = vmatprep.subr.mxu0 0.0
        %4306 = vmatpush1.msra.mxu0 0.0
        %4307 = vmatprep.subr.mxu0 0.0
        %4308 = vmatpush1.msra.mxu0 0.0
        %4309 = vmatprep.subr.mxu0 0.0
        %4310 = vmatpush1.msra.mxu0 0.0
        %4311 = vmatprep.subr.mxu0 0.0
        %4312 = vmatpush1.msra.mxu0 0.0
        %4313 = vmatprep.subr.mxu0 0.0
        %4314 = vmatpush1.msra.mxu0 0.0
        %4315 = vmatprep.subr.mxu0 0.0
        %4316 = vmatpush1.msra.mxu0 0.0
        %4317 = vmatprep.subr.mxu0 0.0
        %4318 = vmatpush1.msra.mxu0 0.0
        %4319 = vmatprep.subr.mxu0 0.0
        %4320 = vmatpush1.msra.mxu0 0.0
        %4321 = vmatprep.subr.mxu0 0.0
        %4322 = vmatpush1.msra.mxu0 0.0
        %4323 = vmatprep.mubr.f32.mxu0 0.0
        %4324 = vmatmul.mubr.f32.gmra.mrb[0].mxu0 %v4257
        %v4325 = vpop.f32.mrb[0].mxu0
        %v4326 = vadd.f32 0.0, %v4325
        %v4327 = vpop.f32.mrb[0].mxu0
        %4328 = vdwg.mxu0
        %v4330 = vsel %vm1026, %v4250, 0
        %v4333 = vsel %vm1026, %v4326, 0
        %4335 = vmatprep.subr.mxu0 0.0
        %4336 = vmatpush1.msra.mxu0 %v3171
        %4337 = vmatprep.subr.mxu0 0.0
        %4338 = vmatpush1.msra.mxu0 0.0
        %4339 = vmatprep.subr.mxu0 0.0
        %4340 = vmatpush1.msra.mxu0 0.0
        %4341 = vmatprep.subr.mxu0 0.0
        %4342 = vmatpush1.msra.mxu0 0.0
        %4343 = vmatprep.subr.mxu0 0.0
        %4344 = vmatpush1.msra.mxu0 0.0
        %4345 = vmatprep.subr.mxu0 0.0
        %4346 = vmatpush1.msra.mxu0 0.0
        %4347 = vmatprep.subr.mxu0 0.0
        %4348 = vmatpush1.msra.mxu0 0.0
        %4349 = vmatprep.subr.mxu0 0.0
        %4350 = vmatpush1.msra.mxu0 0.0
        %4351 = vmatprep.subr.mxu0 0.0
        %4352 = vmatpush1.msra.mxu0 0.0
        %4353 = vmatprep.subr.mxu0 0.0
        %4354 = vmatpush1.msra.mxu0 0.0
        %4355 = vmatprep.subr.mxu0 0.0
        %4356 = vmatpush1.msra.mxu0 0.0
        %4357 = vmatprep.subr.mxu0 0.0
        %4358 = vmatpush1.msra.mxu0 0.0
        %4359 = vmatprep.subr.mxu0 0.0
        %4360 = vmatpush1.msra.mxu0 0.0
        %4361 = vmatprep.subr.mxu0 0.0
        %4362 = vmatpush1.msra.mxu0 0.0
        %4363 = vmatprep.subr.mxu0 0.0
        %4364 = vmatpush1.msra.mxu0 0.0
        %4365 = vmatprep.subr.mxu0 0.0
        %4366 = vmatpush1.msra.mxu0 0.0
        %4367 = vmatprep.subr.mxu0 0.0
        %4368 = vmatpush1.msra.mxu0 0.0
        %4369 = vmatprep.subr.mxu0 0.0
        %4370 = vmatpush1.msra.mxu0 0.0
        %4371 = vmatprep.subr.mxu0 0.0
        %4372 = vmatpush1.msra.mxu0 0.0
        %4373 = vmatprep.subr.mxu0 0.0
        %4374 = vmatpush1.msra.mxu0 0.0
        %4375 = vmatprep.subr.mxu0 0.0
        %4376 = vmatpush1.msra.mxu0 0.0
        %4377 = vmatprep.subr.mxu0 0.0
        %4378 = vmatpush1.msra.mxu0 0.0
        %4379 = vmatprep.subr.mxu0 0.0
        %4380 = vmatpush1.msra.mxu0 0.0
        %4381 = vmatprep.subr.mxu0 0.0
        %4382 = vmatpush1.msra.mxu0 0.0
        %4383 = vmatprep.subr.mxu0 0.0
        %4384 = vmatpush1.msra.mxu0 0.0
        %4385 = vmatprep.subr.mxu0 0.0
        %4386 = vmatpush1.msra.mxu0 0.0
        %4387 = vmatprep.subr.mxu0 0.0
        %4388 = vmatpush1.msra.mxu0 0.0
        %4389 = vmatprep.subr.mxu0 0.0
        %4390 = vmatpush1.msra.mxu0 0.0
        %4391 = vmatprep.subr.mxu0 0.0
        %4392 = vmatpush1.msra.mxu0 0.0
        %4393 = vmatprep.subr.mxu0 0.0
        %4394 = vmatpush1.msra.mxu0 0.0
        %4395 = vmatprep.subr.mxu0 0.0
        %4396 = vmatpush1.msra.mxu0 0.0
        %4397 = vmatprep.subr.mxu0 0.0
        %4398 = vmatpush1.msra.mxu0 0.0
        %4399 = vmatprep.mubr.f32.mxu0 0.0
        %4400 = vmatmul.mubr.f32.gmra.mrb[0].mxu0 %v4330
        %v4401 = vpop.f32.mrb[0].mxu0
        %v4402 = vadd.f32 0.0, %v4401
        %v4403 = vpop.f32.mrb[0].mxu0
        %4404 = vmatprep.mubr.f32.mxu0 0.0
        %4405 = vmatmul.mubr.f32.gmra.mrb[0].mxu0 %v4333
        %v4406 = vpop.f32.mrb[0].mxu0
        %v4407 = vadd.f32 0.0, %v4406
        %v4408 = vpop.f32.mrb[0].mxu0
        %4409 = vdwg.mxu0
        %v4410 = vadd.f32 %v3989, %v4402
        %v4411 = vadd.f32 %v3994, %v4407
        %4412 = vrot.lane.b32.xlu0 %v3160, 104
        %v4413 = vpop.permute.xlu0 %4412
        %4414 = vrot.lane.b32.xlu0 %v3160, 72
        %v4415 = vpop.permute.xlu0 %4414
        %v4416 = vsel %vm1026, %v4413, 0
        %v4418 = vsel %vm1026, %v4415, 0
        %4420 = vmatprep.subr.mxu0 0.0
        %4421 = vmatpush1.xpose.msra.mxu0 %v4418
        %4422 = vmatprep.subr.mxu0 0.0
        %4423 = vmatpush1.xpose.msra.mxu0 0.0
        %4424 = vmatprep.subr.mxu0 0.0
        %4425 = vmatpush1.xpose.msra.mxu0 0.0
        %4426 = vmatprep.subr.mxu0 0.0
        %4427 = vmatpush1.xpose.msra.mxu0 0.0
        %4428 = vmatprep.subr.mxu0 0.0
        %4429 = vmatpush1.xpose.msra.mxu0 0.0
        %4430 = vmatprep.subr.mxu0 0.0
        %4431 = vmatpush1.xpose.msra.mxu0 0.0
        %4432 = vmatprep.subr.mxu0 0.0
        %4433 = vmatpush1.xpose.msra.mxu0 0.0
        %4434 = vmatprep.subr.mxu0 0.0
        %4435 = vmatpush1.xpose.msra.mxu0 0.0
        %4436 = vmatprep.subr.mxu0 0.0
        %4437 = vmatpush1.xpose.msra.mxu0 0.0
        %4438 = vmatprep.subr.mxu0 0.0
        %4439 = vmatpush1.xpose.msra.mxu0 0.0
        %4440 = vmatprep.subr.mxu0 0.0
        %4441 = vmatpush1.xpose.msra.mxu0 0.0
        %4442 = vmatprep.subr.mxu0 0.0
        %4443 = vmatpush1.xpose.msra.mxu0 0.0
        %4444 = vmatprep.subr.mxu0 0.0
        %4445 = vmatpush1.xpose.msra.mxu0 0.0
        %4446 = vmatprep.subr.mxu0 0.0
        %4447 = vmatpush1.xpose.msra.mxu0 0.0
        %4448 = vmatprep.subr.mxu0 0.0
        %4449 = vmatpush1.xpose.msra.mxu0 0.0
        %4450 = vmatprep.subr.mxu0 0.0
        %4451 = vmatpush1.xpose.msra.mxu0 0.0
        %4452 = vmatprep.subr.mxu0 0.0
        %4453 = vmatpush1.xpose.msra.mxu0 0.0
        %4454 = vmatprep.subr.mxu0 0.0
        %4455 = vmatpush1.xpose.msra.mxu0 0.0
        %4456 = vmatprep.subr.mxu0 0.0
        %4457 = vmatpush1.xpose.msra.mxu0 0.0
        %4458 = vmatprep.subr.mxu0 0.0
        %4459 = vmatpush1.xpose.msra.mxu0 0.0
        %4460 = vmatprep.subr.mxu0 0.0
        %4461 = vmatpush1.xpose.msra.mxu0 0.0
        %4462 = vmatprep.subr.mxu0 0.0
        %4463 = vmatpush1.xpose.msra.mxu0 0.0
        %4464 = vmatprep.subr.mxu0 0.0
        %4465 = vmatpush1.xpose.msra.mxu0 0.0
        %4466 = vmatprep.subr.mxu0 0.0
        %4467 = vmatpush1.xpose.msra.mxu0 0.0
        %4468 = vmatprep.subr.mxu0 0.0
        %4469 = vmatpush1.xpose.msra.mxu0 0.0
        %4470 = vmatprep.subr.mxu0 0.0
        %4471 = vmatpush1.xpose.msra.mxu0 0.0
        %4472 = vmatprep.subr.mxu0 0.0
        %4473 = vmatpush1.xpose.msra.mxu0 0.0
        %4474 = vmatprep.subr.mxu0 0.0
        %4475 = vmatpush1.xpose.msra.mxu0 0.0
        %4476 = vmatprep.subr.mxu0 0.0
        %4477 = vmatpush1.xpose.msra.mxu0 0.0
        %4478 = vmatprep.subr.mxu0 0.0
        %4479 = vmatpush1.xpose.msra.mxu0 0.0
        %4480 = vmatprep.subr.mxu0 0.0
        %4481 = vmatpush1.xpose.msra.mxu0 0.0
        %4482 = vmatprep.subr.mxu0 0.0
        %4483 = vmatpush1.xpose.msra.mxu0 0.0
        %4484 = vmatprep.mubr.f32.mxu0 0.0
        %4485 = vmatmul.mubr.f32.gmra.mrb[0].mxu0 %v4416
        %v4486 = vpop.f32.mrb[0].mxu0
        %v4487 = vadd.f32 0.0, %v4486
        %v4488 = vpop.f32.mrb[0].mxu0
        %4489 = vdwg.mxu0
        %4490 = vrot.lane.b32.xlu0 %v3165, 104
        %v4491 = vpop.permute.xlu0 %4490
        %4492 = vrot.lane.b32.xlu0 %v3165, 72
        %v4493 = vpop.permute.xlu0 %4492
        %v4494 = vsel %vm1026, %v4491, 0
        %v4496 = vsel %vm1026, %v4493, 0
        %4498 = vmatprep.subr.mxu0 0.0
        %4499 = vmatpush1.xpose.msra.mxu0 %v4496
        %4500 = vmatprep.subr.mxu0 0.0
        %4501 = vmatpush1.xpose.msra.mxu0 0.0
        %4502 = vmatprep.subr.mxu0 0.0
        %4503 = vmatpush1.xpose.msra.mxu0 0.0
        %4504 = vmatprep.subr.mxu0 0.0
        %4505 = vmatpush1.xpose.msra.mxu0 0.0
        %4506 = vmatprep.subr.mxu0 0.0
        %4507 = vmatpush1.xpose.msra.mxu0 0.0
        %4508 = vmatprep.subr.mxu0 0.0
        %4509 = vmatpush1.xpose.msra.mxu0 0.0
        %4510 = vmatprep.subr.mxu0 0.0
        %4511 = vmatpush1.xpose.msra.mxu0 0.0
        %4512 = vmatprep.subr.mxu0 0.0
        %4513 = vmatpush1.xpose.msra.mxu0 0.0
        %4514 = vmatprep.subr.mxu0 0.0
        %4515 = vmatpush1.xpose.msra.mxu0 0.0
        %4516 = vmatprep.subr.mxu0 0.0
        %4517 = vmatpush1.xpose.msra.mxu0 0.0
        %4518 = vmatprep.subr.mxu0 0.0
        %4519 = vmatpush1.xpose.msra.mxu0 0.0
        %4520 = vmatprep.subr.mxu0 0.0
        %4521 = vmatpush1.xpose.msra.mxu0 0.0
        %4522 = vmatprep.subr.mxu0 0.0
        %4523 = vmatpush1.xpose.msra.mxu0 0.0
        %4524 = vmatprep.subr.mxu0 0.0
        %4525 = vmatpush1.xpose.msra.mxu0 0.0
        %4526 = vmatprep.subr.mxu0 0.0
        %4527 = vmatpush1.xpose.msra.mxu0 0.0
        %4528 = vmatprep.subr.mxu0 0.0
        %4529 = vmatpush1.xpose.msra.mxu0 0.0
        %4530 = vmatprep.subr.mxu0 0.0
        %4531 = vmatpush1.xpose.msra.mxu0 0.0
        %4532 = vmatprep.subr.mxu0 0.0
        %4533 = vmatpush1.xpose.msra.mxu0 0.0
        %4534 = vmatprep.subr.mxu0 0.0
        %4535 = vmatpush1.xpose.msra.mxu0 0.0
        %4536 = vmatprep.subr.mxu0 0.0
        %4537 = vmatpush1.xpose.msra.mxu0 0.0
        %4538 = vmatprep.subr.mxu0 0.0
        %4539 = vmatpush1.xpose.msra.mxu0 0.0
        %4540 = vmatprep.subr.mxu0 0.0
        %4541 = vmatpush1.xpose.msra.mxu0 0.0
        %4542 = vmatprep.subr.mxu0 0.0
        %4543 = vmatpush1.xpose.msra.mxu0 0.0
        %4544 = vmatprep.subr.mxu0 0.0
        %4545 = vmatpush1.xpose.msra.mxu0 0.0
        %4546 = vmatprep.subr.mxu0 0.0
        %4547 = vmatpush1.xpose.msra.mxu0 0.0
        %4548 = vmatprep.subr.mxu0 0.0
        %4549 = vmatpush1.xpose.msra.mxu0 0.0
        %4550 = vmatprep.subr.mxu0 0.0
        %4551 = vmatpush1.xpose.msra.mxu0 0.0
        %4552 = vmatprep.subr.mxu0 0.0
        %4553 = vmatpush1.xpose.msra.mxu0 0.0
        %4554 = vmatprep.subr.mxu0 0.0
        %4555 = vmatpush1.xpose.msra.mxu0 0.0
        %4556 = vmatprep.subr.mxu0 0.0
        %4557 = vmatpush1.xpose.msra.mxu0 0.0
        %4558 = vmatprep.subr.mxu0 0.0
        %4559 = vmatpush1.xpose.msra.mxu0 0.0
        %4560 = vmatprep.subr.mxu0 0.0
        %4561 = vmatpush1.xpose.msra.mxu0 0.0
        %4562 = vmatprep.mubr.f32.mxu0 0.0
        %4563 = vmatmul.mubr.f32.gmra.mrb[0].mxu0 %v4494
        %v4564 = vpop.f32.mrb[0].mxu0
        %v4565 = vadd.f32 0.0, %v4564
        %v4566 = vpop.f32.mrb[0].mxu0
        %4567 = vdwg.mxu0
        %v4568 = vmul.f32 %v4487, 0.35355338
        %v4569 = vmul.f32 %v4565, 0.35355338
        %v4570 = vsel %vm1026, %v4568, -inf
        %4571 = vmax.xlane.f32.xlu0 %v4570
        %v4572 = vpop.xlane.xlu0 %4571
        %v4573 = vsel %vm1026, %v4569, -inf
        %4574 = vmax.xlane.f32.xlu0 %v4573
        %v4575 = vpop.xlane.xlu0 %4574
        %v4576 = vsub.f32 %v4568, %v4572
        %v4577 = vsub.f32 %v4569, %v4575
        %v4578 = vmul.f32 %v4576, 1.442695
        %v4579 = vpow.pop %v4578
        %v4580 = vmul.f32 %v4577, 1.442695
        %v4581 = vpow.pop %v4580
        %v4582 = vsel %vm1026, %v4579, 0.0
        %4583 = vadd.xlane.f32.xlu0 %v4582
        %v4584 = vpop.xlane.xlu0 %4583
        %v4585 = vsel %vm1026, %v4581, 0.0
        %4586 = vadd.xlane.f32.xlu0 %v4585
        %v4587 = vpop.xlane.xlu0 %4586
        %v4588 = vrcp.pop %v4584
        %v4589 = vmul.f32 %v4579, %v4588
        %v4590 = vrcp.pop %v4587
        %v4591 = vmul.f32 %v4581, %v4590
        %4592 = vrot.lane.b32.xlu0 %v3160, 40
        %v4593 = vpop.permute.xlu0 %4592
        %v4596 = vsel %vm1026, %v4589, 0
        %4598 = vmatprep.subr.mxu0 0.0
        %4599 = vmatpush1.msra.mxu0 %v4593
        %4600 = vmatprep.subr.mxu0 0.0
        %4601 = vmatpush1.msra.mxu0 0.0
        %4602 = vmatprep.subr.mxu0 0.0
        %4603 = vmatpush1.msra.mxu0 0.0
        %4604 = vmatprep.subr.mxu0 0.0
        %4605 = vmatpush1.msra.mxu0 0.0
        %4606 = vmatprep.subr.mxu0 0.0
        %4607 = vmatpush1.msra.mxu0 0.0
        %4608 = vmatprep.subr.mxu0 0.0
        %4609 = vmatpush1.msra.mxu0 0.0
        %4610 = vmatprep.subr.mxu0 0.0
        %4611 = vmatpush1.msra.mxu0 0.0
        %4612 = vmatprep.subr.mxu0 0.0
        %4613 = vmatpush1.msra.mxu0 0.0
        %4614 = vmatprep.subr.mxu0 0.0
        %4615 = vmatpush1.msra.mxu0 0.0
        %4616 = vmatprep.subr.mxu0 0.0
        %4617 = vmatpush1.msra.mxu0 0.0
        %4618 = vmatprep.subr.mxu0 0.0
        %4619 = vmatpush1.msra.mxu0 0.0
        %4620 = vmatprep.subr.mxu0 0.0
        %4621 = vmatpush1.msra.mxu0 0.0
        %4622 = vmatprep.subr.mxu0 0.0
        %4623 = vmatpush1.msra.mxu0 0.0
        %4624 = vmatprep.subr.mxu0 0.0
        %4625 = vmatpush1.msra.mxu0 0.0
        %4626 = vmatprep.subr.mxu0 0.0
        %4627 = vmatpush1.msra.mxu0 0.0
        %4628 = vmatprep.subr.mxu0 0.0
        %4629 = vmatpush1.msra.mxu0 0.0
        %4630 = vmatprep.subr.mxu0 0.0
        %4631 = vmatpush1.msra.mxu0 0.0
        %4632 = vmatprep.subr.mxu0 0.0
        %4633 = vmatpush1.msra.mxu0 0.0
        %4634 = vmatprep.subr.mxu0 0.0
        %4635 = vmatpush1.msra.mxu0 0.0
        %4636 = vmatprep.subr.mxu0 0.0
        %4637 = vmatpush1.msra.mxu0 0.0
        %4638 = vmatprep.subr.mxu0 0.0
        %4639 = vmatpush1.msra.mxu0 0.0
        %4640 = vmatprep.subr.mxu0 0.0
        %4641 = vmatpush1.msra.mxu0 0.0
        %4642 = vmatprep.subr.mxu0 0.0
        %4643 = vmatpush1.msra.mxu0 0.0
        %4644 = vmatprep.subr.mxu0 0.0
        %4645 = vmatpush1.msra.mxu0 0.0
        %4646 = vmatprep.subr.mxu0 0.0
        %4647 = vmatpush1.msra.mxu0 0.0
        %4648 = vmatprep.subr.mxu0 0.0
        %4649 = vmatpush1.msra.mxu0 0.0
        %4650 = vmatprep.subr.mxu0 0.0
        %4651 = vmatpush1.msra.mxu0 0.0
        %4652 = vmatprep.subr.mxu0 0.0
        %4653 = vmatpush1.msra.mxu0 0.0
        %4654 = vmatprep.subr.mxu0 0.0
        %4655 = vmatpush1.msra.mxu0 0.0
        %4656 = vmatprep.subr.mxu0 0.0
        %4657 = vmatpush1.msra.mxu0 0.0
        %4658 = vmatprep.subr.mxu0 0.0
        %4659 = vmatpush1.msra.mxu0 0.0
        %4660 = vmatprep.subr.mxu0 0.0
        %4661 = vmatpush1.msra.mxu0 0.0
        %4662 = vmatprep.mubr.f32.mxu0 0.0
        %4663 = vmatmul.mubr.f32.gmra.mrb[0].mxu0 %v4596
        %v4664 = vpop.f32.mrb[0].mxu0
        %v4665 = vadd.f32 0.0, %v4664
        %v4666 = vpop.f32.mrb[0].mxu0
        %4667 = vdwg.mxu0
        %4668 = vrot.lane.b32.xlu0 %v3165, 40
        %v4669 = vpop.permute.xlu0 %4668
        %v4672 = vsel %vm1026, %v4591, 0
        %4674 = vmatprep.subr.mxu0 0.0
        %4675 = vmatpush1.msra.mxu0 %v4669
        %4676 = vmatprep.subr.mxu0 0.0
        %4677 = vmatpush1.msra.mxu0 0.0
        %4678 = vmatprep.subr.mxu0 0.0
        %4679 = vmatpush1.msra.mxu0 0.0
        %4680 = vmatprep.subr.mxu0 0.0
        %4681 = vmatpush1.msra.mxu0 0.0
        %4682 = vmatprep.subr.mxu0 0.0
        %4683 = vmatpush1.msra.mxu0 0.0
        %4684 = vmatprep.subr.mxu0 0.0
        %4685 = vmatpush1.msra.mxu0 0.0
        %4686 = vmatprep.subr.mxu0 0.0
        %4687 = vmatpush1.msra.mxu0 0.0
        %4688 = vmatprep.subr.mxu0 0.0
        %4689 = vmatpush1.msra.mxu0 0.0
        %4690 = vmatprep.subr.mxu0 0.0
        %4691 = vmatpush1.msra.mxu0 0.0
        %4692 = vmatprep.subr.mxu0 0.0
        %4693 = vmatpush1.msra.mxu0 0.0
        %4694 = vmatprep.subr.mxu0 0.0
        %4695 = vmatpush1.msra.mxu0 0.0
        %4696 = vmatprep.subr.mxu0 0.0
        %4697 = vmatpush1.msra.mxu0 0.0
        %4698 = vmatprep.subr.mxu0 0.0
        %4699 = vmatpush1.msra.mxu0 0.0
        %4700 = vmatprep.subr.mxu0 0.0
        %4701 = vmatpush1.msra.mxu0 0.0
        %4702 = vmatprep.subr.mxu0 0.0
        %4703 = vmatpush1.msra.mxu0 0.0
        %4704 = vmatprep.subr.mxu0 0.0
        %4705 = vmatpush1.msra.mxu0 0.0
        %4706 = vmatprep.subr.mxu0 0.0
        %4707 = vmatpush1.msra.mxu0 0.0
        %4708 = vmatprep.subr.mxu0 0.0
        %4709 = vmatpush1.msra.mxu0 0.0
        %4710 = vmatprep.subr.mxu0 0.0
        %4711 = vmatpush1.msra.mxu0 0.0
        %4712 = vmatprep.subr.mxu0 0.0
        %4713 = vmatpush1.msra.mxu0 0.0
        %4714 = vmatprep.subr.mxu0 0.0
        %4715 = vmatpush1.msra.mxu0 0.0
        %4716 = vmatprep.subr.mxu0 0.0
        %4717 = vmatpush1.msra.mxu0 0.0
        %4718 = vmatprep.subr.mxu0 0.0
        %4719 = vmatpush1.msra.mxu0 0.0
        %4720 = vmatprep.subr.mxu0 0.0
        %4721 = vmatpush1.msra.mxu0 0.0
        %4722 = vmatprep.subr.mxu0 0.0
        %4723 = vmatpush1.msra.mxu0 0.0
        %4724 = vmatprep.subr.mxu0 0.0
        %4725 = vmatpush1.msra.mxu0 0.0
        %4726 = vmatprep.subr.mxu0 0.0
        %4727 = vmatpush1.msra.mxu0 0.0
        %4728 = vmatprep.subr.mxu0 0.0
        %4729 = vmatpush1.msra.mxu0 0.0
        %4730 = vmatprep.subr.mxu0 0.0
        %4731 = vmatpush1.msra.mxu0 0.0
        %4732 = vmatprep.subr.mxu0 0.0
        %4733 = vmatpush1.msra.mxu0 0.0
        %4734 = vmatprep.subr.mxu0 0.0
        %4735 = vmatpush1.msra.mxu0 0.0
        %4736 = vmatprep.subr.mxu0 0.0
        %4737 = vmatpush1.msra.mxu0 0.0
        %4738 = vmatprep.mubr.f32.mxu0 0.0
        %4739 = vmatmul.mubr.f32.gmra.mrb[0].mxu0 %v4672
        %v4740 = vpop.f32.mrb[0].mxu0
        %v4741 = vadd.f32 0.0, %v4740
        %v4742 = vpop.f32.mrb[0].mxu0
        %4743 = vdwg.mxu0
        %v4745 = vsel %vm1026, %v4665, 0
        %v4748 = vsel %vm1026, %v4741, 0
        %4750 = vmatprep.subr.mxu0 0.0
        %4751 = vmatpush1.msra.mxu0 %v3172
        %4752 = vmatprep.subr.mxu0 0.0
        %4753 = vmatpush1.msra.mxu0 0.0
        %4754 = vmatprep.subr.mxu0 0.0
        %4755 = vmatpush1.msra.mxu0 0.0
        %4756 = vmatprep.subr.mxu0 0.0
        %4757 = vmatpush1.msra.mxu0 0.0
        %4758 = vmatprep.subr.mxu0 0.0
        %4759 = vmatpush1.msra.mxu0 0.0
        %4760 = vmatprep.subr.mxu0 0.0
        %4761 = vmatpush1.msra.mxu0 0.0
        %4762 = vmatprep.subr.mxu0 0.0
        %4763 = vmatpush1.msra.mxu0 0.0
        %4764 = vmatprep.subr.mxu0 0.0
        %4765 = vmatpush1.msra.mxu0 0.0
        %4766 = vmatprep.subr.mxu0 0.0
        %4767 = vmatpush1.msra.mxu0 0.0
        %4768 = vmatprep.subr.mxu0 0.0
        %4769 = vmatpush1.msra.mxu0 0.0
        %4770 = vmatprep.subr.mxu0 0.0
        %4771 = vmatpush1.msra.mxu0 0.0
        %4772 = vmatprep.subr.mxu0 0.0
        %4773 = vmatpush1.msra.mxu0 0.0
        %4774 = vmatprep.subr.mxu0 0.0
        %4775 = vmatpush1.msra.mxu0 0.0
        %4776 = vmatprep.subr.mxu0 0.0
        %4777 = vmatpush1.msra.mxu0 0.0
        %4778 = vmatprep.subr.mxu0 0.0
        %4779 = vmatpush1.msra.mxu0 0.0
        %4780 = vmatprep.subr.mxu0 0.0
        %4781 = vmatpush1.msra.mxu0 0.0
        %4782 = vmatprep.subr.mxu0 0.0
        %4783 = vmatpush1.msra.mxu0 0.0
        %4784 = vmatprep.subr.mxu0 0.0
        %4785 = vmatpush1.msra.mxu0 0.0
        %4786 = vmatprep.subr.mxu0 0.0
        %4787 = vmatpush1.msra.mxu0 0.0
        %4788 = vmatprep.subr.mxu0 0.0
        %4789 = vmatpush1.msra.mxu0 0.0
        %4790 = vmatprep.subr.mxu0 0.0
        %4791 = vmatpush1.msra.mxu0 0.0
        %4792 = vmatprep.subr.mxu0 0.0
        %4793 = vmatpush1.msra.mxu0 0.0
        %4794 = vmatprep.subr.mxu0 0.0
        %4795 = vmatpush1.msra.mxu0 0.0
        %4796 = vmatprep.subr.mxu0 0.0
        %4797 = vmatpush1.msra.mxu0 0.0
        %4798 = vmatprep.subr.mxu0 0.0
        %4799 = vmatpush1.msra.mxu0 0.0
        %4800 = vmatprep.subr.mxu0 0.0
        %4801 = vmatpush1.msra.mxu0 0.0
        %4802 = vmatprep.subr.mxu0 0.0
        %4803 = vmatpush1.msra.mxu0 0.0
        %4804 = vmatprep.subr.mxu0 0.0
        %4805 = vmatpush1.msra.mxu0 0.0
        %4806 = vmatprep.subr.mxu0 0.0
        %4807 = vmatpush1.msra.mxu0 0.0
        %4808 = vmatprep.subr.mxu0 0.0
        %4809 = vmatpush1.msra.mxu0 0.0
        %4810 = vmatprep.subr.mxu0 0.0
        %4811 = vmatpush1.msra.mxu0 0.0
        %4812 = vmatprep.subr.mxu0 0.0
        %4813 = vmatpush1.msra.mxu0 0.0
        %4814 = vmatprep.mubr.f32.mxu0 0.0
        %4815 = vmatmul.mubr.f32.gmra.mrb[0].mxu0 %v4745
        %v4816 = vpop.f32.mrb[0].mxu0
        %v4817 = vadd.f32 0.0, %v4816
        %v4818 = vpop.f32.mrb[0].mxu0
        %4819 = vmatprep.mubr.f32.mxu0 0.0
        %4820 = vmatmul.mubr.f32.gmra.mrb[0].mxu0 %v4748
        %v4821 = vpop.f32.mrb[0].mxu0
        %v4822 = vadd.f32 0.0, %v4821
        %v4823 = vpop.f32.mrb[0].mxu0
        %4824 = vdwg.mxu0
        %v4825 = vadd.f32 %v4410, %v4817
        %v4826 = vadd.f32 %v4411, %v4822
        %s4827 = scalar_lea.vmem [#allocation11], 1
        %v4828 = vld [vmem:[%s4827] sm:$0x1]
        %v4830 = vlaneseq
        %v4831 = vshrl.u32 %v4830, 7
        %v4832 = vsub.s32 0, %v4831
        %v4833 = vrot.slane %v4828, %v4832
        %v4835 = vadd.f32 %v4825, %v4833
        %v4836 = vadd.f32 %v4826, %v4833
        %vm4837 = vcmp.ge.f32.partialorder %v4835, 0.0
        %vm4838 = vcmp.ge.f32.partialorder %v4836, 0.0
        %v4839 = vmul.f32 %v4835, 0.2
        %v4840 = vmul.f32 %v4836, 0.2
        %v4841 = vsel %vm4837, %v4835, %v4839
        %v4842 = vsel %vm4838, %v4836, %v4840
        %s4843 = scalar_lea.vmem %s8, 32
        %v4844 = vld [vmem:[%s4843] sm:$0xff]
        %v4845 = vld [vmem:[%s4843 + $0x8] sm:$0xff]
        %v4846 = vld [vmem:[%s4843 + $0x10] sm:$0xff]
        %v4847 = vld [vmem:[%s4843 + $0x18] sm:$0xff]
        %s4848 = scalar_lea.vmem [#allocation13], 1
        %v4849 = vld [vmem:[%s4848] sm:$0x1]
        %v4851 = vlaneseq
        %v4852 = vshrl.u32 %v4851, 7
        %v4853 = vsub.s32 0, %v4852
        %v4854 = vrot.slane %v4849, %v4853
        %v4857 = vsel %vm883, %v4841, 0
        %v4860 = vsel %vm883, %v4842, 0
        %4862 = vmatprep.subr.mxu0 0.0
        %4863 = vmatpush1.msra.mxu0 %v4844
        %4864 = vmatprep.subr.mxu0 0.0
        %4865 = vmatpush1.msra.mxu0 %v4845
        %4866 = vmatprep.subr.mxu0 0.0
        %4867 = vmatpush1.msra.mxu0 %v4846
        %4868 = vmatprep.subr.mxu0 0.0
        %4869 = vmatpush1.msra.mxu0 %v4847
        %4870 = vmatprep.subr.mxu0 0.0
        %4871 = vmatpush1.msra.mxu0 0.0
        %4872 = vmatprep.subr.mxu0 0.0
        %4873 = vmatpush1.msra.mxu0 0.0
        %4874 = vmatprep.subr.mxu0 0.0
        %4875 = vmatpush1.msra.mxu0 0.0
        %4876 = vmatprep.subr.mxu0 0.0
        %4877 = vmatpush1.msra.mxu0 0.0
        %4878 = vmatprep.subr.mxu0 0.0
        %4879 = vmatpush1.msra.mxu0 0.0
        %4880 = vmatprep.subr.mxu0 0.0
        %4881 = vmatpush1.msra.mxu0 0.0
        %4882 = vmatprep.subr.mxu0 0.0
        %4883 = vmatpush1.msra.mxu0 0.0
        %4884 = vmatprep.subr.mxu0 0.0
        %4885 = vmatpush1.msra.mxu0 0.0
        %4886 = vmatprep.subr.mxu0 0.0
        %4887 = vmatpush1.msra.mxu0 0.0
        %4888 = vmatprep.subr.mxu0 0.0
        %4889 = vmatpush1.msra.mxu0 0.0
        %4890 = vmatprep.subr.mxu0 0.0
        %4891 = vmatpush1.msra.mxu0 0.0
        %4892 = vmatprep.subr.mxu0 0.0
        %4893 = vmatpush1.msra.mxu0 0.0
        %4894 = vmatprep.subr.mxu0 0.0
        %4895 = vmatpush1.msra.mxu0 0.0
        %4896 = vmatprep.subr.mxu0 0.0
        %4897 = vmatpush1.msra.mxu0 0.0
        %4898 = vmatprep.subr.mxu0 0.0
        %4899 = vmatpush1.msra.mxu0 0.0
        %4900 = vmatprep.subr.mxu0 0.0
        %4901 = vmatpush1.msra.mxu0 0.0
        %4902 = vmatprep.subr.mxu0 0.0
        %4903 = vmatpush1.msra.mxu0 0.0
        %4904 = vmatprep.subr.mxu0 0.0
        %4905 = vmatpush1.msra.mxu0 0.0
        %4906 = vmatprep.subr.mxu0 0.0
        %4907 = vmatpush1.msra.mxu0 0.0
        %4908 = vmatprep.subr.mxu0 0.0
        %4909 = vmatpush1.msra.mxu0 0.0
        %4910 = vmatprep.subr.mxu0 0.0
        %4911 = vmatpush1.msra.mxu0 0.0
        %4912 = vmatprep.subr.mxu0 0.0
        %4913 = vmatpush1.msra.mxu0 0.0
        %4914 = vmatprep.subr.mxu0 0.0
        %4915 = vmatpush1.msra.mxu0 0.0
        %4916 = vmatprep.subr.mxu0 0.0
        %4917 = vmatpush1.msra.mxu0 0.0
        %4918 = vmatprep.subr.mxu0 0.0
        %4919 = vmatpush1.msra.mxu0 0.0
        %4920 = vmatprep.subr.mxu0 0.0
        %4921 = vmatpush1.msra.mxu0 0.0
        %4922 = vmatprep.subr.mxu0 0.0
        %4923 = vmatpush1.msra.mxu0 0.0
        %4924 = vmatprep.subr.mxu0 0.0
        %4925 = vmatpush1.msra.mxu0 0.0
        %4926 = vmatprep.mubr.f32.mxu0 0.0
        %4927 = vmatmul.mubr.f32.gmra.mrb[0].mxu0 %v4857
        %v4928 = vpop.f32.mrb[0].mxu0
        %v4929 = vadd.f32 %v4854, %v4928
        %v4930 = vpop.f32.mrb[0].mxu0
        %4931 = vmatprep.mubr.f32.mxu0 0.0
        %4932 = vmatmul.mubr.f32.gmra.mrb[0].mxu0 %v4860
        %v4933 = vpop.f32.mrb[0].mxu0
        %v4934 = vadd.f32 %v4854, %v4933
        %v4935 = vpop.f32.mrb[0].mxu0
        %4936 = vdwg.mxu0
        %v4937 = vadd.f32 %v3026, %v4929
        %v4938 = vadd.f32 %v3027, %v4934
        %s4939 = scalar_lea.vmem [#allocation14], 1
        %v4940 = vld [vmem:[%s4939] sm:$0x1]
        %s4941 = scalar_lea.vmem [#allocation16], 1
        %v4942 = vld [vmem:[%s4941] sm:$0x1]
        %v4943 = vsel %vm883, %v4937, 0.0
        %4944 = vadd.xlane.f32.xlu0 %v4943
        %v4945 = vpop.xlane.xlu0 %4944
        %v4946 = vsel %vm883, %v4938, 0.0
        %4947 = vadd.xlane.f32.xlu0 %v4946
        %v4948 = vpop.xlane.xlu0 %4947
        %v4949 = vmul.f32 %v4945, %v890
        %v4950 = vmul.f32 %v4948, %v890
        %v4951 = vsub.f32 %v4937, %v4949
        %v4952 = vsub.f32 %v4938, %v4950
        %v4953 = vmul.f32 %v4951, %v4951
        %v4954 = vmul.f32 %v4952, %v4952
        %v4955 = vsel %vm883, %v4953, 0.0
        %4956 = vadd.xlane.f32.xlu0 %v4955
        %v4957 = vpop.xlane.xlu0 %4956
        %v4958 = vsel %vm883, %v4954, 0.0
        %4959 = vadd.xlane.f32.xlu0 %v4958
        %v4960 = vpop.xlane.xlu0 %4959
        %v4961 = vmul.f32 %v4957, %v890
        %v4962 = vmul.f32 %v4960, %v890
        %v4963 = vadd.f32 %v4961, 1e-05
        %v4964 = vadd.f32 %v4962, 1e-05
        %v4965 = vrsqrt.pop %v4963
        %v4966 = vrsqrt.pop %v4964
        %v4967 = vmul.f32 %v4951, %v4965
        %v4968 = vmul.f32 %v4952, %v4966
        %v4970 = vlaneseq
        %v4971 = vshrl.u32 %v4970, 7
        %v4972 = vsub.s32 0, %v4971
        %v4973 = vrot.slane %v4940, %v4972
        %v4975 = vmul.f32 %v4967, %v4973
        %v4976 = vmul.f32 %v4968, %v4973
        %v4978 = vlaneseq
        %v4979 = vshrl.u32 %v4978, 7
        %v4980 = vsub.s32 0, %v4979
        %v4981 = vrot.slane %v4942, %v4980
        %v4983 = vadd.f32 %v4975, %v4981
        %v4984 = vadd.f32 %v4976, %v4981
        %s4985 = scalar_lea.vmem [#allocation17], 32
        %v4986 = vld [vmem:[%s4985] sm:$0xff]
        %v4987 = vld [vmem:[%s4985 + $0x8] sm:$0xff]
        %v4988 = vld [vmem:[%s4985 + $0x10] sm:$0xff]
        %v4989 = vld [vmem:[%s4985 + $0x18] sm:$0xff]
        %s4990 = scalar_lea.vmem [#allocation19], 1
        %v4991 = vld [vmem:[%s4990] sm:$0x1]
        %v4993 = vlaneseq
        %v4994 = vshrl.u32 %v4993, 7
        %v4995 = vsub.s32 0, %v4994
        %v4996 = vrot.slane %v4991, %v4995
        %v4999 = vsel %vm883, %v4983, 0
        %v5002 = vsel %vm883, %v4984, 0
        %5004 = vmatprep.subr.mxu0 0.0
        %5005 = vmatpush1.msra.mxu0 %v4986
        %5006 = vmatprep.subr.mxu0 0.0
        %5007 = vmatpush1.msra.mxu0 %v4987
        %5008 = vmatprep.subr.mxu0 0.0
        %5009 = vmatpush1.msra.mxu0 %v4988
        %5010 = vmatprep.subr.mxu0 0.0
        %5011 = vmatpush1.msra.mxu0 %v4989
        %5012 = vmatprep.subr.mxu0 0.0
        %5013 = vmatpush1.msra.mxu0 0.0
        %5014 = vmatprep.subr.mxu0 0.0
        %5015 = vmatpush1.msra.mxu0 0.0
        %5016 = vmatprep.subr.mxu0 0.0
        %5017 = vmatpush1.msra.mxu0 0.0
        %5018 = vmatprep.subr.mxu0 0.0
        %5019 = vmatpush1.msra.mxu0 0.0
        %5020 = vmatprep.subr.mxu0 0.0
        %5021 = vmatpush1.msra.mxu0 0.0
        %5022 = vmatprep.subr.mxu0 0.0
        %5023 = vmatpush1.msra.mxu0 0.0
        %5024 = vmatprep.subr.mxu0 0.0
        %5025 = vmatpush1.msra.mxu0 0.0
        %5026 = vmatprep.subr.mxu0 0.0
        %5027 = vmatpush1.msra.mxu0 0.0
        %5028 = vmatprep.subr.mxu0 0.0
        %5029 = vmatpush1.msra.mxu0 0.0
        %5030 = vmatprep.subr.mxu0 0.0
        %5031 = vmatpush1.msra.mxu0 0.0
        %5032 = vmatprep.subr.mxu0 0.0
        %5033 = vmatpush1.msra.mxu0 0.0
        %5034 = vmatprep.subr.mxu0 0.0
        %5035 = vmatpush1.msra.mxu0 0.0
        %5036 = vmatprep.subr.mxu0 0.0
        %5037 = vmatpush1.msra.mxu0 0.0
        %5038 = vmatprep.subr.mxu0 0.0
        %5039 = vmatpush1.msra.mxu0 0.0
        %5040 = vmatprep.subr.mxu0 0.0
        %5041 = vmatpush1.msra.mxu0 0.0
        %5042 = vmatprep.subr.mxu0 0.0
        %5043 = vmatpush1.msra.mxu0 0.0
        %5044 = vmatprep.subr.mxu0 0.0
        %5045 = vmatpush1.msra.mxu0 0.0
        %5046 = vmatprep.subr.mxu0 0.0
        %5047 = vmatpush1.msra.mxu0 0.0
        %5048 = vmatprep.subr.mxu0 0.0
        %5049 = vmatpush1.msra.mxu0 0.0
        %5050 = vmatprep.subr.mxu0 0.0
        %5051 = vmatpush1.msra.mxu0 0.0
        %5052 = vmatprep.subr.mxu0 0.0
        %5053 = vmatpush1.msra.mxu0 0.0
        %5054 = vmatprep.subr.mxu0 0.0
        %5055 = vmatpush1.msra.mxu0 0.0
        %5056 = vmatprep.subr.mxu0 0.0
        %5057 = vmatpush1.msra.mxu0 0.0
        %5058 = vmatprep.subr.mxu0 0.0
        %5059 = vmatpush1.msra.mxu0 0.0
        %5060 = vmatprep.subr.mxu0 0.0
        %5061 = vmatpush1.msra.mxu0 0.0
        %5062 = vmatprep.subr.mxu0 0.0
        %5063 = vmatpush1.msra.mxu0 0.0
        %5064 = vmatprep.subr.mxu0 0.0
        %5065 = vmatpush1.msra.mxu0 0.0
        %5066 = vmatprep.subr.mxu0 0.0
        %5067 = vmatpush1.msra.mxu0 0.0
        %5068 = vmatprep.mubr.f32.mxu0 0.0
        %5069 = vmatmul.mubr.f32.gmra.mrb[0].mxu0 %v4999
        %v5070 = vpop.f32.mrb[0].mxu0
        %v5071 = vadd.f32 %v4996, %v5070
        %v5072 = vpop.f32.mrb[0].mxu0
        %5073 = vmatprep.mubr.f32.mxu0 0.0
        %5074 = vmatmul.mubr.f32.gmra.mrb[0].mxu0 %v5002
        %v5075 = vpop.f32.mrb[0].mxu0
        %v5076 = vadd.f32 %v4996, %v5075
        %v5077 = vpop.f32.mrb[0].mxu0
        %5078 = vdwg.mxu0
        %vm5079 = vcmp.ge.f32.partialorder %v5071, 0.0
        %vm5080 = vcmp.ge.f32.partialorder %v5076, 0.0
        %v5081 = vmul.f32 %v5071, 0.2
        %v5082 = vmul.f32 %v5076, 0.2
        %v5083 = vsel %vm5079, %v5071, %v5081
        %v5084 = vsel %vm5080, %v5076, %v5082
        %s5085 = scalar_lea.vmem %s14, 64
        %v5086 = vld [vmem:[%s5085] sm:$0xff]
        %v5087 = vld [vmem:[%s5085 + $0x8] sm:$0xff]
        %v5088 = vld [vmem:[%s5085 + $0x10] sm:$0xff]
        %v5089 = vld [vmem:[%s5085 + $0x18] sm:$0xff]
        %v5090 = vld [vmem:[%s5085 + $0x20] sm:$0xff]
        %v5091 = vld [vmem:[%s5085 + $0x28] sm:$0xff]
        %v5092 = vld [vmem:[%s5085 + $0x30] sm:$0xff]
        %v5093 = vld [vmem:[%s5085 + $0x38] sm:$0xff]
        %s5094 = scalar_lea.vmem [#allocation20], 1
        %v5095 = vld [vmem:[%s5094] sm:$0x1]
        %v5097 = vlaneseq
        %v5098 = vshrl.u32 %v5097, 7
        %v5099 = vsub.s32 0, %v5098
        %v5100 = vrot.slane %v5095, %v5099
        %v5103 = vsel %vm2944, %v5083, 0
        %v5106 = vsel %vm2944, %v5084, 0
        %5108 = vmatprep.subr.mxu0 0.0
        %5109 = vmatpush1.msra.mxu0 %v5086
        %5110 = vmatprep.subr.mxu0 0.0
        %5111 = vmatpush1.msra.mxu0 %v5087
        %5112 = vmatprep.subr.mxu0 0.0
        %5113 = vmatpush1.msra.mxu0 %v5088
        %5114 = vmatprep.subr.mxu0 0.0
        %5115 = vmatpush1.msra.mxu0 %v5089
        %5116 = vmatprep.subr.mxu0 0.0
        %5117 = vmatpush1.msra.mxu0 %v5090
        %5118 = vmatprep.subr.mxu0 0.0
        %5119 = vmatpush1.msra.mxu0 %v5091
        %5120 = vmatprep.subr.mxu0 0.0
        %5121 = vmatpush1.msra.mxu0 %v5092
        %5122 = vmatprep.subr.mxu0 0.0
        %5123 = vmatpush1.msra.mxu0 %v5093
        %5124 = vmatprep.subr.mxu0 0.0
        %5125 = vmatpush1.msra.mxu0 0.0
        %5126 = vmatprep.subr.mxu0 0.0
        %5127 = vmatpush1.msra.mxu0 0.0
        %5128 = vmatprep.subr.mxu0 0.0
        %5129 = vmatpush1.msra.mxu0 0.0
        %5130 = vmatprep.subr.mxu0 0.0
        %5131 = vmatpush1.msra.mxu0 0.0
        %5132 = vmatprep.subr.mxu0 0.0
        %5133 = vmatpush1.msra.mxu0 0.0
        %5134 = vmatprep.subr.mxu0 0.0
        %5135 = vmatpush1.msra.mxu0 0.0
        %5136 = vmatprep.subr.mxu0 0.0
        %5137 = vmatpush1.msra.mxu0 0.0
        %5138 = vmatprep.subr.mxu0 0.0
        %5139 = vmatpush1.msra.mxu0 0.0
        %5140 = vmatprep.subr.mxu0 0.0
        %5141 = vmatpush1.msra.mxu0 0.0
        %5142 = vmatprep.subr.mxu0 0.0
        %5143 = vmatpush1.msra.mxu0 0.0
        %5144 = vmatprep.subr.mxu0 0.0
        %5145 = vmatpush1.msra.mxu0 0.0
        %5146 = vmatprep.subr.mxu0 0.0
        %5147 = vmatpush1.msra.mxu0 0.0
        %5148 = vmatprep.subr.mxu0 0.0
        %5149 = vmatpush1.msra.mxu0 0.0
        %5150 = vmatprep.subr.mxu0 0.0
        %5151 = vmatpush1.msra.mxu0 0.0
        %5152 = vmatprep.subr.mxu0 0.0
        %5153 = vmatpush1.msra.mxu0 0.0
        %5154 = vmatprep.subr.mxu0 0.0
        %5155 = vmatpush1.msra.mxu0 0.0
        %5156 = vmatprep.subr.mxu0 0.0
        %5157 = vmatpush1.msra.mxu0 0.0
        %5158 = vmatprep.subr.mxu0 0.0
        %5159 = vmatpush1.msra.mxu0 0.0
        %5160 = vmatprep.subr.mxu0 0.0
        %5161 = vmatpush1.msra.mxu0 0.0
        %5162 = vmatprep.subr.mxu0 0.0
        %5163 = vmatpush1.msra.mxu0 0.0
        %5164 = vmatprep.subr.mxu0 0.0
        %5165 = vmatpush1.msra.mxu0 0.0
        %5166 = vmatprep.subr.mxu0 0.0
        %5167 = vmatpush1.msra.mxu0 0.0
        %5168 = vmatprep.subr.mxu0 0.0
        %5169 = vmatpush1.msra.mxu0 0.0
        %5170 = vmatprep.subr.mxu0 0.0
        %5171 = vmatpush1.msra.mxu0 0.0
        %5172 = vmatprep.mubr.f32.mxu0 0.0
        %5173 = vmatmul.mubr.f32.gmra.mrb[0].mxu0 %v5103
        %v5174 = vpop.f32.mrb[0].mxu0
        %v5175 = vadd.f32 %v5100, %v5174
        %v5176 = vpop.f32.mrb[0].mxu0
        %5177 = vmatprep.mubr.f32.mxu0 0.0
        %5178 = vmatmul.mubr.f32.gmra.mrb[0].mxu0 %v5106
        %v5179 = vpop.f32.mrb[0].mxu0
        %v5180 = vadd.f32 %v5100, %v5179
        %v5181 = vpop.f32.mrb[0].mxu0
        %5182 = vdwg.mxu0
        %v5183 = vadd.f32 %v4937, %v5175
        %v5184 = vadd.f32 %v4938, %v5180
        %v5185 = vld [vmem:[%s16] sm:$0xff]
        %v5186 = vld [vmem:[%s16 + $0x8] sm:$0xff]
        %v5187 = vld [vmem:[%s16 + $0x10] sm:$0xff]
        %v5188 = vld [vmem:[%s16 + $0x18] sm:$0xff]
        %v5190 = vsel %vm883, %v5183, 0
        %5192 = vmatprep.subr.mxu0 0.0
        %5193 = vmatpush1.msra.mxu0 %v5185
        %5194 = vmatprep.subr.mxu0 0.0
        %5195 = vmatpush1.msra.mxu0 %v5186
        %5196 = vmatprep.subr.mxu0 0.0
        %5197 = vmatpush1.msra.mxu0 %v5187
        %5198 = vmatprep.subr.mxu0 0.0
        %5199 = vmatpush1.msra.mxu0 %v5188
        %5200 = vmatprep.subr.mxu0 0.0
        %5201 = vmatpush1.msra.mxu0 0.0
        %5202 = vmatprep.subr.mxu0 0.0
        %5203 = vmatpush1.msra.mxu0 0.0
        %5204 = vmatprep.subr.mxu0 0.0
        %5205 = vmatpush1.msra.mxu0 0.0
        %5206 = vmatprep.subr.mxu0 0.0
        %5207 = vmatpush1.msra.mxu0 0.0
        %5208 = vmatprep.subr.mxu0 0.0
        %5209 = vmatpush1.msra.mxu0 0.0
        %5210 = vmatprep.subr.mxu0 0.0
        %5211 = vmatpush1.msra.mxu0 0.0
        %5212 = vmatprep.subr.mxu0 0.0
        %5213 = vmatpush1.msra.mxu0 0.0
        %5214 = vmatprep.subr.mxu0 0.0
        %5215 = vmatpush1.msra.mxu0 0.0
        %5216 = vmatprep.subr.mxu0 0.0
        %5217 = vmatpush1.msra.mxu0 0.0
        %5218 = vmatprep.subr.mxu0 0.0
        %5219 = vmatpush1.msra.mxu0 0.0
        %5220 = vmatprep.subr.mxu0 0.0
        %5221 = vmatpush1.msra.mxu0 0.0
        %5222 = vmatprep.subr.mxu0 0.0
        %5223 = vmatpush1.msra.mxu0 0.0
        %5224 = vmatprep.subr.mxu0 0.0
        %5225 = vmatpush1.msra.mxu0 0.0
        %5226 = vmatprep.subr.mxu0 0.0
        %5227 = vmatpush1.msra.mxu0 0.0
        %5228 = vmatprep.subr.mxu0 0.0
        %5229 = vmatpush1.msra.mxu0 0.0
        %5230 = vmatprep.subr.mxu0 0.0
        %5231 = vmatpush1.msra.mxu0 0.0
        %5232 = vmatprep.subr.mxu0 0.0
        %5233 = vmatpush1.msra.mxu0 0.0
        %5234 = vmatprep.subr.mxu0 0.0
        %5235 = vmatpush1.msra.mxu0 0.0
        %5236 = vmatprep.subr.mxu0 0.0
        %5237 = vmatpush1.msra.mxu0 0.0
        %5238 = vmatprep.subr.mxu0 0.0
        %5239 = vmatpush1.msra.mxu0 0.0
        %5240 = vmatprep.subr.mxu0 0.0
        %5241 = vmatpush1.msra.mxu0 0.0
        %5242 = vmatprep.subr.mxu0 0.0
        %5243 = vmatpush1.msra.mxu0 0.0
        %5244 = vmatprep.subr.mxu0 0.0
        %5245 = vmatpush1.msra.mxu0 0.0
        %5246 = vmatprep.subr.mxu0 0.0
        %5247 = vmatpush1.msra.mxu0 0.0
        %5248 = vmatprep.subr.mxu0 0.0
        %5249 = vmatpush1.msra.mxu0 0.0
        %5250 = vmatprep.subr.mxu0 0.0
        %5251 = vmatpush1.msra.mxu0 0.0
        %5252 = vmatprep.subr.mxu0 0.0
        %5253 = vmatpush1.msra.mxu0 0.0
        %5254 = vmatprep.subr.mxu0 0.0
        %5255 = vmatpush1.msra.mxu0 0.0
        %5256 = vmatprep.mubr.f32.mxu0 0.0
        %5257 = vmatmul.mubr.f32.gmra.mrb[0].mxu0 %v5190
        %v5258 = vpop.f32.mrb[0].mxu0
        %v5259 = vadd.f32 0.0, %v5258
        %v5260 = vpop.f32.mrb[0].mxu0
        %5261 = vdwg.mxu0
        %v5262 = vld [vmem:[%s17] sm:$0xff]
        %v5263 = vld [vmem:[%s17 + $0x8] sm:$0xff]
        %v5264 = vld [vmem:[%s17 + $0x10] sm:$0xff]
        %v5265 = vld [vmem:[%s17 + $0x18] sm:$0xff]
        %v5267 = vsel %vm883, %v5184, 0
        %5269 = vmatprep.subr.mxu0 0.0
        %5270 = vmatpush1.msra.mxu0 %v5262
        %5271 = vmatprep.subr.mxu0 0.0
        %5272 = vmatpush1.msra.mxu0 %v5263
        %5273 = vmatprep.subr.mxu0 0.0
        %5274 = vmatpush1.msra.mxu0 %v5264
        %5275 = vmatprep.subr.mxu0 0.0
        %5276 = vmatpush1.msra.mxu0 %v5265
        %5277 = vmatprep.subr.mxu0 0.0
        %5278 = vmatpush1.msra.mxu0 0.0
        %5279 = vmatprep.subr.mxu0 0.0
        %5280 = vmatpush1.msra.mxu0 0.0
        %5281 = vmatprep.subr.mxu0 0.0
        %5282 = vmatpush1.msra.mxu0 0.0
        %5283 = vmatprep.subr.mxu0 0.0
        %5284 = vmatpush1.msra.mxu0 0.0
        %5285 = vmatprep.subr.mxu0 0.0
        %5286 = vmatpush1.msra.mxu0 0.0
        %5287 = vmatprep.subr.mxu0 0.0
        %5288 = vmatpush1.msra.mxu0 0.0
        %5289 = vmatprep.subr.mxu0 0.0
        %5290 = vmatpush1.msra.mxu0 0.0
        %5291 = vmatprep.subr.mxu0 0.0
        %5292 = vmatpush1.msra.mxu0 0.0
        %5293 = vmatprep.subr.mxu0 0.0
        %5294 = vmatpush1.msra.mxu0 0.0
        %5295 = vmatprep.subr.mxu0 0.0
        %5296 = vmatpush1.msra.mxu0 0.0
        %5297 = vmatprep.subr.mxu0 0.0
        %5298 = vmatpush1.msra.mxu0 0.0
        %5299 = vmatprep.subr.mxu0 0.0
        %5300 = vmatpush1.msra.mxu0 0.0
        %5301 = vmatprep.subr.mxu0 0.0
        %5302 = vmatpush1.msra.mxu0 0.0
        %5303 = vmatprep.subr.mxu0 0.0
        %5304 = vmatpush1.msra.mxu0 0.0
        %5305 = vmatprep.subr.mxu0 0.0
        %5306 = vmatpush1.msra.mxu0 0.0
        %5307 = vmatprep.subr.mxu0 0.0
        %5308 = vmatpush1.msra.mxu0 0.0
        %5309 = vmatprep.subr.mxu0 0.0
        %5310 = vmatpush1.msra.mxu0 0.0
        %5311 = vmatprep.subr.mxu0 0.0
        %5312 = vmatpush1.msra.mxu0 0.0
        %5313 = vmatprep.subr.mxu0 0.0
        %5314 = vmatpush1.msra.mxu0 0.0
        %5315 = vmatprep.subr.mxu0 0.0
        %5316 = vmatpush1.msra.mxu0 0.0
        %5317 = vmatprep.subr.mxu0 0.0
        %5318 = vmatpush1.msra.mxu0 0.0
        %5319 = vmatprep.subr.mxu0 0.0
        %5320 = vmatpush1.msra.mxu0 0.0
        %5321 = vmatprep.subr.mxu0 0.0
        %5322 = vmatpush1.msra.mxu0 0.0
        %5323 = vmatprep.subr.mxu0 0.0
        %5324 = vmatpush1.msra.mxu0 0.0
        %5325 = vmatprep.subr.mxu0 0.0
        %5326 = vmatpush1.msra.mxu0 0.0
        %5327 = vmatprep.subr.mxu0 0.0
        %5328 = vmatpush1.msra.mxu0 0.0
        %5329 = vmatprep.subr.mxu0 0.0
        %5330 = vmatpush1.msra.mxu0 0.0
        %5331 = vmatprep.subr.mxu0 0.0
        %5332 = vmatpush1.msra.mxu0 0.0
        %5333 = vmatprep.mubr.f32.mxu0 0.0
        %5334 = vmatmul.mubr.f32.gmra.mrb[0].mxu0 %v5267
        %v5335 = vpop.f32.mrb[0].mxu0
        %v5336 = vadd.f32 0.0, %v5335
        %v5337 = vpop.f32.mrb[0].mxu0
        %5338 = vdwg.mxu0
        %v5339 = vld [vmem:[#allocation22] sm:$0xff]
        %v5340 = vld [vmem:[#allocation22 + $0x8] sm:$0xff]
        %v5341 = vld [vmem:[#allocation22 + $0x10] sm:$0xff]
        %v5342 = vld [vmem:[#allocation22 + $0x18] sm:$0xff]
        %5343 = vmatprep.subr.mxu0 0.0
        %5344 = vmatpush1.msra.mxu0 %v5339
        %5345 = vmatprep.subr.mxu0 0.0
        %5346 = vmatpush1.msra.mxu0 %v5340
        %5347 = vmatprep.subr.mxu0 0.0
        %5348 = vmatpush1.msra.mxu0 %v5341
        %5349 = vmatprep.subr.mxu0 0.0
        %5350 = vmatpush1.msra.mxu0 %v5342
        %5351 = vmatprep.subr.mxu0 0.0
        %5352 = vmatpush1.msra.mxu0 0.0
        %5353 = vmatprep.subr.mxu0 0.0
        %5354 = vmatpush1.msra.mxu0 0.0
        %5355 = vmatprep.subr.mxu0 0.0
        %5356 = vmatpush1.msra.mxu0 0.0
        %5357 = vmatprep.subr.mxu0 0.0
        %5358 = vmatpush1.msra.mxu0 0.0
        %5359 = vmatprep.subr.mxu0 0.0
        %5360 = vmatpush1.msra.mxu0 0.0
        %5361 = vmatprep.subr.mxu0 0.0
        %5362 = vmatpush1.msra.mxu0 0.0
        %5363 = vmatprep.subr.mxu0 0.0
        %5364 = vmatpush1.msra.mxu0 0.0
        %5365 = vmatprep.subr.mxu0 0.0
        %5366 = vmatpush1.msra.mxu0 0.0
        %5367 = vmatprep.subr.mxu0 0.0
        %5368 = vmatpush1.msra.mxu0 0.0
        %5369 = vmatprep.subr.mxu0 0.0
        %5370 = vmatpush1.msra.mxu0 0.0
        %5371 = vmatprep.subr.mxu0 0.0
        %5372 = vmatpush1.msra.mxu0 0.0
        %5373 = vmatprep.subr.mxu0 0.0
        %5374 = vmatpush1.msra.mxu0 0.0
        %5375 = vmatprep.subr.mxu0 0.0
        %5376 = vmatpush1.msra.mxu0 0.0
        %5377 = vmatprep.subr.mxu0 0.0
        %5378 = vmatpush1.msra.mxu0 0.0
        %5379 = vmatprep.subr.mxu0 0.0
        %5380 = vmatpush1.msra.mxu0 0.0
        %5381 = vmatprep.subr.mxu0 0.0
        %5382 = vmatpush1.msra.mxu0 0.0
        %5383 = vmatprep.subr.mxu0 0.0
        %5384 = vmatpush1.msra.mxu0 0.0
        %5385 = vmatprep.subr.mxu0 0.0
        %5386 = vmatpush1.msra.mxu0 0.0
        %5387 = vmatprep.subr.mxu0 0.0
        %5388 = vmatpush1.msra.mxu0 0.0
        %5389 = vmatprep.subr.mxu0 0.0
        %5390 = vmatpush1.msra.mxu0 0.0
        %5391 = vmatprep.subr.mxu0 0.0
        %5392 = vmatpush1.msra.mxu0 0.0
        %5393 = vmatprep.subr.mxu0 0.0
        %5394 = vmatpush1.msra.mxu0 0.0
        %5395 = vmatprep.subr.mxu0 0.0
        %5396 = vmatpush1.msra.mxu0 0.0
        %5397 = vmatprep.subr.mxu0 0.0
        %5398 = vmatpush1.msra.mxu0 0.0
        %5399 = vmatprep.subr.mxu0 0.0
        %5400 = vmatpush1.msra.mxu0 0.0
        %5401 = vmatprep.subr.mxu0 0.0
        %5402 = vmatpush1.msra.mxu0 0.0
        %5403 = vmatprep.subr.mxu0 0.0
        %5404 = vmatpush1.msra.mxu0 0.0
        %5405 = vmatprep.subr.mxu0 0.0
        %5406 = vmatpush1.msra.mxu0 0.0
        %5407 = vmatprep.mubr.f32.mxu0 0.0
        %5408 = vmatmul.mubr.f32.gmra.mrb[0].mxu0 %v5267
        %v5409 = vpop.f32.mrb[0].mxu0
        %v5410 = vadd.f32 0.0, %v5409
        %v5411 = vpop.f32.mrb[0].mxu0
        %5412 = vdwg.mxu0
        %v5414 = vsel %vm883, %v5259, 0
        %v5417 = vsel %vm883, %v5336, 0
        %5419 = vmatprep.subr.mxu0 0.0
        %5420 = vmatpush1.xpose.msra.mxu0 %v5417
        %5421 = vmatprep.subr.mxu0 0.0
        %5422 = vmatpush1.xpose.msra.mxu0 0.0
        %5423 = vmatprep.subr.mxu0 0.0
        %5424 = vmatpush1.xpose.msra.mxu0 0.0
        %5425 = vmatprep.subr.mxu0 0.0
        %5426 = vmatpush1.xpose.msra.mxu0 0.0
        %5427 = vmatprep.subr.mxu0 0.0
        %5428 = vmatpush1.xpose.msra.mxu0 0.0
        %5429 = vmatprep.subr.mxu0 0.0
        %5430 = vmatpush1.xpose.msra.mxu0 0.0
        %5431 = vmatprep.subr.mxu0 0.0
        %5432 = vmatpush1.xpose.msra.mxu0 0.0
        %5433 = vmatprep.subr.mxu0 0.0
        %5434 = vmatpush1.xpose.msra.mxu0 0.0
        %5435 = vmatprep.subr.mxu0 0.0
        %5436 = vmatpush1.xpose.msra.mxu0 0.0
        %5437 = vmatprep.subr.mxu0 0.0
        %5438 = vmatpush1.xpose.msra.mxu0 0.0
        %5439 = vmatprep.subr.mxu0 0.0
        %5440 = vmatpush1.xpose.msra.mxu0 0.0
        %5441 = vmatprep.subr.mxu0 0.0
        %5442 = vmatpush1.xpose.msra.mxu0 0.0
        %5443 = vmatprep.subr.mxu0 0.0
        %5444 = vmatpush1.xpose.msra.mxu0 0.0
        %5445 = vmatprep.subr.mxu0 0.0
        %5446 = vmatpush1.xpose.msra.mxu0 0.0
        %5447 = vmatprep.subr.mxu0 0.0
        %5448 = vmatpush1.xpose.msra.mxu0 0.0
        %5449 = vmatprep.subr.mxu0 0.0
        %5450 = vmatpush1.xpose.msra.mxu0 0.0
        %5451 = vmatprep.subr.mxu0 0.0
        %5452 = vmatpush1.xpose.msra.mxu0 0.0
        %5453 = vmatprep.subr.mxu0 0.0
        %5454 = vmatpush1.xpose.msra.mxu0 0.0
        %5455 = vmatprep.subr.mxu0 0.0
        %5456 = vmatpush1.xpose.msra.mxu0 0.0
        %5457 = vmatprep.subr.mxu0 0.0
        %5458 = vmatpush1.xpose.msra.mxu0 0.0
        %5459 = vmatprep.subr.mxu0 0.0
        %5460 = vmatpush1.xpose.msra.mxu0 0.0
        %5461 = vmatprep.subr.mxu0 0.0
        %5462 = vmatpush1.xpose.msra.mxu0 0.0
        %5463 = vmatprep.subr.mxu0 0.0
        %5464 = vmatpush1.xpose.msra.mxu0 0.0
        %5465 = vmatprep.subr.mxu0 0.0
        %5466 = vmatpush1.xpose.msra.mxu0 0.0
        %5467 = vmatprep.subr.mxu0 0.0
        %5468 = vmatpush1.xpose.msra.mxu0 0.0
        %5469 = vmatprep.subr.mxu0 0.0
        %5470 = vmatpush1.xpose.msra.mxu0 0.0
        %5471 = vmatprep.subr.mxu0 0.0
        %5472 = vmatpush1.xpose.msra.mxu0 0.0
        %5473 = vmatprep.subr.mxu0 0.0
        %5474 = vmatpush1.xpose.msra.mxu0 0.0
        %5475 = vmatprep.subr.mxu0 0.0
        %5476 = vmatpush1.xpose.msra.mxu0 0.0
        %5477 = vmatprep.subr.mxu0 0.0
        %5478 = vmatpush1.xpose.msra.mxu0 0.0
        %5479 = vmatprep.subr.mxu0 0.0
        %5480 = vmatpush1.xpose.msra.mxu0 0.0
        %5481 = vmatprep.subr.mxu0 0.0
        %5482 = vmatpush1.xpose.msra.mxu0 0.0
        %5483 = vmatprep.mubr.f32.mxu0 0.0
        %5484 = vmatmul.mubr.f32.gmra.mrb[0].mxu0 %v5414
        %v5485 = vpop.f32.mrb[0].mxu0
        %v5486 = vadd.f32 0.0, %v5485
        %v5487 = vpop.f32.mrb[0].mxu0
        %5488 = vdwg.mxu0
        %v5489 = vmul.f32 %v5486, 0.35355338
        %v5490 = vsel %vm1026, %v5489, -inf
        %5491 = vmax.xlane.f32.xlu0 %v5490
        %v5492 = vpop.xlane.xlu0 %5491
        %v5493 = vsub.f32 %v5489, %v5492
        %v5494 = vmul.f32 %v5493, 1.442695
        %v5495 = vpow.pop %v5494
        %v5496 = vsel %vm1026, %v5495, 0.0
        %5497 = vadd.xlane.f32.xlu0 %v5496
        %v5498 = vpop.xlane.xlu0 %5497
        %v5499 = vrcp.pop %v5498
        %v5500 = vmul.f32 %v5495, %v5499
        %5501 = vst.msk [vmem:[%s878] sm:$0xff] %vm1026, %v5500
        %v5502 = vld [vmem:[%s19] sm:$0x1]
        %v5504 = vlaneseq
        %v5505 = vshrl.u32 %v5504, 7
        %v5506 = vsub.s32 0, %v5505
        %v5507 = vrot.slane %v5502, %v5506
        %v5510 = vsel %vm1026, %v5500, 0
        %5512 = vmatprep.subr.mxu0 0.0
        %5513 = vmatpush1.msra.mxu0 %v5410
        %5514 = vmatprep.subr.mxu0 0.0
        %5515 = vmatpush1.msra.mxu0 0.0
        %5516 = vmatprep.subr.mxu0 0.0
        %5517 = vmatpush1.msra.mxu0 0.0
        %5518 = vmatprep.subr.mxu0 0.0
        %5519 = vmatpush1.msra.mxu0 0.0
        %5520 = vmatprep.subr.mxu0 0.0
        %5521 = vmatpush1.msra.mxu0 0.0
        %5522 = vmatprep.subr.mxu0 0.0
        %5523 = vmatpush1.msra.mxu0 0.0
        %5524 = vmatprep.subr.mxu0 0.0
        %5525 = vmatpush1.msra.mxu0 0.0
        %5526 = vmatprep.subr.mxu0 0.0
        %5527 = vmatpush1.msra.mxu0 0.0
        %5528 = vmatprep.subr.mxu0 0.0
        %5529 = vmatpush1.msra.mxu0 0.0
        %5530 = vmatprep.subr.mxu0 0.0
        %5531 = vmatpush1.msra.mxu0 0.0
        %5532 = vmatprep.subr.mxu0 0.0
        %5533 = vmatpush1.msra.mxu0 0.0
        %5534 = vmatprep.subr.mxu0 0.0
        %5535 = vmatpush1.msra.mxu0 0.0
        %5536 = vmatprep.subr.mxu0 0.0
        %5537 = vmatpush1.msra.mxu0 0.0
        %5538 = vmatprep.subr.mxu0 0.0
        %5539 = vmatpush1.msra.mxu0 0.0
        %5540 = vmatprep.subr.mxu0 0.0
        %5541 = vmatpush1.msra.mxu0 0.0
        %5542 = vmatprep.subr.mxu0 0.0
        %5543 = vmatpush1.msra.mxu0 0.0
        %5544 = vmatprep.subr.mxu0 0.0
        %5545 = vmatpush1.msra.mxu0 0.0
        %5546 = vmatprep.subr.mxu0 0.0
        %5547 = vmatpush1.msra.mxu0 0.0
        %5548 = vmatprep.subr.mxu0 0.0
        %5549 = vmatpush1.msra.mxu0 0.0
        %5550 = vmatprep.subr.mxu0 0.0
        %5551 = vmatpush1.msra.mxu0 0.0
        %5552 = vmatprep.subr.mxu0 0.0
        %5553 = vmatpush1.msra.mxu0 0.0
        %5554 = vmatprep.subr.mxu0 0.0
        %5555 = vmatpush1.msra.mxu0 0.0
        %5556 = vmatprep.subr.mxu0 0.0
        %5557 = vmatpush1.msra.mxu0 0.0
        %5558 = vmatprep.subr.mxu0 0.0
        %5559 = vmatpush1.msra.mxu0 0.0
        %5560 = vmatprep.subr.mxu0 0.0
        %5561 = vmatpush1.msra.mxu0 0.0
        %5562 = vmatprep.subr.mxu0 0.0
        %5563 = vmatpush1.msra.mxu0 0.0
        %5564 = vmatprep.subr.mxu0 0.0
        %5565 = vmatpush1.msra.mxu0 0.0
        %5566 = vmatprep.subr.mxu0 0.0
        %5567 = vmatpush1.msra.mxu0 0.0
        %5568 = vmatprep.subr.mxu0 0.0
        %5569 = vmatpush1.msra.mxu0 0.0
        %5570 = vmatprep.subr.mxu0 0.0
        %5571 = vmatpush1.msra.mxu0 0.0
        %5572 = vmatprep.subr.mxu0 0.0
        %5573 = vmatpush1.msra.mxu0 0.0
        %5574 = vmatprep.subr.mxu0 0.0
        %5575 = vmatpush1.msra.mxu0 0.0
        %5576 = vmatprep.mubr.f32.mxu0 0.0
        %5577 = vmatmul.mubr.f32.gmra.mrb[0].mxu0 %v5510
        %v5578 = vpop.f32.mrb[0].mxu0
        %v5579 = vadd.f32 %v5507, %v5578
        %v5580 = vpop.f32.mrb[0].mxu0
        %5581 = vdwg.mxu0
        %5582 = vst.msk [vmem:[%s871] sm:$0xff] %vm883, %v5579
        %s5583 = sand.u32 %s488, 1
        %s5584 = scalar_lea.sflag [#allocation4], %s5583
        %s5585 = sand.u32 %s488, 1
        %s5586 = smul.addr %s5585, 8
        %s5587 = scalar_lea.vmem [#allocation23], %s5586
        %s5588 = sand.u32 %s514, 1
        %s5589 = scalar_lea.sflag [#allocation25], %s5588
        %s5590 = sand.u32 %s514, 1
        %s5591 = smul.addr %s5590, 8
        %s5592 = scalar_lea.vmem [#allocation24], %s5591
        // Predicated region
        $region153: #{trans_apply.1} parent=99 // pred_check
          %p5593 = pneg %p498
        $region154: #{trans_apply.1} parent=99 // pred_check_branch
          %5595 = sbr.rel (%p5593) target = $region156
        $region155: #{trans_apply.1} parent=99 // pred_region
          %s5597 = ssub.s32 128, 128
          %5598 = vsyncadd %s5584, %s5597
          %s5599 = smul.addr %s50, 128
          %s5600 = scalar_lea.hbm %s20, %s5599
          %s5602 = sshll.u32 %s5587, 4
          %s5603 = int_to_ptr.vmem [resolvable:$true] %s5602
          %5605 = dma.vmem_to_hbm [thread:$0]  %s5603, 128, %s5600, %s5584
        $region156: #{trans_apply.1} parent=99 // pred_fallthru
          _
        // Predicated region
        $region157: #{trans_apply.1} parent=99 // pred_check
          %p5606 = pneg %p524
        $region158: #{trans_apply.1} parent=99 // pred_check_branch
          %5608 = sbr.rel (%p5606) target = $region160
        $region159: #{trans_apply.1} parent=99 // pred_region
          %s5610 = ssub.s32 128, 128
          %5611 = vsyncadd %s5589, %s5610
          %s5612 = smul.addr %s50, 128
          %s5613 = scalar_lea.hbm %s21, %s5612
          %s5615 = sshll.u32 %s5592, 4
          %s5616 = int_to_ptr.vmem [resolvable:$true] %s5615
          %5618 = dma.vmem_to_hbm [thread:$0]  %s5616, 128, %s5613, %s5589
        $region160: #{trans_apply.1} parent=99 // pred_fallthru
          _
      $region100: #{trans_apply.1} parent=5 // pred_fallthru
        _
      %p5619 = scmp.le.s32.totalorder 2, %s45
      // Predicated region
      $region161: #{trans_apply.1} parent=5 // pred_check
        %p5620 = pneg %p5619
      $region162: #{trans_apply.1} parent=5 // pred_check_branch
        %5622 = sbr.rel (%p5620) target = $region164
      $region163: #{trans_apply.1} parent=5 // pred_region
        %s5623 = ssub.s32 %s45, 2
        // Predicated region
        $region165: #{trans_apply.1} parent=163 // pred_check
          %p5624 = pneg %p504
        $region166: #{trans_apply.1} parent=163 // pred_check_branch
          %5626 = sbr.rel (%p5624) target = $region168
        $region167: #{trans_apply.1} parent=163 // pred_region
          %s5627 = sand.u32 %s489, 1
          %s5628 = scalar_lea.sflag [#allocation4], %s5627
          %s5629 = sand.u32 %s489, 1
          %s5630 = smul.addr %s5629, 8
          %s5631 = scalar_lea.vmem [#allocation23], %s5630
          %5632 = dma.done %s5628, 128
        $region168: #{trans_apply.1} parent=163 // pred_fallthru
          _
        // Predicated region
        $region169: #{trans_apply.1} parent=163 // pred_check
          %p5633 = pneg %p530
        $region170: #{trans_apply.1} parent=163 // pred_check_branch
          %5635 = sbr.rel (%p5633) target = $region172
        $region171: #{trans_apply.1} parent=163 // pred_region
          %s5636 = sand.u32 %s515, 1
          %s5637 = scalar_lea.sflag [#allocation25], %s5636
          %s5638 = sand.u32 %s515, 1
          %s5639 = smul.addr %s5638, 8
          %s5640 = scalar_lea.vmem [#allocation24], %s5639
          %5641 = dma.done %s5637, 128
        $region172: #{trans_apply.1} parent=163 // pred_fallthru
          _
      $region164: #{trans_apply.1} parent=5 // pred_fallthru
        _
    $region6: #{trans_apply.1} parent=1 // loop_footer
      %s49 = sadd.s32 1, %s45
    $region7: #{trans_apply.1} parent=1 // loop_footer_branch
      %44 = sbr.rel target = $region3
    $region8: #{trans_apply.1} parent=1 // loop_exit
      _
    %5642 = vsyncpa [#allocation3], 1
    %s5643 = scalar_lea.sflag [#allocation3], 1
    %5644 = vsyncpa %s5643, 1
    %5645 = vsyncpa [#allocation6], 1
    %s5646 = scalar_lea.sflag [#allocation6], 1
    %5647 = vsyncpa %s5646, 1
    %5648 = vsyncpa [#allocation9], 1
    %5649 = vsyncpa [#allocation12], 1
    %5650 = vsyncpa [#allocation15], 1
    %5651 = vsyncpa [#allocation18], 1
    %5652 = vsyncpa [#allocation21], 1
    %5653 = vsyncpa [#allocation4], 1
    %s5654 = scalar_lea.sflag [#allocation4], 1
    %5655 = vsyncpa %s5654, 1
    %5656 = vsyncpa [#allocation25], 1
    %s5657 = scalar_lea.sflag [#allocation25], 1
    %5658 = vsyncpa %s5657, 1

</llo_original>
